<compile_context>
chip_gen: v7x
topology: tpu7x:2x2x1
jax: 0.10.0
libtpu: 0.0.40
codegen_flags: <defaults>
</compile_context>

<pallas_src>
import jax
import jax.numpy as jnp
from jax.experimental import pallas as pl
from jax.experimental.pallas import tpu as pltpu

# ---------------- static configuration ----------------
N, CIN, COUT = 2, 4, 8
H = W = 16
STRIDE = 1                      # only the stride=1 path is implemented in-kernel
HPAD = H + 4                    # 20 rows:  1 top pad + 16 real + 3 extra
WPAD = 32                       # 32 cols:  1 left pad + 16 real + 15 extra
RIMG = HPAD * WPAD              # 640 = 5*128 lanes per padded image
OFF = 128                       # zero guard block (>= 33-lane tap reach, tile aligned)
RTOT = N * RIMG + (N - 1) * OFF   # 1408 = 11*128 interior: [img0 | G | img1]
RGT = RTOT + 2 * OFF              # 1664 = 13*128 guarded slab width
EPS = 1e-5                      # PyTorch BatchNorm default

# packed per-channel parameter row offsets (one (PPROWS,1) f32 operand)
P_S1 = 0                        # BN1 scale            (CIN)
P_B1 = CIN                      # BN1 shift            (CIN)
P_B2 = 2 * CIN                  # BN2 shift            (COUT)
P_AL = 2 * CIN + COUT           # PReLU alpha          (COUT)
P_BM = 2 * CIN + 2 * COUT       # merged BN3+BNs shift (COUT)
PPROWS = 2 * CIN + 3 * COUT     # 32
KW = 9 * COUT                   # 72: lane width of the packed weight operand


def bottleneck_ir_kernel(xg_ref, mg_ref, pp_ref, wp_ref, out_ref,
                         h1g_ref, h2g_ref):
    # ---- unpack per-channel params (column vectors broadcast along lanes) ----
    s1 = pp_ref[P_S1:P_S1 + CIN, :]
    b1 = pp_ref[P_B1:P_B1 + CIN, :]
    b2 = pp_ref[P_B2:P_B2 + COUT, :]
    al = pp_ref[P_AL:P_AL + COUT, :]
    bm = pp_ref[P_BM:P_BM + COUT, :]
    m = mg_ref[...]                                           # (1, RTOT)

    # ---- BN1 over the interior lanes only; zero the guard lanes once ----
    h1g_ref[:, :OFF] = jnp.zeros((CIN, OFF), jnp.float32)
    h1g_ref[:, OFF + RTOT:] = jnp.zeros((CIN, OFF), jnp.float32)
    h1g_ref[:, OFF:OFF + RTOT] = (xg_ref[:, OFF:OFF + RTOT] * s1 + b1) * m

    # ---- conv1 3x3 (stride 1, pad 1): nine accumulated K=CIN dots read
    #      straight from the guarded slab (no im2col staging stores) ----
    acc1 = jnp.zeros((COUT, RTOT), jnp.float32)
    for k in range(9):
        d = (k // 3 - 1) * WPAD + (k % 3 - 1)                 # static lane shift
        acc1 = acc1 + jnp.dot(
            wp_ref[0:COUT, k * CIN:(k + 1) * CIN],            # BN2 scale pre-folded
            h1g_ref[:, OFF + d:OFF + d + RTOT].astype(jnp.bfloat16),
            preferred_element_type=jnp.float32)

    # ---- shortcut 1x1 conv fused onto the BN1 center tap:
    #      weights = ws*ss/s1; the ss*(ws@(b1/s1)) offset is inside `bm` ----
    sc = jnp.dot(wp_ref[COUT:2 * COUT, 4 * CIN:5 * CIN],
                 h1g_ref[:, OFF:OFF + RTOT].astype(jnp.bfloat16),
                 preferred_element_type=jnp.float32)

    # ---- BN2 shift + per-channel PReLU, re-zero all non-real-pixel lanes ----
    h2 = acc1 + b2
    h2 = jnp.where(h2 >= 0.0, h2, h2 * al) * m

    # ---- guarded copy of h2 (all stores are full f32 (8,128)-tile aligned) ----
    h2g_ref[:, :OFF] = jnp.zeros((COUT, OFF), jnp.float32)
    h2g_ref[:, OFF + RTOT:] = jnp.zeros((COUT, OFF), jnp.float32)
    h2g_ref[:, OFF:OFF + RTOT] = h2

    # ---- conv2 3x3: nine accumulated K=COUT dots; the accumulator starts at
    #      shortcut + merged (BN3 + BNs - fusion-offset) shifts ----
    acc2 = sc + bm
    for k in range(9):
        d = (k // 3 - 1) * WPAD + (k % 3 - 1)
        acc2 = acc2 + jnp.dot(
            wp_ref[2 * COUT:3 * COUT, k * COUT:(k + 1) * COUT],   # BN3 scale pre-folded
            h2g_ref[:, OFF + d:OFF + d + RTOT].astype(jnp.bfloat16),
            preferred_element_type=jnp.float32)

    out_ref[...] = acc2                                        # lane-dense store


def make_bottleneck_ir(params):
    (w1_t, w2_t, wsc_t, bn1, bn2, bn3, bns, alpha) = params

    def fold(p):
        g, b, mean, v = p
        s = g / jnp.sqrt(v + EPS)
        return s, b - mean * s

    s1, b1 = fold(bn1)
    s2, b2 = fold(bn2)
    s3, b3 = fold(bn3)
    ss, bsn = fold(bns)

    # conv weights -> (Cout, 9*Cin) im2col column order (tap-major, channel-minor);
    # fold the FOLLOWING BatchNorm's scale in f32, single bf16 cast at the end.
    w1b = jnp.transpose(w1_t, (0, 2, 3, 1)).reshape(COUT, 9 * CIN) * s2[:, None]
    w2b = jnp.transpose(w2_t, (0, 2, 3, 1)).reshape(COUT, 9 * COUT) * s3[:, None]
    ws2d = wsc_t[:, :, 0, 0]                                   # (COUT, CIN)
    wsf = ws2d * ss[:, None] / s1[None, :]                     # BN scale s1 > 0 always

    wpack = jnp.zeros((3 * COUT, KW), jnp.float32)
    wpack = wpack.at[0:COUT, 0:9 * CIN].set(w1b)               # conv1 rows
    wpack = wpack.at[COUT:2 * COUT, 4 * CIN:5 * CIN].set(wsf)  # fused shortcut rows
    wpack = wpack.at[2 * COUT:3 * COUT, :].set(w2b)            # conv2 rows
    wpack = wpack.astype(jnp.bfloat16)

    # merged additive shift: BN3 + BNs shifts minus the shortcut-fusion offset
    bmerged = b3 + bsn - ss * (ws2d @ (b1 / s1))

    pp = jnp.concatenate([s1, b1, b2, alpha, bmerged]).reshape(PPROWS, 1)

    # real-pixel mask over the interior lanes [img0 | guard | img1]
    m_img = jnp.zeros((HPAD, WPAD), jnp.float32).at[1:H + 1, 1:W + 1].set(1.0)
    m_img = m_img.reshape(1, RIMG)
    mparts = []
    for i in range(N):
        if i:
            mparts.append(jnp.zeros((1, OFF), jnp.float32))
        mparts.append(m_img)
    mg = jnp.concatenate(mparts, axis=1)                       # (1, RTOT)

    call = pl.pallas_call(
        bottleneck_ir_kernel,
        grid=(1,),                                             # batch lives on lanes
        in_specs=[
            pl.BlockSpec((CIN, RGT), lambda i: (0, 0)),        # guarded input slab
            pl.BlockSpec((1, RTOT), lambda i: (0, 0)),         # real-pixel mask
            pl.BlockSpec((PPROWS, 1), lambda i: (0, 0)),       # packed per-channel params
            pl.BlockSpec((3 * COUT, KW), lambda i: (0, 0)),    # packed bf16 weights
        ],
        out_specs=pl.BlockSpec((COUT, RTOT), lambda i: (0, 0)),
        out_shape=jax.ShapeDtypeStruct((COUT, RTOT), jnp.float32),
        scratch_shapes=[
            pltpu.VMEM((CIN, RGT), jnp.float32),               # BN1(x), guarded
            pltpu.VMEM((COUT, RGT), jnp.float32),              # PReLU output, guarded
        ],
    )

    @jax.jit
    def forward(x_nchw):
        # glue: NCHW -> guarded (C, 13*128) lane slab [G | img0 | G | img1 | G]
        xpad = jnp.pad(x_nchw.astype(jnp.float32),
                       ((0, 0), (0, 0), (1, HPAD - H - 1), (1, WPAD - W - 1)))
        xpad = xpad.reshape(N, CIN, RIMG)
        parts = [jnp.zeros((CIN, OFF), jnp.float32)]
        for i in range(N):
            parts.append(xpad[i])
            parts.append(jnp.zeros((CIN, OFF), jnp.float32))
        xg = jnp.concatenate(parts, axis=1)                    # (CIN, RGT)

        out = call(xg, mg, pp, wpack)                          # (COUT, RTOT)

        imgs = []
        for i in range(N):
            s = i * (RIMG + OFF)
            img = out[:, s:s + RIMG].reshape(COUT, HPAD, WPAD)[:, 1:H + 1, 1:W + 1]
            imgs.append(img)
        return jnp.stack(imgs, axis=0)                         # NCHW

    return forward


def reference(x, params):
    """Pure-JAX (XLA) reference mirroring the PyTorch forward (eval-mode BN)."""
    (w1_t, w2_t, wsc_t, bn1, bn2, bn3, bns, alpha) = params

    def bn(y, p):
        g, b, m, v = p
        s = g / jnp.sqrt(v + EPS)
        return y * s[None, :, None, None] + (b - m * s)[None, :, None, None]

    def conv(y, w, stride, pad):
        return jax.lax.conv_general_dilated(
            y, w, (stride, stride), ((pad, pad), (pad, pad)),
            dimension_numbers=('NCHW', 'OIHW', 'NCHW'),
            precision=jax.lax.Precision.HIGHEST)

    r = bn(x, bn1)
    r = conv(r, w1_t, 1, 1)
    r = bn(r, bn2)
    r = jnp.where(r >= 0, r, r * alpha[None, :, None, None])
    r = conv(r, w2_t, STRIDE, 1)
    r = bn(r, bn3)
    sc = bn(conv(x, wsc_t, STRIDE, 0), bns)
    return r + sc


if __name__ == "__main__":
    key = jax.random.PRNGKey(0)
    ks = jax.random.split(key, 8)

    def bn_params(k, c):
        k1, k2, k3, k4 = jax.random.split(k, 4)
        gamma = jax.random.uniform(k1, (c,), jnp.float32, 0.5, 1.5)
        beta = jax.random.normal(k2, (c,), jnp.float32) * 0.1
        mean = jax.random.normal(k3, (c,), jnp.float32) * 0.1
        var = jax.random.uniform(k4, (c,), jnp.float32, 0.5, 1.5)
        return gamma, beta, mean, var

    w1_t = jax.random.normal(ks[0], (COUT, CIN, 3, 3), jnp.float32) * 0.1
    w2_t = jax.random.normal(ks[1], (COUT, COUT, 3, 3), jnp.float32) * 0.1
    wsc_t = jax.random.normal(ks[2], (COUT, CIN, 1, 1), jnp.float32) * 0.1
    params = (w1_t, w2_t, wsc_t,
              bn_params(ks[3], CIN), bn_params(ks[4], COUT),
              bn_params(ks[5], COUT), bn_params(ks[6], COUT),
              jnp.full((COUT,), 0.25, jnp.float32))             # PReLU init

    x = jax.random.normal(ks[7], (N, CIN, H, W), jnp.float32)

    fwd = make_bottleneck_ir(params)
    out = jax.block_until_ready(fwd(x))

    ref = jax.block_until_ready(reference(x, params))
    assert out.shape == (N, COUT, H, W), out.shape
    # bf16 MXU operands set the precision floor (~5e-3 max abs err vs f32 ref);
    # 2e-2 still catches any indexing / BN-folding / fusion bug (those are O(1)).
    assert jnp.allclose(out, ref, rtol=2e-2, atol=2e-2), \
        f"max abs diff = {jnp.max(jnp.abs(out - ref))}"

    print("KERNEL_OK")
</pallas_src>

<mosaic_0001>
module attributes {stable_mosaic.version = 11 : i64} {
  func.func @bottleneck_ir_kernel(%arg0: i32, %arg1: memref<4x1664xf32, #tpu.memory_space<vmem>>, %arg2: memref<1x1408xf32, #tpu.memory_space<vmem>>, %arg3: memref<32x1xf32, #tpu.memory_space<vmem>>, %arg4: memref<24x72xbf16, #tpu.memory_space<vmem>>, %arg5: memref<8x1408xf32, #tpu.memory_space<vmem>>, %arg6: memref<4x1664xf32, #tpu.memory_space<vmem>>, %arg7: memref<8x1664xf32, #tpu.memory_space<vmem>>) attributes {dimension_semantics = [#tpu.dimension_semantics<arbitrary>], iteration_bounds = array<i64: 1>, scalar_prefetch = 0 : i64, scratch_operands = 2 : i64, tpu.core_type = #tpu.core_type<tc>, window_params = [{pipeline_mode = #tpu.pipeline_mode<synchronous>, transform_indices = @transform_0, window_bounds = array<i64: 4, 1664>}, {pipeline_mode = #tpu.pipeline_mode<synchronous>, transform_indices = @transform_1, window_bounds = array<i64: 1, 1408>}, {pipeline_mode = #tpu.pipeline_mode<synchronous>, transform_indices = @transform_2, window_bounds = array<i64: 32, 1>}, {pipeline_mode = #tpu.pipeline_mode<synchronous>, transform_indices = @transform_3, window_bounds = array<i64: 24, 72>}, {pipeline_mode = #tpu.pipeline_mode<synchronous>, transform_indices = @transform_4, window_bounds = array<i64: 8, 1408>}]} {
    %c0 = arith.constant 0 : index
    %c0_0 = arith.constant 0 : index
    %0 = vector.load %arg3[%c0, %c0_0] : memref<32x1xf32, #tpu.memory_space<vmem>>, vector<4x1xf32>
    %c4 = arith.constant 4 : index
    %c0_1 = arith.constant 0 : index
    %1 = vector.load %arg3[%c4, %c0_1] : memref<32x1xf32, #tpu.memory_space<vmem>>, vector<4x1xf32>
    %c8 = arith.constant 8 : index
    %c0_2 = arith.constant 0 : index
    %2 = vector.load %arg3[%c8, %c0_2] : memref<32x1xf32, #tpu.memory_space<vmem>>, vector<8x1xf32>
    %c16 = arith.constant 16 : index
    %c0_3 = arith.constant 0 : index
    %3 = vector.load %arg3[%c16, %c0_3] : memref<32x1xf32, #tpu.memory_space<vmem>>, vector<8x1xf32>
    %c24 = arith.constant 24 : index
    %c0_4 = arith.constant 0 : index
    %4 = vector.load %arg3[%c24, %c0_4] : memref<32x1xf32, #tpu.memory_space<vmem>>, vector<8x1xf32>
    %c0_5 = arith.constant 0 : index
    %c0_6 = arith.constant 0 : index
    %5 = vector.load %arg2[%c0_5, %c0_6] : memref<1x1408xf32, #tpu.memory_space<vmem>>, vector<1x1408xf32>
    %cst = arith.constant 0.000000e+00 : f32
    %6 = vector.broadcast %cst : f32 to vector<4x128xf32>
    %c0_7 = arith.constant 0 : index
    %c0_8 = arith.constant 0 : index
    %7 = vector.load %arg6[%c0_7, %c0_8] : memref<4x1664xf32, #tpu.memory_space<vmem>>, vector<4x128xf32>
    tpu.vector_store %arg6[%c0_7, %c0_8], %6 {strides = array<i32>} : memref<4x1664xf32, #tpu.memory_space<vmem>>, vector<4x128xf32>,
    %cst_9 = arith.constant 0.000000e+00 : f32
    %8 = vector.broadcast %cst_9 : f32 to vector<4x128xf32>
    %c0_10 = arith.constant 0 : index
    %c1536 = arith.constant 1536 : index
    %9 = vector.load %arg6[%c0_10, %c1536] : memref<4x1664xf32, #tpu.memory_space<vmem>>, vector<4x128xf32>
    tpu.vector_store %arg6[%c0_10, %c1536], %8 {strides = array<i32>} : memref<4x1664xf32, #tpu.memory_space<vmem>>, vector<4x128xf32>,
    %c0_11 = arith.constant 0 : index
    %c128 = arith.constant 128 : index
    %10 = vector.load %arg1[%c0_11, %c128] : memref<4x1664xf32, #tpu.memory_space<vmem>>, vector<4x1408xf32>
    %11 = vector.broadcast %0 : vector<4x1xf32> to vector<4x1408xf32>
    %12 = arith.mulf %10, %11 : vector<4x1408xf32>
    %13 = vector.broadcast %1 : vector<4x1xf32> to vector<4x1408xf32>
    %14 = arith.addf %12, %13 : vector<4x1408xf32>
    %15 = vector.broadcast %5 : vector<1x1408xf32> to vector<4x1408xf32>
    %16 = arith.mulf %14, %15 : vector<4x1408xf32>
    %c0_12 = arith.constant 0 : index
    %c128_13 = arith.constant 128 : index
    %17 = vector.load %arg6[%c0_12, %c128_13] : memref<4x1664xf32, #tpu.memory_space<vmem>>, vector<4x1408xf32>
    tpu.vector_store %arg6[%c0_12, %c128_13], %16 {strides = array<i32>} : memref<4x1664xf32, #tpu.memory_space<vmem>>, vector<4x1408xf32>,
    %cst_14 = arith.constant 0.000000e+00 : f32
    %18 = vector.broadcast %cst_14 : f32 to vector<8x1408xf32>
    %c0_15 = arith.constant 0 : index
    %c0_16 = arith.constant 0 : index
    %19 = vector.load %arg4[%c0_15, %c0_16] : memref<24x72xbf16, #tpu.memory_space<vmem>>, vector<8x4xbf16>
    %c0_17 = arith.constant 0 : index
    %c95 = arith.constant 95 : index
    %20 = vector.load %arg6[%c0_17, %c95] : memref<4x1664xf32, #tpu.memory_space<vmem>>, vector<4x1408xf32>
    %21 = arith.truncf %20 : vector<4x1408xf32> to vector<4x1408xbf16>
    %cst_18 = arith.constant dense<0.000000e+00> : vector<8x1408xf32>
    %22 = tpu.matmul %19, %21, %cst_18 {dimension_numbers = #tpu.dot_dimension_numbers<[1], [0], [0], [1], [0, 0, 1, 1], [], []>} : vector<8x4xbf16>, vector<4x1408xbf16>, vector<8x1408xf32> -> vector<8x1408xf32>
    %23 = arith.addf %18, %22 : vector<8x1408xf32>
    %c0_19 = arith.constant 0 : index
    %c4_20 = arith.constant 4 : index
    %24 = vector.load %arg4[%c0_19, %c4_20] : memref<24x72xbf16, #tpu.memory_space<vmem>>, vector<8x4xbf16>
    %c0_21 = arith.constant 0 : index
    %c96 = arith.constant 96 : index
    %25 = vector.load %arg6[%c0_21, %c96] : memref<4x1664xf32, #tpu.memory_space<vmem>>, vector<4x1408xf32>
    %26 = arith.truncf %25 : vector<4x1408xf32> to vector<4x1408xbf16>
    %cst_22 = arith.constant dense<0.000000e+00> : vector<8x1408xf32>
    %27 = tpu.matmul %24, %26, %cst_22 {dimension_numbers = #tpu.dot_dimension_numbers<[1], [0], [0], [1], [0, 0, 1, 1], [], []>} : vector<8x4xbf16>, vector<4x1408xbf16>, vector<8x1408xf32> -> vector<8x1408xf32>
    %28 = arith.addf %23, %27 : vector<8x1408xf32>
    %c0_23 = arith.constant 0 : index
    %c8_24 = arith.constant 8 : index
    %29 = vector.load %arg4[%c0_23, %c8_24] : memref<24x72xbf16, #tpu.memory_space<vmem>>, vector<8x4xbf16>
    %c0_25 = arith.constant 0 : index
    %c97 = arith.constant 97 : index
    %30 = vector.load %arg6[%c0_25, %c97] : memref<4x1664xf32, #tpu.memory_space<vmem>>, vector<4x1408xf32>
    %31 = arith.truncf %30 : vector<4x1408xf32> to vector<4x1408xbf16>
    %cst_26 = arith.constant dense<0.000000e+00> : vector<8x1408xf32>
    %32 = tpu.matmul %29, %31, %cst_26 {dimension_numbers = #tpu.dot_dimension_numbers<[1], [0], [0], [1], [0, 0, 1, 1], [], []>} : vector<8x4xbf16>, vector<4x1408xbf16>, vector<8x1408xf32> -> vector<8x1408xf32>
    %33 = arith.addf %28, %32 : vector<8x1408xf32>
    %c0_27 = arith.constant 0 : index
    %c12 = arith.constant 12 : index
    %34 = vector.load %arg4[%c0_27, %c12] : memref<24x72xbf16, #tpu.memory_space<vmem>>, vector<8x4xbf16>
    %c0_28 = arith.constant 0 : index
    %c127 = arith.constant 127 : index
    %35 = vector.load %arg6[%c0_28, %c127] : memref<4x1664xf32, #tpu.memory_space<vmem>>, vector<4x1408xf32>
    %36 = arith.truncf %35 : vector<4x1408xf32> to vector<4x1408xbf16>
    %cst_29 = arith.constant dense<0.000000e+00> : vector<8x1408xf32>
    %37 = tpu.matmul %34, %36, %cst_29 {dimension_numbers = #tpu.dot_dimension_numbers<[1], [0], [0], [1], [0, 0, 1, 1], [], []>} : vector<8x4xbf16>, vector<4x1408xbf16>, vector<8x1408xf32> -> vector<8x1408xf32>
    %38 = arith.addf %33, %37 : vector<8x1408xf32>
    %c0_30 = arith.constant 0 : index
    %c16_31 = arith.constant 16 : index
    %39 = vector.load %arg4[%c0_30, %c16_31] : memref<24x72xbf16, #tpu.memory_space<vmem>>, vector<8x4xbf16>
    %c0_32 = arith.constant 0 : index
    %c128_33 = arith.constant 128 : index
    %40 = vector.load %arg6[%c0_32, %c128_33] : memref<4x1664xf32, #tpu.memory_space<vmem>>, vector<4x1408xf32>
    %41 = arith.truncf %40 : vector<4x1408xf32> to vector<4x1408xbf16>
    %cst_34 = arith.constant dense<0.000000e+00> : vector<8x1408xf32>
    %42 = tpu.matmul %39, %41, %cst_34 {dimension_numbers = #tpu.dot_dimension_numbers<[1], [0], [0], [1], [0, 0, 1, 1], [], []>} : vector<8x4xbf16>, vector<4x1408xbf16>, vector<8x1408xf32> -> vector<8x1408xf32>
    %43 = arith.addf %38, %42 : vector<8x1408xf32>
    %c0_35 = arith.constant 0 : index
    %c20 = arith.constant 20 : index
    %44 = vector.load %arg4[%c0_35, %c20] : memref<24x72xbf16, #tpu.memory_space<vmem>>, vector<8x4xbf16>
    %c0_36 = arith.constant 0 : index
    %c129 = arith.constant 129 : index
    %45 = vector.load %arg6[%c0_36, %c129] : memref<4x1664xf32, #tpu.memory_space<vmem>>, vector<4x1408xf32>
    %46 = arith.truncf %45 : vector<4x1408xf32> to vector<4x1408xbf16>
    %cst_37 = arith.constant dense<0.000000e+00> : vector<8x1408xf32>
    %47 = tpu.matmul %44, %46, %cst_37 {dimension_numbers = #tpu.dot_dimension_numbers<[1], [0], [0], [1], [0, 0, 1, 1], [], []>} : vector<8x4xbf16>, vector<4x1408xbf16>, vector<8x1408xf32> -> vector<8x1408xf32>
    %48 = arith.addf %43, %47 : vector<8x1408xf32>
    %c0_38 = arith.constant 0 : index
    %c24_39 = arith.constant 24 : index
    %49 = vector.load %arg4[%c0_38, %c24_39] : memref<24x72xbf16, #tpu.memory_space<vmem>>, vector<8x4xbf16>
    %c0_40 = arith.constant 0 : index
    %c159 = arith.constant 159 : index
    %50 = vector.load %arg6[%c0_40, %c159] : memref<4x1664xf32, #tpu.memory_space<vmem>>, vector<4x1408xf32>
    %51 = arith.truncf %50 : vector<4x1408xf32> to vector<4x1408xbf16>
    %cst_41 = arith.constant dense<0.000000e+00> : vector<8x1408xf32>
    %52 = tpu.matmul %49, %51, %cst_41 {dimension_numbers = #tpu.dot_dimension_numbers<[1], [0], [0], [1], [0, 0, 1, 1], [], []>} : vector<8x4xbf16>, vector<4x1408xbf16>, vector<8x1408xf32> -> vector<8x1408xf32>
    %53 = arith.addf %48, %52 : vector<8x1408xf32>
    %c0_42 = arith.constant 0 : index
    %c28 = arith.constant 28 : index
    %54 = vector.load %arg4[%c0_42, %c28] : memref<24x72xbf16, #tpu.memory_space<vmem>>, vector<8x4xbf16>
    %c0_43 = arith.constant 0 : index
    %c160 = arith.constant 160 : index
    %55 = vector.load %arg6[%c0_43, %c160] : memref<4x1664xf32, #tpu.memory_space<vmem>>, vector<4x1408xf32>
    %56 = arith.truncf %55 : vector<4x1408xf32> to vector<4x1408xbf16>
    %cst_44 = arith.constant dense<0.000000e+00> : vector<8x1408xf32>
    %57 = tpu.matmul %54, %56, %cst_44 {dimension_numbers = #tpu.dot_dimension_numbers<[1], [0], [0], [1], [0, 0, 1, 1], [], []>} : vector<8x4xbf16>, vector<4x1408xbf16>, vector<8x1408xf32> -> vector<8x1408xf32>
    %58 = arith.addf %53, %57 : vector<8x1408xf32>
    %c0_45 = arith.constant 0 : index
    %c32 = arith.constant 32 : index
    %59 = vector.load %arg4[%c0_45, %c32] : memref<24x72xbf16, #tpu.memory_space<vmem>>, vector<8x4xbf16>
    %c0_46 = arith.constant 0 : index
    %c161 = arith.constant 161 : index
    %60 = vector.load %arg6[%c0_46, %c161] : memref<4x1664xf32, #tpu.memory_space<vmem>>, vector<4x1408xf32>
    %61 = arith.truncf %60 : vector<4x1408xf32> to vector<4x1408xbf16>
    %cst_47 = arith.constant dense<0.000000e+00> : vector<8x1408xf32>
    %62 = tpu.matmul %59, %61, %cst_47 {dimension_numbers = #tpu.dot_dimension_numbers<[1], [0], [0], [1], [0, 0, 1, 1], [], []>} : vector<8x4xbf16>, vector<4x1408xbf16>, vector<8x1408xf32> -> vector<8x1408xf32>
    %63 = arith.addf %58, %62 : vector<8x1408xf32>
    %c8_48 = arith.constant 8 : index
    %c16_49 = arith.constant 16 : index
    %64 = vector.load %arg4[%c8_48, %c16_49] : memref<24x72xbf16, #tpu.memory_space<vmem>>, vector<8x4xbf16>
    %c0_50 = arith.constant 0 : index
    %c128_51 = arith.constant 128 : index
    %65 = vector.load %arg6[%c0_50, %c128_51] : memref<4x1664xf32, #tpu.memory_space<vmem>>, vector<4x1408xf32>
    %66 = arith.truncf %65 : vector<4x1408xf32> to vector<4x1408xbf16>
    %cst_52 = arith.constant dense<0.000000e+00> : vector<8x1408xf32>
    %67 = tpu.matmul %64, %66, %cst_52 {dimension_numbers = #tpu.dot_dimension_numbers<[1], [0], [0], [1], [0, 0, 1, 1], [], []>} : vector<8x4xbf16>, vector<4x1408xbf16>, vector<8x1408xf32> -> vector<8x1408xf32>
    %68 = vector.broadcast %2 : vector<8x1xf32> to vector<8x1408xf32>
    %69 = arith.addf %63, %68 : vector<8x1408xf32>
    %cst_53 = arith.constant 0.000000e+00 : f32
    %70 = vector.broadcast %cst_53 : f32 to vector<8x1408xf32>
    %71 = arith.cmpf oge, %69, %70 : vector<8x1408xf32>
    %72 = vector.broadcast %3 : vector<8x1xf32> to vector<8x1408xf32>
    %73 = arith.mulf %69, %72 : vector<8x1408xf32>
    %74 = arith.select %71, %69, %73 : vector<8x1408xi1>, vector<8x1408xf32>
    %75 = vector.broadcast %5 : vector<1x1408xf32> to vector<8x1408xf32>
    %76 = arith.mulf %74, %75 : vector<8x1408xf32>
    %cst_54 = arith.constant 0.000000e+00 : f32
    %77 = vector.broadcast %cst_54 : f32 to vector<8x128xf32>
    %c0_55 = arith.constant 0 : index
    %c0_56 = arith.constant 0 : index
    %78 = vector.load %arg7[%c0_55, %c0_56] : memref<8x1664xf32, #tpu.memory_space<vmem>>, vector<8x128xf32>
    tpu.vector_store %arg7[%c0_55, %c0_56], %77 {strides = array<i32>} : memref<8x1664xf32, #tpu.memory_space<vmem>>, vector<8x128xf32>,
    %cst_57 = arith.constant 0.000000e+00 : f32
    %79 = vector.broadcast %cst_57 : f32 to vector<8x128xf32>
    %c0_58 = arith.constant 0 : index
    %c1536_59 = arith.constant 1536 : index
    %80 = vector.load %arg7[%c0_58, %c1536_59] : memref<8x1664xf32, #tpu.memory_space<vmem>>, vector<8x128xf32>
    tpu.vector_store %arg7[%c0_58, %c1536_59], %79 {strides = array<i32>} : memref<8x1664xf32, #tpu.memory_space<vmem>>, vector<8x128xf32>,
    %c0_60 = arith.constant 0 : index
    %c128_61 = arith.constant 128 : index
    %81 = vector.load %arg7[%c0_60, %c128_61] : memref<8x1664xf32, #tpu.memory_space<vmem>>, vector<8x1408xf32>
    tpu.vector_store %arg7[%c0_60, %c128_61], %76 {strides = array<i32>} : memref<8x1664xf32, #tpu.memory_space<vmem>>, vector<8x1408xf32>,
    %82 = vector.broadcast %4 : vector<8x1xf32> to vector<8x1408xf32>
    %83 = arith.addf %67, %82 : vector<8x1408xf32>
    %c16_62 = arith.constant 16 : index
    %c0_63 = arith.constant 0 : index
    %84 = vector.load %arg4[%c16_62, %c0_63] : memref<24x72xbf16, #tpu.memory_space<vmem>>, vector<8x8xbf16>
    %c0_64 = arith.constant 0 : index
    %c95_65 = arith.constant 95 : index
    %85 = vector.load %arg7[%c0_64, %c95_65] : memref<8x1664xf32, #tpu.memory_space<vmem>>, vector<8x1408xf32>
    %86 = arith.truncf %85 : vector<8x1408xf32> to vector<8x1408xbf16>
    %cst_66 = arith.constant dense<0.000000e+00> : vector<8x1408xf32>
    %87 = tpu.matmul %84, %86, %cst_66 {dimension_numbers = #tpu.dot_dimension_numbers<[1], [0], [0], [1], [0, 0, 1, 1], [], []>} : vector<8x8xbf16>, vector<8x1408xbf16>, vector<8x1408xf32> -> vector<8x1408xf32>
    %88 = arith.addf %83, %87 : vector<8x1408xf32>
    %c16_67 = arith.constant 16 : index
    %c8_68 = arith.constant 8 : index
    %89 = vector.load %arg4[%c16_67, %c8_68] : memref<24x72xbf16, #tpu.memory_space<vmem>>, vector<8x8xbf16>
    %c0_69 = arith.constant 0 : index
    %c96_70 = arith.constant 96 : index
    %90 = vector.load %arg7[%c0_69, %c96_70] : memref<8x1664xf32, #tpu.memory_space<vmem>>, vector<8x1408xf32>
    %91 = arith.truncf %90 : vector<8x1408xf32> to vector<8x1408xbf16>
    %cst_71 = arith.constant dense<0.000000e+00> : vector<8x1408xf32>
    %92 = tpu.matmul %89, %91, %cst_71 {dimension_numbers = #tpu.dot_dimension_numbers<[1], [0], [0], [1], [0, 0, 1, 1], [], []>} : vector<8x8xbf16>, vector<8x1408xbf16>, vector<8x1408xf32> -> vector<8x1408xf32>
    %93 = arith.addf %88, %92 : vector<8x1408xf32>
    %c16_72 = arith.constant 16 : index
    %c16_73 = arith.constant 16 : index
    %94 = vector.load %arg4[%c16_72, %c16_73] : memref<24x72xbf16, #tpu.memory_space<vmem>>, vector<8x8xbf16>
    %c0_74 = arith.constant 0 : index
    %c97_75 = arith.constant 97 : index
    %95 = vector.load %arg7[%c0_74, %c97_75] : memref<8x1664xf32, #tpu.memory_space<vmem>>, vector<8x1408xf32>
    %96 = arith.truncf %95 : vector<8x1408xf32> to vector<8x1408xbf16>
    %cst_76 = arith.constant dense<0.000000e+00> : vector<8x1408xf32>
    %97 = tpu.matmul %94, %96, %cst_76 {dimension_numbers = #tpu.dot_dimension_numbers<[1], [0], [0], [1], [0, 0, 1, 1], [], []>} : vector<8x8xbf16>, vector<8x1408xbf16>, vector<8x1408xf32> -> vector<8x1408xf32>
    %98 = arith.addf %93, %97 : vector<8x1408xf32>
    %c16_77 = arith.constant 16 : index
    %c24_78 = arith.constant 24 : index
    %99 = vector.load %arg4[%c16_77, %c24_78] : memref<24x72xbf16, #tpu.memory_space<vmem>>, vector<8x8xbf16>
    %c0_79 = arith.constant 0 : index
    %c127_80 = arith.constant 127 : index
    %100 = vector.load %arg7[%c0_79, %c127_80] : memref<8x1664xf32, #tpu.memory_space<vmem>>, vector<8x1408xf32>
    %101 = arith.truncf %100 : vector<8x1408xf32> to vector<8x1408xbf16>
    %cst_81 = arith.constant dense<0.000000e+00> : vector<8x1408xf32>
    %102 = tpu.matmul %99, %101, %cst_81 {dimension_numbers = #tpu.dot_dimension_numbers<[1], [0], [0], [1], [0, 0, 1, 1], [], []>} : vector<8x8xbf16>, vector<8x1408xbf16>, vector<8x1408xf32> -> vector<8x1408xf32>
    %103 = arith.addf %98, %102 : vector<8x1408xf32>
    %c16_82 = arith.constant 16 : index
    %c32_83 = arith.constant 32 : index
    %104 = vector.load %arg4[%c16_82, %c32_83] : memref<24x72xbf16, #tpu.memory_space<vmem>>, vector<8x8xbf16>
    %c0_84 = arith.constant 0 : index
    %c128_85 = arith.constant 128 : index
    %105 = vector.load %arg7[%c0_84, %c128_85] : memref<8x1664xf32, #tpu.memory_space<vmem>>, vector<8x1408xf32>
    %106 = arith.truncf %105 : vector<8x1408xf32> to vector<8x1408xbf16>
    %cst_86 = arith.constant dense<0.000000e+00> : vector<8x1408xf32>
    %107 = tpu.matmul %104, %106, %cst_86 {dimension_numbers = #tpu.dot_dimension_numbers<[1], [0], [0], [1], [0, 0, 1, 1], [], []>} : vector<8x8xbf16>, vector<8x1408xbf16>, vector<8x1408xf32> -> vector<8x1408xf32>
    %108 = arith.addf %103, %107 : vector<8x1408xf32>
    %c16_87 = arith.constant 16 : index
    %c40 = arith.constant 40 : index
    %109 = vector.load %arg4[%c16_87, %c40] : memref<24x72xbf16, #tpu.memory_space<vmem>>, vector<8x8xbf16>
    %c0_88 = arith.constant 0 : index
    %c129_89 = arith.constant 129 : index
    %110 = vector.load %arg7[%c0_88, %c129_89] : memref<8x1664xf32, #tpu.memory_space<vmem>>, vector<8x1408xf32>
    %111 = arith.truncf %110 : vector<8x1408xf32> to vector<8x1408xbf16>
    %cst_90 = arith.constant dense<0.000000e+00> : vector<8x1408xf32>
    %112 = tpu.matmul %109, %111, %cst_90 {dimension_numbers = #tpu.dot_dimension_numbers<[1], [0], [0], [1], [0, 0, 1, 1], [], []>} : vector<8x8xbf16>, vector<8x1408xbf16>, vector<8x1408xf32> -> vector<8x1408xf32>
    %113 = arith.addf %108, %112 : vector<8x1408xf32>
    %c16_91 = arith.constant 16 : index
    %c48 = arith.constant 48 : index
    %114 = vector.load %arg4[%c16_91, %c48] : memref<24x72xbf16, #tpu.memory_space<vmem>>, vector<8x8xbf16>
    %c0_92 = arith.constant 0 : index
    %c159_93 = arith.constant 159 : index
    %115 = vector.load %arg7[%c0_92, %c159_93] : memref<8x1664xf32, #tpu.memory_space<vmem>>, vector<8x1408xf32>
    %116 = arith.truncf %115 : vector<8x1408xf32> to vector<8x1408xbf16>
    %cst_94 = arith.constant dense<0.000000e+00> : vector<8x1408xf32>
    %117 = tpu.matmul %114, %116, %cst_94 {dimension_numbers = #tpu.dot_dimension_numbers<[1], [0], [0], [1], [0, 0, 1, 1], [], []>} : vector<8x8xbf16>, vector<8x1408xbf16>, vector<8x1408xf32> -> vector<8x1408xf32>
    %118 = arith.addf %113, %117 : vector<8x1408xf32>
    %c16_95 = arith.constant 16 : index
    %c56 = arith.constant 56 : index
    %119 = vector.load %arg4[%c16_95, %c56] : memref<24x72xbf16, #tpu.memory_space<vmem>>, vector<8x8xbf16>
    %c0_96 = arith.constant 0 : index
    %c160_97 = arith.constant 160 : index
    %120 = vector.load %arg7[%c0_96, %c160_97] : memref<8x1664xf32, #tpu.memory_space<vmem>>, vector<8x1408xf32>
    %121 = arith.truncf %120 : vector<8x1408xf32> to vector<8x1408xbf16>
    %cst_98 = arith.constant dense<0.000000e+00> : vector<8x1408xf32>
    %122 = tpu.matmul %119, %121, %cst_98 {dimension_numbers = #tpu.dot_dimension_numbers<[1], [0], [0], [1], [0, 0, 1, 1], [], []>} : vector<8x8xbf16>, vector<8x1408xbf16>, vector<8x1408xf32> -> vector<8x1408xf32>
    %123 = arith.addf %118, %122 : vector<8x1408xf32>
    %c16_99 = arith.constant 16 : index
    %c64 = arith.constant 64 : index
    %124 = vector.load %arg4[%c16_99, %c64] : memref<24x72xbf16, #tpu.memory_space<vmem>>, vector<8x8xbf16>
    %c0_100 = arith.constant 0 : index
    %c161_101 = arith.constant 161 : index
    %125 = vector.load %arg7[%c0_100, %c161_101] : memref<8x1664xf32, #tpu.memory_space<vmem>>, vector<8x1408xf32>
    %126 = arith.truncf %125 : vector<8x1408xf32> to vector<8x1408xbf16>
    %cst_102 = arith.constant dense<0.000000e+00> : vector<8x1408xf32>
    %127 = tpu.matmul %124, %126, %cst_102 {dimension_numbers = #tpu.dot_dimension_numbers<[1], [0], [0], [1], [0, 0, 1, 1], [], []>} : vector<8x8xbf16>, vector<8x1408xbf16>, vector<8x1408xf32> -> vector<8x1408xf32>
    %128 = arith.addf %123, %127 : vector<8x1408xf32>
    %c0_103 = arith.constant 0 : index
    %c0_104 = arith.constant 0 : index
    %129 = vector.load %arg5[%c0_103, %c0_104] : memref<8x1408xf32, #tpu.memory_space<vmem>>, vector<8x1408xf32>
    tpu.vector_store %arg5[%c0_103, %c0_104], %128 {strides = array<i32>} : memref<8x1408xf32, #tpu.memory_space<vmem>>, vector<8x1408xf32>,
    return
  }
  func.func @transform_0(%arg0: i32) -> (i32, i32) {
    %c0_i32 = arith.constant 0 : i32
    %c0_i32_0 = arith.constant 0 : i32
    %c0_i32_1 = arith.constant 0 : i32
    return %c0_i32, %c0_i32_0 : i32, i32
  }
  func.func @transform_1(%arg0: i32) -> (i32, i32) {
    %c0_i32 = arith.constant 0 : i32
    %c0_i32_0 = arith.constant 0 : i32
    %c0_i32_1 = arith.constant 0 : i32
    return %c0_i32, %c0_i32_0 : i32, i32
  }
  func.func @transform_2(%arg0: i32) -> (i32, i32) {
    %c0_i32 = arith.constant 0 : i32
    %c0_i32_0 = arith.constant 0 : i32
    %c0_i32_1 = arith.constant 0 : i32
    return %c0_i32, %c0_i32_0 : i32, i32
  }
  func.func @transform_3(%arg0: i32) -> (i32, i32) {
    %c0_i32 = arith.constant 0 : i32
    %c0_i32_0 = arith.constant 0 : i32
    %c0_i32_1 = arith.constant 0 : i32
    return %c0_i32, %c0_i32_0 : i32, i32
  }
  func.func @transform_4(%arg0: i32) -> (i32, i32) {
    %c0_i32 = arith.constant 0 : i32
    %c0_i32_0 = arith.constant 0 : i32
    %c0_i32_1 = arith.constant 0 : i32
    return %c0_i32, %c0_i32_0 : i32, i32
  }
}

</mosaic_0001>

<llo_original>
// kernel: squeeze.2
$region0: #{squeeze.2}
  %s0 = inlined_call_operand.vmem [shape: f32[1,4,20,32], index: 0, kind: input, shape index: {}]
  %s1 = inlined_call_operand.vmem [shape: f32[4,640], index: 1, kind: output, shape index: {}]
  $region1: #{squeeze.2} parent=0
    #allocation0 [shape = 'u8[20480]{0}', space=vmem, size = 0x5000, scoped, tag = 'scoped mem for output reshape']
    %v2 = vld [vmem:[%s0] ss:$4 sm:$0x1f]
    %vm3 = vcmask 261120
    %4 = vst.msk [vmem:[#allocation0] ss:$8 sm:$0xf] %vm3, %v2
    %s5 = scalar_lea.vmem [#allocation0], 28
    %6 = vst.msk [vmem:[%s5] sm:$0x10] %vm3, %v2
    %s7 = scalar_lea.vmem %s0, 24
    %v8 = vld [vmem:[%s7] ss:$4 sm:$0x1f]
    %vm9 = vcmask 261120
    %s10 = scalar_lea.vmem [#allocation0], 1
    %11 = vst.msk [vmem:[%s10] ss:$8 sm:$0xf] %vm9, %v8
    %s12 = scalar_lea.vmem [#allocation0], 29
    %13 = vst.msk [vmem:[%s12] sm:$0x10] %vm9, %v8
    %s14 = scalar_lea.vmem %s0, 48
    %v15 = vld [vmem:[%s14] ss:$4 sm:$0x1f]
    %vm16 = vcmask 261120
    %s17 = scalar_lea.vmem [#allocation0], 2
    %18 = vst.msk [vmem:[%s17] ss:$8 sm:$0xf] %vm16, %v15
    %s19 = scalar_lea.vmem [#allocation0], 30
    %20 = vst.msk [vmem:[%s19] sm:$0x10] %vm16, %v15
    %s21 = scalar_lea.vmem %s0, 72
    %v22 = vld [vmem:[%s21] ss:$4 sm:$0x1f]
    %vm23 = vcmask 261120
    %s24 = scalar_lea.vmem [#allocation0], 3
    %25 = vst.msk [vmem:[%s24] ss:$8 sm:$0xf] %vm23, %v22
    %s26 = scalar_lea.vmem [#allocation0], 31
    %27 = vst.msk [vmem:[%s26] sm:$0x10] %vm23, %v22
    %s28 = scalar_lea.vmem %s0, 3
    %v29 = vld [vmem:[%s28] ss:$24 sm:$0xf]
    %s30 = scalar_lea.vmem %s0, 4294967207
    %v31 = vld [vmem:[%s30] ss:$24 sm:$0xf0]
    %vm32 = vcmask 1047556
    %v33 = vsel %vm32, %v31, %v29
    %34 = vrot.lane.b32.xlu0 %v33, 96
    %v35 = vpop.permute.xlu0 %34
    %vm36 = vcmask 1048320
    %37 = vst.msk [vmem:[#allocation0] sm:$0xf] %vm36, %v35
    %s38 = scalar_lea.vmem [#allocation0], 4
    %39 = vst.msk [vmem:[%s38] sm:$0xf0] %vm36, %v35
    %s40 = scalar_lea.vmem %s0, 19
    %v41 = vld [vmem:[%s40] ss:$24 sm:$0xf]
    %s42 = scalar_lea.vmem %s0, 4294967211
    %v43 = vld [vmem:[%s42] ss:$24 sm:$0xf0]
    %vm44 = vcmask 1047556
    %v45 = vsel %vm44, %v43, %v41
    %46 = vrot.lane.b32.xlu0 %v45, 96
    %v47 = vpop.permute.xlu0 %46
    %vm48 = vcmask 1048320
    %s49 = scalar_lea.vmem [#allocation0], 32
    %50 = vst.msk [vmem:[%s49] sm:$0xf] %vm48, %v47
    %s51 = scalar_lea.vmem [#allocation0], 12
    %52 = vst.msk [vmem:[%s51] sm:$0xf0] %vm48, %v47
    %s53 = scalar_lea.vmem %s0, 15
    %v54 = vld [vmem:[%s53] ss:$24 sm:$0xf]
    %55 = vrot.lane.b32.xlu0 %v54, 96
    %v56 = vpop.permute.xlu0 %55
    %vm57 = vcmask 1048320
    %s58 = scalar_lea.vmem [#allocation0], 24
    %59 = vst.msk [vmem:[%s58] sm:$0xf] %vm57, %v56
    %s60 = scalar_lea.vmem %s0, 2
    %v61 = vld [vmem:[%s60] ss:$24 sm:$0xf]
    %s62 = scalar_lea.vmem %s0, 4294967206
    %v63 = vld [vmem:[%s62] ss:$24 sm:$0xf0]
    %vm64 = vcmask 1047556
    %v65 = vsel %vm64, %v63, %v61
    %66 = vrot.lane.b32.xlu0 %v65, 64
    %v67 = vpop.permute.xlu0 %66
    %vm68 = vcmask 785920
    %69 = vst.msk [vmem:[#allocation0] sm:$0xf] %vm68, %v67
    %s70 = scalar_lea.vmem [#allocation0], 4
    %71 = vst.msk [vmem:[%s70] sm:$0xf0] %vm68, %v67
    %s72 = scalar_lea.vmem %s0, 18
    %v73 = vld [vmem:[%s72] ss:$24 sm:$0xf]
    %s74 = scalar_lea.vmem %s0, 4294967210
    %v75 = vld [vmem:[%s74] ss:$24 sm:$0xf0]
    %vm76 = vcmask 1047556
    %v77 = vsel %vm76, %v75, %v73
    %78 = vrot.lane.b32.xlu0 %v77, 64
    %v79 = vpop.permute.xlu0 %78
    %vm80 = vcmask 785920
    %s81 = scalar_lea.vmem [#allocation0], 32
    %82 = vst.msk [vmem:[%s81] sm:$0xf] %vm80, %v79
    %s83 = scalar_lea.vmem [#allocation0], 12
    %84 = vst.msk [vmem:[%s83] sm:$0xf0] %vm80, %v79
    %s85 = scalar_lea.vmem %s0, 14
    %v86 = vld [vmem:[%s85] ss:$24 sm:$0xf]
    %87 = vrot.lane.b32.xlu0 %v86, 64
    %v88 = vpop.permute.xlu0 %87
    %vm89 = vcmask 785920
    %s90 = scalar_lea.vmem [#allocation0], 24
    %91 = vst.msk [vmem:[%s90] sm:$0xf] %vm89, %v88
    %s92 = scalar_lea.vmem %s0, 1
    %v93 = vld [vmem:[%s92] ss:$24 sm:$0xf]
    %s94 = scalar_lea.vmem %s0, 4294967205
    %v95 = vld [vmem:[%s94] ss:$24 sm:$0xf0]
    %vm96 = vcmask 1047556
    %v97 = vsel %vm96, %v95, %v93
    %98 = vrot.lane.b32.xlu0 %v97, 32
    %v99 = vpop.permute.xlu0 %98
    %vm100 = vcmask 523520
    %101 = vst.msk [vmem:[#allocation0] sm:$0xf] %vm100, %v99
    %s102 = scalar_lea.vmem [#allocation0], 4
    %103 = vst.msk [vmem:[%s102] sm:$0xf0] %vm100, %v99
    %s104 = scalar_lea.vmem %s0, 17
    %v105 = vld [vmem:[%s104] ss:$24 sm:$0xf]
    %s106 = scalar_lea.vmem %s0, 4294967209
    %v107 = vld [vmem:[%s106] ss:$24 sm:$0xf0]
    %vm108 = vcmask 1047556
    %v109 = vsel %vm108, %v107, %v105
    %110 = vrot.lane.b32.xlu0 %v109, 32
    %v111 = vpop.permute.xlu0 %110
    %vm112 = vcmask 523520
    %s113 = scalar_lea.vmem [#allocation0], 32
    %114 = vst.msk [vmem:[%s113] sm:$0xf] %vm112, %v111
    %s115 = scalar_lea.vmem [#allocation0], 12
    %116 = vst.msk [vmem:[%s115] sm:$0xf0] %vm112, %v111
    %s117 = scalar_lea.vmem %s0, 13
    %v118 = vld [vmem:[%s117] ss:$24 sm:$0xf]
    %119 = vrot.lane.b32.xlu0 %v118, 32
    %v120 = vpop.permute.xlu0 %119
    %vm121 = vcmask 523520
    %s122 = scalar_lea.vmem [#allocation0], 24
    %123 = vst.msk [vmem:[%s122] sm:$0xf] %vm121, %v120
    %s125 = sshllo.u32 0, 4
    %v127 = vld [vmem:[#allocation0] sm:%s125]
    %s128 = sshllo.u32 0, 4
    %129 = vst [vmem:[%s1] sm:%s128] %v127
    %s130 = scalar_lea.vmem [#allocation0], 8
    %v131 = vld [vmem:[%s130] sm:%s125]
    %s132 = sshllo.u32 0, 4
    %s133 = scalar_lea.vmem %s1, 4
    %134 = vst [vmem:[%s133] sm:%s132] %v131
    %s135 = scalar_lea.vmem [#allocation0], 16
    %v136 = vld [vmem:[%s135] sm:%s125]
    %s137 = sshllo.u32 0, 4
    %s138 = smul.addr 4, 2
    %s139 = scalar_lea.vmem %s1, %s138
    %140 = vst [vmem:[%s139] sm:%s137] %v136
    %s141 = scalar_lea.vmem [#allocation0], 24
    %v142 = vld [vmem:[%s141] sm:%s125]
    %s143 = sshllo.u32 0, 4
    %s144 = smul.addr 4, 3
    %s145 = scalar_lea.vmem %s1, %s144
    %146 = vst [vmem:[%s145] sm:%s143] %v142
    %s147 = scalar_lea.vmem [#allocation0], 32
    %v148 = vld [vmem:[%s147] sm:%s125]
    %s149 = sshllo.u32 0, 4
    %s150 = smul.addr 4, 4
    %s151 = scalar_lea.vmem %s1, %s150
    %152 = vst [vmem:[%s151] sm:%s149] %v148

// kernel: forward.1
$region0: #{forward.1}
  #allocation0 [shape = 'u32[]', space=smem, size = 0x4, offset = 0x4, fixed_abs, tag = 'smem constant byte address 0x4 - core index']
  #allocation1 [shape = 'u32[144,128]{1,0:T(1,128)}', space=vmem, size = 0x12000, scoped, tag = 'internal scratch']
  #allocation2 [shape = 'f32[4,1664]{1,0:T(4,128)}', space=vmem, size = 0x6800, scoped, tag = 'scratch operand']
  #allocation3 [shape = 'f32[8,1664]{1,0:T(8,128)}', space=vmem, size = 0xd000, scoped, tag = 'scratch operand']
  %s0 = inlined_call_operand.vmem [shape: f32[4,1664], index: 0, kind: input, shape index: {}]
  %s1 = inlined_call_operand.vmem [shape: f32[1,1408], index: 1, kind: input, shape index: {}]
  %s2 = inlined_call_operand.vmem [shape: f32[32,1], index: 2, kind: input, shape index: {}]
  %s3 = inlined_call_operand.vmem [shape: bf16[24,72], index: 3, kind: input, shape index: {}]
  %s4 = inlined_call_operand.vmem [shape: f32[8,1408], index: 4, kind: output, shape index: {}]
  %s5 = sld [smem:[#allocation0]]
  $region26: #{forward.1} parent=0
    _
  %s7 = ssub.s32 1, %s5
  %s8 = scalar_select 0, %s7, %s5
  // Predicated region
  $region2: #{forward.1} parent=0 // pred_check
    _
  $region3: #{forward.1} parent=0 // pred_check_branch
    %10 = sbr.rel (0) target = $region5
  $region4: #{forward.1} parent=0 // pred_region
    _
  $region5: #{forward.1} parent=0 // pred_fallthru
    _
  // Predicated region
  $region6: #{forward.1} parent=0 // pred_check
    _
  $region7: #{forward.1} parent=0 // pred_check_branch
    %12 = sbr.rel (0) target = $region9
  $region8: #{forward.1} parent=0 // pred_region
    _
  $region9: #{forward.1} parent=0 // pred_fallthru
    _
  // Predicated region
  $region10: #{forward.1} parent=0 // pred_check
    _
  $region11: #{forward.1} parent=0 // pred_check_branch
    %14 = sbr.rel (0) target = $region13
  $region12: #{forward.1} parent=0 // pred_region
    _
  $region13: #{forward.1} parent=0 // pred_fallthru
    _
  // Predicated region
  $region14: #{forward.1} parent=0 // pred_check
    _
  $region15: #{forward.1} parent=0 // pred_check_branch
    %16 = sbr.rel (0) target = $region17
  $region16: #{forward.1} parent=0 // pred_region
    _
  $region17: #{forward.1} parent=0 // pred_fallthru
    _
  %v18 = vld [vmem:[%s2] sm:$0xf]
  %v19 = vld [vmem:[%s2 + $0x4] sm:$0xf]
  %v20 = vld [vmem:[%s2 + $0x8] sm:$0xff]
  %v21 = vld [vmem:[%s2 + $0x10] sm:$0xff]
  %v22 = vld [vmem:[%s2 + $0x18] sm:$0xff]
  %v23 = vld [vmem:[%s1] sm:$0xff]
  %v24 = vld [vmem:[%s1 + $0x8] sm:$0x7]
  %25 = vst [vmem:[#allocation2] sm:$0xf] 0.0
  %26 = vst [vmem:[#allocation2 + $0x30] sm:$0xf] 0.0
  %v27 = vld [vmem:[%s0 + $0x4] sm:$0xff]
  %v28 = vld [vmem:[%s0 + $0xc] sm:$0xff]
  %v29 = vld [vmem:[%s0 + $0x14] sm:$0xff]
  %v30 = vld [vmem:[%s0 + $0x1c] sm:$0xff]
  %v31 = vld [vmem:[%s0 + $0x24] sm:$0xff]
  %v32 = vld [vmem:[%s0 + $0x2c] sm:$0xf]
  %34 = vset.pattern.permute.xlu0 0
  %35 = vperm.xlu0 %34, %v18
  %v36 = vpop.permute.xlu0 %35
  %v38 = vunpack.c.l.s4 839922192
  %v39 = vunpack.c.0.s8 %v38
  %v40 = vlaneseq
  %v41 = vshrl.u32 %v40, 7
  %v42 = vsub.s32 %v39, %v41
  %v43 = vrot.slane %v36, %v42
  %v45 = vmul.f32 %v27, %v43
  %v46 = vmul.f32 %v28, %v43
  %v47 = vmul.f32 %v29, %v43
  %v48 = vmul.f32 %v30, %v43
  %v49 = vmul.f32 %v31, %v43
  %v50 = vmul.f32 %v32, %v43
  %52 = vset.pattern.permute.xlu0 0
  %53 = vperm.xlu0 %52, %v19
  %v54 = vpop.permute.xlu0 %53
  %v56 = vunpack.c.l.s4 839922192
  %v57 = vunpack.c.0.s8 %v56
  %v58 = vlaneseq
  %v59 = vshrl.u32 %v58, 7
  %v60 = vsub.s32 %v57, %v59
  %v61 = vrot.slane %v54, %v60
  %v63 = vadd.f32 %v45, %v61
  %v64 = vadd.f32 %v46, %v61
  %v65 = vadd.f32 %v47, %v61
  %v66 = vadd.f32 %v48, %v61
  %v67 = vadd.f32 %v49, %v61
  %v68 = vadd.f32 %v50, %v61
  %v71 = vlaneseq
  %v72 = vshrl.u32 %v71, 7
  %v73 = vsub.s32 0, %v72
  %v74 = vrot.slane %v23, %v73
  %v75 = vlaneseq
  %v76 = vshrl.u32 %v75, 7
  %v77 = vsub.s32 1, %v76
  %v78 = vrot.slane %v23, %v77
  %v79 = vlaneseq
  %v80 = vshrl.u32 %v79, 7
  %v81 = vsub.s32 2, %v80
  %v82 = vrot.slane %v23, %v81
  %v83 = vlaneseq
  %v84 = vshrl.u32 %v83, 7
  %v85 = vsub.s32 3, %v84
  %v86 = vrot.slane %v23, %v85
  %v87 = vlaneseq
  %v88 = vshrl.u32 %v87, 7
  %v89 = vsub.s32 4, %v88
  %v90 = vrot.slane %v23, %v89
  %v91 = vlaneseq
  %v92 = vshrl.u32 %v91, 7
  %v93 = vsub.s32 5, %v92
  %v94 = vrot.slane %v23, %v93
  %v95 = vlaneseq
  %v96 = vshrl.u32 %v95, 7
  %v97 = vsub.s32 6, %v96
  %v98 = vrot.slane %v23, %v97
  %v99 = vlaneseq
  %v100 = vshrl.u32 %v99, 7
  %v101 = vsub.s32 7, %v100
  %v102 = vrot.slane %v23, %v101
  %v103 = vlaneseq
  %v104 = vshrl.u32 %v103, 7
  %v105 = vsub.s32 0, %v104
  %v106 = vrot.slane %v24, %v105
  %v107 = vlaneseq
  %v108 = vshrl.u32 %v107, 7
  %v109 = vsub.s32 1, %v108
  %v110 = vrot.slane %v24, %v109
  %v111 = vlaneseq
  %v112 = vshrl.u32 %v111, 7
  %v113 = vsub.s32 2, %v112
  %v114 = vrot.slane %v24, %v113
  %v116 = vcombine.low %v74, %v78
  %v117 = vcombine.low %v82, %v86
  %v118 = vcombine.low %v90, %v94
  %v119 = vcombine.low %v98, %v102
  %v120 = vcombine.low %v106, %v110
  %v126 = vmul.f32 %v63, %v116
  %v127 = vmul.f32 %v64, %v117
  %v128 = vmul.f32 %v65, %v118
  %v129 = vmul.f32 %v66, %v119
  %v130 = vmul.f32 %v67, %v120
  %v131 = vmul.f32 %v68, %v114
  %132 = vst [vmem:[#allocation2 + $0x4] sm:$0xff] %v126
  %133 = vst [vmem:[#allocation2 + $0xc] sm:$0xff] %v127
  %134 = vst [vmem:[#allocation2 + $0x14] sm:$0xff] %v128
  %135 = vst [vmem:[#allocation2 + $0x1c] sm:$0xff] %v129
  %136 = vst [vmem:[#allocation2 + $0x24] sm:$0xff] %v130
  %137 = vst [vmem:[#allocation2 + $0x2c] sm:$0xf] %v131
  %v138 = vld [vmem:[%s3] sm:$0xf]
  %v139 = vld [vmem:[#allocation2] sm:$0xff]
  %v140 = vld [vmem:[#allocation2 + $0x8] sm:$0xff]
  %v141 = vld [vmem:[#allocation2 + $0x10] sm:$0xff]
  %v142 = vld [vmem:[#allocation2 + $0x18] sm:$0xff]
  %v143 = vld [vmem:[#allocation2 + $0x20] sm:$0xff]
  %v144 = vld [vmem:[#allocation2 + $0x28] sm:$0xff]
  %v151 = vcombine.high %v139, %v139
  %v152 = vcombine.high %v140, %v140
  %v153 = vcombine.high %v141, %v141
  %v154 = vcombine.high %v142, %v142
  %v155 = vcombine.high %v143, %v143
  %v156 = vcombine.high %v144, %v144
  %v163 = vpack.c.bf16 %v139, %v139
  %v164 = vpack.c.bf16 %v151, %v151
  %v165 = vpack.c.bf16 %v140, %v140
  %v166 = vpack.c.bf16 %v152, %v152
  %v167 = vpack.c.bf16 %v141, %v141
  %v168 = vpack.c.bf16 %v153, %v153
  %v169 = vpack.c.bf16 %v142, %v142
  %v170 = vpack.c.bf16 %v154, %v154
  %v171 = vpack.c.bf16 %v143, %v143
  %v172 = vpack.c.bf16 %v155, %v155
  %v173 = vpack.c.bf16 %v144, %v144
  %v174 = vpack.c.bf16 %v156, %v156
  %v176 = vunpack.c.l.b16 %v138
  %v177 = vpack.c.b16 %v176, %v176
  %178 = vrot.lane.b32.xlu0 %v177, 124
  %v179 = vpop.permute.xlu0 %178
  %192 = vrot.lane.b32.xlu0 %v163, 32
  %v193 = vpop.permute.xlu0 %192
  %194 = vrot.lane.b32.xlu0 %v164, 32
  %v195 = vpop.permute.xlu0 %194
  %196 = vrot.lane.b32.xlu0 %v165, 32
  %v197 = vpop.permute.xlu0 %196
  %198 = vrot.lane.b32.xlu0 %v166, 32
  %v199 = vpop.permute.xlu0 %198
  %200 = vrot.lane.b32.xlu0 %v167, 32
  %v201 = vpop.permute.xlu0 %200
  %202 = vrot.lane.b32.xlu0 %v168, 32
  %v203 = vpop.permute.xlu0 %202
  %204 = vrot.lane.b32.xlu0 %v169, 32
  %v205 = vpop.permute.xlu0 %204
  %206 = vrot.lane.b32.xlu0 %v170, 32
  %v207 = vpop.permute.xlu0 %206
  %208 = vrot.lane.b32.xlu0 %v171, 32
  %v209 = vpop.permute.xlu0 %208
  %210 = vrot.lane.b32.xlu0 %v172, 32
  %v211 = vpop.permute.xlu0 %210
  %212 = vrot.lane.b32.xlu0 %v173, 32
  %v213 = vpop.permute.xlu0 %212
  %214 = vrot.lane.b32.xlu0 %v174, 32
  %v215 = vpop.permute.xlu0 %214
  %vm216 = vcmask 261120
  %v217 = vsel %vm216, %v193, %v195
  %v218 = vsel %vm216, %v195, %v197
  %v219 = vsel %vm216, %v197, %v199
  %v220 = vsel %vm216, %v199, %v201
  %v221 = vsel %vm216, %v201, %v203
  %v222 = vsel %vm216, %v203, %v205
  %v223 = vsel %vm216, %v205, %v207
  %v224 = vsel %vm216, %v207, %v209
  %v225 = vsel %vm216, %v209, %v211
  %v226 = vsel %vm216, %v211, %v213
  %v227 = vsel %vm216, %v213, %v215
  %vm228 = vcmask 31744
  %v230 = vsel %vm228, %v179, 0
  %vm232 = vcmask 1041408
  %v234 = vsel %vm232, %v217, 0
  %v237 = vsel %vm232, %v218, 0
  %v240 = vsel %vm232, %v219, 0
  %v243 = vsel %vm232, %v220, 0
  %v246 = vsel %vm232, %v221, 0
  %v249 = vsel %vm232, %v222, 0
  %v252 = vsel %vm232, %v223, 0
  %v255 = vsel %vm232, %v224, 0
  %v258 = vsel %vm232, %v225, 0
  %v261 = vsel %vm232, %v226, 0
  %v264 = vsel %vm232, %v227, 0
  %266 = vmatprep.subr.bf16.mxu0 %v237
  %267 = vmatpush1.bf16.msra.mxu0 %v234
  %268 = vmatprep.subr.bf16.mxu0 0
  %269 = vmatpush1.bf16.msra.mxu0 0
  %270 = vmatprep.subr.bf16.mxu0 0
  %271 = vmatpush1.bf16.msra.mxu0 0
  %272 = vmatprep.subr.bf16.mxu0 0
  %273 = vmatpush1.bf16.msra.mxu0 0
  %274 = vmatprep.subr.bf16.mxu0 0
  %275 = vmatpush1.bf16.msra.mxu0 0
  %276 = vmatprep.subr.bf16.mxu0 0
  %277 = vmatpush1.bf16.msra.mxu0 0
  %278 = vmatprep.subr.bf16.mxu0 0
  %279 = vmatpush1.bf16.msra.mxu0 0
  %280 = vmatprep.subr.bf16.mxu0 0
  %281 = vmatpush1.bf16.msra.mxu0 0
  %282 = vmatprep.subr.bf16.mxu0 0
  %283 = vmatpush1.bf16.msra.mxu0 0
  %284 = vmatprep.subr.bf16.mxu0 0
  %285 = vmatpush1.bf16.msra.mxu0 0
  %286 = vmatprep.subr.bf16.mxu0 0
  %287 = vmatpush1.bf16.msra.mxu0 0
  %288 = vmatprep.subr.bf16.mxu0 0
  %289 = vmatpush1.bf16.msra.mxu0 0
  %290 = vmatprep.subr.bf16.mxu0 0
  %291 = vmatpush1.bf16.msra.mxu0 0
  %292 = vmatprep.subr.bf16.mxu0 0
  %293 = vmatpush1.bf16.msra.mxu0 0
  %294 = vmatprep.subr.bf16.mxu0 0
  %295 = vmatpush1.bf16.msra.mxu0 0
  %296 = vmatprep.subr.bf16.mxu0 0
  %297 = vmatpush1.bf16.msra.mxu0 0
  %298 = vmatprep.mubr.bf16.mxu0 0
  %299 = vmatmul.mubr.bf16.gmra.mrb[0].mxu0 %v230
  %v300 = vpop.f32.mrb[0].mxu0
  %v301 = vadd.f32 0.0, %v300
  %v302 = vpop.f32.mrb[0].mxu0
  %v303 = vadd.f32 0.0, %v302
  %v304 = vpop.f32.mrb[0].mxu0
  %v305 = vpop.f32.mrb[0].mxu0
  %306 = vdwg.mxu0
  %307 = vmatprep.subr.bf16.mxu0 %v243
  %308 = vmatpush1.bf16.msra.mxu0 %v240
  %309 = vmatprep.subr.bf16.mxu0 0
  %310 = vmatpush1.bf16.msra.mxu0 0
  %311 = vmatprep.subr.bf16.mxu0 0
  %312 = vmatpush1.bf16.msra.mxu0 0
  %313 = vmatprep.subr.bf16.mxu0 0
  %314 = vmatpush1.bf16.msra.mxu0 0
  %315 = vmatprep.subr.bf16.mxu0 0
  %316 = vmatpush1.bf16.msra.mxu0 0
  %317 = vmatprep.subr.bf16.mxu0 0
  %318 = vmatpush1.bf16.msra.mxu0 0
  %319 = vmatprep.subr.bf16.mxu0 0
  %320 = vmatpush1.bf16.msra.mxu0 0
  %321 = vmatprep.subr.bf16.mxu0 0
  %322 = vmatpush1.bf16.msra.mxu0 0
  %323 = vmatprep.subr.bf16.mxu0 0
  %324 = vmatpush1.bf16.msra.mxu0 0
  %325 = vmatprep.subr.bf16.mxu0 0
  %326 = vmatpush1.bf16.msra.mxu0 0
  %327 = vmatprep.subr.bf16.mxu0 0
  %328 = vmatpush1.bf16.msra.mxu0 0
  %329 = vmatprep.subr.bf16.mxu0 0
  %330 = vmatpush1.bf16.msra.mxu0 0
  %331 = vmatprep.subr.bf16.mxu0 0
  %332 = vmatpush1.bf16.msra.mxu0 0
  %333 = vmatprep.subr.bf16.mxu0 0
  %334 = vmatpush1.bf16.msra.mxu0 0
  %335 = vmatprep.subr.bf16.mxu0 0
  %336 = vmatpush1.bf16.msra.mxu0 0
  %337 = vmatprep.subr.bf16.mxu0 0
  %338 = vmatpush1.bf16.msra.mxu0 0
  %339 = vmatprep.mubr.bf16.mxu0 0
  %340 = vmatmul.mubr.bf16.gmra.mrb[0].mxu0 %v230
  %v341 = vpop.f32.mrb[0].mxu0
  %v342 = vadd.f32 0.0, %v341
  %v343 = vpop.f32.mrb[0].mxu0
  %v344 = vadd.f32 0.0, %v343
  %v345 = vpop.f32.mrb[0].mxu0
  %v346 = vpop.f32.mrb[0].mxu0
  %347 = vdwg.mxu0
  %348 = vmatprep.subr.bf16.mxu0 %v249
  %349 = vmatpush1.bf16.msra.mxu0 %v246
  %350 = vmatprep.subr.bf16.mxu0 0
  %351 = vmatpush1.bf16.msra.mxu0 0
  %352 = vmatprep.subr.bf16.mxu0 0
  %353 = vmatpush1.bf16.msra.mxu0 0
  %354 = vmatprep.subr.bf16.mxu0 0
  %355 = vmatpush1.bf16.msra.mxu0 0
  %356 = vmatprep.subr.bf16.mxu0 0
  %357 = vmatpush1.bf16.msra.mxu0 0
  %358 = vmatprep.subr.bf16.mxu0 0
  %359 = vmatpush1.bf16.msra.mxu0 0
  %360 = vmatprep.subr.bf16.mxu0 0
  %361 = vmatpush1.bf16.msra.mxu0 0
  %362 = vmatprep.subr.bf16.mxu0 0
  %363 = vmatpush1.bf16.msra.mxu0 0
  %364 = vmatprep.subr.bf16.mxu0 0
  %365 = vmatpush1.bf16.msra.mxu0 0
  %366 = vmatprep.subr.bf16.mxu0 0
  %367 = vmatpush1.bf16.msra.mxu0 0
  %368 = vmatprep.subr.bf16.mxu0 0
  %369 = vmatpush1.bf16.msra.mxu0 0
  %370 = vmatprep.subr.bf16.mxu0 0
  %371 = vmatpush1.bf16.msra.mxu0 0
  %372 = vmatprep.subr.bf16.mxu0 0
  %373 = vmatpush1.bf16.msra.mxu0 0
  %374 = vmatprep.subr.bf16.mxu0 0
  %375 = vmatpush1.bf16.msra.mxu0 0
  %376 = vmatprep.subr.bf16.mxu0 0
  %377 = vmatpush1.bf16.msra.mxu0 0
  %378 = vmatprep.subr.bf16.mxu0 0
  %379 = vmatpush1.bf16.msra.mxu0 0
  %380 = vmatprep.mubr.bf16.mxu0 0
  %381 = vmatmul.mubr.bf16.gmra.mrb[0].mxu0 %v230
  %v382 = vpop.f32.mrb[0].mxu0
  %v383 = vadd.f32 0.0, %v382
  %v384 = vpop.f32.mrb[0].mxu0
  %v385 = vadd.f32 0.0, %v384
  %v386 = vpop.f32.mrb[0].mxu0
  %v387 = vpop.f32.mrb[0].mxu0
  %388 = vdwg.mxu0
  %389 = vmatprep.subr.bf16.mxu0 %v255
  %390 = vmatpush1.bf16.msra.mxu0 %v252
  %391 = vmatprep.subr.bf16.mxu0 0
  %392 = vmatpush1.bf16.msra.mxu0 0
  %393 = vmatprep.subr.bf16.mxu0 0
  %394 = vmatpush1.bf16.msra.mxu0 0
  %395 = vmatprep.subr.bf16.mxu0 0
  %396 = vmatpush1.bf16.msra.mxu0 0
  %397 = vmatprep.subr.bf16.mxu0 0
  %398 = vmatpush1.bf16.msra.mxu0 0
  %399 = vmatprep.subr.bf16.mxu0 0
  %400 = vmatpush1.bf16.msra.mxu0 0
  %401 = vmatprep.subr.bf16.mxu0 0
  %402 = vmatpush1.bf16.msra.mxu0 0
  %403 = vmatprep.subr.bf16.mxu0 0
  %404 = vmatpush1.bf16.msra.mxu0 0
  %405 = vmatprep.subr.bf16.mxu0 0
  %406 = vmatpush1.bf16.msra.mxu0 0
  %407 = vmatprep.subr.bf16.mxu0 0
  %408 = vmatpush1.bf16.msra.mxu0 0
  %409 = vmatprep.subr.bf16.mxu0 0
  %410 = vmatpush1.bf16.msra.mxu0 0
  %411 = vmatprep.subr.bf16.mxu0 0
  %412 = vmatpush1.bf16.msra.mxu0 0
  %413 = vmatprep.subr.bf16.mxu0 0
  %414 = vmatpush1.bf16.msra.mxu0 0
  %415 = vmatprep.subr.bf16.mxu0 0
  %416 = vmatpush1.bf16.msra.mxu0 0
  %417 = vmatprep.subr.bf16.mxu0 0
  %418 = vmatpush1.bf16.msra.mxu0 0
  %419 = vmatprep.subr.bf16.mxu0 0
  %420 = vmatpush1.bf16.msra.mxu0 0
  %421 = vmatprep.mubr.bf16.mxu0 0
  %422 = vmatmul.mubr.bf16.gmra.mrb[0].mxu0 %v230
  %v423 = vpop.f32.mrb[0].mxu0
  %v424 = vadd.f32 0.0, %v423
  %v425 = vpop.f32.mrb[0].mxu0
  %v426 = vadd.f32 0.0, %v425
  %v427 = vpop.f32.mrb[0].mxu0
  %v428 = vpop.f32.mrb[0].mxu0
  %429 = vdwg.mxu0
  %430 = vmatprep.subr.bf16.mxu0 %v261
  %431 = vmatpush1.bf16.msra.mxu0 %v258
  %432 = vmatprep.subr.bf16.mxu0 0
  %433 = vmatpush1.bf16.msra.mxu0 0
  %434 = vmatprep.subr.bf16.mxu0 0
  %435 = vmatpush1.bf16.msra.mxu0 0
  %436 = vmatprep.subr.bf16.mxu0 0
  %437 = vmatpush1.bf16.msra.mxu0 0
  %438 = vmatprep.subr.bf16.mxu0 0
  %439 = vmatpush1.bf16.msra.mxu0 0
  %440 = vmatprep.subr.bf16.mxu0 0
  %441 = vmatpush1.bf16.msra.mxu0 0
  %442 = vmatprep.subr.bf16.mxu0 0
  %443 = vmatpush1.bf16.msra.mxu0 0
  %444 = vmatprep.subr.bf16.mxu0 0
  %445 = vmatpush1.bf16.msra.mxu0 0
  %446 = vmatprep.subr.bf16.mxu0 0
  %447 = vmatpush1.bf16.msra.mxu0 0
  %448 = vmatprep.subr.bf16.mxu0 0
  %449 = vmatpush1.bf16.msra.mxu0 0
  %450 = vmatprep.subr.bf16.mxu0 0
  %451 = vmatpush1.bf16.msra.mxu0 0
  %452 = vmatprep.subr.bf16.mxu0 0
  %453 = vmatpush1.bf16.msra.mxu0 0
  %454 = vmatprep.subr.bf16.mxu0 0
  %455 = vmatpush1.bf16.msra.mxu0 0
  %456 = vmatprep.subr.bf16.mxu0 0
  %457 = vmatpush1.bf16.msra.mxu0 0
  %458 = vmatprep.subr.bf16.mxu0 0
  %459 = vmatpush1.bf16.msra.mxu0 0
  %460 = vmatprep.subr.bf16.mxu0 0
  %461 = vmatpush1.bf16.msra.mxu0 0
  %462 = vmatprep.mubr.bf16.mxu0 0
  %463 = vmatmul.mubr.bf16.gmra.mrb[0].mxu0 %v230
  %v464 = vpop.f32.mrb[0].mxu0
  %v465 = vadd.f32 0.0, %v464
  %v466 = vpop.f32.mrb[0].mxu0
  %v467 = vadd.f32 0.0, %v466
  %v468 = vpop.f32.mrb[0].mxu0
  %v469 = vpop.f32.mrb[0].mxu0
  %470 = vdwg.mxu0
  %471 = vmatprep.subr.bf16.mxu0 0
  %472 = vmatpush1.bf16.msra.mxu0 %v264
  %473 = vmatprep.subr.bf16.mxu0 0
  %474 = vmatpush1.bf16.msra.mxu0 0
  %475 = vmatprep.subr.bf16.mxu0 0
  %476 = vmatpush1.bf16.msra.mxu0 0
  %477 = vmatprep.subr.bf16.mxu0 0
  %478 = vmatpush1.bf16.msra.mxu0 0
  %479 = vmatprep.subr.bf16.mxu0 0
  %480 = vmatpush1.bf16.msra.mxu0 0
  %481 = vmatprep.subr.bf16.mxu0 0
  %482 = vmatpush1.bf16.msra.mxu0 0
  %483 = vmatprep.subr.bf16.mxu0 0
  %484 = vmatpush1.bf16.msra.mxu0 0
  %485 = vmatprep.subr.bf16.mxu0 0
  %486 = vmatpush1.bf16.msra.mxu0 0
  %487 = vmatprep.subr.bf16.mxu0 0
  %488 = vmatpush1.bf16.msra.mxu0 0
  %489 = vmatprep.subr.bf16.mxu0 0
  %490 = vmatpush1.bf16.msra.mxu0 0
  %491 = vmatprep.subr.bf16.mxu0 0
  %492 = vmatpush1.bf16.msra.mxu0 0
  %493 = vmatprep.subr.bf16.mxu0 0
  %494 = vmatpush1.bf16.msra.mxu0 0
  %495 = vmatprep.subr.bf16.mxu0 0
  %496 = vmatpush1.bf16.msra.mxu0 0
  %497 = vmatprep.subr.bf16.mxu0 0
  %498 = vmatpush1.bf16.msra.mxu0 0
  %499 = vmatprep.subr.bf16.mxu0 0
  %500 = vmatpush1.bf16.msra.mxu0 0
  %501 = vmatprep.subr.bf16.mxu0 0
  %502 = vmatpush1.bf16.msra.mxu0 0
  %503 = vmatprep.mubr.bf16.mxu0 0
  %504 = vmatmul.mubr.bf16.gmra.mrb[0].mxu0 %v230
  %v505 = vpop.f32.mrb[0].mxu0
  %v506 = vadd.f32 0.0, %v505
  %v507 = vpop.f32.mrb[0].mxu0
  %v508 = vpop.f32.mrb[0].mxu0
  %v509 = vpop.f32.mrb[0].mxu0
  %510 = vdwg.mxu0
  %511 = vrot.lane.b32.xlu0 %v163, 33
  %v512 = vpop.permute.xlu0 %511
  %513 = vrot.lane.b32.xlu0 %v164, 33
  %v514 = vpop.permute.xlu0 %513
  %515 = vrot.lane.b32.xlu0 %v165, 33
  %v516 = vpop.permute.xlu0 %515
  %517 = vrot.lane.b32.xlu0 %v166, 33
  %v518 = vpop.permute.xlu0 %517
  %519 = vrot.lane.b32.xlu0 %v167, 33
  %v520 = vpop.permute.xlu0 %519
  %521 = vrot.lane.b32.xlu0 %v168, 33
  %v522 = vpop.permute.xlu0 %521
  %523 = vrot.lane.b32.xlu0 %v169, 33
  %v524 = vpop.permute.xlu0 %523
  %525 = vrot.lane.b32.xlu0 %v170, 33
  %v526 = vpop.permute.xlu0 %525
  %527 = vrot.lane.b32.xlu0 %v171, 33
  %v528 = vpop.permute.xlu0 %527
  %529 = vrot.lane.b32.xlu0 %v172, 33
  %v530 = vpop.permute.xlu0 %529
  %531 = vrot.lane.b32.xlu0 %v173, 33
  %v532 = vpop.permute.xlu0 %531
  %533 = vrot.lane.b32.xlu0 %v174, 33
  %v534 = vpop.permute.xlu0 %533
  %vm535 = vcmask 269312
  %v536 = vsel %vm535, %v512, %v514
  %v537 = vsel %vm535, %v514, %v516
  %v538 = vsel %vm535, %v516, %v518
  %v539 = vsel %vm535, %v518, %v520
  %v540 = vsel %vm535, %v520, %v522
  %v541 = vsel %vm535, %v522, %v524
  %v542 = vsel %vm535, %v524, %v526
  %v543 = vsel %vm535, %v526, %v528
  %v544 = vsel %vm535, %v528, %v530
  %v545 = vsel %vm535, %v530, %v532
  %v546 = vsel %vm535, %v532, %v534
  %v548 = vsel %vm228, %v138, 0
  %v551 = vsel %vm232, %v536, 0
  %v554 = vsel %vm232, %v537, 0
  %v557 = vsel %vm232, %v538, 0
  %v560 = vsel %vm232, %v539, 0
  %v563 = vsel %vm232, %v540, 0
  %v566 = vsel %vm232, %v541, 0
  %v569 = vsel %vm232, %v542, 0
  %v572 = vsel %vm232, %v543, 0
  %v575 = vsel %vm232, %v544, 0
  %v578 = vsel %vm232, %v545, 0
  %v581 = vsel %vm232, %v546, 0
  %583 = vmatprep.subr.bf16.mxu0 %v554
  %584 = vmatpush1.bf16.msra.mxu0 %v551
  %585 = vmatprep.subr.bf16.mxu0 0
  %586 = vmatpush1.bf16.msra.mxu0 0
  %587 = vmatprep.subr.bf16.mxu0 0
  %588 = vmatpush1.bf16.msra.mxu0 0
  %589 = vmatprep.subr.bf16.mxu0 0
  %590 = vmatpush1.bf16.msra.mxu0 0
  %591 = vmatprep.subr.bf16.mxu0 0
  %592 = vmatpush1.bf16.msra.mxu0 0
  %593 = vmatprep.subr.bf16.mxu0 0
  %594 = vmatpush1.bf16.msra.mxu0 0
  %595 = vmatprep.subr.bf16.mxu0 0
  %596 = vmatpush1.bf16.msra.mxu0 0
  %597 = vmatprep.subr.bf16.mxu0 0
  %598 = vmatpush1.bf16.msra.mxu0 0
  %599 = vmatprep.subr.bf16.mxu0 0
  %600 = vmatpush1.bf16.msra.mxu0 0
  %601 = vmatprep.subr.bf16.mxu0 0
  %602 = vmatpush1.bf16.msra.mxu0 0
  %603 = vmatprep.subr.bf16.mxu0 0
  %604 = vmatpush1.bf16.msra.mxu0 0
  %605 = vmatprep.subr.bf16.mxu0 0
  %606 = vmatpush1.bf16.msra.mxu0 0
  %607 = vmatprep.subr.bf16.mxu0 0
  %608 = vmatpush1.bf16.msra.mxu0 0
  %609 = vmatprep.subr.bf16.mxu0 0
  %610 = vmatpush1.bf16.msra.mxu0 0
  %611 = vmatprep.subr.bf16.mxu0 0
  %612 = vmatpush1.bf16.msra.mxu0 0
  %613 = vmatprep.subr.bf16.mxu0 0
  %614 = vmatpush1.bf16.msra.mxu0 0
  %615 = vmatprep.mubr.bf16.mxu0 0
  %616 = vmatmul.mubr.bf16.gmra.mrb[0].mxu0 %v548
  %v617 = vpop.f32.mrb[0].mxu0
  %v618 = vadd.f32 %v301, %v617
  %v619 = vpop.f32.mrb[0].mxu0
  %v620 = vadd.f32 %v303, %v619
  %v621 = vpop.f32.mrb[0].mxu0
  %v622 = vpop.f32.mrb[0].mxu0
  %623 = vdwg.mxu0
  %624 = vmatprep.subr.bf16.mxu0 %v560
  %625 = vmatpush1.bf16.msra.mxu0 %v557
  %626 = vmatprep.subr.bf16.mxu0 0
  %627 = vmatpush1.bf16.msra.mxu0 0
  %628 = vmatprep.subr.bf16.mxu0 0
  %629 = vmatpush1.bf16.msra.mxu0 0
  %630 = vmatprep.subr.bf16.mxu0 0
  %631 = vmatpush1.bf16.msra.mxu0 0
  %632 = vmatprep.subr.bf16.mxu0 0
  %633 = vmatpush1.bf16.msra.mxu0 0
  %634 = vmatprep.subr.bf16.mxu0 0
  %635 = vmatpush1.bf16.msra.mxu0 0
  %636 = vmatprep.subr.bf16.mxu0 0
  %637 = vmatpush1.bf16.msra.mxu0 0
  %638 = vmatprep.subr.bf16.mxu0 0
  %639 = vmatpush1.bf16.msra.mxu0 0
  %640 = vmatprep.subr.bf16.mxu0 0
  %641 = vmatpush1.bf16.msra.mxu0 0
  %642 = vmatprep.subr.bf16.mxu0 0
  %643 = vmatpush1.bf16.msra.mxu0 0
  %644 = vmatprep.subr.bf16.mxu0 0
  %645 = vmatpush1.bf16.msra.mxu0 0
  %646 = vmatprep.subr.bf16.mxu0 0
  %647 = vmatpush1.bf16.msra.mxu0 0
  %648 = vmatprep.subr.bf16.mxu0 0
  %649 = vmatpush1.bf16.msra.mxu0 0
  %650 = vmatprep.subr.bf16.mxu0 0
  %651 = vmatpush1.bf16.msra.mxu0 0
  %652 = vmatprep.subr.bf16.mxu0 0
  %653 = vmatpush1.bf16.msra.mxu0 0
  %654 = vmatprep.subr.bf16.mxu0 0
  %655 = vmatpush1.bf16.msra.mxu0 0
  %656 = vmatprep.mubr.bf16.mxu0 0
  %657 = vmatmul.mubr.bf16.gmra.mrb[0].mxu0 %v548
  %v658 = vpop.f32.mrb[0].mxu0
  %v659 = vadd.f32 %v342, %v658
  %v660 = vpop.f32.mrb[0].mxu0
  %v661 = vadd.f32 %v344, %v660
  %v662 = vpop.f32.mrb[0].mxu0
  %v663 = vpop.f32.mrb[0].mxu0
  %664 = vdwg.mxu0
  %665 = vmatprep.subr.bf16.mxu0 %v566
  %666 = vmatpush1.bf16.msra.mxu0 %v563
  %667 = vmatprep.subr.bf16.mxu0 0
  %668 = vmatpush1.bf16.msra.mxu0 0
  %669 = vmatprep.subr.bf16.mxu0 0
  %670 = vmatpush1.bf16.msra.mxu0 0
  %671 = vmatprep.subr.bf16.mxu0 0
  %672 = vmatpush1.bf16.msra.mxu0 0
  %673 = vmatprep.subr.bf16.mxu0 0
  %674 = vmatpush1.bf16.msra.mxu0 0
  %675 = vmatprep.subr.bf16.mxu0 0
  %676 = vmatpush1.bf16.msra.mxu0 0
  %677 = vmatprep.subr.bf16.mxu0 0
  %678 = vmatpush1.bf16.msra.mxu0 0
  %679 = vmatprep.subr.bf16.mxu0 0
  %680 = vmatpush1.bf16.msra.mxu0 0
  %681 = vmatprep.subr.bf16.mxu0 0
  %682 = vmatpush1.bf16.msra.mxu0 0
  %683 = vmatprep.subr.bf16.mxu0 0
  %684 = vmatpush1.bf16.msra.mxu0 0
  %685 = vmatprep.subr.bf16.mxu0 0
  %686 = vmatpush1.bf16.msra.mxu0 0
  %687 = vmatprep.subr.bf16.mxu0 0
  %688 = vmatpush1.bf16.msra.mxu0 0
  %689 = vmatprep.subr.bf16.mxu0 0
  %690 = vmatpush1.bf16.msra.mxu0 0
  %691 = vmatprep.subr.bf16.mxu0 0
  %692 = vmatpush1.bf16.msra.mxu0 0
  %693 = vmatprep.subr.bf16.mxu0 0
  %694 = vmatpush1.bf16.msra.mxu0 0
  %695 = vmatprep.subr.bf16.mxu0 0
  %696 = vmatpush1.bf16.msra.mxu0 0
  %697 = vmatprep.mubr.bf16.mxu0 0
  %698 = vmatmul.mubr.bf16.gmra.mrb[0].mxu0 %v548
  %v699 = vpop.f32.mrb[0].mxu0
  %v700 = vadd.f32 %v383, %v699
  %v701 = vpop.f32.mrb[0].mxu0
  %v702 = vadd.f32 %v385, %v701
  %v703 = vpop.f32.mrb[0].mxu0
  %v704 = vpop.f32.mrb[0].mxu0
  %705 = vdwg.mxu0
  %706 = vmatprep.subr.bf16.mxu0 %v572
  %707 = vmatpush1.bf16.msra.mxu0 %v569
  %708 = vmatprep.subr.bf16.mxu0 0
  %709 = vmatpush1.bf16.msra.mxu0 0
  %710 = vmatprep.subr.bf16.mxu0 0
  %711 = vmatpush1.bf16.msra.mxu0 0
  %712 = vmatprep.subr.bf16.mxu0 0
  %713 = vmatpush1.bf16.msra.mxu0 0
  %714 = vmatprep.subr.bf16.mxu0 0
  %715 = vmatpush1.bf16.msra.mxu0 0
  %716 = vmatprep.subr.bf16.mxu0 0
  %717 = vmatpush1.bf16.msra.mxu0 0
  %718 = vmatprep.subr.bf16.mxu0 0
  %719 = vmatpush1.bf16.msra.mxu0 0
  %720 = vmatprep.subr.bf16.mxu0 0
  %721 = vmatpush1.bf16.msra.mxu0 0
  %722 = vmatprep.subr.bf16.mxu0 0
  %723 = vmatpush1.bf16.msra.mxu0 0
  %724 = vmatprep.subr.bf16.mxu0 0
  %725 = vmatpush1.bf16.msra.mxu0 0
  %726 = vmatprep.subr.bf16.mxu0 0
  %727 = vmatpush1.bf16.msra.mxu0 0
  %728 = vmatprep.subr.bf16.mxu0 0
  %729 = vmatpush1.bf16.msra.mxu0 0
  %730 = vmatprep.subr.bf16.mxu0 0
  %731 = vmatpush1.bf16.msra.mxu0 0
  %732 = vmatprep.subr.bf16.mxu0 0
  %733 = vmatpush1.bf16.msra.mxu0 0
  %734 = vmatprep.subr.bf16.mxu0 0
  %735 = vmatpush1.bf16.msra.mxu0 0
  %736 = vmatprep.subr.bf16.mxu0 0
  %737 = vmatpush1.bf16.msra.mxu0 0
  %738 = vmatprep.mubr.bf16.mxu0 0
  %739 = vmatmul.mubr.bf16.gmra.mrb[0].mxu0 %v548
  %v740 = vpop.f32.mrb[0].mxu0
  %v741 = vadd.f32 %v424, %v740
  %v742 = vpop.f32.mrb[0].mxu0
  %v743 = vadd.f32 %v426, %v742
  %v744 = vpop.f32.mrb[0].mxu0
  %v745 = vpop.f32.mrb[0].mxu0
  %746 = vdwg.mxu0
  %747 = vmatprep.subr.bf16.mxu0 %v578
  %748 = vmatpush1.bf16.msra.mxu0 %v575
  %749 = vmatprep.subr.bf16.mxu0 0
  %750 = vmatpush1.bf16.msra.mxu0 0
  %751 = vmatprep.subr.bf16.mxu0 0
  %752 = vmatpush1.bf16.msra.mxu0 0
  %753 = vmatprep.subr.bf16.mxu0 0
  %754 = vmatpush1.bf16.msra.mxu0 0
  %755 = vmatprep.subr.bf16.mxu0 0
  %756 = vmatpush1.bf16.msra.mxu0 0
  %757 = vmatprep.subr.bf16.mxu0 0
  %758 = vmatpush1.bf16.msra.mxu0 0
  %759 = vmatprep.subr.bf16.mxu0 0
  %760 = vmatpush1.bf16.msra.mxu0 0
  %761 = vmatprep.subr.bf16.mxu0 0
  %762 = vmatpush1.bf16.msra.mxu0 0
  %763 = vmatprep.subr.bf16.mxu0 0
  %764 = vmatpush1.bf16.msra.mxu0 0
  %765 = vmatprep.subr.bf16.mxu0 0
  %766 = vmatpush1.bf16.msra.mxu0 0
  %767 = vmatprep.subr.bf16.mxu0 0
  %768 = vmatpush1.bf16.msra.mxu0 0
  %769 = vmatprep.subr.bf16.mxu0 0
  %770 = vmatpush1.bf16.msra.mxu0 0
  %771 = vmatprep.subr.bf16.mxu0 0
  %772 = vmatpush1.bf16.msra.mxu0 0
  %773 = vmatprep.subr.bf16.mxu0 0
  %774 = vmatpush1.bf16.msra.mxu0 0
  %775 = vmatprep.subr.bf16.mxu0 0
  %776 = vmatpush1.bf16.msra.mxu0 0
  %777 = vmatprep.subr.bf16.mxu0 0
  %778 = vmatpush1.bf16.msra.mxu0 0
  %779 = vmatprep.mubr.bf16.mxu0 0
  %780 = vmatmul.mubr.bf16.gmra.mrb[0].mxu0 %v548
  %v781 = vpop.f32.mrb[0].mxu0
  %v782 = vadd.f32 %v465, %v781
  %v783 = vpop.f32.mrb[0].mxu0
  %v784 = vadd.f32 %v467, %v783
  %v785 = vpop.f32.mrb[0].mxu0
  %v786 = vpop.f32.mrb[0].mxu0
  %787 = vdwg.mxu0
  %788 = vmatprep.subr.bf16.mxu0 0
  %789 = vmatpush1.bf16.msra.mxu0 %v581
  %790 = vmatprep.subr.bf16.mxu0 0
  %791 = vmatpush1.bf16.msra.mxu0 0
  %792 = vmatprep.subr.bf16.mxu0 0
  %793 = vmatpush1.bf16.msra.mxu0 0
  %794 = vmatprep.subr.bf16.mxu0 0
  %795 = vmatpush1.bf16.msra.mxu0 0
  %796 = vmatprep.subr.bf16.mxu0 0
  %797 = vmatpush1.bf16.msra.mxu0 0
  %798 = vmatprep.subr.bf16.mxu0 0
  %799 = vmatpush1.bf16.msra.mxu0 0
  %800 = vmatprep.subr.bf16.mxu0 0
  %801 = vmatpush1.bf16.msra.mxu0 0
  %802 = vmatprep.subr.bf16.mxu0 0
  %803 = vmatpush1.bf16.msra.mxu0 0
  %804 = vmatprep.subr.bf16.mxu0 0
  %805 = vmatpush1.bf16.msra.mxu0 0
  %806 = vmatprep.subr.bf16.mxu0 0
  %807 = vmatpush1.bf16.msra.mxu0 0
  %808 = vmatprep.subr.bf16.mxu0 0
  %809 = vmatpush1.bf16.msra.mxu0 0
  %810 = vmatprep.subr.bf16.mxu0 0
  %811 = vmatpush1.bf16.msra.mxu0 0
  %812 = vmatprep.subr.bf16.mxu0 0
  %813 = vmatpush1.bf16.msra.mxu0 0
  %814 = vmatprep.subr.bf16.mxu0 0
  %815 = vmatpush1.bf16.msra.mxu0 0
  %816 = vmatprep.subr.bf16.mxu0 0
  %817 = vmatpush1.bf16.msra.mxu0 0
  %818 = vmatprep.subr.bf16.mxu0 0
  %819 = vmatpush1.bf16.msra.mxu0 0
  %820 = vmatprep.mubr.bf16.mxu0 0
  %821 = vmatmul.mubr.bf16.gmra.mrb[0].mxu0 %v548
  %v822 = vpop.f32.mrb[0].mxu0
  %v823 = vadd.f32 %v506, %v822
  %v824 = vpop.f32.mrb[0].mxu0
  %v825 = vpop.f32.mrb[0].mxu0
  %v826 = vpop.f32.mrb[0].mxu0
  %827 = vdwg.mxu0
  %v828 = vld [vmem:[%s3] sm:$0xf]
  %v829 = vld [vmem:[#allocation2] sm:$0xff]
  %v830 = vld [vmem:[#allocation2 + $0x8] sm:$0xff]
  %v831 = vld [vmem:[#allocation2 + $0x10] sm:$0xff]
  %v832 = vld [vmem:[#allocation2 + $0x18] sm:$0xff]
  %v833 = vld [vmem:[#allocation2 + $0x20] sm:$0xff]
  %v834 = vld [vmem:[#allocation2 + $0x28] sm:$0xff]
  %v841 = vcombine.high %v829, %v829
  %v842 = vcombine.high %v830, %v830
  %v843 = vcombine.high %v831, %v831
  %v844 = vcombine.high %v832, %v832
  %v845 = vcombine.high %v833, %v833
  %v846 = vcombine.high %v834, %v834
  %v853 = vpack.c.bf16 %v829, %v829
  %v854 = vpack.c.bf16 %v841, %v841
  %v855 = vpack.c.bf16 %v830, %v830
  %v856 = vpack.c.bf16 %v842, %v842
  %v857 = vpack.c.bf16 %v831, %v831
  %v858 = vpack.c.bf16 %v843, %v843
  %v859 = vpack.c.bf16 %v832, %v832
  %v860 = vpack.c.bf16 %v844, %v844
  %v861 = vpack.c.bf16 %v833, %v833
  %v862 = vpack.c.bf16 %v845, %v845
  %v863 = vpack.c.bf16 %v834, %v834
  %v864 = vpack.c.bf16 %v846, %v846
  %v866 = vunpack.c.l.b16 %v828
  %v867 = vpack.c.b16 %v866, %v866
  %868 = vrot.lane.b32.xlu0 %v867, 120
  %v869 = vpop.permute.xlu0 %868
  %882 = vrot.lane.b32.xlu0 %v853, 31
  %v883 = vpop.permute.xlu0 %882
  %884 = vrot.lane.b32.xlu0 %v854, 31
  %v885 = vpop.permute.xlu0 %884
  %886 = vrot.lane.b32.xlu0 %v855, 31
  %v887 = vpop.permute.xlu0 %886
  %888 = vrot.lane.b32.xlu0 %v856, 31
  %v889 = vpop.permute.xlu0 %888
  %890 = vrot.lane.b32.xlu0 %v857, 31
  %v891 = vpop.permute.xlu0 %890
  %892 = vrot.lane.b32.xlu0 %v858, 31
  %v893 = vpop.permute.xlu0 %892
  %894 = vrot.lane.b32.xlu0 %v859, 31
  %v895 = vpop.permute.xlu0 %894
  %896 = vrot.lane.b32.xlu0 %v860, 31
  %v897 = vpop.permute.xlu0 %896
  %898 = vrot.lane.b32.xlu0 %v861, 31
  %v899 = vpop.permute.xlu0 %898
  %900 = vrot.lane.b32.xlu0 %v862, 31
  %v901 = vpop.permute.xlu0 %900
  %902 = vrot.lane.b32.xlu0 %v863, 31
  %v903 = vpop.permute.xlu0 %902
  %904 = vrot.lane.b32.xlu0 %v864, 31
  %v905 = vpop.permute.xlu0 %904
  %vm906 = vcmask 252928
  %v907 = vsel %vm906, %v883, %v885
  %v908 = vsel %vm906, %v885, %v887
  %v909 = vsel %vm906, %v887, %v889
  %v910 = vsel %vm906, %v889, %v891
  %v911 = vsel %vm906, %v891, %v893
  %v912 = vsel %vm906, %v893, %v895
  %v913 = vsel %vm906, %v895, %v897
  %v914 = vsel %vm906, %v897, %v899
  %v915 = vsel %vm906, %v899, %v901
  %v916 = vsel %vm906, %v901, %v903
  %v917 = vsel %vm906, %v903, %v905
  %v919 = vsel %vm228, %v869, 0
  %v922 = vsel %vm232, %v907, 0
  %v925 = vsel %vm232, %v908, 0
  %v928 = vsel %vm232, %v909, 0
  %v931 = vsel %vm232, %v910, 0
  %v934 = vsel %vm232, %v911, 0
  %v937 = vsel %vm232, %v912, 0
  %v940 = vsel %vm232, %v913, 0
  %v943 = vsel %vm232, %v914, 0
  %v946 = vsel %vm232, %v915, 0
  %v949 = vsel %vm232, %v916, 0
  %v952 = vsel %vm232, %v917, 0
  %954 = vmatprep.subr.bf16.mxu0 %v925
  %955 = vmatpush1.bf16.msra.mxu0 %v922
  %956 = vmatprep.subr.bf16.mxu0 0
  %957 = vmatpush1.bf16.msra.mxu0 0
  %958 = vmatprep.subr.bf16.mxu0 0
  %959 = vmatpush1.bf16.msra.mxu0 0
  %960 = vmatprep.subr.bf16.mxu0 0
  %961 = vmatpush1.bf16.msra.mxu0 0
  %962 = vmatprep.subr.bf16.mxu0 0
  %963 = vmatpush1.bf16.msra.mxu0 0
  %964 = vmatprep.subr.bf16.mxu0 0
  %965 = vmatpush1.bf16.msra.mxu0 0
  %966 = vmatprep.subr.bf16.mxu0 0
  %967 = vmatpush1.bf16.msra.mxu0 0
  %968 = vmatprep.subr.bf16.mxu0 0
  %969 = vmatpush1.bf16.msra.mxu0 0
  %970 = vmatprep.subr.bf16.mxu0 0
  %971 = vmatpush1.bf16.msra.mxu0 0
  %972 = vmatprep.subr.bf16.mxu0 0
  %973 = vmatpush1.bf16.msra.mxu0 0
  %974 = vmatprep.subr.bf16.mxu0 0
  %975 = vmatpush1.bf16.msra.mxu0 0
  %976 = vmatprep.subr.bf16.mxu0 0
  %977 = vmatpush1.bf16.msra.mxu0 0
  %978 = vmatprep.subr.bf16.mxu0 0
  %979 = vmatpush1.bf16.msra.mxu0 0
  %980 = vmatprep.subr.bf16.mxu0 0
  %981 = vmatpush1.bf16.msra.mxu0 0
  %982 = vmatprep.subr.bf16.mxu0 0
  %983 = vmatpush1.bf16.msra.mxu0 0
  %984 = vmatprep.subr.bf16.mxu0 0
  %985 = vmatpush1.bf16.msra.mxu0 0
  %986 = vmatprep.mubr.bf16.mxu0 0
  %987 = vmatmul.mubr.bf16.gmra.mrb[0].mxu0 %v919
  %v988 = vpop.f32.mrb[0].mxu0
  %v989 = vadd.f32 0.0, %v988
  %v990 = vpop.f32.mrb[0].mxu0
  %v991 = vadd.f32 0.0, %v990
  %v992 = vpop.f32.mrb[0].mxu0
  %v993 = vpop.f32.mrb[0].mxu0
  %994 = vdwg.mxu0
  %995 = vmatprep.subr.bf16.mxu0 %v931
  %996 = vmatpush1.bf16.msra.mxu0 %v928
  %997 = vmatprep.subr.bf16.mxu0 0
  %998 = vmatpush1.bf16.msra.mxu0 0
  %999 = vmatprep.subr.bf16.mxu0 0
  %1000 = vmatpush1.bf16.msra.mxu0 0
  %1001 = vmatprep.subr.bf16.mxu0 0
  %1002 = vmatpush1.bf16.msra.mxu0 0
  %1003 = vmatprep.subr.bf16.mxu0 0
  %1004 = vmatpush1.bf16.msra.mxu0 0
  %1005 = vmatprep.subr.bf16.mxu0 0
  %1006 = vmatpush1.bf16.msra.mxu0 0
  %1007 = vmatprep.subr.bf16.mxu0 0
  %1008 = vmatpush1.bf16.msra.mxu0 0
  %1009 = vmatprep.subr.bf16.mxu0 0
  %1010 = vmatpush1.bf16.msra.mxu0 0
  %1011 = vmatprep.subr.bf16.mxu0 0
  %1012 = vmatpush1.bf16.msra.mxu0 0
  %1013 = vmatprep.subr.bf16.mxu0 0
  %1014 = vmatpush1.bf16.msra.mxu0 0
  %1015 = vmatprep.subr.bf16.mxu0 0
  %1016 = vmatpush1.bf16.msra.mxu0 0
  %1017 = vmatprep.subr.bf16.mxu0 0
  %1018 = vmatpush1.bf16.msra.mxu0 0
  %1019 = vmatprep.subr.bf16.mxu0 0
  %1020 = vmatpush1.bf16.msra.mxu0 0
  %1021 = vmatprep.subr.bf16.mxu0 0
  %1022 = vmatpush1.bf16.msra.mxu0 0
  %1023 = vmatprep.subr.bf16.mxu0 0
  %1024 = vmatpush1.bf16.msra.mxu0 0
  %1025 = vmatprep.subr.bf16.mxu0 0
  %1026 = vmatpush1.bf16.msra.mxu0 0
  %1027 = vmatprep.mubr.bf16.mxu0 0
  %1028 = vmatmul.mubr.bf16.gmra.mrb[0].mxu0 %v919
  %v1029 = vpop.f32.mrb[0].mxu0
  %v1030 = vadd.f32 0.0, %v1029
  %v1031 = vpop.f32.mrb[0].mxu0
  %v1032 = vadd.f32 0.0, %v1031
  %v1033 = vpop.f32.mrb[0].mxu0
  %v1034 = vpop.f32.mrb[0].mxu0
  %1035 = vdwg.mxu0
  %1036 = vmatprep.subr.bf16.mxu0 %v937
  %1037 = vmatpush1.bf16.msra.mxu0 %v934
  %1038 = vmatprep.subr.bf16.mxu0 0
  %1039 = vmatpush1.bf16.msra.mxu0 0
  %1040 = vmatprep.subr.bf16.mxu0 0
  %1041 = vmatpush1.bf16.msra.mxu0 0
  %1042 = vmatprep.subr.bf16.mxu0 0
  %1043 = vmatpush1.bf16.msra.mxu0 0
  %1044 = vmatprep.subr.bf16.mxu0 0
  %1045 = vmatpush1.bf16.msra.mxu0 0
  %1046 = vmatprep.subr.bf16.mxu0 0
  %1047 = vmatpush1.bf16.msra.mxu0 0
  %1048 = vmatprep.subr.bf16.mxu0 0
  %1049 = vmatpush1.bf16.msra.mxu0 0
  %1050 = vmatprep.subr.bf16.mxu0 0
  %1051 = vmatpush1.bf16.msra.mxu0 0
  %1052 = vmatprep.subr.bf16.mxu0 0
  %1053 = vmatpush1.bf16.msra.mxu0 0
  %1054 = vmatprep.subr.bf16.mxu0 0
  %1055 = vmatpush1.bf16.msra.mxu0 0
  %1056 = vmatprep.subr.bf16.mxu0 0
  %1057 = vmatpush1.bf16.msra.mxu0 0
  %1058 = vmatprep.subr.bf16.mxu0 0
  %1059 = vmatpush1.bf16.msra.mxu0 0
  %1060 = vmatprep.subr.bf16.mxu0 0
  %1061 = vmatpush1.bf16.msra.mxu0 0
  %1062 = vmatprep.subr.bf16.mxu0 0
  %1063 = vmatpush1.bf16.msra.mxu0 0
  %1064 = vmatprep.subr.bf16.mxu0 0
  %1065 = vmatpush1.bf16.msra.mxu0 0
  %1066 = vmatprep.subr.bf16.mxu0 0
  %1067 = vmatpush1.bf16.msra.mxu0 0
  %1068 = vmatprep.mubr.bf16.mxu0 0
  %1069 = vmatmul.mubr.bf16.gmra.mrb[0].mxu0 %v919
  %v1070 = vpop.f32.mrb[0].mxu0
  %v1071 = vadd.f32 0.0, %v1070
  %v1072 = vpop.f32.mrb[0].mxu0
  %v1073 = vadd.f32 0.0, %v1072
  %v1074 = vpop.f32.mrb[0].mxu0
  %v1075 = vpop.f32.mrb[0].mxu0
  %1076 = vdwg.mxu0
  %1077 = vmatprep.subr.bf16.mxu0 %v943
  %1078 = vmatpush1.bf16.msra.mxu0 %v940
  %1079 = vmatprep.subr.bf16.mxu0 0
  %1080 = vmatpush1.bf16.msra.mxu0 0
  %1081 = vmatprep.subr.bf16.mxu0 0
  %1082 = vmatpush1.bf16.msra.mxu0 0
  %1083 = vmatprep.subr.bf16.mxu0 0
  %1084 = vmatpush1.bf16.msra.mxu0 0
  %1085 = vmatprep.subr.bf16.mxu0 0
  %1086 = vmatpush1.bf16.msra.mxu0 0
  %1087 = vmatprep.subr.bf16.mxu0 0
  %1088 = vmatpush1.bf16.msra.mxu0 0
  %1089 = vmatprep.subr.bf16.mxu0 0
  %1090 = vmatpush1.bf16.msra.mxu0 0
  %1091 = vmatprep.subr.bf16.mxu0 0
  %1092 = vmatpush1.bf16.msra.mxu0 0
  %1093 = vmatprep.subr.bf16.mxu0 0
  %1094 = vmatpush1.bf16.msra.mxu0 0
  %1095 = vmatprep.subr.bf16.mxu0 0
  %1096 = vmatpush1.bf16.msra.mxu0 0
  %1097 = vmatprep.subr.bf16.mxu0 0
  %1098 = vmatpush1.bf16.msra.mxu0 0
  %1099 = vmatprep.subr.bf16.mxu0 0
  %1100 = vmatpush1.bf16.msra.mxu0 0
  %1101 = vmatprep.subr.bf16.mxu0 0
  %1102 = vmatpush1.bf16.msra.mxu0 0
  %1103 = vmatprep.subr.bf16.mxu0 0
  %1104 = vmatpush1.bf16.msra.mxu0 0
  %1105 = vmatprep.subr.bf16.mxu0 0
  %1106 = vmatpush1.bf16.msra.mxu0 0
  %1107 = vmatprep.subr.bf16.mxu0 0
  %1108 = vmatpush1.bf16.msra.mxu0 0
  %1109 = vmatprep.mubr.bf16.mxu0 0
  %1110 = vmatmul.mubr.bf16.gmra.mrb[0].mxu0 %v919
  %v1111 = vpop.f32.mrb[0].mxu0
  %v1112 = vadd.f32 0.0, %v1111
  %v1113 = vpop.f32.mrb[0].mxu0
  %v1114 = vadd.f32 0.0, %v1113
  %v1115 = vpop.f32.mrb[0].mxu0
  %v1116 = vpop.f32.mrb[0].mxu0
  %1117 = vdwg.mxu0
  %1118 = vmatprep.subr.bf16.mxu0 %v949
  %1119 = vmatpush1.bf16.msra.mxu0 %v946
  %1120 = vmatprep.subr.bf16.mxu0 0
  %1121 = vmatpush1.bf16.msra.mxu0 0
  %1122 = vmatprep.subr.bf16.mxu0 0
  %1123 = vmatpush1.bf16.msra.mxu0 0
  %1124 = vmatprep.subr.bf16.mxu0 0
  %1125 = vmatpush1.bf16.msra.mxu0 0
  %1126 = vmatprep.subr.bf16.mxu0 0
  %1127 = vmatpush1.bf16.msra.mxu0 0
  %1128 = vmatprep.subr.bf16.mxu0 0
  %1129 = vmatpush1.bf16.msra.mxu0 0
  %1130 = vmatprep.subr.bf16.mxu0 0
  %1131 = vmatpush1.bf16.msra.mxu0 0
  %1132 = vmatprep.subr.bf16.mxu0 0
  %1133 = vmatpush1.bf16.msra.mxu0 0
  %1134 = vmatprep.subr.bf16.mxu0 0
  %1135 = vmatpush1.bf16.msra.mxu0 0
  %1136 = vmatprep.subr.bf16.mxu0 0
  %1137 = vmatpush1.bf16.msra.mxu0 0
  %1138 = vmatprep.subr.bf16.mxu0 0
  %1139 = vmatpush1.bf16.msra.mxu0 0
  %1140 = vmatprep.subr.bf16.mxu0 0
  %1141 = vmatpush1.bf16.msra.mxu0 0
  %1142 = vmatprep.subr.bf16.mxu0 0
  %1143 = vmatpush1.bf16.msra.mxu0 0
  %1144 = vmatprep.subr.bf16.mxu0 0
  %1145 = vmatpush1.bf16.msra.mxu0 0
  %1146 = vmatprep.subr.bf16.mxu0 0
  %1147 = vmatpush1.bf16.msra.mxu0 0
  %1148 = vmatprep.subr.bf16.mxu0 0
  %1149 = vmatpush1.bf16.msra.mxu0 0
  %1150 = vmatprep.mubr.bf16.mxu0 0
  %1151 = vmatmul.mubr.bf16.gmra.mrb[0].mxu0 %v919
  %v1152 = vpop.f32.mrb[0].mxu0
  %v1153 = vadd.f32 0.0, %v1152
  %v1154 = vpop.f32.mrb[0].mxu0
  %v1155 = vadd.f32 0.0, %v1154
  %v1156 = vpop.f32.mrb[0].mxu0
  %v1157 = vpop.f32.mrb[0].mxu0
  %1158 = vdwg.mxu0
  %1159 = vmatprep.subr.bf16.mxu0 0
  %1160 = vmatpush1.bf16.msra.mxu0 %v952
  %1161 = vmatprep.subr.bf16.mxu0 0
  %1162 = vmatpush1.bf16.msra.mxu0 0
  %1163 = vmatprep.subr.bf16.mxu0 0
  %1164 = vmatpush1.bf16.msra.mxu0 0
  %1165 = vmatprep.subr.bf16.mxu0 0
  %1166 = vmatpush1.bf16.msra.mxu0 0
  %1167 = vmatprep.subr.bf16.mxu0 0
  %1168 = vmatpush1.bf16.msra.mxu0 0
  %1169 = vmatprep.subr.bf16.mxu0 0
  %1170 = vmatpush1.bf16.msra.mxu0 0
  %1171 = vmatprep.subr.bf16.mxu0 0
  %1172 = vmatpush1.bf16.msra.mxu0 0
  %1173 = vmatprep.subr.bf16.mxu0 0
  %1174 = vmatpush1.bf16.msra.mxu0 0
  %1175 = vmatprep.subr.bf16.mxu0 0
  %1176 = vmatpush1.bf16.msra.mxu0 0
  %1177 = vmatprep.subr.bf16.mxu0 0
  %1178 = vmatpush1.bf16.msra.mxu0 0
  %1179 = vmatprep.subr.bf16.mxu0 0
  %1180 = vmatpush1.bf16.msra.mxu0 0
  %1181 = vmatprep.subr.bf16.mxu0 0
  %1182 = vmatpush1.bf16.msra.mxu0 0
  %1183 = vmatprep.subr.bf16.mxu0 0
  %1184 = vmatpush1.bf16.msra.mxu0 0
  %1185 = vmatprep.subr.bf16.mxu0 0
  %1186 = vmatpush1.bf16.msra.mxu0 0
  %1187 = vmatprep.subr.bf16.mxu0 0
  %1188 = vmatpush1.bf16.msra.mxu0 0
  %1189 = vmatprep.subr.bf16.mxu0 0
  %1190 = vmatpush1.bf16.msra.mxu0 0
  %1191 = vmatprep.mubr.bf16.mxu0 0
  %1192 = vmatmul.mubr.bf16.gmra.mrb[0].mxu0 %v919
  %v1193 = vpop.f32.mrb[0].mxu0
  %v1194 = vadd.f32 0.0, %v1193
  %v1195 = vpop.f32.mrb[0].mxu0
  %v1196 = vpop.f32.mrb[0].mxu0
  %v1197 = vpop.f32.mrb[0].mxu0
  %1198 = vdwg.mxu0
  %v1199 = vadd.f32 %v618, %v989
  %v1200 = vadd.f32 %v620, %v991
  %v1201 = vadd.f32 %v659, %v1030
  %v1202 = vadd.f32 %v661, %v1032
  %v1203 = vadd.f32 %v700, %v1071
  %v1204 = vadd.f32 %v702, %v1073
  %v1205 = vadd.f32 %v741, %v1112
  %v1206 = vadd.f32 %v743, %v1114
  %v1207 = vadd.f32 %v782, %v1153
  %v1208 = vadd.f32 %v784, %v1155
  %v1209 = vadd.f32 %v823, %v1194
  %v1210 = vld [vmem:[%s3] sm:$0xf]
  %v1211 = vld [vmem:[#allocation2] sm:$0xff]
  %v1212 = vld [vmem:[#allocation2 + $0x8] sm:$0xff]
  %v1213 = vld [vmem:[#allocation2 + $0x10] sm:$0xff]
  %v1214 = vld [vmem:[#allocation2 + $0x18] sm:$0xff]
  %v1215 = vld [vmem:[#allocation2 + $0x20] sm:$0xff]
  %v1216 = vld [vmem:[#allocation2 + $0x28] sm:$0xff]
  %v1223 = vcombine.high %v1211, %v1211
  %v1224 = vcombine.high %v1212, %v1212
  %v1225 = vcombine.high %v1213, %v1213
  %v1226 = vcombine.high %v1214, %v1214
  %v1227 = vcombine.high %v1215, %v1215
  %v1228 = vcombine.high %v1216, %v1216
  %v1235 = vpack.c.bf16 %v1211, %v1211
  %v1236 = vpack.c.bf16 %v1223, %v1223
  %v1237 = vpack.c.bf16 %v1212, %v1212
  %v1238 = vpack.c.bf16 %v1224, %v1224
  %v1239 = vpack.c.bf16 %v1213, %v1213
  %v1240 = vpack.c.bf16 %v1225, %v1225
  %v1241 = vpack.c.bf16 %v1214, %v1214
  %v1242 = vpack.c.bf16 %v1226, %v1226
  %v1243 = vpack.c.bf16 %v1215, %v1215
  %v1244 = vpack.c.bf16 %v1227, %v1227
  %v1245 = vpack.c.bf16 %v1216, %v1216
  %v1246 = vpack.c.bf16 %v1228, %v1228
  %v1248 = vunpack.c.l.b16 %v1210
  %v1249 = vpack.c.b16 %v1248, %v1248
  %1250 = vrot.lane.b32.xlu0 %v1249, 116
  %v1251 = vpop.permute.xlu0 %1250
  %1264 = vrot.lane.b32.xlu0 %v1235, 1
  %v1265 = vpop.permute.xlu0 %1264
  %1266 = vrot.lane.b32.xlu0 %v1236, 1
  %v1267 = vpop.permute.xlu0 %1266
  %1268 = vrot.lane.b32.xlu0 %v1237, 1
  %v1269 = vpop.permute.xlu0 %1268
  %1270 = vrot.lane.b32.xlu0 %v1238, 1
  %v1271 = vpop.permute.xlu0 %1270
  %1272 = vrot.lane.b32.xlu0 %v1239, 1
  %v1273 = vpop.permute.xlu0 %1272
  %1274 = vrot.lane.b32.xlu0 %v1240, 1
  %v1275 = vpop.permute.xlu0 %1274
  %1276 = vrot.lane.b32.xlu0 %v1241, 1
  %v1277 = vpop.permute.xlu0 %1276
  %1278 = vrot.lane.b32.xlu0 %v1242, 1
  %v1279 = vpop.permute.xlu0 %1278
  %1280 = vrot.lane.b32.xlu0 %v1243, 1
  %v1281 = vpop.permute.xlu0 %1280
  %1282 = vrot.lane.b32.xlu0 %v1244, 1
  %v1283 = vpop.permute.xlu0 %1282
  %1284 = vrot.lane.b32.xlu0 %v1245, 1
  %v1285 = vpop.permute.xlu0 %1284
  %1286 = vrot.lane.b32.xlu0 %v1246, 1
  %v1287 = vpop.permute.xlu0 %1286
  %vm1288 = vcmask 7168
  %v1289 = vsel %vm1288, %v1265, %v1267
  %v1290 = vsel %vm1288, %v1267, %v1269
  %v1291 = vsel %vm1288, %v1269, %v1271
  %v1292 = vsel %vm1288, %v1271, %v1273
  %v1293 = vsel %vm1288, %v1273, %v1275
  %v1294 = vsel %vm1288, %v1275, %v1277
  %v1295 = vsel %vm1288, %v1277, %v1279
  %v1296 = vsel %vm1288, %v1279, %v1281
  %v1297 = vsel %vm1288, %v1281, %v1283
  %v1298 = vsel %vm1288, %v1283, %v1285
  %v1299 = vsel %vm1288, %v1285, %v1287
  %v1301 = vsel %vm228, %v1251, 0
  %v1304 = vsel %vm232, %v1289, 0
  %v1307 = vsel %vm232, %v1290, 0
  %v1310 = vsel %vm232, %v1291, 0
  %v1313 = vsel %vm232, %v1292, 0
  %v1316 = vsel %vm232, %v1293, 0
  %v1319 = vsel %vm232, %v1294, 0
  %v1322 = vsel %vm232, %v1295, 0
  %v1325 = vsel %vm232, %v1296, 0
  %v1328 = vsel %vm232, %v1297, 0
  %v1331 = vsel %vm232, %v1298, 0
  %v1334 = vsel %vm232, %v1299, 0
  %1336 = vmatprep.subr.bf16.mxu0 %v1307
  %1337 = vmatpush1.bf16.msra.mxu0 %v1304
  %1338 = vmatprep.subr.bf16.mxu0 0
  %1339 = vmatpush1.bf16.msra.mxu0 0
  %1340 = vmatprep.subr.bf16.mxu0 0
  %1341 = vmatpush1.bf16.msra.mxu0 0
  %1342 = vmatprep.subr.bf16.mxu0 0
  %1343 = vmatpush1.bf16.msra.mxu0 0
  %1344 = vmatprep.subr.bf16.mxu0 0
  %1345 = vmatpush1.bf16.msra.mxu0 0
  %1346 = vmatprep.subr.bf16.mxu0 0
  %1347 = vmatpush1.bf16.msra.mxu0 0
  %1348 = vmatprep.subr.bf16.mxu0 0
  %1349 = vmatpush1.bf16.msra.mxu0 0
  %1350 = vmatprep.subr.bf16.mxu0 0
  %1351 = vmatpush1.bf16.msra.mxu0 0
  %1352 = vmatprep.subr.bf16.mxu0 0
  %1353 = vmatpush1.bf16.msra.mxu0 0
  %1354 = vmatprep.subr.bf16.mxu0 0
  %1355 = vmatpush1.bf16.msra.mxu0 0
  %1356 = vmatprep.subr.bf16.mxu0 0
  %1357 = vmatpush1.bf16.msra.mxu0 0
  %1358 = vmatprep.subr.bf16.mxu0 0
  %1359 = vmatpush1.bf16.msra.mxu0 0
  %1360 = vmatprep.subr.bf16.mxu0 0
  %1361 = vmatpush1.bf16.msra.mxu0 0
  %1362 = vmatprep.subr.bf16.mxu0 0
  %1363 = vmatpush1.bf16.msra.mxu0 0
  %1364 = vmatprep.subr.bf16.mxu0 0
  %1365 = vmatpush1.bf16.msra.mxu0 0
  %1366 = vmatprep.subr.bf16.mxu0 0
  %1367 = vmatpush1.bf16.msra.mxu0 0
  %1368 = vmatprep.mubr.bf16.mxu0 0
  %1369 = vmatmul.mubr.bf16.gmra.mrb[0].mxu0 %v1301
  %v1370 = vpop.f32.mrb[0].mxu0
  %v1371 = vadd.f32 0.0, %v1370
  %v1372 = vpop.f32.mrb[0].mxu0
  %v1373 = vadd.f32 0.0, %v1372
  %v1374 = vpop.f32.mrb[0].mxu0
  %v1375 = vpop.f32.mrb[0].mxu0
  %1376 = vdwg.mxu0
  %1377 = vmatprep.subr.bf16.mxu0 %v1313
  %1378 = vmatpush1.bf16.msra.mxu0 %v1310
  %1379 = vmatprep.subr.bf16.mxu0 0
  %1380 = vmatpush1.bf16.msra.mxu0 0
  %1381 = vmatprep.subr.bf16.mxu0 0
  %1382 = vmatpush1.bf16.msra.mxu0 0
  %1383 = vmatprep.subr.bf16.mxu0 0
  %1384 = vmatpush1.bf16.msra.mxu0 0
  %1385 = vmatprep.subr.bf16.mxu0 0
  %1386 = vmatpush1.bf16.msra.mxu0 0
  %1387 = vmatprep.subr.bf16.mxu0 0
  %1388 = vmatpush1.bf16.msra.mxu0 0
  %1389 = vmatprep.subr.bf16.mxu0 0
  %1390 = vmatpush1.bf16.msra.mxu0 0
  %1391 = vmatprep.subr.bf16.mxu0 0
  %1392 = vmatpush1.bf16.msra.mxu0 0
  %1393 = vmatprep.subr.bf16.mxu0 0
  %1394 = vmatpush1.bf16.msra.mxu0 0
  %1395 = vmatprep.subr.bf16.mxu0 0
  %1396 = vmatpush1.bf16.msra.mxu0 0
  %1397 = vmatprep.subr.bf16.mxu0 0
  %1398 = vmatpush1.bf16.msra.mxu0 0
  %1399 = vmatprep.subr.bf16.mxu0 0
  %1400 = vmatpush1.bf16.msra.mxu0 0
  %1401 = vmatprep.subr.bf16.mxu0 0
  %1402 = vmatpush1.bf16.msra.mxu0 0
  %1403 = vmatprep.subr.bf16.mxu0 0
  %1404 = vmatpush1.bf16.msra.mxu0 0
  %1405 = vmatprep.subr.bf16.mxu0 0
  %1406 = vmatpush1.bf16.msra.mxu0 0
  %1407 = vmatprep.subr.bf16.mxu0 0
  %1408 = vmatpush1.bf16.msra.mxu0 0
  %1409 = vmatprep.mubr.bf16.mxu0 0
  %1410 = vmatmul.mubr.bf16.gmra.mrb[0].mxu0 %v1301
  %v1411 = vpop.f32.mrb[0].mxu0
  %v1412 = vadd.f32 0.0, %v1411
  %v1413 = vpop.f32.mrb[0].mxu0
  %v1414 = vadd.f32 0.0, %v1413
  %v1415 = vpop.f32.mrb[0].mxu0
  %v1416 = vpop.f32.mrb[0].mxu0
  %1417 = vdwg.mxu0
  %1418 = vmatprep.subr.bf16.mxu0 %v1319
  %1419 = vmatpush1.bf16.msra.mxu0 %v1316
  %1420 = vmatprep.subr.bf16.mxu0 0
  %1421 = vmatpush1.bf16.msra.mxu0 0
  %1422 = vmatprep.subr.bf16.mxu0 0
  %1423 = vmatpush1.bf16.msra.mxu0 0
  %1424 = vmatprep.subr.bf16.mxu0 0
  %1425 = vmatpush1.bf16.msra.mxu0 0
  %1426 = vmatprep.subr.bf16.mxu0 0
  %1427 = vmatpush1.bf16.msra.mxu0 0
  %1428 = vmatprep.subr.bf16.mxu0 0
  %1429 = vmatpush1.bf16.msra.mxu0 0
  %1430 = vmatprep.subr.bf16.mxu0 0
  %1431 = vmatpush1.bf16.msra.mxu0 0
  %1432 = vmatprep.subr.bf16.mxu0 0
  %1433 = vmatpush1.bf16.msra.mxu0 0
  %1434 = vmatprep.subr.bf16.mxu0 0
  %1435 = vmatpush1.bf16.msra.mxu0 0
  %1436 = vmatprep.subr.bf16.mxu0 0
  %1437 = vmatpush1.bf16.msra.mxu0 0
  %1438 = vmatprep.subr.bf16.mxu0 0
  %1439 = vmatpush1.bf16.msra.mxu0 0
  %1440 = vmatprep.subr.bf16.mxu0 0
  %1441 = vmatpush1.bf16.msra.mxu0 0
  %1442 = vmatprep.subr.bf16.mxu0 0
  %1443 = vmatpush1.bf16.msra.mxu0 0
  %1444 = vmatprep.subr.bf16.mxu0 0
  %1445 = vmatpush1.bf16.msra.mxu0 0
  %1446 = vmatprep.subr.bf16.mxu0 0
  %1447 = vmatpush1.bf16.msra.mxu0 0
  %1448 = vmatprep.subr.bf16.mxu0 0
  %1449 = vmatpush1.bf16.msra.mxu0 0
  %1450 = vmatprep.mubr.bf16.mxu0 0
  %1451 = vmatmul.mubr.bf16.gmra.mrb[0].mxu0 %v1301
  %v1452 = vpop.f32.mrb[0].mxu0
  %v1453 = vadd.f32 0.0, %v1452
  %v1454 = vpop.f32.mrb[0].mxu0
  %v1455 = vadd.f32 0.0, %v1454
  %v1456 = vpop.f32.mrb[0].mxu0
  %v1457 = vpop.f32.mrb[0].mxu0
  %1458 = vdwg.mxu0
  %1459 = vmatprep.subr.bf16.mxu0 %v1325
  %1460 = vmatpush1.bf16.msra.mxu0 %v1322
  %1461 = vmatprep.subr.bf16.mxu0 0
  %1462 = vmatpush1.bf16.msra.mxu0 0
  %1463 = vmatprep.subr.bf16.mxu0 0
  %1464 = vmatpush1.bf16.msra.mxu0 0
  %1465 = vmatprep.subr.bf16.mxu0 0
  %1466 = vmatpush1.bf16.msra.mxu0 0
  %1467 = vmatprep.subr.bf16.mxu0 0
  %1468 = vmatpush1.bf16.msra.mxu0 0
  %1469 = vmatprep.subr.bf16.mxu0 0
  %1470 = vmatpush1.bf16.msra.mxu0 0
  %1471 = vmatprep.subr.bf16.mxu0 0
  %1472 = vmatpush1.bf16.msra.mxu0 0
  %1473 = vmatprep.subr.bf16.mxu0 0
  %1474 = vmatpush1.bf16.msra.mxu0 0
  %1475 = vmatprep.subr.bf16.mxu0 0
  %1476 = vmatpush1.bf16.msra.mxu0 0
  %1477 = vmatprep.subr.bf16.mxu0 0
  %1478 = vmatpush1.bf16.msra.mxu0 0
  %1479 = vmatprep.subr.bf16.mxu0 0
  %1480 = vmatpush1.bf16.msra.mxu0 0
  %1481 = vmatprep.subr.bf16.mxu0 0
  %1482 = vmatpush1.bf16.msra.mxu0 0
  %1483 = vmatprep.subr.bf16.mxu0 0
  %1484 = vmatpush1.bf16.msra.mxu0 0
  %1485 = vmatprep.subr.bf16.mxu0 0
  %1486 = vmatpush1.bf16.msra.mxu0 0
  %1487 = vmatprep.subr.bf16.mxu0 0
  %1488 = vmatpush1.bf16.msra.mxu0 0
  %1489 = vmatprep.subr.bf16.mxu0 0
  %1490 = vmatpush1.bf16.msra.mxu0 0
  %1491 = vmatprep.mubr.bf16.mxu0 0
  %1492 = vmatmul.mubr.bf16.gmra.mrb[0].mxu0 %v1301
  %v1493 = vpop.f32.mrb[0].mxu0
  %v1494 = vadd.f32 0.0, %v1493
  %v1495 = vpop.f32.mrb[0].mxu0
  %v1496 = vadd.f32 0.0, %v1495
  %v1497 = vpop.f32.mrb[0].mxu0
  %v1498 = vpop.f32.mrb[0].mxu0
  %1499 = vdwg.mxu0
  %1500 = vmatprep.subr.bf16.mxu0 %v1331
  %1501 = vmatpush1.bf16.msra.mxu0 %v1328
  %1502 = vmatprep.subr.bf16.mxu0 0
  %1503 = vmatpush1.bf16.msra.mxu0 0
  %1504 = vmatprep.subr.bf16.mxu0 0
  %1505 = vmatpush1.bf16.msra.mxu0 0
  %1506 = vmatprep.subr.bf16.mxu0 0
  %1507 = vmatpush1.bf16.msra.mxu0 0
  %1508 = vmatprep.subr.bf16.mxu0 0
  %1509 = vmatpush1.bf16.msra.mxu0 0
  %1510 = vmatprep.subr.bf16.mxu0 0
  %1511 = vmatpush1.bf16.msra.mxu0 0
  %1512 = vmatprep.subr.bf16.mxu0 0
  %1513 = vmatpush1.bf16.msra.mxu0 0
  %1514 = vmatprep.subr.bf16.mxu0 0
  %1515 = vmatpush1.bf16.msra.mxu0 0
  %1516 = vmatprep.subr.bf16.mxu0 0
  %1517 = vmatpush1.bf16.msra.mxu0 0
  %1518 = vmatprep.subr.bf16.mxu0 0
  %1519 = vmatpush1.bf16.msra.mxu0 0
  %1520 = vmatprep.subr.bf16.mxu0 0
  %1521 = vmatpush1.bf16.msra.mxu0 0
  %1522 = vmatprep.subr.bf16.mxu0 0
  %1523 = vmatpush1.bf16.msra.mxu0 0
  %1524 = vmatprep.subr.bf16.mxu0 0
  %1525 = vmatpush1.bf16.msra.mxu0 0
  %1526 = vmatprep.subr.bf16.mxu0 0
  %1527 = vmatpush1.bf16.msra.mxu0 0
  %1528 = vmatprep.subr.bf16.mxu0 0
  %1529 = vmatpush1.bf16.msra.mxu0 0
  %1530 = vmatprep.subr.bf16.mxu0 0
  %1531 = vmatpush1.bf16.msra.mxu0 0
  %1532 = vmatprep.mubr.bf16.mxu0 0
  %1533 = vmatmul.mubr.bf16.gmra.mrb[0].mxu0 %v1301
  %v1534 = vpop.f32.mrb[0].mxu0
  %v1535 = vadd.f32 0.0, %v1534
  %v1536 = vpop.f32.mrb[0].mxu0
  %v1537 = vadd.f32 0.0, %v1536
  %v1538 = vpop.f32.mrb[0].mxu0
  %v1539 = vpop.f32.mrb[0].mxu0
  %1540 = vdwg.mxu0
  %1541 = vmatprep.subr.bf16.mxu0 0
  %1542 = vmatpush1.bf16.msra.mxu0 %v1334
  %1543 = vmatprep.subr.bf16.mxu0 0
  %1544 = vmatpush1.bf16.msra.mxu0 0
  %1545 = vmatprep.subr.bf16.mxu0 0
  %1546 = vmatpush1.bf16.msra.mxu0 0
  %1547 = vmatprep.subr.bf16.mxu0 0
  %1548 = vmatpush1.bf16.msra.mxu0 0
  %1549 = vmatprep.subr.bf16.mxu0 0
  %1550 = vmatpush1.bf16.msra.mxu0 0
  %1551 = vmatprep.subr.bf16.mxu0 0
  %1552 = vmatpush1.bf16.msra.mxu0 0
  %1553 = vmatprep.subr.bf16.mxu0 0
  %1554 = vmatpush1.bf16.msra.mxu0 0
  %1555 = vmatprep.subr.bf16.mxu0 0
  %1556 = vmatpush1.bf16.msra.mxu0 0
  %1557 = vmatprep.subr.bf16.mxu0 0
  %1558 = vmatpush1.bf16.msra.mxu0 0
  %1559 = vmatprep.subr.bf16.mxu0 0
  %1560 = vmatpush1.bf16.msra.mxu0 0
  %1561 = vmatprep.subr.bf16.mxu0 0
  %1562 = vmatpush1.bf16.msra.mxu0 0
  %1563 = vmatprep.subr.bf16.mxu0 0
  %1564 = vmatpush1.bf16.msra.mxu0 0
  %1565 = vmatprep.subr.bf16.mxu0 0
  %1566 = vmatpush1.bf16.msra.mxu0 0
  %1567 = vmatprep.subr.bf16.mxu0 0
  %1568 = vmatpush1.bf16.msra.mxu0 0
  %1569 = vmatprep.subr.bf16.mxu0 0
  %1570 = vmatpush1.bf16.msra.mxu0 0
  %1571 = vmatprep.subr.bf16.mxu0 0
  %1572 = vmatpush1.bf16.msra.mxu0 0
  %1573 = vmatprep.mubr.bf16.mxu0 0
  %1574 = vmatmul.mubr.bf16.gmra.mrb[0].mxu0 %v1301
  %v1575 = vpop.f32.mrb[0].mxu0
  %v1576 = vadd.f32 0.0, %v1575
  %v1577 = vpop.f32.mrb[0].mxu0
  %v1578 = vpop.f32.mrb[0].mxu0
  %v1579 = vpop.f32.mrb[0].mxu0
  %1580 = vdwg.mxu0
  %v1581 = vadd.f32 %v1199, %v1371
  %v1582 = vadd.f32 %v1200, %v1373
  %v1583 = vadd.f32 %v1201, %v1412
  %v1584 = vadd.f32 %v1202, %v1414
  %v1585 = vadd.f32 %v1203, %v1453
  %v1586 = vadd.f32 %v1204, %v1455
  %v1587 = vadd.f32 %v1205, %v1494
  %v1588 = vadd.f32 %v1206, %v1496
  %v1589 = vadd.f32 %v1207, %v1535
  %v1590 = vadd.f32 %v1208, %v1537
  %v1591 = vadd.f32 %v1209, %v1576
  %v1592 = vld [vmem:[%s3] sm:$0xf]
  %v1593 = vld [vmem:[#allocation2 + $0x4] sm:$0xff]
  %v1594 = vld [vmem:[#allocation2 + $0xc] sm:$0xff]
  %v1595 = vld [vmem:[#allocation2 + $0x14] sm:$0xff]
  %v1596 = vld [vmem:[#allocation2 + $0x1c] sm:$0xff]
  %v1597 = vld [vmem:[#allocation2 + $0x24] sm:$0xff]
  %v1598 = vld [vmem:[#allocation2 + $0x2c] sm:$0xf]
  %v1604 = vcombine.high %v1593, %v1593
  %v1605 = vcombine.high %v1594, %v1594
  %v1606 = vcombine.high %v1595, %v1595
  %v1607 = vcombine.high %v1596, %v1596
  %v1608 = vcombine.high %v1597, %v1597
  %v1614 = vpack.c.bf16 %v1593, %v1593
  %v1615 = vpack.c.bf16 %v1604, %v1604
  %v1616 = vpack.c.bf16 %v1594, %v1594
  %v1617 = vpack.c.bf16 %v1605, %v1605
  %v1618 = vpack.c.bf16 %v1595, %v1595
  %v1619 = vpack.c.bf16 %v1606, %v1606
  %v1620 = vpack.c.bf16 %v1596, %v1596
  %v1621 = vpack.c.bf16 %v1607, %v1607
  %v1622 = vpack.c.bf16 %v1597, %v1597
  %v1623 = vpack.c.bf16 %v1608, %v1608
  %v1624 = vpack.c.bf16 %v1598, %v1598
  %v1626 = vunpack.c.l.b16 %v1592
  %v1627 = vpack.c.b16 %v1626, %v1626
  %1628 = vrot.lane.b32.xlu0 %v1627, 112
  %v1629 = vpop.permute.xlu0 %1628
  %v1631 = vsel %vm228, %v1629, 0
  %v1634 = vsel %vm232, %v1614, 0
  %v1637 = vsel %vm232, %v1615, 0
  %v1640 = vsel %vm232, %v1616, 0
  %v1643 = vsel %vm232, %v1617, 0
  %v1646 = vsel %vm232, %v1618, 0
  %v1649 = vsel %vm232, %v1619, 0
  %v1652 = vsel %vm232, %v1620, 0
  %v1655 = vsel %vm232, %v1621, 0
  %v1658 = vsel %vm232, %v1622, 0
  %v1661 = vsel %vm232, %v1623, 0
  %v1664 = vsel %vm232, %v1624, 0
  %1666 = vmatprep.subr.bf16.mxu0 %v1637
  %1667 = vmatpush1.bf16.msra.mxu0 %v1634
  %1668 = vmatprep.subr.bf16.mxu0 0
  %1669 = vmatpush1.bf16.msra.mxu0 0
  %1670 = vmatprep.subr.bf16.mxu0 0
  %1671 = vmatpush1.bf16.msra.mxu0 0
  %1672 = vmatprep.subr.bf16.mxu0 0
  %1673 = vmatpush1.bf16.msra.mxu0 0
  %1674 = vmatprep.subr.bf16.mxu0 0
  %1675 = vmatpush1.bf16.msra.mxu0 0
  %1676 = vmatprep.subr.bf16.mxu0 0
  %1677 = vmatpush1.bf16.msra.mxu0 0
  %1678 = vmatprep.subr.bf16.mxu0 0
  %1679 = vmatpush1.bf16.msra.mxu0 0
  %1680 = vmatprep.subr.bf16.mxu0 0
  %1681 = vmatpush1.bf16.msra.mxu0 0
  %1682 = vmatprep.subr.bf16.mxu0 0
  %1683 = vmatpush1.bf16.msra.mxu0 0
  %1684 = vmatprep.subr.bf16.mxu0 0
  %1685 = vmatpush1.bf16.msra.mxu0 0
  %1686 = vmatprep.subr.bf16.mxu0 0
  %1687 = vmatpush1.bf16.msra.mxu0 0
  %1688 = vmatprep.subr.bf16.mxu0 0
  %1689 = vmatpush1.bf16.msra.mxu0 0
  %1690 = vmatprep.subr.bf16.mxu0 0
  %1691 = vmatpush1.bf16.msra.mxu0 0
  %1692 = vmatprep.subr.bf16.mxu0 0
  %1693 = vmatpush1.bf16.msra.mxu0 0
  %1694 = vmatprep.subr.bf16.mxu0 0
  %1695 = vmatpush1.bf16.msra.mxu0 0
  %1696 = vmatprep.subr.bf16.mxu0 0
  %1697 = vmatpush1.bf16.msra.mxu0 0
  %1698 = vmatprep.mubr.bf16.mxu0 0
  %1699 = vmatmul.mubr.bf16.gmra.mrb[0].mxu0 %v1631
  %v1700 = vpop.f32.mrb[0].mxu0
  %v1701 = vadd.f32 0.0, %v1700
  %v1702 = vpop.f32.mrb[0].mxu0
  %v1703 = vadd.f32 0.0, %v1702
  %v1704 = vpop.f32.mrb[0].mxu0
  %v1705 = vpop.f32.mrb[0].mxu0
  %1706 = vdwg.mxu0
  %1707 = vmatprep.subr.bf16.mxu0 %v1643
  %1708 = vmatpush1.bf16.msra.mxu0 %v1640
  %1709 = vmatprep.subr.bf16.mxu0 0
  %1710 = vmatpush1.bf16.msra.mxu0 0
  %1711 = vmatprep.subr.bf16.mxu0 0
  %1712 = vmatpush1.bf16.msra.mxu0 0
  %1713 = vmatprep.subr.bf16.mxu0 0
  %1714 = vmatpush1.bf16.msra.mxu0 0
  %1715 = vmatprep.subr.bf16.mxu0 0
  %1716 = vmatpush1.bf16.msra.mxu0 0
  %1717 = vmatprep.subr.bf16.mxu0 0
  %1718 = vmatpush1.bf16.msra.mxu0 0
  %1719 = vmatprep.subr.bf16.mxu0 0
  %1720 = vmatpush1.bf16.msra.mxu0 0
  %1721 = vmatprep.subr.bf16.mxu0 0
  %1722 = vmatpush1.bf16.msra.mxu0 0
  %1723 = vmatprep.subr.bf16.mxu0 0
  %1724 = vmatpush1.bf16.msra.mxu0 0
  %1725 = vmatprep.subr.bf16.mxu0 0
  %1726 = vmatpush1.bf16.msra.mxu0 0
  %1727 = vmatprep.subr.bf16.mxu0 0
  %1728 = vmatpush1.bf16.msra.mxu0 0
  %1729 = vmatprep.subr.bf16.mxu0 0
  %1730 = vmatpush1.bf16.msra.mxu0 0
  %1731 = vmatprep.subr.bf16.mxu0 0
  %1732 = vmatpush1.bf16.msra.mxu0 0
  %1733 = vmatprep.subr.bf16.mxu0 0
  %1734 = vmatpush1.bf16.msra.mxu0 0
  %1735 = vmatprep.subr.bf16.mxu0 0
  %1736 = vmatpush1.bf16.msra.mxu0 0
  %1737 = vmatprep.subr.bf16.mxu0 0
  %1738 = vmatpush1.bf16.msra.mxu0 0
  %1739 = vmatprep.mubr.bf16.mxu0 0
  %1740 = vmatmul.mubr.bf16.gmra.mrb[0].mxu0 %v1631
  %v1741 = vpop.f32.mrb[0].mxu0
  %v1742 = vadd.f32 0.0, %v1741
  %v1743 = vpop.f32.mrb[0].mxu0
  %v1744 = vadd.f32 0.0, %v1743
  %v1745 = vpop.f32.mrb[0].mxu0
  %v1746 = vpop.f32.mrb[0].mxu0
  %1747 = vdwg.mxu0
  %1748 = vmatprep.subr.bf16.mxu0 %v1649
  %1749 = vmatpush1.bf16.msra.mxu0 %v1646
  %1750 = vmatprep.subr.bf16.mxu0 0
  %1751 = vmatpush1.bf16.msra.mxu0 0
  %1752 = vmatprep.subr.bf16.mxu0 0
  %1753 = vmatpush1.bf16.msra.mxu0 0
  %1754 = vmatprep.subr.bf16.mxu0 0
  %1755 = vmatpush1.bf16.msra.mxu0 0
  %1756 = vmatprep.subr.bf16.mxu0 0
  %1757 = vmatpush1.bf16.msra.mxu0 0
  %1758 = vmatprep.subr.bf16.mxu0 0
  %1759 = vmatpush1.bf16.msra.mxu0 0
  %1760 = vmatprep.subr.bf16.mxu0 0
  %1761 = vmatpush1.bf16.msra.mxu0 0
  %1762 = vmatprep.subr.bf16.mxu0 0
  %1763 = vmatpush1.bf16.msra.mxu0 0
  %1764 = vmatprep.subr.bf16.mxu0 0
  %1765 = vmatpush1.bf16.msra.mxu0 0
  %1766 = vmatprep.subr.bf16.mxu0 0
  %1767 = vmatpush1.bf16.msra.mxu0 0
  %1768 = vmatprep.subr.bf16.mxu0 0
  %1769 = vmatpush1.bf16.msra.mxu0 0
  %1770 = vmatprep.subr.bf16.mxu0 0
  %1771 = vmatpush1.bf16.msra.mxu0 0
  %1772 = vmatprep.subr.bf16.mxu0 0
  %1773 = vmatpush1.bf16.msra.mxu0 0
  %1774 = vmatprep.subr.bf16.mxu0 0
  %1775 = vmatpush1.bf16.msra.mxu0 0
  %1776 = vmatprep.subr.bf16.mxu0 0
  %1777 = vmatpush1.bf16.msra.mxu0 0
  %1778 = vmatprep.subr.bf16.mxu0 0
  %1779 = vmatpush1.bf16.msra.mxu0 0
  %1780 = vmatprep.mubr.bf16.mxu0 0
  %1781 = vmatmul.mubr.bf16.gmra.mrb[0].mxu0 %v1631
  %v1782 = vpop.f32.mrb[0].mxu0
  %v1783 = vadd.f32 0.0, %v1782
  %v1784 = vpop.f32.mrb[0].mxu0
  %v1785 = vadd.f32 0.0, %v1784
  %v1786 = vpop.f32.mrb[0].mxu0
  %v1787 = vpop.f32.mrb[0].mxu0
  %1788 = vdwg.mxu0
  %1789 = vmatprep.subr.bf16.mxu0 %v1655
  %1790 = vmatpush1.bf16.msra.mxu0 %v1652
  %1791 = vmatprep.subr.bf16.mxu0 0
  %1792 = vmatpush1.bf16.msra.mxu0 0
  %1793 = vmatprep.subr.bf16.mxu0 0
  %1794 = vmatpush1.bf16.msra.mxu0 0
  %1795 = vmatprep.subr.bf16.mxu0 0
  %1796 = vmatpush1.bf16.msra.mxu0 0
  %1797 = vmatprep.subr.bf16.mxu0 0
  %1798 = vmatpush1.bf16.msra.mxu0 0
  %1799 = vmatprep.subr.bf16.mxu0 0
  %1800 = vmatpush1.bf16.msra.mxu0 0
  %1801 = vmatprep.subr.bf16.mxu0 0
  %1802 = vmatpush1.bf16.msra.mxu0 0
  %1803 = vmatprep.subr.bf16.mxu0 0
  %1804 = vmatpush1.bf16.msra.mxu0 0
  %1805 = vmatprep.subr.bf16.mxu0 0
  %1806 = vmatpush1.bf16.msra.mxu0 0
  %1807 = vmatprep.subr.bf16.mxu0 0
  %1808 = vmatpush1.bf16.msra.mxu0 0
  %1809 = vmatprep.subr.bf16.mxu0 0
  %1810 = vmatpush1.bf16.msra.mxu0 0
  %1811 = vmatprep.subr.bf16.mxu0 0
  %1812 = vmatpush1.bf16.msra.mxu0 0
  %1813 = vmatprep.subr.bf16.mxu0 0
  %1814 = vmatpush1.bf16.msra.mxu0 0
  %1815 = vmatprep.subr.bf16.mxu0 0
  %1816 = vmatpush1.bf16.msra.mxu0 0
  %1817 = vmatprep.subr.bf16.mxu0 0
  %1818 = vmatpush1.bf16.msra.mxu0 0
  %1819 = vmatprep.subr.bf16.mxu0 0
  %1820 = vmatpush1.bf16.msra.mxu0 0
  %1821 = vmatprep.mubr.bf16.mxu0 0
  %1822 = vmatmul.mubr.bf16.gmra.mrb[0].mxu0 %v1631
  %v1823 = vpop.f32.mrb[0].mxu0
  %v1824 = vadd.f32 0.0, %v1823
  %v1825 = vpop.f32.mrb[0].mxu0
  %v1826 = vadd.f32 0.0, %v1825
  %v1827 = vpop.f32.mrb[0].mxu0
  %v1828 = vpop.f32.mrb[0].mxu0
  %1829 = vdwg.mxu0
  %1830 = vmatprep.subr.bf16.mxu0 %v1661
  %1831 = vmatpush1.bf16.msra.mxu0 %v1658
  %1832 = vmatprep.subr.bf16.mxu0 0
  %1833 = vmatpush1.bf16.msra.mxu0 0
  %1834 = vmatprep.subr.bf16.mxu0 0
  %1835 = vmatpush1.bf16.msra.mxu0 0
  %1836 = vmatprep.subr.bf16.mxu0 0
  %1837 = vmatpush1.bf16.msra.mxu0 0
  %1838 = vmatprep.subr.bf16.mxu0 0
  %1839 = vmatpush1.bf16.msra.mxu0 0
  %1840 = vmatprep.subr.bf16.mxu0 0
  %1841 = vmatpush1.bf16.msra.mxu0 0
  %1842 = vmatprep.subr.bf16.mxu0 0
  %1843 = vmatpush1.bf16.msra.mxu0 0
  %1844 = vmatprep.subr.bf16.mxu0 0
  %1845 = vmatpush1.bf16.msra.mxu0 0
  %1846 = vmatprep.subr.bf16.mxu0 0
  %1847 = vmatpush1.bf16.msra.mxu0 0
  %1848 = vmatprep.subr.bf16.mxu0 0
  %1849 = vmatpush1.bf16.msra.mxu0 0
  %1850 = vmatprep.subr.bf16.mxu0 0
  %1851 = vmatpush1.bf16.msra.mxu0 0
  %1852 = vmatprep.subr.bf16.mxu0 0
  %1853 = vmatpush1.bf16.msra.mxu0 0
  %1854 = vmatprep.subr.bf16.mxu0 0
  %1855 = vmatpush1.bf16.msra.mxu0 0
  %1856 = vmatprep.subr.bf16.mxu0 0
  %1857 = vmatpush1.bf16.msra.mxu0 0
  %1858 = vmatprep.subr.bf16.mxu0 0
  %1859 = vmatpush1.bf16.msra.mxu0 0
  %1860 = vmatprep.subr.bf16.mxu0 0
  %1861 = vmatpush1.bf16.msra.mxu0 0
  %1862 = vmatprep.mubr.bf16.mxu0 0
  %1863 = vmatmul.mubr.bf16.gmra.mrb[0].mxu0 %v1631
  %v1864 = vpop.f32.mrb[0].mxu0
  %v1865 = vadd.f32 0.0, %v1864
  %v1866 = vpop.f32.mrb[0].mxu0
  %v1867 = vadd.f32 0.0, %v1866
  %v1868 = vpop.f32.mrb[0].mxu0
  %v1869 = vpop.f32.mrb[0].mxu0
  %1870 = vdwg.mxu0
  %1871 = vmatprep.subr.bf16.mxu0 0
  %1872 = vmatpush1.bf16.msra.mxu0 %v1664
  %1873 = vmatprep.subr.bf16.mxu0 0
  %1874 = vmatpush1.bf16.msra.mxu0 0
  %1875 = vmatprep.subr.bf16.mxu0 0
  %1876 = vmatpush1.bf16.msra.mxu0 0
  %1877 = vmatprep.subr.bf16.mxu0 0
  %1878 = vmatpush1.bf16.msra.mxu0 0
  %1879 = vmatprep.subr.bf16.mxu0 0
  %1880 = vmatpush1.bf16.msra.mxu0 0
  %1881 = vmatprep.subr.bf16.mxu0 0
  %1882 = vmatpush1.bf16.msra.mxu0 0
  %1883 = vmatprep.subr.bf16.mxu0 0
  %1884 = vmatpush1.bf16.msra.mxu0 0
  %1885 = vmatprep.subr.bf16.mxu0 0
  %1886 = vmatpush1.bf16.msra.mxu0 0
  %1887 = vmatprep.subr.bf16.mxu0 0
  %1888 = vmatpush1.bf16.msra.mxu0 0
  %1889 = vmatprep.subr.bf16.mxu0 0
  %1890 = vmatpush1.bf16.msra.mxu0 0
  %1891 = vmatprep.subr.bf16.mxu0 0
  %1892 = vmatpush1.bf16.msra.mxu0 0
  %1893 = vmatprep.subr.bf16.mxu0 0
  %1894 = vmatpush1.bf16.msra.mxu0 0
  %1895 = vmatprep.subr.bf16.mxu0 0
  %1896 = vmatpush1.bf16.msra.mxu0 0
  %1897 = vmatprep.subr.bf16.mxu0 0
  %1898 = vmatpush1.bf16.msra.mxu0 0
  %1899 = vmatprep.subr.bf16.mxu0 0
  %1900 = vmatpush1.bf16.msra.mxu0 0
  %1901 = vmatprep.subr.bf16.mxu0 0
  %1902 = vmatpush1.bf16.msra.mxu0 0
  %1903 = vmatprep.mubr.bf16.mxu0 0
  %1904 = vmatmul.mubr.bf16.gmra.mrb[0].mxu0 %v1631
  %v1905 = vpop.f32.mrb[0].mxu0
  %v1906 = vadd.f32 0.0, %v1905
  %v1907 = vpop.f32.mrb[0].mxu0
  %v1908 = vpop.f32.mrb[0].mxu0
  %v1909 = vpop.f32.mrb[0].mxu0
  %1910 = vdwg.mxu0
  %v1911 = vadd.f32 %v1581, %v1701
  %v1912 = vadd.f32 %v1582, %v1703
  %v1913 = vadd.f32 %v1583, %v1742
  %v1914 = vadd.f32 %v1584, %v1744
  %v1915 = vadd.f32 %v1585, %v1783
  %v1916 = vadd.f32 %v1586, %v1785
  %v1917 = vadd.f32 %v1587, %v1824
  %v1918 = vadd.f32 %v1588, %v1826
  %v1919 = vadd.f32 %v1589, %v1865
  %v1920 = vadd.f32 %v1590, %v1867
  %v1921 = vadd.f32 %v1591, %v1906
  %v1922 = vld [vmem:[%s3] sm:$0xf]
  %v1923 = vld [vmem:[#allocation2 + $0x4] sm:$0xff]
  %v1924 = vld [vmem:[#allocation2 + $0xc] sm:$0xff]
  %v1925 = vld [vmem:[#allocation2 + $0x14] sm:$0xff]
  %v1926 = vld [vmem:[#allocation2 + $0x1c] sm:$0xff]
  %v1927 = vld [vmem:[#allocation2 + $0x24] sm:$0xff]
  %v1928 = vld [vmem:[#allocation2 + $0x2c] sm:$0xff]
  %v1935 = vcombine.high %v1923, %v1923
  %v1936 = vcombine.high %v1924, %v1924
  %v1937 = vcombine.high %v1925, %v1925
  %v1938 = vcombine.high %v1926, %v1926
  %v1939 = vcombine.high %v1927, %v1927
  %v1940 = vcombine.high %v1928, %v1928
  %v1947 = vpack.c.bf16 %v1923, %v1923
  %v1948 = vpack.c.bf16 %v1935, %v1935
  %v1949 = vpack.c.bf16 %v1924, %v1924
  %v1950 = vpack.c.bf16 %v1936, %v1936
  %v1951 = vpack.c.bf16 %v1925, %v1925
  %v1952 = vpack.c.bf16 %v1937, %v1937
  %v1953 = vpack.c.bf16 %v1926, %v1926
  %v1954 = vpack.c.bf16 %v1938, %v1938
  %v1955 = vpack.c.bf16 %v1927, %v1927
  %v1956 = vpack.c.bf16 %v1939, %v1939
  %v1957 = vpack.c.bf16 %v1928, %v1928
  %v1958 = vpack.c.bf16 %v1940, %v1940
  %v1960 = vunpack.c.l.b16 %v1922
  %v1961 = vpack.c.b16 %v1960, %v1960
  %1962 = vrot.lane.b32.xlu0 %v1961, 108
  %v1963 = vpop.permute.xlu0 %1962
  %1976 = vrot.lane.b32.xlu0 %v1947, 127
  %v1977 = vpop.permute.xlu0 %1976
  %1978 = vrot.lane.b32.xlu0 %v1948, 127
  %v1979 = vpop.permute.xlu0 %1978
  %1980 = vrot.lane.b32.xlu0 %v1949, 127
  %v1981 = vpop.permute.xlu0 %1980
  %1982 = vrot.lane.b32.xlu0 %v1950, 127
  %v1983 = vpop.permute.xlu0 %1982
  %1984 = vrot.lane.b32.xlu0 %v1951, 127
  %v1985 = vpop.permute.xlu0 %1984
  %1986 = vrot.lane.b32.xlu0 %v1952, 127
  %v1987 = vpop.permute.xlu0 %1986
  %1988 = vrot.lane.b32.xlu0 %v1953, 127
  %v1989 = vpop.permute.xlu0 %1988
  %1990 = vrot.lane.b32.xlu0 %v1954, 127
  %v1991 = vpop.permute.xlu0 %1990
  %1992 = vrot.lane.b32.xlu0 %v1955, 127
  %v1993 = vpop.permute.xlu0 %1992
  %1994 = vrot.lane.b32.xlu0 %v1956, 127
  %v1995 = vpop.permute.xlu0 %1994
  %1996 = vrot.lane.b32.xlu0 %v1957, 127
  %v1997 = vpop.permute.xlu0 %1996
  %1998 = vrot.lane.b32.xlu0 %v1958, 127
  %v1999 = vpop.permute.xlu0 %1998
  %vm2000 = vcmask 1039360
  %v2001 = vsel %vm2000, %v1977, %v1979
  %v2002 = vsel %vm2000, %v1979, %v1981
  %v2003 = vsel %vm2000, %v1981, %v1983
  %v2004 = vsel %vm2000, %v1983, %v1985
  %v2005 = vsel %vm2000, %v1985, %v1987
  %v2006 = vsel %vm2000, %v1987, %v1989
  %v2007 = vsel %vm2000, %v1989, %v1991
  %v2008 = vsel %vm2000, %v1991, %v1993
  %v2009 = vsel %vm2000, %v1993, %v1995
  %v2010 = vsel %vm2000, %v1995, %v1997
  %v2011 = vsel %vm2000, %v1997, %v1999
  %v2013 = vsel %vm228, %v1963, 0
  %v2016 = vsel %vm232, %v2001, 0
  %v2019 = vsel %vm232, %v2002, 0
  %v2022 = vsel %vm232, %v2003, 0
  %v2025 = vsel %vm232, %v2004, 0
  %v2028 = vsel %vm232, %v2005, 0
  %v2031 = vsel %vm232, %v2006, 0
  %v2034 = vsel %vm232, %v2007, 0
  %v2037 = vsel %vm232, %v2008, 0
  %v2040 = vsel %vm232, %v2009, 0
  %v2043 = vsel %vm232, %v2010, 0
  %v2046 = vsel %vm232, %v2011, 0
  %2048 = vmatprep.subr.bf16.mxu0 %v2019
  %2049 = vmatpush1.bf16.msra.mxu0 %v2016
  %2050 = vmatprep.subr.bf16.mxu0 0
  %2051 = vmatpush1.bf16.msra.mxu0 0
  %2052 = vmatprep.subr.bf16.mxu0 0
  %2053 = vmatpush1.bf16.msra.mxu0 0
  %2054 = vmatprep.subr.bf16.mxu0 0
  %2055 = vmatpush1.bf16.msra.mxu0 0
  %2056 = vmatprep.subr.bf16.mxu0 0
  %2057 = vmatpush1.bf16.msra.mxu0 0
  %2058 = vmatprep.subr.bf16.mxu0 0
  %2059 = vmatpush1.bf16.msra.mxu0 0
  %2060 = vmatprep.subr.bf16.mxu0 0
  %2061 = vmatpush1.bf16.msra.mxu0 0
  %2062 = vmatprep.subr.bf16.mxu0 0
  %2063 = vmatpush1.bf16.msra.mxu0 0
  %2064 = vmatprep.subr.bf16.mxu0 0
  %2065 = vmatpush1.bf16.msra.mxu0 0
  %2066 = vmatprep.subr.bf16.mxu0 0
  %2067 = vmatpush1.bf16.msra.mxu0 0
  %2068 = vmatprep.subr.bf16.mxu0 0
  %2069 = vmatpush1.bf16.msra.mxu0 0
  %2070 = vmatprep.subr.bf16.mxu0 0
  %2071 = vmatpush1.bf16.msra.mxu0 0
  %2072 = vmatprep.subr.bf16.mxu0 0
  %2073 = vmatpush1.bf16.msra.mxu0 0
  %2074 = vmatprep.subr.bf16.mxu0 0
  %2075 = vmatpush1.bf16.msra.mxu0 0
  %2076 = vmatprep.subr.bf16.mxu0 0
  %2077 = vmatpush1.bf16.msra.mxu0 0
  %2078 = vmatprep.subr.bf16.mxu0 0
  %2079 = vmatpush1.bf16.msra.mxu0 0
  %2080 = vmatprep.mubr.bf16.mxu0 0
  %2081 = vmatmul.mubr.bf16.gmra.mrb[0].mxu0 %v2013
  %v2082 = vpop.f32.mrb[0].mxu0
  %v2083 = vadd.f32 0.0, %v2082
  %v2084 = vpop.f32.mrb[0].mxu0
  %v2085 = vadd.f32 0.0, %v2084
  %v2086 = vpop.f32.mrb[0].mxu0
  %v2087 = vpop.f32.mrb[0].mxu0
  %2088 = vdwg.mxu0
  %2089 = vmatprep.subr.bf16.mxu0 %v2025
  %2090 = vmatpush1.bf16.msra.mxu0 %v2022
  %2091 = vmatprep.subr.bf16.mxu0 0
  %2092 = vmatpush1.bf16.msra.mxu0 0
  %2093 = vmatprep.subr.bf16.mxu0 0
  %2094 = vmatpush1.bf16.msra.mxu0 0
  %2095 = vmatprep.subr.bf16.mxu0 0
  %2096 = vmatpush1.bf16.msra.mxu0 0
  %2097 = vmatprep.subr.bf16.mxu0 0
  %2098 = vmatpush1.bf16.msra.mxu0 0
  %2099 = vmatprep.subr.bf16.mxu0 0
  %2100 = vmatpush1.bf16.msra.mxu0 0
  %2101 = vmatprep.subr.bf16.mxu0 0
  %2102 = vmatpush1.bf16.msra.mxu0 0
  %2103 = vmatprep.subr.bf16.mxu0 0
  %2104 = vmatpush1.bf16.msra.mxu0 0
  %2105 = vmatprep.subr.bf16.mxu0 0
  %2106 = vmatpush1.bf16.msra.mxu0 0
  %2107 = vmatprep.subr.bf16.mxu0 0
  %2108 = vmatpush1.bf16.msra.mxu0 0
  %2109 = vmatprep.subr.bf16.mxu0 0
  %2110 = vmatpush1.bf16.msra.mxu0 0
  %2111 = vmatprep.subr.bf16.mxu0 0
  %2112 = vmatpush1.bf16.msra.mxu0 0
  %2113 = vmatprep.subr.bf16.mxu0 0
  %2114 = vmatpush1.bf16.msra.mxu0 0
  %2115 = vmatprep.subr.bf16.mxu0 0
  %2116 = vmatpush1.bf16.msra.mxu0 0
  %2117 = vmatprep.subr.bf16.mxu0 0
  %2118 = vmatpush1.bf16.msra.mxu0 0
  %2119 = vmatprep.subr.bf16.mxu0 0
  %2120 = vmatpush1.bf16.msra.mxu0 0
  %2121 = vmatprep.mubr.bf16.mxu0 0
  %2122 = vmatmul.mubr.bf16.gmra.mrb[0].mxu0 %v2013
  %v2123 = vpop.f32.mrb[0].mxu0
  %v2124 = vadd.f32 0.0, %v2123
  %v2125 = vpop.f32.mrb[0].mxu0
  %v2126 = vadd.f32 0.0, %v2125
  %v2127 = vpop.f32.mrb[0].mxu0
  %v2128 = vpop.f32.mrb[0].mxu0
  %2129 = vdwg.mxu0
  %2130 = vmatprep.subr.bf16.mxu0 %v2031
  %2131 = vmatpush1.bf16.msra.mxu0 %v2028
  %2132 = vmatprep.subr.bf16.mxu0 0
  %2133 = vmatpush1.bf16.msra.mxu0 0
  %2134 = vmatprep.subr.bf16.mxu0 0
  %2135 = vmatpush1.bf16.msra.mxu0 0
  %2136 = vmatprep.subr.bf16.mxu0 0
  %2137 = vmatpush1.bf16.msra.mxu0 0
  %2138 = vmatprep.subr.bf16.mxu0 0
  %2139 = vmatpush1.bf16.msra.mxu0 0
  %2140 = vmatprep.subr.bf16.mxu0 0
  %2141 = vmatpush1.bf16.msra.mxu0 0
  %2142 = vmatprep.subr.bf16.mxu0 0
  %2143 = vmatpush1.bf16.msra.mxu0 0
  %2144 = vmatprep.subr.bf16.mxu0 0
  %2145 = vmatpush1.bf16.msra.mxu0 0
  %2146 = vmatprep.subr.bf16.mxu0 0
  %2147 = vmatpush1.bf16.msra.mxu0 0
  %2148 = vmatprep.subr.bf16.mxu0 0
  %2149 = vmatpush1.bf16.msra.mxu0 0
  %2150 = vmatprep.subr.bf16.mxu0 0
  %2151 = vmatpush1.bf16.msra.mxu0 0
  %2152 = vmatprep.subr.bf16.mxu0 0
  %2153 = vmatpush1.bf16.msra.mxu0 0
  %2154 = vmatprep.subr.bf16.mxu0 0
  %2155 = vmatpush1.bf16.msra.mxu0 0
  %2156 = vmatprep.subr.bf16.mxu0 0
  %2157 = vmatpush1.bf16.msra.mxu0 0
  %2158 = vmatprep.subr.bf16.mxu0 0
  %2159 = vmatpush1.bf16.msra.mxu0 0
  %2160 = vmatprep.subr.bf16.mxu0 0
  %2161 = vmatpush1.bf16.msra.mxu0 0
  %2162 = vmatprep.mubr.bf16.mxu0 0
  %2163 = vmatmul.mubr.bf16.gmra.mrb[0].mxu0 %v2013
  %v2164 = vpop.f32.mrb[0].mxu0
  %v2165 = vadd.f32 0.0, %v2164
  %v2166 = vpop.f32.mrb[0].mxu0
  %v2167 = vadd.f32 0.0, %v2166
  %v2168 = vpop.f32.mrb[0].mxu0
  %v2169 = vpop.f32.mrb[0].mxu0
  %2170 = vdwg.mxu0
  %2171 = vmatprep.subr.bf16.mxu0 %v2037
  %2172 = vmatpush1.bf16.msra.mxu0 %v2034
  %2173 = vmatprep.subr.bf16.mxu0 0
  %2174 = vmatpush1.bf16.msra.mxu0 0
  %2175 = vmatprep.subr.bf16.mxu0 0
  %2176 = vmatpush1.bf16.msra.mxu0 0
  %2177 = vmatprep.subr.bf16.mxu0 0
  %2178 = vmatpush1.bf16.msra.mxu0 0
  %2179 = vmatprep.subr.bf16.mxu0 0
  %2180 = vmatpush1.bf16.msra.mxu0 0
  %2181 = vmatprep.subr.bf16.mxu0 0
  %2182 = vmatpush1.bf16.msra.mxu0 0
  %2183 = vmatprep.subr.bf16.mxu0 0
  %2184 = vmatpush1.bf16.msra.mxu0 0
  %2185 = vmatprep.subr.bf16.mxu0 0
  %2186 = vmatpush1.bf16.msra.mxu0 0
  %2187 = vmatprep.subr.bf16.mxu0 0
  %2188 = vmatpush1.bf16.msra.mxu0 0
  %2189 = vmatprep.subr.bf16.mxu0 0
  %2190 = vmatpush1.bf16.msra.mxu0 0
  %2191 = vmatprep.subr.bf16.mxu0 0
  %2192 = vmatpush1.bf16.msra.mxu0 0
  %2193 = vmatprep.subr.bf16.mxu0 0
  %2194 = vmatpush1.bf16.msra.mxu0 0
  %2195 = vmatprep.subr.bf16.mxu0 0
  %2196 = vmatpush1.bf16.msra.mxu0 0
  %2197 = vmatprep.subr.bf16.mxu0 0
  %2198 = vmatpush1.bf16.msra.mxu0 0
  %2199 = vmatprep.subr.bf16.mxu0 0
  %2200 = vmatpush1.bf16.msra.mxu0 0
  %2201 = vmatprep.subr.bf16.mxu0 0
  %2202 = vmatpush1.bf16.msra.mxu0 0
  %2203 = vmatprep.mubr.bf16.mxu0 0
  %2204 = vmatmul.mubr.bf16.gmra.mrb[0].mxu0 %v2013
  %v2205 = vpop.f32.mrb[0].mxu0
  %v2206 = vadd.f32 0.0, %v2205
  %v2207 = vpop.f32.mrb[0].mxu0
  %v2208 = vadd.f32 0.0, %v2207
  %v2209 = vpop.f32.mrb[0].mxu0
  %v2210 = vpop.f32.mrb[0].mxu0
  %2211 = vdwg.mxu0
  %2212 = vmatprep.subr.bf16.mxu0 %v2043
  %2213 = vmatpush1.bf16.msra.mxu0 %v2040
  %2214 = vmatprep.subr.bf16.mxu0 0
  %2215 = vmatpush1.bf16.msra.mxu0 0
  %2216 = vmatprep.subr.bf16.mxu0 0
  %2217 = vmatpush1.bf16.msra.mxu0 0
  %2218 = vmatprep.subr.bf16.mxu0 0
  %2219 = vmatpush1.bf16.msra.mxu0 0
  %2220 = vmatprep.subr.bf16.mxu0 0
  %2221 = vmatpush1.bf16.msra.mxu0 0
  %2222 = vmatprep.subr.bf16.mxu0 0
  %2223 = vmatpush1.bf16.msra.mxu0 0
  %2224 = vmatprep.subr.bf16.mxu0 0
  %2225 = vmatpush1.bf16.msra.mxu0 0
  %2226 = vmatprep.subr.bf16.mxu0 0
  %2227 = vmatpush1.bf16.msra.mxu0 0
  %2228 = vmatprep.subr.bf16.mxu0 0
  %2229 = vmatpush1.bf16.msra.mxu0 0
  %2230 = vmatprep.subr.bf16.mxu0 0
  %2231 = vmatpush1.bf16.msra.mxu0 0
  %2232 = vmatprep.subr.bf16.mxu0 0
  %2233 = vmatpush1.bf16.msra.mxu0 0
  %2234 = vmatprep.subr.bf16.mxu0 0
  %2235 = vmatpush1.bf16.msra.mxu0 0
  %2236 = vmatprep.subr.bf16.mxu0 0
  %2237 = vmatpush1.bf16.msra.mxu0 0
  %2238 = vmatprep.subr.bf16.mxu0 0
  %2239 = vmatpush1.bf16.msra.mxu0 0
  %2240 = vmatprep.subr.bf16.mxu0 0
  %2241 = vmatpush1.bf16.msra.mxu0 0
  %2242 = vmatprep.subr.bf16.mxu0 0
  %2243 = vmatpush1.bf16.msra.mxu0 0
  %2244 = vmatprep.mubr.bf16.mxu0 0
  %2245 = vmatmul.mubr.bf16.gmra.mrb[0].mxu0 %v2013
  %v2246 = vpop.f32.mrb[0].mxu0
  %v2247 = vadd.f32 0.0, %v2246
  %v2248 = vpop.f32.mrb[0].mxu0
  %v2249 = vadd.f32 0.0, %v2248
  %v2250 = vpop.f32.mrb[0].mxu0
  %v2251 = vpop.f32.mrb[0].mxu0
  %2252 = vdwg.mxu0
  %2253 = vmatprep.subr.bf16.mxu0 0
  %2254 = vmatpush1.bf16.msra.mxu0 %v2046
  %2255 = vmatprep.subr.bf16.mxu0 0
  %2256 = vmatpush1.bf16.msra.mxu0 0
  %2257 = vmatprep.subr.bf16.mxu0 0
  %2258 = vmatpush1.bf16.msra.mxu0 0
  %2259 = vmatprep.subr.bf16.mxu0 0
  %2260 = vmatpush1.bf16.msra.mxu0 0
  %2261 = vmatprep.subr.bf16.mxu0 0
  %2262 = vmatpush1.bf16.msra.mxu0 0
  %2263 = vmatprep.subr.bf16.mxu0 0
  %2264 = vmatpush1.bf16.msra.mxu0 0
  %2265 = vmatprep.subr.bf16.mxu0 0
  %2266 = vmatpush1.bf16.msra.mxu0 0
  %2267 = vmatprep.subr.bf16.mxu0 0
  %2268 = vmatpush1.bf16.msra.mxu0 0
  %2269 = vmatprep.subr.bf16.mxu0 0
  %2270 = vmatpush1.bf16.msra.mxu0 0
  %2271 = vmatprep.subr.bf16.mxu0 0
  %2272 = vmatpush1.bf16.msra.mxu0 0
  %2273 = vmatprep.subr.bf16.mxu0 0
  %2274 = vmatpush1.bf16.msra.mxu0 0
  %2275 = vmatprep.subr.bf16.mxu0 0
  %2276 = vmatpush1.bf16.msra.mxu0 0
  %2277 = vmatprep.subr.bf16.mxu0 0
  %2278 = vmatpush1.bf16.msra.mxu0 0
  %2279 = vmatprep.subr.bf16.mxu0 0
  %2280 = vmatpush1.bf16.msra.mxu0 0
  %2281 = vmatprep.subr.bf16.mxu0 0
  %2282 = vmatpush1.bf16.msra.mxu0 0
  %2283 = vmatprep.subr.bf16.mxu0 0
  %2284 = vmatpush1.bf16.msra.mxu0 0
  %2285 = vmatprep.mubr.bf16.mxu0 0
  %2286 = vmatmul.mubr.bf16.gmra.mrb[0].mxu0 %v2013
  %v2287 = vpop.f32.mrb[0].mxu0
  %v2288 = vadd.f32 0.0, %v2287
  %v2289 = vpop.f32.mrb[0].mxu0
  %v2290 = vpop.f32.mrb[0].mxu0
  %v2291 = vpop.f32.mrb[0].mxu0
  %2292 = vdwg.mxu0
  %v2293 = vadd.f32 %v1911, %v2083
  %v2294 = vadd.f32 %v1912, %v2085
  %v2295 = vadd.f32 %v1913, %v2124
  %v2296 = vadd.f32 %v1914, %v2126
  %v2297 = vadd.f32 %v1915, %v2165
  %v2298 = vadd.f32 %v1916, %v2167
  %v2299 = vadd.f32 %v1917, %v2206
  %v2300 = vadd.f32 %v1918, %v2208
  %v2301 = vadd.f32 %v1919, %v2247
  %v2302 = vadd.f32 %v1920, %v2249
  %v2303 = vadd.f32 %v1921, %v2288
  %v2304 = vld [vmem:[%s3] sm:$0xf]
  %v2305 = vld [vmem:[#allocation2 + $0x4] sm:$0xff]
  %v2306 = vld [vmem:[#allocation2 + $0xc] sm:$0xff]
  %v2307 = vld [vmem:[#allocation2 + $0x14] sm:$0xff]
  %v2308 = vld [vmem:[#allocation2 + $0x1c] sm:$0xff]
  %v2309 = vld [vmem:[#allocation2 + $0x24] sm:$0xff]
  %v2310 = vld [vmem:[#allocation2 + $0x2c] sm:$0xff]
  %v2317 = vcombine.high %v2305, %v2305
  %v2318 = vcombine.high %v2306, %v2306
  %v2319 = vcombine.high %v2307, %v2307
  %v2320 = vcombine.high %v2308, %v2308
  %v2321 = vcombine.high %v2309, %v2309
  %v2322 = vcombine.high %v2310, %v2310
  %v2329 = vpack.c.bf16 %v2305, %v2305
  %v2330 = vpack.c.bf16 %v2317, %v2317
  %v2331 = vpack.c.bf16 %v2306, %v2306
  %v2332 = vpack.c.bf16 %v2318, %v2318
  %v2333 = vpack.c.bf16 %v2307, %v2307
  %v2334 = vpack.c.bf16 %v2319, %v2319
  %v2335 = vpack.c.bf16 %v2308, %v2308
  %v2336 = vpack.c.bf16 %v2320, %v2320
  %v2337 = vpack.c.bf16 %v2309, %v2309
  %v2338 = vpack.c.bf16 %v2321, %v2321
  %v2339 = vpack.c.bf16 %v2310, %v2310
  %v2340 = vpack.c.bf16 %v2322, %v2322
  %v2342 = vunpack.c.l.b16 %v2304
  %v2343 = vpack.c.b16 %v2342, %v2342
  %2344 = vrot.lane.b32.xlu0 %v2343, 104
  %v2345 = vpop.permute.xlu0 %2344
  %2358 = vrot.lane.b32.xlu0 %v2329, 97
  %v2359 = vpop.permute.xlu0 %2358
  %2360 = vrot.lane.b32.xlu0 %v2330, 97
  %v2361 = vpop.permute.xlu0 %2360
  %2362 = vrot.lane.b32.xlu0 %v2331, 97
  %v2363 = vpop.permute.xlu0 %2362
  %2364 = vrot.lane.b32.xlu0 %v2332, 97
  %v2365 = vpop.permute.xlu0 %2364
  %2366 = vrot.lane.b32.xlu0 %v2333, 97
  %v2367 = vpop.permute.xlu0 %2366
  %2368 = vrot.lane.b32.xlu0 %v2334, 97
  %v2369 = vpop.permute.xlu0 %2368
  %2370 = vrot.lane.b32.xlu0 %v2335, 97
  %v2371 = vpop.permute.xlu0 %2370
  %2372 = vrot.lane.b32.xlu0 %v2336, 97
  %v2373 = vpop.permute.xlu0 %2372
  %2374 = vrot.lane.b32.xlu0 %v2337, 97
  %v2375 = vpop.permute.xlu0 %2374
  %2376 = vrot.lane.b32.xlu0 %v2338, 97
  %v2377 = vpop.permute.xlu0 %2376
  %2378 = vrot.lane.b32.xlu0 %v2339, 97
  %v2379 = vpop.permute.xlu0 %2378
  %2380 = vrot.lane.b32.xlu0 %v2340, 97
  %v2381 = vpop.permute.xlu0 %2380
  %vm2382 = vcmask 793600
  %v2383 = vsel %vm2382, %v2359, %v2361
  %v2384 = vsel %vm2382, %v2361, %v2363
  %v2385 = vsel %vm2382, %v2363, %v2365
  %v2386 = vsel %vm2382, %v2365, %v2367
  %v2387 = vsel %vm2382, %v2367, %v2369
  %v2388 = vsel %vm2382, %v2369, %v2371
  %v2389 = vsel %vm2382, %v2371, %v2373
  %v2390 = vsel %vm2382, %v2373, %v2375
  %v2391 = vsel %vm2382, %v2375, %v2377
  %v2392 = vsel %vm2382, %v2377, %v2379
  %v2393 = vsel %vm2382, %v2379, %v2381
  %v2395 = vsel %vm228, %v2345, 0
  %v2398 = vsel %vm232, %v2383, 0
  %v2401 = vsel %vm232, %v2384, 0
  %v2404 = vsel %vm232, %v2385, 0
  %v2407 = vsel %vm232, %v2386, 0
  %v2410 = vsel %vm232, %v2387, 0
  %v2413 = vsel %vm232, %v2388, 0
  %v2416 = vsel %vm232, %v2389, 0
  %v2419 = vsel %vm232, %v2390, 0
  %v2422 = vsel %vm232, %v2391, 0
  %v2425 = vsel %vm232, %v2392, 0
  %v2428 = vsel %vm232, %v2393, 0
  %2430 = vmatprep.subr.bf16.mxu0 %v2401
  %2431 = vmatpush1.bf16.msra.mxu0 %v2398
  %2432 = vmatprep.subr.bf16.mxu0 0
  %2433 = vmatpush1.bf16.msra.mxu0 0
  %2434 = vmatprep.subr.bf16.mxu0 0
  %2435 = vmatpush1.bf16.msra.mxu0 0
  %2436 = vmatprep.subr.bf16.mxu0 0
  %2437 = vmatpush1.bf16.msra.mxu0 0
  %2438 = vmatprep.subr.bf16.mxu0 0
  %2439 = vmatpush1.bf16.msra.mxu0 0
  %2440 = vmatprep.subr.bf16.mxu0 0
  %2441 = vmatpush1.bf16.msra.mxu0 0
  %2442 = vmatprep.subr.bf16.mxu0 0
  %2443 = vmatpush1.bf16.msra.mxu0 0
  %2444 = vmatprep.subr.bf16.mxu0 0
  %2445 = vmatpush1.bf16.msra.mxu0 0
  %2446 = vmatprep.subr.bf16.mxu0 0
  %2447 = vmatpush1.bf16.msra.mxu0 0
  %2448 = vmatprep.subr.bf16.mxu0 0
  %2449 = vmatpush1.bf16.msra.mxu0 0
  %2450 = vmatprep.subr.bf16.mxu0 0
  %2451 = vmatpush1.bf16.msra.mxu0 0
  %2452 = vmatprep.subr.bf16.mxu0 0
  %2453 = vmatpush1.bf16.msra.mxu0 0
  %2454 = vmatprep.subr.bf16.mxu0 0
  %2455 = vmatpush1.bf16.msra.mxu0 0
  %2456 = vmatprep.subr.bf16.mxu0 0
  %2457 = vmatpush1.bf16.msra.mxu0 0
  %2458 = vmatprep.subr.bf16.mxu0 0
  %2459 = vmatpush1.bf16.msra.mxu0 0
  %2460 = vmatprep.subr.bf16.mxu0 0
  %2461 = vmatpush1.bf16.msra.mxu0 0
  %2462 = vmatprep.mubr.bf16.mxu0 0
  %2463 = vmatmul.mubr.bf16.gmra.mrb[0].mxu0 %v2395
  %v2464 = vpop.f32.mrb[0].mxu0
  %v2465 = vadd.f32 0.0, %v2464
  %v2466 = vpop.f32.mrb[0].mxu0
  %v2467 = vadd.f32 0.0, %v2466
  %v2468 = vpop.f32.mrb[0].mxu0
  %v2469 = vpop.f32.mrb[0].mxu0
  %2470 = vdwg.mxu0
  %2471 = vmatprep.subr.bf16.mxu0 %v2407
  %2472 = vmatpush1.bf16.msra.mxu0 %v2404
  %2473 = vmatprep.subr.bf16.mxu0 0
  %2474 = vmatpush1.bf16.msra.mxu0 0
  %2475 = vmatprep.subr.bf16.mxu0 0
  %2476 = vmatpush1.bf16.msra.mxu0 0
  %2477 = vmatprep.subr.bf16.mxu0 0
  %2478 = vmatpush1.bf16.msra.mxu0 0
  %2479 = vmatprep.subr.bf16.mxu0 0
  %2480 = vmatpush1.bf16.msra.mxu0 0
  %2481 = vmatprep.subr.bf16.mxu0 0
  %2482 = vmatpush1.bf16.msra.mxu0 0
  %2483 = vmatprep.subr.bf16.mxu0 0
  %2484 = vmatpush1.bf16.msra.mxu0 0
  %2485 = vmatprep.subr.bf16.mxu0 0
  %2486 = vmatpush1.bf16.msra.mxu0 0
  %2487 = vmatprep.subr.bf16.mxu0 0
  %2488 = vmatpush1.bf16.msra.mxu0 0
  %2489 = vmatprep.subr.bf16.mxu0 0
  %2490 = vmatpush1.bf16.msra.mxu0 0
  %2491 = vmatprep.subr.bf16.mxu0 0
  %2492 = vmatpush1.bf16.msra.mxu0 0
  %2493 = vmatprep.subr.bf16.mxu0 0
  %2494 = vmatpush1.bf16.msra.mxu0 0
  %2495 = vmatprep.subr.bf16.mxu0 0
  %2496 = vmatpush1.bf16.msra.mxu0 0
  %2497 = vmatprep.subr.bf16.mxu0 0
  %2498 = vmatpush1.bf16.msra.mxu0 0
  %2499 = vmatprep.subr.bf16.mxu0 0
  %2500 = vmatpush1.bf16.msra.mxu0 0
  %2501 = vmatprep.subr.bf16.mxu0 0
  %2502 = vmatpush1.bf16.msra.mxu0 0
  %2503 = vmatprep.mubr.bf16.mxu0 0
  %2504 = vmatmul.mubr.bf16.gmra.mrb[0].mxu0 %v2395
  %v2505 = vpop.f32.mrb[0].mxu0
  %v2506 = vadd.f32 0.0, %v2505
  %v2507 = vpop.f32.mrb[0].mxu0
  %v2508 = vadd.f32 0.0, %v2507
  %v2509 = vpop.f32.mrb[0].mxu0
  %v2510 = vpop.f32.mrb[0].mxu0
  %2511 = vdwg.mxu0
  %2512 = vmatprep.subr.bf16.mxu0 %v2413
  %2513 = vmatpush1.bf16.msra.mxu0 %v2410
  %2514 = vmatprep.subr.bf16.mxu0 0
  %2515 = vmatpush1.bf16.msra.mxu0 0
  %2516 = vmatprep.subr.bf16.mxu0 0
  %2517 = vmatpush1.bf16.msra.mxu0 0
  %2518 = vmatprep.subr.bf16.mxu0 0
  %2519 = vmatpush1.bf16.msra.mxu0 0
  %2520 = vmatprep.subr.bf16.mxu0 0
  %2521 = vmatpush1.bf16.msra.mxu0 0
  %2522 = vmatprep.subr.bf16.mxu0 0
  %2523 = vmatpush1.bf16.msra.mxu0 0
  %2524 = vmatprep.subr.bf16.mxu0 0
  %2525 = vmatpush1.bf16.msra.mxu0 0
  %2526 = vmatprep.subr.bf16.mxu0 0
  %2527 = vmatpush1.bf16.msra.mxu0 0
  %2528 = vmatprep.subr.bf16.mxu0 0
  %2529 = vmatpush1.bf16.msra.mxu0 0
  %2530 = vmatprep.subr.bf16.mxu0 0
  %2531 = vmatpush1.bf16.msra.mxu0 0
  %2532 = vmatprep.subr.bf16.mxu0 0
  %2533 = vmatpush1.bf16.msra.mxu0 0
  %2534 = vmatprep.subr.bf16.mxu0 0
  %2535 = vmatpush1.bf16.msra.mxu0 0
  %2536 = vmatprep.subr.bf16.mxu0 0
  %2537 = vmatpush1.bf16.msra.mxu0 0
  %2538 = vmatprep.subr.bf16.mxu0 0
  %2539 = vmatpush1.bf16.msra.mxu0 0
  %2540 = vmatprep.subr.bf16.mxu0 0
  %2541 = vmatpush1.bf16.msra.mxu0 0
  %2542 = vmatprep.subr.bf16.mxu0 0
  %2543 = vmatpush1.bf16.msra.mxu0 0
  %2544 = vmatprep.mubr.bf16.mxu0 0
  %2545 = vmatmul.mubr.bf16.gmra.mrb[0].mxu0 %v2395
  %v2546 = vpop.f32.mrb[0].mxu0
  %v2547 = vadd.f32 0.0, %v2546
  %v2548 = vpop.f32.mrb[0].mxu0
  %v2549 = vadd.f32 0.0, %v2548
  %v2550 = vpop.f32.mrb[0].mxu0
  %v2551 = vpop.f32.mrb[0].mxu0
  %2552 = vdwg.mxu0
  %2553 = vmatprep.subr.bf16.mxu0 %v2419
  %2554 = vmatpush1.bf16.msra.mxu0 %v2416
  %2555 = vmatprep.subr.bf16.mxu0 0
  %2556 = vmatpush1.bf16.msra.mxu0 0
  %2557 = vmatprep.subr.bf16.mxu0 0
  %2558 = vmatpush1.bf16.msra.mxu0 0
  %2559 = vmatprep.subr.bf16.mxu0 0
  %2560 = vmatpush1.bf16.msra.mxu0 0
  %2561 = vmatprep.subr.bf16.mxu0 0
  %2562 = vmatpush1.bf16.msra.mxu0 0
  %2563 = vmatprep.subr.bf16.mxu0 0
  %2564 = vmatpush1.bf16.msra.mxu0 0
  %2565 = vmatprep.subr.bf16.mxu0 0
  %2566 = vmatpush1.bf16.msra.mxu0 0
  %2567 = vmatprep.subr.bf16.mxu0 0
  %2568 = vmatpush1.bf16.msra.mxu0 0
  %2569 = vmatprep.subr.bf16.mxu0 0
  %2570 = vmatpush1.bf16.msra.mxu0 0
  %2571 = vmatprep.subr.bf16.mxu0 0
  %2572 = vmatpush1.bf16.msra.mxu0 0
  %2573 = vmatprep.subr.bf16.mxu0 0
  %2574 = vmatpush1.bf16.msra.mxu0 0
  %2575 = vmatprep.subr.bf16.mxu0 0
  %2576 = vmatpush1.bf16.msra.mxu0 0
  %2577 = vmatprep.subr.bf16.mxu0 0
  %2578 = vmatpush1.bf16.msra.mxu0 0
  %2579 = vmatprep.subr.bf16.mxu0 0
  %2580 = vmatpush1.bf16.msra.mxu0 0
  %2581 = vmatprep.subr.bf16.mxu0 0
  %2582 = vmatpush1.bf16.msra.mxu0 0
  %2583 = vmatprep.subr.bf16.mxu0 0
  %2584 = vmatpush1.bf16.msra.mxu0 0
  %2585 = vmatprep.mubr.bf16.mxu0 0
  %2586 = vmatmul.mubr.bf16.gmra.mrb[0].mxu0 %v2395
  %v2587 = vpop.f32.mrb[0].mxu0
  %v2588 = vadd.f32 0.0, %v2587
  %v2589 = vpop.f32.mrb[0].mxu0
  %v2590 = vadd.f32 0.0, %v2589
  %v2591 = vpop.f32.mrb[0].mxu0
  %v2592 = vpop.f32.mrb[0].mxu0
  %2593 = vdwg.mxu0
  %2594 = vmatprep.subr.bf16.mxu0 %v2425
  %2595 = vmatpush1.bf16.msra.mxu0 %v2422
  %2596 = vmatprep.subr.bf16.mxu0 0
  %2597 = vmatpush1.bf16.msra.mxu0 0
  %2598 = vmatprep.subr.bf16.mxu0 0
  %2599 = vmatpush1.bf16.msra.mxu0 0
  %2600 = vmatprep.subr.bf16.mxu0 0
  %2601 = vmatpush1.bf16.msra.mxu0 0
  %2602 = vmatprep.subr.bf16.mxu0 0
  %2603 = vmatpush1.bf16.msra.mxu0 0
  %2604 = vmatprep.subr.bf16.mxu0 0
  %2605 = vmatpush1.bf16.msra.mxu0 0
  %2606 = vmatprep.subr.bf16.mxu0 0
  %2607 = vmatpush1.bf16.msra.mxu0 0
  %2608 = vmatprep.subr.bf16.mxu0 0
  %2609 = vmatpush1.bf16.msra.mxu0 0
  %2610 = vmatprep.subr.bf16.mxu0 0
  %2611 = vmatpush1.bf16.msra.mxu0 0
  %2612 = vmatprep.subr.bf16.mxu0 0
  %2613 = vmatpush1.bf16.msra.mxu0 0
  %2614 = vmatprep.subr.bf16.mxu0 0
  %2615 = vmatpush1.bf16.msra.mxu0 0
  %2616 = vmatprep.subr.bf16.mxu0 0
  %2617 = vmatpush1.bf16.msra.mxu0 0
  %2618 = vmatprep.subr.bf16.mxu0 0
  %2619 = vmatpush1.bf16.msra.mxu0 0
  %2620 = vmatprep.subr.bf16.mxu0 0
  %2621 = vmatpush1.bf16.msra.mxu0 0
  %2622 = vmatprep.subr.bf16.mxu0 0
  %2623 = vmatpush1.bf16.msra.mxu0 0
  %2624 = vmatprep.subr.bf16.mxu0 0
  %2625 = vmatpush1.bf16.msra.mxu0 0
  %2626 = vmatprep.mubr.bf16.mxu0 0
  %2627 = vmatmul.mubr.bf16.gmra.mrb[0].mxu0 %v2395
  %v2628 = vpop.f32.mrb[0].mxu0
  %v2629 = vadd.f32 0.0, %v2628
  %v2630 = vpop.f32.mrb[0].mxu0
  %v2631 = vadd.f32 0.0, %v2630
  %v2632 = vpop.f32.mrb[0].mxu0
  %v2633 = vpop.f32.mrb[0].mxu0
  %2634 = vdwg.mxu0
  %2635 = vmatprep.subr.bf16.mxu0 0
  %2636 = vmatpush1.bf16.msra.mxu0 %v2428
  %2637 = vmatprep.subr.bf16.mxu0 0
  %2638 = vmatpush1.bf16.msra.mxu0 0
  %2639 = vmatprep.subr.bf16.mxu0 0
  %2640 = vmatpush1.bf16.msra.mxu0 0
  %2641 = vmatprep.subr.bf16.mxu0 0
  %2642 = vmatpush1.bf16.msra.mxu0 0
  %2643 = vmatprep.subr.bf16.mxu0 0
  %2644 = vmatpush1.bf16.msra.mxu0 0
  %2645 = vmatprep.subr.bf16.mxu0 0
  %2646 = vmatpush1.bf16.msra.mxu0 0
  %2647 = vmatprep.subr.bf16.mxu0 0
  %2648 = vmatpush1.bf16.msra.mxu0 0
  %2649 = vmatprep.subr.bf16.mxu0 0
  %2650 = vmatpush1.bf16.msra.mxu0 0
  %2651 = vmatprep.subr.bf16.mxu0 0
  %2652 = vmatpush1.bf16.msra.mxu0 0
  %2653 = vmatprep.subr.bf16.mxu0 0
  %2654 = vmatpush1.bf16.msra.mxu0 0
  %2655 = vmatprep.subr.bf16.mxu0 0
  %2656 = vmatpush1.bf16.msra.mxu0 0
  %2657 = vmatprep.subr.bf16.mxu0 0
  %2658 = vmatpush1.bf16.msra.mxu0 0
  %2659 = vmatprep.subr.bf16.mxu0 0
  %2660 = vmatpush1.bf16.msra.mxu0 0
  %2661 = vmatprep.subr.bf16.mxu0 0
  %2662 = vmatpush1.bf16.msra.mxu0 0
  %2663 = vmatprep.subr.bf16.mxu0 0
  %2664 = vmatpush1.bf16.msra.mxu0 0
  %2665 = vmatprep.subr.bf16.mxu0 0
  %2666 = vmatpush1.bf16.msra.mxu0 0
  %2667 = vmatprep.mubr.bf16.mxu0 0
  %2668 = vmatmul.mubr.bf16.gmra.mrb[0].mxu0 %v2395
  %v2669 = vpop.f32.mrb[0].mxu0
  %v2670 = vadd.f32 0.0, %v2669
  %v2671 = vpop.f32.mrb[0].mxu0
  %v2672 = vpop.f32.mrb[0].mxu0
  %v2673 = vpop.f32.mrb[0].mxu0
  %2674 = vdwg.mxu0
  %v2675 = vadd.f32 %v2293, %v2465
  %v2676 = vadd.f32 %v2294, %v2467
  %v2677 = vadd.f32 %v2295, %v2506
  %v2678 = vadd.f32 %v2296, %v2508
  %v2679 = vadd.f32 %v2297, %v2547
  %v2680 = vadd.f32 %v2298, %v2549
  %v2681 = vadd.f32 %v2299, %v2588
  %v2682 = vadd.f32 %v2300, %v2590
  %v2683 = vadd.f32 %v2301, %v2629
  %v2684 = vadd.f32 %v2302, %v2631
  %v2685 = vadd.f32 %v2303, %v2670
  %v2686 = vld [vmem:[%s3] sm:$0xf]
  %v2687 = vld [vmem:[#allocation2 + $0x4] sm:$0xff]
  %v2688 = vld [vmem:[#allocation2 + $0xc] sm:$0xff]
  %v2689 = vld [vmem:[#allocation2 + $0x14] sm:$0xff]
  %v2690 = vld [vmem:[#allocation2 + $0x1c] sm:$0xff]
  %v2691 = vld [vmem:[#allocation2 + $0x24] sm:$0xff]
  %v2692 = vld [vmem:[#allocation2 + $0x2c] sm:$0xff]
  %v2699 = vcombine.high %v2687, %v2687
  %v2700 = vcombine.high %v2688, %v2688
  %v2701 = vcombine.high %v2689, %v2689
  %v2702 = vcombine.high %v2690, %v2690
  %v2703 = vcombine.high %v2691, %v2691
  %v2704 = vcombine.high %v2692, %v2692
  %v2711 = vpack.c.bf16 %v2687, %v2687
  %v2712 = vpack.c.bf16 %v2699, %v2699
  %v2713 = vpack.c.bf16 %v2688, %v2688
  %v2714 = vpack.c.bf16 %v2700, %v2700
  %v2715 = vpack.c.bf16 %v2689, %v2689
  %v2716 = vpack.c.bf16 %v2701, %v2701
  %v2717 = vpack.c.bf16 %v2690, %v2690
  %v2718 = vpack.c.bf16 %v2702, %v2702
  %v2719 = vpack.c.bf16 %v2691, %v2691
  %v2720 = vpack.c.bf16 %v2703, %v2703
  %v2721 = vpack.c.bf16 %v2692, %v2692
  %v2722 = vpack.c.bf16 %v2704, %v2704
  %v2724 = vunpack.c.l.b16 %v2686
  %v2725 = vpack.c.b16 %v2724, %v2724
  %2726 = vrot.lane.b32.xlu0 %v2725, 100
  %v2727 = vpop.permute.xlu0 %2726
  %2740 = vrot.lane.b32.xlu0 %v2711, 96
  %v2741 = vpop.permute.xlu0 %2740
  %2742 = vrot.lane.b32.xlu0 %v2712, 96
  %v2743 = vpop.permute.xlu0 %2742
  %2744 = vrot.lane.b32.xlu0 %v2713, 96
  %v2745 = vpop.permute.xlu0 %2744
  %2746 = vrot.lane.b32.xlu0 %v2714, 96
  %v2747 = vpop.permute.xlu0 %2746
  %2748 = vrot.lane.b32.xlu0 %v2715, 96
  %v2749 = vpop.permute.xlu0 %2748
  %2750 = vrot.lane.b32.xlu0 %v2716, 96
  %v2751 = vpop.permute.xlu0 %2750
  %2752 = vrot.lane.b32.xlu0 %v2717, 96
  %v2753 = vpop.permute.xlu0 %2752
  %2754 = vrot.lane.b32.xlu0 %v2718, 96
  %v2755 = vpop.permute.xlu0 %2754
  %2756 = vrot.lane.b32.xlu0 %v2719, 96
  %v2757 = vpop.permute.xlu0 %2756
  %2758 = vrot.lane.b32.xlu0 %v2720, 96
  %v2759 = vpop.permute.xlu0 %2758
  %2760 = vrot.lane.b32.xlu0 %v2721, 96
  %v2761 = vpop.permute.xlu0 %2760
  %2762 = vrot.lane.b32.xlu0 %v2722, 96
  %v2763 = vpop.permute.xlu0 %2762
  %vm2764 = vcmask 785408
  %v2765 = vsel %vm2764, %v2741, %v2743
  %v2766 = vsel %vm2764, %v2743, %v2745
  %v2767 = vsel %vm2764, %v2745, %v2747
  %v2768 = vsel %vm2764, %v2747, %v2749
  %v2769 = vsel %vm2764, %v2749, %v2751
  %v2770 = vsel %vm2764, %v2751, %v2753
  %v2771 = vsel %vm2764, %v2753, %v2755
  %v2772 = vsel %vm2764, %v2755, %v2757
  %v2773 = vsel %vm2764, %v2757, %v2759
  %v2774 = vsel %vm2764, %v2759, %v2761
  %v2775 = vsel %vm2764, %v2761, %v2763
  %v2777 = vsel %vm228, %v2727, 0
  %v2780 = vsel %vm232, %v2765, 0
  %v2783 = vsel %vm232, %v2766, 0
  %v2786 = vsel %vm232, %v2767, 0
  %v2789 = vsel %vm232, %v2768, 0
  %v2792 = vsel %vm232, %v2769, 0
  %v2795 = vsel %vm232, %v2770, 0
  %v2798 = vsel %vm232, %v2771, 0
  %v2801 = vsel %vm232, %v2772, 0
  %v2804 = vsel %vm232, %v2773, 0
  %v2807 = vsel %vm232, %v2774, 0
  %v2810 = vsel %vm232, %v2775, 0
  %2812 = vmatprep.subr.bf16.mxu0 %v2783
  %2813 = vmatpush1.bf16.msra.mxu0 %v2780
  %2814 = vmatprep.subr.bf16.mxu0 0
  %2815 = vmatpush1.bf16.msra.mxu0 0
  %2816 = vmatprep.subr.bf16.mxu0 0
  %2817 = vmatpush1.bf16.msra.mxu0 0
  %2818 = vmatprep.subr.bf16.mxu0 0
  %2819 = vmatpush1.bf16.msra.mxu0 0
  %2820 = vmatprep.subr.bf16.mxu0 0
  %2821 = vmatpush1.bf16.msra.mxu0 0
  %2822 = vmatprep.subr.bf16.mxu0 0
  %2823 = vmatpush1.bf16.msra.mxu0 0
  %2824 = vmatprep.subr.bf16.mxu0 0
  %2825 = vmatpush1.bf16.msra.mxu0 0
  %2826 = vmatprep.subr.bf16.mxu0 0
  %2827 = vmatpush1.bf16.msra.mxu0 0
  %2828 = vmatprep.subr.bf16.mxu0 0
  %2829 = vmatpush1.bf16.msra.mxu0 0
  %2830 = vmatprep.subr.bf16.mxu0 0
  %2831 = vmatpush1.bf16.msra.mxu0 0
  %2832 = vmatprep.subr.bf16.mxu0 0
  %2833 = vmatpush1.bf16.msra.mxu0 0
  %2834 = vmatprep.subr.bf16.mxu0 0
  %2835 = vmatpush1.bf16.msra.mxu0 0
  %2836 = vmatprep.subr.bf16.mxu0 0
  %2837 = vmatpush1.bf16.msra.mxu0 0
  %2838 = vmatprep.subr.bf16.mxu0 0
  %2839 = vmatpush1.bf16.msra.mxu0 0
  %2840 = vmatprep.subr.bf16.mxu0 0
  %2841 = vmatpush1.bf16.msra.mxu0 0
  %2842 = vmatprep.subr.bf16.mxu0 0
  %2843 = vmatpush1.bf16.msra.mxu0 0
  %2844 = vmatprep.mubr.bf16.mxu0 0
  %2845 = vmatmul.mubr.bf16.gmra.mrb[0].mxu0 %v2777
  %v2846 = vpop.f32.mrb[0].mxu0
  %v2847 = vadd.f32 0.0, %v2846
  %v2848 = vpop.f32.mrb[0].mxu0
  %v2849 = vadd.f32 0.0, %v2848
  %v2850 = vpop.f32.mrb[0].mxu0
  %v2851 = vpop.f32.mrb[0].mxu0
  %2852 = vdwg.mxu0
  %2853 = vmatprep.subr.bf16.mxu0 %v2789
  %2854 = vmatpush1.bf16.msra.mxu0 %v2786
  %2855 = vmatprep.subr.bf16.mxu0 0
  %2856 = vmatpush1.bf16.msra.mxu0 0
  %2857 = vmatprep.subr.bf16.mxu0 0
  %2858 = vmatpush1.bf16.msra.mxu0 0
  %2859 = vmatprep.subr.bf16.mxu0 0
  %2860 = vmatpush1.bf16.msra.mxu0 0
  %2861 = vmatprep.subr.bf16.mxu0 0
  %2862 = vmatpush1.bf16.msra.mxu0 0
  %2863 = vmatprep.subr.bf16.mxu0 0
  %2864 = vmatpush1.bf16.msra.mxu0 0
  %2865 = vmatprep.subr.bf16.mxu0 0
  %2866 = vmatpush1.bf16.msra.mxu0 0
  %2867 = vmatprep.subr.bf16.mxu0 0
  %2868 = vmatpush1.bf16.msra.mxu0 0
  %2869 = vmatprep.subr.bf16.mxu0 0
  %2870 = vmatpush1.bf16.msra.mxu0 0
  %2871 = vmatprep.subr.bf16.mxu0 0
  %2872 = vmatpush1.bf16.msra.mxu0 0
  %2873 = vmatprep.subr.bf16.mxu0 0
  %2874 = vmatpush1.bf16.msra.mxu0 0
  %2875 = vmatprep.subr.bf16.mxu0 0
  %2876 = vmatpush1.bf16.msra.mxu0 0
  %2877 = vmatprep.subr.bf16.mxu0 0
  %2878 = vmatpush1.bf16.msra.mxu0 0
  %2879 = vmatprep.subr.bf16.mxu0 0
  %2880 = vmatpush1.bf16.msra.mxu0 0
  %2881 = vmatprep.subr.bf16.mxu0 0
  %2882 = vmatpush1.bf16.msra.mxu0 0
  %2883 = vmatprep.subr.bf16.mxu0 0
  %2884 = vmatpush1.bf16.msra.mxu0 0
  %2885 = vmatprep.mubr.bf16.mxu0 0
  %2886 = vmatmul.mubr.bf16.gmra.mrb[0].mxu0 %v2777
  %v2887 = vpop.f32.mrb[0].mxu0
  %v2888 = vadd.f32 0.0, %v2887
  %v2889 = vpop.f32.mrb[0].mxu0
  %v2890 = vadd.f32 0.0, %v2889
  %v2891 = vpop.f32.mrb[0].mxu0
  %v2892 = vpop.f32.mrb[0].mxu0
  %2893 = vdwg.mxu0
  %2894 = vmatprep.subr.bf16.mxu0 %v2795
  %2895 = vmatpush1.bf16.msra.mxu0 %v2792
  %2896 = vmatprep.subr.bf16.mxu0 0
  %2897 = vmatpush1.bf16.msra.mxu0 0
  %2898 = vmatprep.subr.bf16.mxu0 0
  %2899 = vmatpush1.bf16.msra.mxu0 0
  %2900 = vmatprep.subr.bf16.mxu0 0
  %2901 = vmatpush1.bf16.msra.mxu0 0
  %2902 = vmatprep.subr.bf16.mxu0 0
  %2903 = vmatpush1.bf16.msra.mxu0 0
  %2904 = vmatprep.subr.bf16.mxu0 0
  %2905 = vmatpush1.bf16.msra.mxu0 0
  %2906 = vmatprep.subr.bf16.mxu0 0
  %2907 = vmatpush1.bf16.msra.mxu0 0
  %2908 = vmatprep.subr.bf16.mxu0 0
  %2909 = vmatpush1.bf16.msra.mxu0 0
  %2910 = vmatprep.subr.bf16.mxu0 0
  %2911 = vmatpush1.bf16.msra.mxu0 0
  %2912 = vmatprep.subr.bf16.mxu0 0
  %2913 = vmatpush1.bf16.msra.mxu0 0
  %2914 = vmatprep.subr.bf16.mxu0 0
  %2915 = vmatpush1.bf16.msra.mxu0 0
  %2916 = vmatprep.subr.bf16.mxu0 0
  %2917 = vmatpush1.bf16.msra.mxu0 0
  %2918 = vmatprep.subr.bf16.mxu0 0
  %2919 = vmatpush1.bf16.msra.mxu0 0
  %2920 = vmatprep.subr.bf16.mxu0 0
  %2921 = vmatpush1.bf16.msra.mxu0 0
  %2922 = vmatprep.subr.bf16.mxu0 0
  %2923 = vmatpush1.bf16.msra.mxu0 0
  %2924 = vmatprep.subr.bf16.mxu0 0
  %2925 = vmatpush1.bf16.msra.mxu0 0
  %2926 = vmatprep.mubr.bf16.mxu0 0
  %2927 = vmatmul.mubr.bf16.gmra.mrb[0].mxu0 %v2777
  %v2928 = vpop.f32.mrb[0].mxu0
  %v2929 = vadd.f32 0.0, %v2928
  %v2930 = vpop.f32.mrb[0].mxu0
  %v2931 = vadd.f32 0.0, %v2930
  %v2932 = vpop.f32.mrb[0].mxu0
  %v2933 = vpop.f32.mrb[0].mxu0
  %2934 = vdwg.mxu0
  %2935 = vmatprep.subr.bf16.mxu0 %v2801
  %2936 = vmatpush1.bf16.msra.mxu0 %v2798
  %2937 = vmatprep.subr.bf16.mxu0 0
  %2938 = vmatpush1.bf16.msra.mxu0 0
  %2939 = vmatprep.subr.bf16.mxu0 0
  %2940 = vmatpush1.bf16.msra.mxu0 0
  %2941 = vmatprep.subr.bf16.mxu0 0
  %2942 = vmatpush1.bf16.msra.mxu0 0
  %2943 = vmatprep.subr.bf16.mxu0 0
  %2944 = vmatpush1.bf16.msra.mxu0 0
  %2945 = vmatprep.subr.bf16.mxu0 0
  %2946 = vmatpush1.bf16.msra.mxu0 0
  %2947 = vmatprep.subr.bf16.mxu0 0
  %2948 = vmatpush1.bf16.msra.mxu0 0
  %2949 = vmatprep.subr.bf16.mxu0 0
  %2950 = vmatpush1.bf16.msra.mxu0 0
  %2951 = vmatprep.subr.bf16.mxu0 0
  %2952 = vmatpush1.bf16.msra.mxu0 0
  %2953 = vmatprep.subr.bf16.mxu0 0
  %2954 = vmatpush1.bf16.msra.mxu0 0
  %2955 = vmatprep.subr.bf16.mxu0 0
  %2956 = vmatpush1.bf16.msra.mxu0 0
  %2957 = vmatprep.subr.bf16.mxu0 0
  %2958 = vmatpush1.bf16.msra.mxu0 0
  %2959 = vmatprep.subr.bf16.mxu0 0
  %2960 = vmatpush1.bf16.msra.mxu0 0
  %2961 = vmatprep.subr.bf16.mxu0 0
  %2962 = vmatpush1.bf16.msra.mxu0 0
  %2963 = vmatprep.subr.bf16.mxu0 0
  %2964 = vmatpush1.bf16.msra.mxu0 0
  %2965 = vmatprep.subr.bf16.mxu0 0
  %2966 = vmatpush1.bf16.msra.mxu0 0
  %2967 = vmatprep.mubr.bf16.mxu0 0
  %2968 = vmatmul.mubr.bf16.gmra.mrb[0].mxu0 %v2777
  %v2969 = vpop.f32.mrb[0].mxu0
  %v2970 = vadd.f32 0.0, %v2969
  %v2971 = vpop.f32.mrb[0].mxu0
  %v2972 = vadd.f32 0.0, %v2971
  %v2973 = vpop.f32.mrb[0].mxu0
  %v2974 = vpop.f32.mrb[0].mxu0
  %2975 = vdwg.mxu0
  %2976 = vmatprep.subr.bf16.mxu0 %v2807
  %2977 = vmatpush1.bf16.msra.mxu0 %v2804
  %2978 = vmatprep.subr.bf16.mxu0 0
  %2979 = vmatpush1.bf16.msra.mxu0 0
  %2980 = vmatprep.subr.bf16.mxu0 0
  %2981 = vmatpush1.bf16.msra.mxu0 0
  %2982 = vmatprep.subr.bf16.mxu0 0
  %2983 = vmatpush1.bf16.msra.mxu0 0
  %2984 = vmatprep.subr.bf16.mxu0 0
  %2985 = vmatpush1.bf16.msra.mxu0 0
  %2986 = vmatprep.subr.bf16.mxu0 0
  %2987 = vmatpush1.bf16.msra.mxu0 0
  %2988 = vmatprep.subr.bf16.mxu0 0
  %2989 = vmatpush1.bf16.msra.mxu0 0
  %2990 = vmatprep.subr.bf16.mxu0 0
  %2991 = vmatpush1.bf16.msra.mxu0 0
  %2992 = vmatprep.subr.bf16.mxu0 0
  %2993 = vmatpush1.bf16.msra.mxu0 0
  %2994 = vmatprep.subr.bf16.mxu0 0
  %2995 = vmatpush1.bf16.msra.mxu0 0
  %2996 = vmatprep.subr.bf16.mxu0 0
  %2997 = vmatpush1.bf16.msra.mxu0 0
  %2998 = vmatprep.subr.bf16.mxu0 0
  %2999 = vmatpush1.bf16.msra.mxu0 0
  %3000 = vmatprep.subr.bf16.mxu0 0
  %3001 = vmatpush1.bf16.msra.mxu0 0
  %3002 = vmatprep.subr.bf16.mxu0 0
  %3003 = vmatpush1.bf16.msra.mxu0 0
  %3004 = vmatprep.subr.bf16.mxu0 0
  %3005 = vmatpush1.bf16.msra.mxu0 0
  %3006 = vmatprep.subr.bf16.mxu0 0
  %3007 = vmatpush1.bf16.msra.mxu0 0
  %3008 = vmatprep.mubr.bf16.mxu0 0
  %3009 = vmatmul.mubr.bf16.gmra.mrb[0].mxu0 %v2777
  %v3010 = vpop.f32.mrb[0].mxu0
  %v3011 = vadd.f32 0.0, %v3010
  %v3012 = vpop.f32.mrb[0].mxu0
  %v3013 = vadd.f32 0.0, %v3012
  %v3014 = vpop.f32.mrb[0].mxu0
  %v3015 = vpop.f32.mrb[0].mxu0
  %3016 = vdwg.mxu0
  %3017 = vmatprep.subr.bf16.mxu0 0
  %3018 = vmatpush1.bf16.msra.mxu0 %v2810
  %3019 = vmatprep.subr.bf16.mxu0 0
  %3020 = vmatpush1.bf16.msra.mxu0 0
  %3021 = vmatprep.subr.bf16.mxu0 0
  %3022 = vmatpush1.bf16.msra.mxu0 0
  %3023 = vmatprep.subr.bf16.mxu0 0
  %3024 = vmatpush1.bf16.msra.mxu0 0
  %3025 = vmatprep.subr.bf16.mxu0 0
  %3026 = vmatpush1.bf16.msra.mxu0 0
  %3027 = vmatprep.subr.bf16.mxu0 0
  %3028 = vmatpush1.bf16.msra.mxu0 0
  %3029 = vmatprep.subr.bf16.mxu0 0
  %3030 = vmatpush1.bf16.msra.mxu0 0
  %3031 = vmatprep.subr.bf16.mxu0 0
  %3032 = vmatpush1.bf16.msra.mxu0 0
  %3033 = vmatprep.subr.bf16.mxu0 0
  %3034 = vmatpush1.bf16.msra.mxu0 0
  %3035 = vmatprep.subr.bf16.mxu0 0
  %3036 = vmatpush1.bf16.msra.mxu0 0
  %3037 = vmatprep.subr.bf16.mxu0 0
  %3038 = vmatpush1.bf16.msra.mxu0 0
  %3039 = vmatprep.subr.bf16.mxu0 0
  %3040 = vmatpush1.bf16.msra.mxu0 0
  %3041 = vmatprep.subr.bf16.mxu0 0
  %3042 = vmatpush1.bf16.msra.mxu0 0
  %3043 = vmatprep.subr.bf16.mxu0 0
  %3044 = vmatpush1.bf16.msra.mxu0 0
  %3045 = vmatprep.subr.bf16.mxu0 0
  %3046 = vmatpush1.bf16.msra.mxu0 0
  %3047 = vmatprep.subr.bf16.mxu0 0
  %3048 = vmatpush1.bf16.msra.mxu0 0
  %3049 = vmatprep.mubr.bf16.mxu0 0
  %3050 = vmatmul.mubr.bf16.gmra.mrb[0].mxu0 %v2777
  %v3051 = vpop.f32.mrb[0].mxu0
  %v3052 = vadd.f32 0.0, %v3051
  %v3053 = vpop.f32.mrb[0].mxu0
  %v3054 = vpop.f32.mrb[0].mxu0
  %v3055 = vpop.f32.mrb[0].mxu0
  %3056 = vdwg.mxu0
  %v3057 = vadd.f32 %v2675, %v2847
  %v3058 = vadd.f32 %v2676, %v2849
  %v3059 = vadd.f32 %v2677, %v2888
  %v3060 = vadd.f32 %v2678, %v2890
  %v3061 = vadd.f32 %v2679, %v2929
  %v3062 = vadd.f32 %v2680, %v2931
  %v3063 = vadd.f32 %v2681, %v2970
  %v3064 = vadd.f32 %v2682, %v2972
  %v3065 = vadd.f32 %v2683, %v3011
  %v3066 = vadd.f32 %v2684, %v3013
  %v3067 = vadd.f32 %v2685, %v3052
  %v3068 = vld [vmem:[%s3] sm:$0xf]
  %v3069 = vld [vmem:[#allocation2 + $0x4] sm:$0xff]
  %v3070 = vld [vmem:[#allocation2 + $0xc] sm:$0xff]
  %v3071 = vld [vmem:[#allocation2 + $0x14] sm:$0xff]
  %v3072 = vld [vmem:[#allocation2 + $0x1c] sm:$0xff]
  %v3073 = vld [vmem:[#allocation2 + $0x24] sm:$0xff]
  %v3074 = vld [vmem:[#allocation2 + $0x2c] sm:$0xff]
  %v3081 = vcombine.high %v3069, %v3069
  %v3082 = vcombine.high %v3070, %v3070
  %v3083 = vcombine.high %v3071, %v3071
  %v3084 = vcombine.high %v3072, %v3072
  %v3085 = vcombine.high %v3073, %v3073
  %v3086 = vcombine.high %v3074, %v3074
  %v3093 = vpack.c.bf16 %v3069, %v3069
  %v3094 = vpack.c.bf16 %v3081, %v3081
  %v3095 = vpack.c.bf16 %v3070, %v3070
  %v3096 = vpack.c.bf16 %v3082, %v3082
  %v3097 = vpack.c.bf16 %v3071, %v3071
  %v3098 = vpack.c.bf16 %v3083, %v3083
  %v3099 = vpack.c.bf16 %v3072, %v3072
  %v3100 = vpack.c.bf16 %v3084, %v3084
  %v3101 = vpack.c.bf16 %v3073, %v3073
  %v3102 = vpack.c.bf16 %v3085, %v3085
  %v3103 = vpack.c.bf16 %v3074, %v3074
  %v3104 = vpack.c.bf16 %v3086, %v3086
  %v3106 = vunpack.c.l.b16 %v3068
  %v3107 = vpack.c.b16 %v3106, %v3106
  %3108 = vrot.lane.b32.xlu0 %v3107, 96
  %v3109 = vpop.permute.xlu0 %3108
  %3122 = vrot.lane.b32.xlu0 %v3093, 95
  %v3123 = vpop.permute.xlu0 %3122
  %3124 = vrot.lane.b32.xlu0 %v3094, 95
  %v3125 = vpop.permute.xlu0 %3124
  %3126 = vrot.lane.b32.xlu0 %v3095, 95
  %v3127 = vpop.permute.xlu0 %3126
  %3128 = vrot.lane.b32.xlu0 %v3096, 95
  %v3129 = vpop.permute.xlu0 %3128
  %3130 = vrot.lane.b32.xlu0 %v3097, 95
  %v3131 = vpop.permute.xlu0 %3130
  %3132 = vrot.lane.b32.xlu0 %v3098, 95
  %v3133 = vpop.permute.xlu0 %3132
  %3134 = vrot.lane.b32.xlu0 %v3099, 95
  %v3135 = vpop.permute.xlu0 %3134
  %3136 = vrot.lane.b32.xlu0 %v3100, 95
  %v3137 = vpop.permute.xlu0 %3136
  %3138 = vrot.lane.b32.xlu0 %v3101, 95
  %v3139 = vpop.permute.xlu0 %3138
  %3140 = vrot.lane.b32.xlu0 %v3102, 95
  %v3141 = vpop.permute.xlu0 %3140
  %3142 = vrot.lane.b32.xlu0 %v3103, 95
  %v3143 = vpop.permute.xlu0 %3142
  %3144 = vrot.lane.b32.xlu0 %v3104, 95
  %v3145 = vpop.permute.xlu0 %3144
  %vm3146 = vcmask 777216
  %v3147 = vsel %vm3146, %v3123, %v3125
  %v3148 = vsel %vm3146, %v3125, %v3127
  %v3149 = vsel %vm3146, %v3127, %v3129
  %v3150 = vsel %vm3146, %v3129, %v3131
  %v3151 = vsel %vm3146, %v3131, %v3133
  %v3152 = vsel %vm3146, %v3133, %v3135
  %v3153 = vsel %vm3146, %v3135, %v3137
  %v3154 = vsel %vm3146, %v3137, %v3139
  %v3155 = vsel %vm3146, %v3139, %v3141
  %v3156 = vsel %vm3146, %v3141, %v3143
  %v3157 = vsel %vm3146, %v3143, %v3145
  %v3159 = vsel %vm228, %v3109, 0
  %v3162 = vsel %vm232, %v3147, 0
  %v3165 = vsel %vm232, %v3148, 0
  %v3168 = vsel %vm232, %v3149, 0
  %v3171 = vsel %vm232, %v3150, 0
  %v3174 = vsel %vm232, %v3151, 0
  %v3177 = vsel %vm232, %v3152, 0
  %v3180 = vsel %vm232, %v3153, 0
  %v3183 = vsel %vm232, %v3154, 0
  %v3186 = vsel %vm232, %v3155, 0
  %v3189 = vsel %vm232, %v3156, 0
  %v3192 = vsel %vm232, %v3157, 0
  %3194 = vmatprep.subr.bf16.mxu0 %v3165
  %3195 = vmatpush1.bf16.msra.mxu0 %v3162
  %3196 = vmatprep.subr.bf16.mxu0 0
  %3197 = vmatpush1.bf16.msra.mxu0 0
  %3198 = vmatprep.subr.bf16.mxu0 0
  %3199 = vmatpush1.bf16.msra.mxu0 0
  %3200 = vmatprep.subr.bf16.mxu0 0
  %3201 = vmatpush1.bf16.msra.mxu0 0
  %3202 = vmatprep.subr.bf16.mxu0 0
  %3203 = vmatpush1.bf16.msra.mxu0 0
  %3204 = vmatprep.subr.bf16.mxu0 0
  %3205 = vmatpush1.bf16.msra.mxu0 0
  %3206 = vmatprep.subr.bf16.mxu0 0
  %3207 = vmatpush1.bf16.msra.mxu0 0
  %3208 = vmatprep.subr.bf16.mxu0 0
  %3209 = vmatpush1.bf16.msra.mxu0 0
  %3210 = vmatprep.subr.bf16.mxu0 0
  %3211 = vmatpush1.bf16.msra.mxu0 0
  %3212 = vmatprep.subr.bf16.mxu0 0
  %3213 = vmatpush1.bf16.msra.mxu0 0
  %3214 = vmatprep.subr.bf16.mxu0 0
  %3215 = vmatpush1.bf16.msra.mxu0 0
  %3216 = vmatprep.subr.bf16.mxu0 0
  %3217 = vmatpush1.bf16.msra.mxu0 0
  %3218 = vmatprep.subr.bf16.mxu0 0
  %3219 = vmatpush1.bf16.msra.mxu0 0
  %3220 = vmatprep.subr.bf16.mxu0 0
  %3221 = vmatpush1.bf16.msra.mxu0 0
  %3222 = vmatprep.subr.bf16.mxu0 0
  %3223 = vmatpush1.bf16.msra.mxu0 0
  %3224 = vmatprep.subr.bf16.mxu0 0
  %3225 = vmatpush1.bf16.msra.mxu0 0
  %3226 = vmatprep.mubr.bf16.mxu0 0
  %3227 = vmatmul.mubr.bf16.gmra.mrb[0].mxu0 %v3159
  %v3228 = vpop.f32.mrb[0].mxu0
  %v3229 = vadd.f32 0.0, %v3228
  %v3230 = vpop.f32.mrb[0].mxu0
  %v3231 = vadd.f32 0.0, %v3230
  %v3232 = vpop.f32.mrb[0].mxu0
  %v3233 = vpop.f32.mrb[0].mxu0
  %3234 = vdwg.mxu0
  %3235 = vmatprep.subr.bf16.mxu0 %v3171
  %3236 = vmatpush1.bf16.msra.mxu0 %v3168
  %3237 = vmatprep.subr.bf16.mxu0 0
  %3238 = vmatpush1.bf16.msra.mxu0 0
  %3239 = vmatprep.subr.bf16.mxu0 0
  %3240 = vmatpush1.bf16.msra.mxu0 0
  %3241 = vmatprep.subr.bf16.mxu0 0
  %3242 = vmatpush1.bf16.msra.mxu0 0
  %3243 = vmatprep.subr.bf16.mxu0 0
  %3244 = vmatpush1.bf16.msra.mxu0 0
  %3245 = vmatprep.subr.bf16.mxu0 0
  %3246 = vmatpush1.bf16.msra.mxu0 0
  %3247 = vmatprep.subr.bf16.mxu0 0
  %3248 = vmatpush1.bf16.msra.mxu0 0
  %3249 = vmatprep.subr.bf16.mxu0 0
  %3250 = vmatpush1.bf16.msra.mxu0 0
  %3251 = vmatprep.subr.bf16.mxu0 0
  %3252 = vmatpush1.bf16.msra.mxu0 0
  %3253 = vmatprep.subr.bf16.mxu0 0
  %3254 = vmatpush1.bf16.msra.mxu0 0
  %3255 = vmatprep.subr.bf16.mxu0 0
  %3256 = vmatpush1.bf16.msra.mxu0 0
  %3257 = vmatprep.subr.bf16.mxu0 0
  %3258 = vmatpush1.bf16.msra.mxu0 0
  %3259 = vmatprep.subr.bf16.mxu0 0
  %3260 = vmatpush1.bf16.msra.mxu0 0
  %3261 = vmatprep.subr.bf16.mxu0 0
  %3262 = vmatpush1.bf16.msra.mxu0 0
  %3263 = vmatprep.subr.bf16.mxu0 0
  %3264 = vmatpush1.bf16.msra.mxu0 0
  %3265 = vmatprep.subr.bf16.mxu0 0
  %3266 = vmatpush1.bf16.msra.mxu0 0
  %3267 = vmatprep.mubr.bf16.mxu0 0
  %3268 = vmatmul.mubr.bf16.gmra.mrb[0].mxu0 %v3159
  %v3269 = vpop.f32.mrb[0].mxu0
  %v3270 = vadd.f32 0.0, %v3269
  %v3271 = vpop.f32.mrb[0].mxu0
  %v3272 = vadd.f32 0.0, %v3271
  %v3273 = vpop.f32.mrb[0].mxu0
  %v3274 = vpop.f32.mrb[0].mxu0
  %3275 = vdwg.mxu0
  %3276 = vmatprep.subr.bf16.mxu0 %v3177
  %3277 = vmatpush1.bf16.msra.mxu0 %v3174
  %3278 = vmatprep.subr.bf16.mxu0 0
  %3279 = vmatpush1.bf16.msra.mxu0 0
  %3280 = vmatprep.subr.bf16.mxu0 0
  %3281 = vmatpush1.bf16.msra.mxu0 0
  %3282 = vmatprep.subr.bf16.mxu0 0
  %3283 = vmatpush1.bf16.msra.mxu0 0
  %3284 = vmatprep.subr.bf16.mxu0 0
  %3285 = vmatpush1.bf16.msra.mxu0 0
  %3286 = vmatprep.subr.bf16.mxu0 0
  %3287 = vmatpush1.bf16.msra.mxu0 0
  %3288 = vmatprep.subr.bf16.mxu0 0
  %3289 = vmatpush1.bf16.msra.mxu0 0
  %3290 = vmatprep.subr.bf16.mxu0 0
  %3291 = vmatpush1.bf16.msra.mxu0 0
  %3292 = vmatprep.subr.bf16.mxu0 0
  %3293 = vmatpush1.bf16.msra.mxu0 0
  %3294 = vmatprep.subr.bf16.mxu0 0
  %3295 = vmatpush1.bf16.msra.mxu0 0
  %3296 = vmatprep.subr.bf16.mxu0 0
  %3297 = vmatpush1.bf16.msra.mxu0 0
  %3298 = vmatprep.subr.bf16.mxu0 0
  %3299 = vmatpush1.bf16.msra.mxu0 0
  %3300 = vmatprep.subr.bf16.mxu0 0
  %3301 = vmatpush1.bf16.msra.mxu0 0
  %3302 = vmatprep.subr.bf16.mxu0 0
  %3303 = vmatpush1.bf16.msra.mxu0 0
  %3304 = vmatprep.subr.bf16.mxu0 0
  %3305 = vmatpush1.bf16.msra.mxu0 0
  %3306 = vmatprep.subr.bf16.mxu0 0
  %3307 = vmatpush1.bf16.msra.mxu0 0
  %3308 = vmatprep.mubr.bf16.mxu0 0
  %3309 = vmatmul.mubr.bf16.gmra.mrb[0].mxu0 %v3159
  %v3310 = vpop.f32.mrb[0].mxu0
  %v3311 = vadd.f32 0.0, %v3310
  %v3312 = vpop.f32.mrb[0].mxu0
  %v3313 = vadd.f32 0.0, %v3312
  %v3314 = vpop.f32.mrb[0].mxu0
  %v3315 = vpop.f32.mrb[0].mxu0
  %3316 = vdwg.mxu0
  %3317 = vmatprep.subr.bf16.mxu0 %v3183
  %3318 = vmatpush1.bf16.msra.mxu0 %v3180
  %3319 = vmatprep.subr.bf16.mxu0 0
  %3320 = vmatpush1.bf16.msra.mxu0 0
  %3321 = vmatprep.subr.bf16.mxu0 0
  %3322 = vmatpush1.bf16.msra.mxu0 0
  %3323 = vmatprep.subr.bf16.mxu0 0
  %3324 = vmatpush1.bf16.msra.mxu0 0
  %3325 = vmatprep.subr.bf16.mxu0 0
  %3326 = vmatpush1.bf16.msra.mxu0 0
  %3327 = vmatprep.subr.bf16.mxu0 0
  %3328 = vmatpush1.bf16.msra.mxu0 0
  %3329 = vmatprep.subr.bf16.mxu0 0
  %3330 = vmatpush1.bf16.msra.mxu0 0
  %3331 = vmatprep.subr.bf16.mxu0 0
  %3332 = vmatpush1.bf16.msra.mxu0 0
  %3333 = vmatprep.subr.bf16.mxu0 0
  %3334 = vmatpush1.bf16.msra.mxu0 0
  %3335 = vmatprep.subr.bf16.mxu0 0
  %3336 = vmatpush1.bf16.msra.mxu0 0
  %3337 = vmatprep.subr.bf16.mxu0 0
  %3338 = vmatpush1.bf16.msra.mxu0 0
  %3339 = vmatprep.subr.bf16.mxu0 0
  %3340 = vmatpush1.bf16.msra.mxu0 0
  %3341 = vmatprep.subr.bf16.mxu0 0
  %3342 = vmatpush1.bf16.msra.mxu0 0
  %3343 = vmatprep.subr.bf16.mxu0 0
  %3344 = vmatpush1.bf16.msra.mxu0 0
  %3345 = vmatprep.subr.bf16.mxu0 0
  %3346 = vmatpush1.bf16.msra.mxu0 0
  %3347 = vmatprep.subr.bf16.mxu0 0
  %3348 = vmatpush1.bf16.msra.mxu0 0
  %3349 = vmatprep.mubr.bf16.mxu0 0
  %3350 = vmatmul.mubr.bf16.gmra.mrb[0].mxu0 %v3159
  %v3351 = vpop.f32.mrb[0].mxu0
  %v3352 = vadd.f32 0.0, %v3351
  %v3353 = vpop.f32.mrb[0].mxu0
  %v3354 = vadd.f32 0.0, %v3353
  %v3355 = vpop.f32.mrb[0].mxu0
  %v3356 = vpop.f32.mrb[0].mxu0
  %3357 = vdwg.mxu0
  %3358 = vmatprep.subr.bf16.mxu0 %v3189
  %3359 = vmatpush1.bf16.msra.mxu0 %v3186
  %3360 = vmatprep.subr.bf16.mxu0 0
  %3361 = vmatpush1.bf16.msra.mxu0 0
  %3362 = vmatprep.subr.bf16.mxu0 0
  %3363 = vmatpush1.bf16.msra.mxu0 0
  %3364 = vmatprep.subr.bf16.mxu0 0
  %3365 = vmatpush1.bf16.msra.mxu0 0
  %3366 = vmatprep.subr.bf16.mxu0 0
  %3367 = vmatpush1.bf16.msra.mxu0 0
  %3368 = vmatprep.subr.bf16.mxu0 0
  %3369 = vmatpush1.bf16.msra.mxu0 0
  %3370 = vmatprep.subr.bf16.mxu0 0
  %3371 = vmatpush1.bf16.msra.mxu0 0
  %3372 = vmatprep.subr.bf16.mxu0 0
  %3373 = vmatpush1.bf16.msra.mxu0 0
  %3374 = vmatprep.subr.bf16.mxu0 0
  %3375 = vmatpush1.bf16.msra.mxu0 0
  %3376 = vmatprep.subr.bf16.mxu0 0
  %3377 = vmatpush1.bf16.msra.mxu0 0
  %3378 = vmatprep.subr.bf16.mxu0 0
  %3379 = vmatpush1.bf16.msra.mxu0 0
  %3380 = vmatprep.subr.bf16.mxu0 0
  %3381 = vmatpush1.bf16.msra.mxu0 0
  %3382 = vmatprep.subr.bf16.mxu0 0
  %3383 = vmatpush1.bf16.msra.mxu0 0
  %3384 = vmatprep.subr.bf16.mxu0 0
  %3385 = vmatpush1.bf16.msra.mxu0 0
  %3386 = vmatprep.subr.bf16.mxu0 0
  %3387 = vmatpush1.bf16.msra.mxu0 0
  %3388 = vmatprep.subr.bf16.mxu0 0
  %3389 = vmatpush1.bf16.msra.mxu0 0
  %3390 = vmatprep.mubr.bf16.mxu0 0
  %3391 = vmatmul.mubr.bf16.gmra.mrb[0].mxu0 %v3159
  %v3392 = vpop.f32.mrb[0].mxu0
  %v3393 = vadd.f32 0.0, %v3392
  %v3394 = vpop.f32.mrb[0].mxu0
  %v3395 = vadd.f32 0.0, %v3394
  %v3396 = vpop.f32.mrb[0].mxu0
  %v3397 = vpop.f32.mrb[0].mxu0
  %3398 = vdwg.mxu0
  %3399 = vmatprep.subr.bf16.mxu0 0
  %3400 = vmatpush1.bf16.msra.mxu0 %v3192
  %3401 = vmatprep.subr.bf16.mxu0 0
  %3402 = vmatpush1.bf16.msra.mxu0 0
  %3403 = vmatprep.subr.bf16.mxu0 0
  %3404 = vmatpush1.bf16.msra.mxu0 0
  %3405 = vmatprep.subr.bf16.mxu0 0
  %3406 = vmatpush1.bf16.msra.mxu0 0
  %3407 = vmatprep.subr.bf16.mxu0 0
  %3408 = vmatpush1.bf16.msra.mxu0 0
  %3409 = vmatprep.subr.bf16.mxu0 0
  %3410 = vmatpush1.bf16.msra.mxu0 0
  %3411 = vmatprep.subr.bf16.mxu0 0
  %3412 = vmatpush1.bf16.msra.mxu0 0
  %3413 = vmatprep.subr.bf16.mxu0 0
  %3414 = vmatpush1.bf16.msra.mxu0 0
  %3415 = vmatprep.subr.bf16.mxu0 0
  %3416 = vmatpush1.bf16.msra.mxu0 0
  %3417 = vmatprep.subr.bf16.mxu0 0
  %3418 = vmatpush1.bf16.msra.mxu0 0
  %3419 = vmatprep.subr.bf16.mxu0 0
  %3420 = vmatpush1.bf16.msra.mxu0 0
  %3421 = vmatprep.subr.bf16.mxu0 0
  %3422 = vmatpush1.bf16.msra.mxu0 0
  %3423 = vmatprep.subr.bf16.mxu0 0
  %3424 = vmatpush1.bf16.msra.mxu0 0
  %3425 = vmatprep.subr.bf16.mxu0 0
  %3426 = vmatpush1.bf16.msra.mxu0 0
  %3427 = vmatprep.subr.bf16.mxu0 0
  %3428 = vmatpush1.bf16.msra.mxu0 0
  %3429 = vmatprep.subr.bf16.mxu0 0
  %3430 = vmatpush1.bf16.msra.mxu0 0
  %3431 = vmatprep.mubr.bf16.mxu0 0
  %3432 = vmatmul.mubr.bf16.gmra.mrb[0].mxu0 %v3159
  %v3433 = vpop.f32.mrb[0].mxu0
  %v3434 = vadd.f32 0.0, %v3433
  %v3435 = vpop.f32.mrb[0].mxu0
  %v3436 = vpop.f32.mrb[0].mxu0
  %v3437 = vpop.f32.mrb[0].mxu0
  %3438 = vdwg.mxu0
  %v3439 = vadd.f32 %v3057, %v3229
  %v3440 = vadd.f32 %v3058, %v3231
  %v3441 = vadd.f32 %v3059, %v3270
  %v3442 = vadd.f32 %v3060, %v3272
  %v3443 = vadd.f32 %v3061, %v3311
  %v3444 = vadd.f32 %v3062, %v3313
  %v3445 = vadd.f32 %v3063, %v3352
  %v3446 = vadd.f32 %v3064, %v3354
  %v3447 = vadd.f32 %v3065, %v3393
  %v3448 = vadd.f32 %v3066, %v3395
  %v3449 = vadd.f32 %v3067, %v3434
  %v3450 = vld [vmem:[%s3 + $0x4] sm:$0xf]
  %3452 = vset.pattern.permute.xlu0 0
  %3453 = vperm.xlu0 %3452, %v20
  %v3454 = vpop.permute.xlu0 %3453
  %v3456 = vadd.f32 %v3439, %v3454
  %v3457 = vadd.f32 %v3440, %v3454
  %v3458 = vadd.f32 %v3441, %v3454
  %v3459 = vadd.f32 %v3442, %v3454
  %v3460 = vadd.f32 %v3443, %v3454
  %v3461 = vadd.f32 %v3444, %v3454
  %v3462 = vadd.f32 %v3445, %v3454
  %v3463 = vadd.f32 %v3446, %v3454
  %v3464 = vadd.f32 %v3447, %v3454
  %v3465 = vadd.f32 %v3448, %v3454
  %v3466 = vadd.f32 %v3449, %v3454
  %vm3467 = vcmp.ge.f32.partialorder %v3456, 0.0
  %vm3468 = vcmp.ge.f32.partialorder %v3457, 0.0
  %vm3469 = vcmp.ge.f32.partialorder %v3458, 0.0
  %vm3470 = vcmp.ge.f32.partialorder %v3459, 0.0
  %vm3471 = vcmp.ge.f32.partialorder %v3460, 0.0
  %vm3472 = vcmp.ge.f32.partialorder %v3461, 0.0
  %vm3473 = vcmp.ge.f32.partialorder %v3462, 0.0
  %vm3474 = vcmp.ge.f32.partialorder %v3463, 0.0
  %vm3475 = vcmp.ge.f32.partialorder %v3464, 0.0
  %vm3476 = vcmp.ge.f32.partialorder %v3465, 0.0
  %vm3477 = vcmp.ge.f32.partialorder %v3466, 0.0
  %3479 = vset.pattern.permute.xlu0 0
  %3480 = vperm.xlu0 %3479, %v21
  %v3481 = vpop.permute.xlu0 %3480
  %v3483 = vmul.f32 %v3456, %v3481
  %v3484 = vmul.f32 %v3457, %v3481
  %v3485 = vmul.f32 %v3458, %v3481
  %v3486 = vmul.f32 %v3459, %v3481
  %v3487 = vmul.f32 %v3460, %v3481
  %v3488 = vmul.f32 %v3461, %v3481
  %v3489 = vmul.f32 %v3462, %v3481
  %v3490 = vmul.f32 %v3463, %v3481
  %v3491 = vmul.f32 %v3464, %v3481
  %v3492 = vmul.f32 %v3465, %v3481
  %v3493 = vmul.f32 %v3466, %v3481
  %v3494 = vsel %vm3467, %v3456, %v3483
  %v3495 = vsel %vm3468, %v3457, %v3484
  %v3496 = vsel %vm3469, %v3458, %v3485
  %v3497 = vsel %vm3470, %v3459, %v3486
  %v3498 = vsel %vm3471, %v3460, %v3487
  %v3499 = vsel %vm3472, %v3461, %v3488
  %v3500 = vsel %vm3473, %v3462, %v3489
  %v3501 = vsel %vm3474, %v3463, %v3490
  %v3502 = vsel %vm3475, %v3464, %v3491
  %v3503 = vsel %vm3476, %v3465, %v3492
  %v3504 = vsel %vm3477, %v3466, %v3493
  %v3515 = vmul.f32 %v3494, %v74
  %v3516 = vmul.f32 %v3495, %v78
  %v3517 = vmul.f32 %v3496, %v82
  %v3518 = vmul.f32 %v3497, %v86
  %v3519 = vmul.f32 %v3498, %v90
  %v3520 = vmul.f32 %v3499, %v94
  %v3521 = vmul.f32 %v3500, %v98
  %v3522 = vmul.f32 %v3501, %v102
  %v3523 = vmul.f32 %v3502, %v106
  %v3524 = vmul.f32 %v3503, %v110
  %v3525 = vmul.f32 %v3504, %v114
  %3526 = vst [vmem:[#allocation3] sm:$0xff] 0.0
  %3527 = vst [vmem:[#allocation3 + $0x60] sm:$0xff] 0.0
  %3528 = vst [vmem:[#allocation3 + $0x8] sm:$0xff] %v3515
  %3529 = vst [vmem:[#allocation3 + $0x10] sm:$0xff] %v3516
  %3530 = vst [vmem:[#allocation3 + $0x18] sm:$0xff] %v3517
  %3531 = vst [vmem:[#allocation3 + $0x20] sm:$0xff] %v3518
  %3532 = vst [vmem:[#allocation3 + $0x28] sm:$0xff] %v3519
  %3533 = vst [vmem:[#allocation3 + $0x30] sm:$0xff] %v3520
  %3534 = vst [vmem:[#allocation3 + $0x38] sm:$0xff] %v3521
  %3535 = vst [vmem:[#allocation3 + $0x40] sm:$0xff] %v3522
  %3536 = vst [vmem:[#allocation3 + $0x48] sm:$0xff] %v3523
  %3537 = vst [vmem:[#allocation3 + $0x50] sm:$0xff] %v3524
  %3538 = vst [vmem:[#allocation3 + $0x58] sm:$0xff] %v3525
  %3540 = vset.pattern.permute.xlu0 0
  %3541 = vperm.xlu0 %3540, %v22
  %v3542 = vpop.permute.xlu0 %3541
  %v3545 = vunpack.c.l.b16 %v3450
  %v3546 = vpack.c.b16 %v3545, %v3545
  %3547 = vrot.lane.b32.xlu0 %v3546, 112
  %v3548 = vpop.permute.xlu0 %3547
  %v3550 = vsel %vm228, %v3548, 0
  %3552 = vmatprep.subr.bf16.mxu0 %v1637
  %3553 = vmatpush1.bf16.msra.mxu0 %v1634
  %3554 = vmatprep.subr.bf16.mxu0 0
  %3555 = vmatpush1.bf16.msra.mxu0 0
  %3556 = vmatprep.subr.bf16.mxu0 0
  %3557 = vmatpush1.bf16.msra.mxu0 0
  %3558 = vmatprep.subr.bf16.mxu0 0
  %3559 = vmatpush1.bf16.msra.mxu0 0
  %3560 = vmatprep.subr.bf16.mxu0 0
  %3561 = vmatpush1.bf16.msra.mxu0 0
  %3562 = vmatprep.subr.bf16.mxu0 0
  %3563 = vmatpush1.bf16.msra.mxu0 0
  %3564 = vmatprep.subr.bf16.mxu0 0
  %3565 = vmatpush1.bf16.msra.mxu0 0
  %3566 = vmatprep.subr.bf16.mxu0 0
  %3567 = vmatpush1.bf16.msra.mxu0 0
  %3568 = vmatprep.subr.bf16.mxu0 0
  %3569 = vmatpush1.bf16.msra.mxu0 0
  %3570 = vmatprep.subr.bf16.mxu0 0
  %3571 = vmatpush1.bf16.msra.mxu0 0
  %3572 = vmatprep.subr.bf16.mxu0 0
  %3573 = vmatpush1.bf16.msra.mxu0 0
  %3574 = vmatprep.subr.bf16.mxu0 0
  %3575 = vmatpush1.bf16.msra.mxu0 0
  %3576 = vmatprep.subr.bf16.mxu0 0
  %3577 = vmatpush1.bf16.msra.mxu0 0
  %3578 = vmatprep.subr.bf16.mxu0 0
  %3579 = vmatpush1.bf16.msra.mxu0 0
  %3580 = vmatprep.subr.bf16.mxu0 0
  %3581 = vmatpush1.bf16.msra.mxu0 0
  %3582 = vmatprep.subr.bf16.mxu0 0
  %3583 = vmatpush1.bf16.msra.mxu0 0
  %3584 = vmatprep.mubr.bf16.mxu0 0
  %3585 = vmatmul.mubr.bf16.gmra.mrb[0].mxu0 %v3550
  %v3586 = vpop.f32.mrb[0].mxu0
  %v3587 = vadd.f32 %v3542, %v3586
  %v3588 = vpop.f32.mrb[0].mxu0
  %v3589 = vadd.f32 %v3542, %v3588
  %v3590 = vpop.f32.mrb[0].mxu0
  %v3591 = vpop.f32.mrb[0].mxu0
  %3592 = vdwg.mxu0
  %3593 = vmatprep.subr.bf16.mxu0 %v1643
  %3594 = vmatpush1.bf16.msra.mxu0 %v1640
  %3595 = vmatprep.subr.bf16.mxu0 0
  %3596 = vmatpush1.bf16.msra.mxu0 0
  %3597 = vmatprep.subr.bf16.mxu0 0
  %3598 = vmatpush1.bf16.msra.mxu0 0
  %3599 = vmatprep.subr.bf16.mxu0 0
  %3600 = vmatpush1.bf16.msra.mxu0 0
  %3601 = vmatprep.subr.bf16.mxu0 0
  %3602 = vmatpush1.bf16.msra.mxu0 0
  %3603 = vmatprep.subr.bf16.mxu0 0
  %3604 = vmatpush1.bf16.msra.mxu0 0
  %3605 = vmatprep.subr.bf16.mxu0 0
  %3606 = vmatpush1.bf16.msra.mxu0 0
  %3607 = vmatprep.subr.bf16.mxu0 0
  %3608 = vmatpush1.bf16.msra.mxu0 0
  %3609 = vmatprep.subr.bf16.mxu0 0
  %3610 = vmatpush1.bf16.msra.mxu0 0
  %3611 = vmatprep.subr.bf16.mxu0 0
  %3612 = vmatpush1.bf16.msra.mxu0 0
  %3613 = vmatprep.subr.bf16.mxu0 0
  %3614 = vmatpush1.bf16.msra.mxu0 0
  %3615 = vmatprep.subr.bf16.mxu0 0
  %3616 = vmatpush1.bf16.msra.mxu0 0
  %3617 = vmatprep.subr.bf16.mxu0 0
  %3618 = vmatpush1.bf16.msra.mxu0 0
  %3619 = vmatprep.subr.bf16.mxu0 0
  %3620 = vmatpush1.bf16.msra.mxu0 0
  %3621 = vmatprep.subr.bf16.mxu0 0
  %3622 = vmatpush1.bf16.msra.mxu0 0
  %3623 = vmatprep.subr.bf16.mxu0 0
  %3624 = vmatpush1.bf16.msra.mxu0 0
  %3625 = vmatprep.mubr.bf16.mxu0 0
  %3626 = vmatmul.mubr.bf16.gmra.mrb[0].mxu0 %v3550
  %v3627 = vpop.f32.mrb[0].mxu0
  %v3628 = vadd.f32 %v3542, %v3627
  %v3629 = vpop.f32.mrb[0].mxu0
  %v3630 = vadd.f32 %v3542, %v3629
  %v3631 = vpop.f32.mrb[0].mxu0
  %v3632 = vpop.f32.mrb[0].mxu0
  %3633 = vdwg.mxu0
  %3634 = vmatprep.subr.bf16.mxu0 %v1649
  %3635 = vmatpush1.bf16.msra.mxu0 %v1646
  %3636 = vmatprep.subr.bf16.mxu0 0
  %3637 = vmatpush1.bf16.msra.mxu0 0
  %3638 = vmatprep.subr.bf16.mxu0 0
  %3639 = vmatpush1.bf16.msra.mxu0 0
  %3640 = vmatprep.subr.bf16.mxu0 0
  %3641 = vmatpush1.bf16.msra.mxu0 0
  %3642 = vmatprep.subr.bf16.mxu0 0
  %3643 = vmatpush1.bf16.msra.mxu0 0
  %3644 = vmatprep.subr.bf16.mxu0 0
  %3645 = vmatpush1.bf16.msra.mxu0 0
  %3646 = vmatprep.subr.bf16.mxu0 0
  %3647 = vmatpush1.bf16.msra.mxu0 0
  %3648 = vmatprep.subr.bf16.mxu0 0
  %3649 = vmatpush1.bf16.msra.mxu0 0
  %3650 = vmatprep.subr.bf16.mxu0 0
  %3651 = vmatpush1.bf16.msra.mxu0 0
  %3652 = vmatprep.subr.bf16.mxu0 0
  %3653 = vmatpush1.bf16.msra.mxu0 0
  %3654 = vmatprep.subr.bf16.mxu0 0
  %3655 = vmatpush1.bf16.msra.mxu0 0
  %3656 = vmatprep.subr.bf16.mxu0 0
  %3657 = vmatpush1.bf16.msra.mxu0 0
  %3658 = vmatprep.subr.bf16.mxu0 0
  %3659 = vmatpush1.bf16.msra.mxu0 0
  %3660 = vmatprep.subr.bf16.mxu0 0
  %3661 = vmatpush1.bf16.msra.mxu0 0
  %3662 = vmatprep.subr.bf16.mxu0 0
  %3663 = vmatpush1.bf16.msra.mxu0 0
  %3664 = vmatprep.subr.bf16.mxu0 0
  %3665 = vmatpush1.bf16.msra.mxu0 0
  %3666 = vmatprep.mubr.bf16.mxu0 0
  %3667 = vmatmul.mubr.bf16.gmra.mrb[0].mxu0 %v3550
  %v3668 = vpop.f32.mrb[0].mxu0
  %v3669 = vadd.f32 %v3542, %v3668
  %v3670 = vpop.f32.mrb[0].mxu0
  %v3671 = vadd.f32 %v3542, %v3670
  %v3672 = vpop.f32.mrb[0].mxu0
  %v3673 = vpop.f32.mrb[0].mxu0
  %3674 = vdwg.mxu0
  %3675 = vmatprep.subr.bf16.mxu0 %v1655
  %3676 = vmatpush1.bf16.msra.mxu0 %v1652
  %3677 = vmatprep.subr.bf16.mxu0 0
  %3678 = vmatpush1.bf16.msra.mxu0 0
  %3679 = vmatprep.subr.bf16.mxu0 0
  %3680 = vmatpush1.bf16.msra.mxu0 0
  %3681 = vmatprep.subr.bf16.mxu0 0
  %3682 = vmatpush1.bf16.msra.mxu0 0
  %3683 = vmatprep.subr.bf16.mxu0 0
  %3684 = vmatpush1.bf16.msra.mxu0 0
  %3685 = vmatprep.subr.bf16.mxu0 0
  %3686 = vmatpush1.bf16.msra.mxu0 0
  %3687 = vmatprep.subr.bf16.mxu0 0
  %3688 = vmatpush1.bf16.msra.mxu0 0
  %3689 = vmatprep.subr.bf16.mxu0 0
  %3690 = vmatpush1.bf16.msra.mxu0 0
  %3691 = vmatprep.subr.bf16.mxu0 0
  %3692 = vmatpush1.bf16.msra.mxu0 0
  %3693 = vmatprep.subr.bf16.mxu0 0
  %3694 = vmatpush1.bf16.msra.mxu0 0
  %3695 = vmatprep.subr.bf16.mxu0 0
  %3696 = vmatpush1.bf16.msra.mxu0 0
  %3697 = vmatprep.subr.bf16.mxu0 0
  %3698 = vmatpush1.bf16.msra.mxu0 0
  %3699 = vmatprep.subr.bf16.mxu0 0
  %3700 = vmatpush1.bf16.msra.mxu0 0
  %3701 = vmatprep.subr.bf16.mxu0 0
  %3702 = vmatpush1.bf16.msra.mxu0 0
  %3703 = vmatprep.subr.bf16.mxu0 0
  %3704 = vmatpush1.bf16.msra.mxu0 0
  %3705 = vmatprep.subr.bf16.mxu0 0
  %3706 = vmatpush1.bf16.msra.mxu0 0
  %3707 = vmatprep.mubr.bf16.mxu0 0
  %3708 = vmatmul.mubr.bf16.gmra.mrb[0].mxu0 %v3550
  %v3709 = vpop.f32.mrb[0].mxu0
  %v3710 = vadd.f32 %v3542, %v3709
  %v3711 = vpop.f32.mrb[0].mxu0
  %v3712 = vadd.f32 %v3542, %v3711
  %v3713 = vpop.f32.mrb[0].mxu0
  %v3714 = vpop.f32.mrb[0].mxu0
  %3715 = vdwg.mxu0
  %3716 = vmatprep.subr.bf16.mxu0 %v1661
  %3717 = vmatpush1.bf16.msra.mxu0 %v1658
  %3718 = vmatprep.subr.bf16.mxu0 0
  %3719 = vmatpush1.bf16.msra.mxu0 0
  %3720 = vmatprep.subr.bf16.mxu0 0
  %3721 = vmatpush1.bf16.msra.mxu0 0
  %3722 = vmatprep.subr.bf16.mxu0 0
  %3723 = vmatpush1.bf16.msra.mxu0 0
  %3724 = vmatprep.subr.bf16.mxu0 0
  %3725 = vmatpush1.bf16.msra.mxu0 0
  %3726 = vmatprep.subr.bf16.mxu0 0
  %3727 = vmatpush1.bf16.msra.mxu0 0
  %3728 = vmatprep.subr.bf16.mxu0 0
  %3729 = vmatpush1.bf16.msra.mxu0 0
  %3730 = vmatprep.subr.bf16.mxu0 0
  %3731 = vmatpush1.bf16.msra.mxu0 0
  %3732 = vmatprep.subr.bf16.mxu0 0
  %3733 = vmatpush1.bf16.msra.mxu0 0
  %3734 = vmatprep.subr.bf16.mxu0 0
  %3735 = vmatpush1.bf16.msra.mxu0 0
  %3736 = vmatprep.subr.bf16.mxu0 0
  %3737 = vmatpush1.bf16.msra.mxu0 0
  %3738 = vmatprep.subr.bf16.mxu0 0
  %3739 = vmatpush1.bf16.msra.mxu0 0
  %3740 = vmatprep.subr.bf16.mxu0 0
  %3741 = vmatpush1.bf16.msra.mxu0 0
  %3742 = vmatprep.subr.bf16.mxu0 0
  %3743 = vmatpush1.bf16.msra.mxu0 0
  %3744 = vmatprep.subr.bf16.mxu0 0
  %3745 = vmatpush1.bf16.msra.mxu0 0
  %3746 = vmatprep.subr.bf16.mxu0 0
  %3747 = vmatpush1.bf16.msra.mxu0 0
  %3748 = vmatprep.mubr.bf16.mxu0 0
  %3749 = vmatmul.mubr.bf16.gmra.mrb[0].mxu0 %v3550
  %v3750 = vpop.f32.mrb[0].mxu0
  %v3751 = vadd.f32 %v3542, %v3750
  %v3752 = vpop.f32.mrb[0].mxu0
  %v3753 = vadd.f32 %v3542, %v3752
  %v3754 = vpop.f32.mrb[0].mxu0
  %v3755 = vpop.f32.mrb[0].mxu0
  %3756 = vdwg.mxu0
  %3757 = vmatprep.subr.bf16.mxu0 0
  %3758 = vmatpush1.bf16.msra.mxu0 %v1664
  %3759 = vmatprep.subr.bf16.mxu0 0
  %3760 = vmatpush1.bf16.msra.mxu0 0
  %3761 = vmatprep.subr.bf16.mxu0 0
  %3762 = vmatpush1.bf16.msra.mxu0 0
  %3763 = vmatprep.subr.bf16.mxu0 0
  %3764 = vmatpush1.bf16.msra.mxu0 0
  %3765 = vmatprep.subr.bf16.mxu0 0
  %3766 = vmatpush1.bf16.msra.mxu0 0
  %3767 = vmatprep.subr.bf16.mxu0 0
  %3768 = vmatpush1.bf16.msra.mxu0 0
  %3769 = vmatprep.subr.bf16.mxu0 0
  %3770 = vmatpush1.bf16.msra.mxu0 0
  %3771 = vmatprep.subr.bf16.mxu0 0
  %3772 = vmatpush1.bf16.msra.mxu0 0
  %3773 = vmatprep.subr.bf16.mxu0 0
  %3774 = vmatpush1.bf16.msra.mxu0 0
  %3775 = vmatprep.subr.bf16.mxu0 0
  %3776 = vmatpush1.bf16.msra.mxu0 0
  %3777 = vmatprep.subr.bf16.mxu0 0
  %3778 = vmatpush1.bf16.msra.mxu0 0
  %3779 = vmatprep.subr.bf16.mxu0 0
  %3780 = vmatpush1.bf16.msra.mxu0 0
  %3781 = vmatprep.subr.bf16.mxu0 0
  %3782 = vmatpush1.bf16.msra.mxu0 0
  %3783 = vmatprep.subr.bf16.mxu0 0
  %3784 = vmatpush1.bf16.msra.mxu0 0
  %3785 = vmatprep.subr.bf16.mxu0 0
  %3786 = vmatpush1.bf16.msra.mxu0 0
  %3787 = vmatprep.subr.bf16.mxu0 0
  %3788 = vmatpush1.bf16.msra.mxu0 0
  %3789 = vmatprep.mubr.bf16.mxu0 0
  %3790 = vmatmul.mubr.bf16.gmra.mrb[0].mxu0 %v3550
  %v3791 = vpop.f32.mrb[0].mxu0
  %v3792 = vadd.f32 %v3542, %v3791
  %v3793 = vpop.f32.mrb[0].mxu0
  %v3794 = vpop.f32.mrb[0].mxu0
  %v3795 = vpop.f32.mrb[0].mxu0
  %3796 = vdwg.mxu0
  %v3797 = vld [vmem:[%s3 + $0x8] sm:$0xf]
  %v3798 = vld [vmem:[#allocation3] sm:$0xff]
  %v3799 = vld [vmem:[#allocation3 + $0x8] sm:$0xff]
  %v3800 = vld [vmem:[#allocation3 + $0x10] sm:$0xff]
  %v3801 = vld [vmem:[#allocation3 + $0x18] sm:$0xff]
  %v3802 = vld [vmem:[#allocation3 + $0x20] sm:$0xff]
  %v3803 = vld [vmem:[#allocation3 + $0x28] sm:$0xff]
  %v3804 = vld [vmem:[#allocation3 + $0x30] sm:$0xff]
  %v3805 = vld [vmem:[#allocation3 + $0x38] sm:$0xff]
  %v3806 = vld [vmem:[#allocation3 + $0x40] sm:$0xff]
  %v3807 = vld [vmem:[#allocation3 + $0x48] sm:$0xff]
  %v3808 = vld [vmem:[#allocation3 + $0x50] sm:$0xff]
  %v3809 = vld [vmem:[#allocation3 + $0x58] sm:$0xff]
  %v3810 = vpack.c.bf16 %v3798, %v3798
  %v3811 = vpack.c.bf16 %v3799, %v3799
  %v3812 = vpack.c.bf16 %v3800, %v3800
  %v3813 = vpack.c.bf16 %v3801, %v3801
  %v3814 = vpack.c.bf16 %v3802, %v3802
  %v3815 = vpack.c.bf16 %v3803, %v3803
  %v3816 = vpack.c.bf16 %v3804, %v3804
  %v3817 = vpack.c.bf16 %v3805, %v3805
  %v3818 = vpack.c.bf16 %v3806, %v3806
  %v3819 = vpack.c.bf16 %v3807, %v3807
  %v3820 = vpack.c.bf16 %v3808, %v3808
  %v3821 = vpack.c.bf16 %v3809, %v3809
  %3834 = vrot.lane.b32.xlu0 %v3810, 33
  %v3835 = vpop.permute.xlu0 %3834
  %3836 = vrot.lane.b32.xlu0 %v3811, 33
  %v3837 = vpop.permute.xlu0 %3836
  %3838 = vrot.lane.b32.xlu0 %v3812, 33
  %v3839 = vpop.permute.xlu0 %3838
  %3840 = vrot.lane.b32.xlu0 %v3813, 33
  %v3841 = vpop.permute.xlu0 %3840
  %3842 = vrot.lane.b32.xlu0 %v3814, 33
  %v3843 = vpop.permute.xlu0 %3842
  %3844 = vrot.lane.b32.xlu0 %v3815, 33
  %v3845 = vpop.permute.xlu0 %3844
  %3846 = vrot.lane.b32.xlu0 %v3816, 33
  %v3847 = vpop.permute.xlu0 %3846
  %3848 = vrot.lane.b32.xlu0 %v3817, 33
  %v3849 = vpop.permute.xlu0 %3848
  %3850 = vrot.lane.b32.xlu0 %v3818, 33
  %v3851 = vpop.permute.xlu0 %3850
  %3852 = vrot.lane.b32.xlu0 %v3819, 33
  %v3853 = vpop.permute.xlu0 %3852
  %3854 = vrot.lane.b32.xlu0 %v3820, 33
  %v3855 = vpop.permute.xlu0 %3854
  %3856 = vrot.lane.b32.xlu0 %v3821, 33
  %v3857 = vpop.permute.xlu0 %3856
  %v3858 = vsel %vm535, %v3835, %v3837
  %v3859 = vsel %vm535, %v3837, %v3839
  %v3860 = vsel %vm535, %v3839, %v3841
  %v3861 = vsel %vm535, %v3841, %v3843
  %v3862 = vsel %vm535, %v3843, %v3845
  %v3863 = vsel %vm535, %v3845, %v3847
  %v3864 = vsel %vm535, %v3847, %v3849
  %v3865 = vsel %vm535, %v3849, %v3851
  %v3866 = vsel %vm535, %v3851, %v3853
  %v3867 = vsel %vm535, %v3853, %v3855
  %v3868 = vsel %vm535, %v3855, %v3857
  %vm3869 = vcmask 64512
  %v3871 = vsel %vm3869, %v3797, 0
  %vm3873 = vcmask 1043456
  %v3875 = vsel %vm3873, %v3858, 0
  %v3878 = vsel %vm3873, %v3859, 0
  %v3881 = vsel %vm3873, %v3860, 0
  %v3884 = vsel %vm3873, %v3861, 0
  %v3887 = vsel %vm3873, %v3862, 0
  %v3890 = vsel %vm3873, %v3863, 0
  %v3893 = vsel %vm3873, %v3864, 0
  %v3896 = vsel %vm3873, %v3865, 0
  %v3899 = vsel %vm3873, %v3866, 0
  %v3902 = vsel %vm3873, %v3867, 0
  %v3905 = vsel %vm3873, %v3868, 0
  %3907 = vmatprep.subr.bf16.mxu0 %v3878
  %3908 = vmatpush1.bf16.msra.mxu0 %v3875
  %3909 = vmatprep.subr.bf16.mxu0 0
  %3910 = vmatpush1.bf16.msra.mxu0 0
  %3911 = vmatprep.subr.bf16.mxu0 0
  %3912 = vmatpush1.bf16.msra.mxu0 0
  %3913 = vmatprep.subr.bf16.mxu0 0
  %3914 = vmatpush1.bf16.msra.mxu0 0
  %3915 = vmatprep.subr.bf16.mxu0 0
  %3916 = vmatpush1.bf16.msra.mxu0 0
  %3917 = vmatprep.subr.bf16.mxu0 0
  %3918 = vmatpush1.bf16.msra.mxu0 0
  %3919 = vmatprep.subr.bf16.mxu0 0
  %3920 = vmatpush1.bf16.msra.mxu0 0
  %3921 = vmatprep.subr.bf16.mxu0 0
  %3922 = vmatpush1.bf16.msra.mxu0 0
  %3923 = vmatprep.subr.bf16.mxu0 0
  %3924 = vmatpush1.bf16.msra.mxu0 0
  %3925 = vmatprep.subr.bf16.mxu0 0
  %3926 = vmatpush1.bf16.msra.mxu0 0
  %3927 = vmatprep.subr.bf16.mxu0 0
  %3928 = vmatpush1.bf16.msra.mxu0 0
  %3929 = vmatprep.subr.bf16.mxu0 0
  %3930 = vmatpush1.bf16.msra.mxu0 0
  %3931 = vmatprep.subr.bf16.mxu0 0
  %3932 = vmatpush1.bf16.msra.mxu0 0
  %3933 = vmatprep.subr.bf16.mxu0 0
  %3934 = vmatpush1.bf16.msra.mxu0 0
  %3935 = vmatprep.subr.bf16.mxu0 0
  %3936 = vmatpush1.bf16.msra.mxu0 0
  %3937 = vmatprep.subr.bf16.mxu0 0
  %3938 = vmatpush1.bf16.msra.mxu0 0
  %3939 = vmatprep.mubr.bf16.mxu0 0
  %3940 = vmatmul.mubr.bf16.gmra.mrb[0].mxu0 %v3871
  %v3941 = vpop.f32.mrb[0].mxu0
  %v3942 = vadd.f32 0.0, %v3941
  %v3943 = vpop.f32.mrb[0].mxu0
  %v3944 = vadd.f32 0.0, %v3943
  %v3945 = vpop.f32.mrb[0].mxu0
  %v3946 = vpop.f32.mrb[0].mxu0
  %3947 = vdwg.mxu0
  %3948 = vmatprep.subr.bf16.mxu0 %v3884
  %3949 = vmatpush1.bf16.msra.mxu0 %v3881
  %3950 = vmatprep.subr.bf16.mxu0 0
  %3951 = vmatpush1.bf16.msra.mxu0 0
  %3952 = vmatprep.subr.bf16.mxu0 0
  %3953 = vmatpush1.bf16.msra.mxu0 0
  %3954 = vmatprep.subr.bf16.mxu0 0
  %3955 = vmatpush1.bf16.msra.mxu0 0
  %3956 = vmatprep.subr.bf16.mxu0 0
  %3957 = vmatpush1.bf16.msra.mxu0 0
  %3958 = vmatprep.subr.bf16.mxu0 0
  %3959 = vmatpush1.bf16.msra.mxu0 0
  %3960 = vmatprep.subr.bf16.mxu0 0
  %3961 = vmatpush1.bf16.msra.mxu0 0
  %3962 = vmatprep.subr.bf16.mxu0 0
  %3963 = vmatpush1.bf16.msra.mxu0 0
  %3964 = vmatprep.subr.bf16.mxu0 0
  %3965 = vmatpush1.bf16.msra.mxu0 0
  %3966 = vmatprep.subr.bf16.mxu0 0
  %3967 = vmatpush1.bf16.msra.mxu0 0
  %3968 = vmatprep.subr.bf16.mxu0 0
  %3969 = vmatpush1.bf16.msra.mxu0 0
  %3970 = vmatprep.subr.bf16.mxu0 0
  %3971 = vmatpush1.bf16.msra.mxu0 0
  %3972 = vmatprep.subr.bf16.mxu0 0
  %3973 = vmatpush1.bf16.msra.mxu0 0
  %3974 = vmatprep.subr.bf16.mxu0 0
  %3975 = vmatpush1.bf16.msra.mxu0 0
  %3976 = vmatprep.subr.bf16.mxu0 0
  %3977 = vmatpush1.bf16.msra.mxu0 0
  %3978 = vmatprep.subr.bf16.mxu0 0
  %3979 = vmatpush1.bf16.msra.mxu0 0
  %3980 = vmatprep.mubr.bf16.mxu0 0
  %3981 = vmatmul.mubr.bf16.gmra.mrb[0].mxu0 %v3871
  %v3982 = vpop.f32.mrb[0].mxu0
  %v3983 = vadd.f32 0.0, %v3982
  %v3984 = vpop.f32.mrb[0].mxu0
  %v3985 = vadd.f32 0.0, %v3984
  %v3986 = vpop.f32.mrb[0].mxu0
  %v3987 = vpop.f32.mrb[0].mxu0
  %3988 = vdwg.mxu0
  %3989 = vmatprep.subr.bf16.mxu0 %v3890
  %3990 = vmatpush1.bf16.msra.mxu0 %v3887
  %3991 = vmatprep.subr.bf16.mxu0 0
  %3992 = vmatpush1.bf16.msra.mxu0 0
  %3993 = vmatprep.subr.bf16.mxu0 0
  %3994 = vmatpush1.bf16.msra.mxu0 0
  %3995 = vmatprep.subr.bf16.mxu0 0
  %3996 = vmatpush1.bf16.msra.mxu0 0
  %3997 = vmatprep.subr.bf16.mxu0 0
  %3998 = vmatpush1.bf16.msra.mxu0 0
  %3999 = vmatprep.subr.bf16.mxu0 0
  %4000 = vmatpush1.bf16.msra.mxu0 0
  %4001 = vmatprep.subr.bf16.mxu0 0
  %4002 = vmatpush1.bf16.msra.mxu0 0
  %4003 = vmatprep.subr.bf16.mxu0 0
  %4004 = vmatpush1.bf16.msra.mxu0 0
  %4005 = vmatprep.subr.bf16.mxu0 0
  %4006 = vmatpush1.bf16.msra.mxu0 0
  %4007 = vmatprep.subr.bf16.mxu0 0
  %4008 = vmatpush1.bf16.msra.mxu0 0
  %4009 = vmatprep.subr.bf16.mxu0 0
  %4010 = vmatpush1.bf16.msra.mxu0 0
  %4011 = vmatprep.subr.bf16.mxu0 0
  %4012 = vmatpush1.bf16.msra.mxu0 0
  %4013 = vmatprep.subr.bf16.mxu0 0
  %4014 = vmatpush1.bf16.msra.mxu0 0
  %4015 = vmatprep.subr.bf16.mxu0 0
  %4016 = vmatpush1.bf16.msra.mxu0 0
  %4017 = vmatprep.subr.bf16.mxu0 0
  %4018 = vmatpush1.bf16.msra.mxu0 0
  %4019 = vmatprep.subr.bf16.mxu0 0
  %4020 = vmatpush1.bf16.msra.mxu0 0
  %4021 = vmatprep.mubr.bf16.mxu0 0
  %4022 = vmatmul.mubr.bf16.gmra.mrb[0].mxu0 %v3871
  %v4023 = vpop.f32.mrb[0].mxu0
  %v4024 = vadd.f32 0.0, %v4023
  %v4025 = vpop.f32.mrb[0].mxu0
  %v4026 = vadd.f32 0.0, %v4025
  %v4027 = vpop.f32.mrb[0].mxu0
  %v4028 = vpop.f32.mrb[0].mxu0
  %4029 = vdwg.mxu0
  %4030 = vmatprep.subr.bf16.mxu0 %v3896
  %4031 = vmatpush1.bf16.msra.mxu0 %v3893
  %4032 = vmatprep.subr.bf16.mxu0 0
  %4033 = vmatpush1.bf16.msra.mxu0 0
  %4034 = vmatprep.subr.bf16.mxu0 0
  %4035 = vmatpush1.bf16.msra.mxu0 0
  %4036 = vmatprep.subr.bf16.mxu0 0
  %4037 = vmatpush1.bf16.msra.mxu0 0
  %4038 = vmatprep.subr.bf16.mxu0 0
  %4039 = vmatpush1.bf16.msra.mxu0 0
  %4040 = vmatprep.subr.bf16.mxu0 0
  %4041 = vmatpush1.bf16.msra.mxu0 0
  %4042 = vmatprep.subr.bf16.mxu0 0
  %4043 = vmatpush1.bf16.msra.mxu0 0
  %4044 = vmatprep.subr.bf16.mxu0 0
  %4045 = vmatpush1.bf16.msra.mxu0 0
  %4046 = vmatprep.subr.bf16.mxu0 0
  %4047 = vmatpush1.bf16.msra.mxu0 0
  %4048 = vmatprep.subr.bf16.mxu0 0
  %4049 = vmatpush1.bf16.msra.mxu0 0
  %4050 = vmatprep.subr.bf16.mxu0 0
  %4051 = vmatpush1.bf16.msra.mxu0 0
  %4052 = vmatprep.subr.bf16.mxu0 0
  %4053 = vmatpush1.bf16.msra.mxu0 0
  %4054 = vmatprep.subr.bf16.mxu0 0
  %4055 = vmatpush1.bf16.msra.mxu0 0
  %4056 = vmatprep.subr.bf16.mxu0 0
  %4057 = vmatpush1.bf16.msra.mxu0 0
  %4058 = vmatprep.subr.bf16.mxu0 0
  %4059 = vmatpush1.bf16.msra.mxu0 0
  %4060 = vmatprep.subr.bf16.mxu0 0
  %4061 = vmatpush1.bf16.msra.mxu0 0
  %4062 = vmatprep.mubr.bf16.mxu0 0
  %4063 = vmatmul.mubr.bf16.gmra.mrb[0].mxu0 %v3871
  %v4064 = vpop.f32.mrb[0].mxu0
  %v4065 = vadd.f32 0.0, %v4064
  %v4066 = vpop.f32.mrb[0].mxu0
  %v4067 = vadd.f32 0.0, %v4066
  %v4068 = vpop.f32.mrb[0].mxu0
  %v4069 = vpop.f32.mrb[0].mxu0
  %4070 = vdwg.mxu0
  %4071 = vmatprep.subr.bf16.mxu0 %v3902
  %4072 = vmatpush1.bf16.msra.mxu0 %v3899
  %4073 = vmatprep.subr.bf16.mxu0 0
  %4074 = vmatpush1.bf16.msra.mxu0 0
  %4075 = vmatprep.subr.bf16.mxu0 0
  %4076 = vmatpush1.bf16.msra.mxu0 0
  %4077 = vmatprep.subr.bf16.mxu0 0
  %4078 = vmatpush1.bf16.msra.mxu0 0
  %4079 = vmatprep.subr.bf16.mxu0 0
  %4080 = vmatpush1.bf16.msra.mxu0 0
  %4081 = vmatprep.subr.bf16.mxu0 0
  %4082 = vmatpush1.bf16.msra.mxu0 0
  %4083 = vmatprep.subr.bf16.mxu0 0
  %4084 = vmatpush1.bf16.msra.mxu0 0
  %4085 = vmatprep.subr.bf16.mxu0 0
  %4086 = vmatpush1.bf16.msra.mxu0 0
  %4087 = vmatprep.subr.bf16.mxu0 0
  %4088 = vmatpush1.bf16.msra.mxu0 0
  %4089 = vmatprep.subr.bf16.mxu0 0
  %4090 = vmatpush1.bf16.msra.mxu0 0
  %4091 = vmatprep.subr.bf16.mxu0 0
  %4092 = vmatpush1.bf16.msra.mxu0 0
  %4093 = vmatprep.subr.bf16.mxu0 0
  %4094 = vmatpush1.bf16.msra.mxu0 0
  %4095 = vmatprep.subr.bf16.mxu0 0
  %4096 = vmatpush1.bf16.msra.mxu0 0
  %4097 = vmatprep.subr.bf16.mxu0 0
  %4098 = vmatpush1.bf16.msra.mxu0 0
  %4099 = vmatprep.subr.bf16.mxu0 0
  %4100 = vmatpush1.bf16.msra.mxu0 0
  %4101 = vmatprep.subr.bf16.mxu0 0
  %4102 = vmatpush1.bf16.msra.mxu0 0
  %4103 = vmatprep.mubr.bf16.mxu0 0
  %4104 = vmatmul.mubr.bf16.gmra.mrb[0].mxu0 %v3871
  %v4105 = vpop.f32.mrb[0].mxu0
  %v4106 = vadd.f32 0.0, %v4105
  %v4107 = vpop.f32.mrb[0].mxu0
  %v4108 = vadd.f32 0.0, %v4107
  %v4109 = vpop.f32.mrb[0].mxu0
  %v4110 = vpop.f32.mrb[0].mxu0
  %4111 = vdwg.mxu0
  %4112 = vmatprep.subr.bf16.mxu0 0
  %4113 = vmatpush1.bf16.msra.mxu0 %v3905
  %4114 = vmatprep.subr.bf16.mxu0 0
  %4115 = vmatpush1.bf16.msra.mxu0 0
  %4116 = vmatprep.subr.bf16.mxu0 0
  %4117 = vmatpush1.bf16.msra.mxu0 0
  %4118 = vmatprep.subr.bf16.mxu0 0
  %4119 = vmatpush1.bf16.msra.mxu0 0
  %4120 = vmatprep.subr.bf16.mxu0 0
  %4121 = vmatpush1.bf16.msra.mxu0 0
  %4122 = vmatprep.subr.bf16.mxu0 0
  %4123 = vmatpush1.bf16.msra.mxu0 0
  %4124 = vmatprep.subr.bf16.mxu0 0
  %4125 = vmatpush1.bf16.msra.mxu0 0
  %4126 = vmatprep.subr.bf16.mxu0 0
  %4127 = vmatpush1.bf16.msra.mxu0 0
  %4128 = vmatprep.subr.bf16.mxu0 0
  %4129 = vmatpush1.bf16.msra.mxu0 0
  %4130 = vmatprep.subr.bf16.mxu0 0
  %4131 = vmatpush1.bf16.msra.mxu0 0
  %4132 = vmatprep.subr.bf16.mxu0 0
  %4133 = vmatpush1.bf16.msra.mxu0 0
  %4134 = vmatprep.subr.bf16.mxu0 0
  %4135 = vmatpush1.bf16.msra.mxu0 0
  %4136 = vmatprep.subr.bf16.mxu0 0
  %4137 = vmatpush1.bf16.msra.mxu0 0
  %4138 = vmatprep.subr.bf16.mxu0 0
  %4139 = vmatpush1.bf16.msra.mxu0 0
  %4140 = vmatprep.subr.bf16.mxu0 0
  %4141 = vmatpush1.bf16.msra.mxu0 0
  %4142 = vmatprep.subr.bf16.mxu0 0
  %4143 = vmatpush1.bf16.msra.mxu0 0
  %4144 = vmatprep.mubr.bf16.mxu0 0
  %4145 = vmatmul.mubr.bf16.gmra.mrb[0].mxu0 %v3871
  %v4146 = vpop.f32.mrb[0].mxu0
  %v4147 = vadd.f32 0.0, %v4146
  %v4148 = vpop.f32.mrb[0].mxu0
  %v4149 = vpop.f32.mrb[0].mxu0
  %v4150 = vpop.f32.mrb[0].mxu0
  %4151 = vdwg.mxu0
  %v4152 = vadd.f32 %v3587, %v3942
  %v4153 = vadd.f32 %v3589, %v3944
  %v4154 = vadd.f32 %v3628, %v3983
  %v4155 = vadd.f32 %v3630, %v3985
  %v4156 = vadd.f32 %v3669, %v4024
  %v4157 = vadd.f32 %v3671, %v4026
  %v4158 = vadd.f32 %v3710, %v4065
  %v4159 = vadd.f32 %v3712, %v4067
  %v4160 = vadd.f32 %v3751, %v4106
  %v4161 = vadd.f32 %v3753, %v4108
  %v4162 = vadd.f32 %v3792, %v4147
  %v4164 = vunpack.c.l.b16 %v3797
  %v4165 = vpack.c.b16 %v4164, %v4164
  %4166 = vrot.lane.b32.xlu0 %v4165, 120
  %v4167 = vpop.permute.xlu0 %4166
  %4168 = vrot.lane.b32.xlu0 %v3810, 32
  %v4169 = vpop.permute.xlu0 %4168
  %4170 = vrot.lane.b32.xlu0 %v3811, 32
  %v4171 = vpop.permute.xlu0 %4170
  %4172 = vrot.lane.b32.xlu0 %v3812, 32
  %v4173 = vpop.permute.xlu0 %4172
  %4174 = vrot.lane.b32.xlu0 %v3813, 32
  %v4175 = vpop.permute.xlu0 %4174
  %4176 = vrot.lane.b32.xlu0 %v3814, 32
  %v4177 = vpop.permute.xlu0 %4176
  %4178 = vrot.lane.b32.xlu0 %v3815, 32
  %v4179 = vpop.permute.xlu0 %4178
  %4180 = vrot.lane.b32.xlu0 %v3816, 32
  %v4181 = vpop.permute.xlu0 %4180
  %4182 = vrot.lane.b32.xlu0 %v3817, 32
  %v4183 = vpop.permute.xlu0 %4182
  %4184 = vrot.lane.b32.xlu0 %v3818, 32
  %v4185 = vpop.permute.xlu0 %4184
  %4186 = vrot.lane.b32.xlu0 %v3819, 32
  %v4187 = vpop.permute.xlu0 %4186
  %4188 = vrot.lane.b32.xlu0 %v3820, 32
  %v4189 = vpop.permute.xlu0 %4188
  %4190 = vrot.lane.b32.xlu0 %v3821, 32
  %v4191 = vpop.permute.xlu0 %4190
  %v4192 = vsel %vm216, %v4169, %v4171
  %v4193 = vsel %vm216, %v4171, %v4173
  %v4194 = vsel %vm216, %v4173, %v4175
  %v4195 = vsel %vm216, %v4175, %v4177
  %v4196 = vsel %vm216, %v4177, %v4179
  %v4197 = vsel %vm216, %v4179, %v4181
  %v4198 = vsel %vm216, %v4181, %v4183
  %v4199 = vsel %vm216, %v4183, %v4185
  %v4200 = vsel %vm216, %v4185, %v4187
  %v4201 = vsel %vm216, %v4187, %v4189
  %v4202 = vsel %vm216, %v4189, %v4191
  %v4204 = vsel %vm3869, %v4167, 0
  %v4207 = vsel %vm3873, %v4192, 0
  %v4210 = vsel %vm3873, %v4193, 0
  %v4213 = vsel %vm3873, %v4194, 0
  %v4216 = vsel %vm3873, %v4195, 0
  %v4219 = vsel %vm3873, %v4196, 0
  %v4222 = vsel %vm3873, %v4197, 0
  %v4225 = vsel %vm3873, %v4198, 0
  %v4228 = vsel %vm3873, %v4199, 0
  %v4231 = vsel %vm3873, %v4200, 0
  %v4234 = vsel %vm3873, %v4201, 0
  %v4237 = vsel %vm3873, %v4202, 0
  %4239 = vmatprep.subr.bf16.mxu0 %v4210
  %4240 = vmatpush1.bf16.msra.mxu0 %v4207
  %4241 = vmatprep.subr.bf16.mxu0 0
  %4242 = vmatpush1.bf16.msra.mxu0 0
  %4243 = vmatprep.subr.bf16.mxu0 0
  %4244 = vmatpush1.bf16.msra.mxu0 0
  %4245 = vmatprep.subr.bf16.mxu0 0
  %4246 = vmatpush1.bf16.msra.mxu0 0
  %4247 = vmatprep.subr.bf16.mxu0 0
  %4248 = vmatpush1.bf16.msra.mxu0 0
  %4249 = vmatprep.subr.bf16.mxu0 0
  %4250 = vmatpush1.bf16.msra.mxu0 0
  %4251 = vmatprep.subr.bf16.mxu0 0
  %4252 = vmatpush1.bf16.msra.mxu0 0
  %4253 = vmatprep.subr.bf16.mxu0 0
  %4254 = vmatpush1.bf16.msra.mxu0 0
  %4255 = vmatprep.subr.bf16.mxu0 0
  %4256 = vmatpush1.bf16.msra.mxu0 0
  %4257 = vmatprep.subr.bf16.mxu0 0
  %4258 = vmatpush1.bf16.msra.mxu0 0
  %4259 = vmatprep.subr.bf16.mxu0 0
  %4260 = vmatpush1.bf16.msra.mxu0 0
  %4261 = vmatprep.subr.bf16.mxu0 0
  %4262 = vmatpush1.bf16.msra.mxu0 0
  %4263 = vmatprep.subr.bf16.mxu0 0
  %4264 = vmatpush1.bf16.msra.mxu0 0
  %4265 = vmatprep.subr.bf16.mxu0 0
  %4266 = vmatpush1.bf16.msra.mxu0 0
  %4267 = vmatprep.subr.bf16.mxu0 0
  %4268 = vmatpush1.bf16.msra.mxu0 0
  %4269 = vmatprep.subr.bf16.mxu0 0
  %4270 = vmatpush1.bf16.msra.mxu0 0
  %4271 = vmatprep.mubr.bf16.mxu0 0
  %4272 = vmatmul.mubr.bf16.gmra.mrb[0].mxu0 %v4204
  %v4273 = vpop.f32.mrb[0].mxu0
  %v4274 = vadd.f32 0.0, %v4273
  %v4275 = vpop.f32.mrb[0].mxu0
  %v4276 = vadd.f32 0.0, %v4275
  %v4277 = vpop.f32.mrb[0].mxu0
  %v4278 = vpop.f32.mrb[0].mxu0
  %4279 = vdwg.mxu0
  %4280 = vmatprep.subr.bf16.mxu0 %v4216
  %4281 = vmatpush1.bf16.msra.mxu0 %v4213
  %4282 = vmatprep.subr.bf16.mxu0 0
  %4283 = vmatpush1.bf16.msra.mxu0 0
  %4284 = vmatprep.subr.bf16.mxu0 0
  %4285 = vmatpush1.bf16.msra.mxu0 0
  %4286 = vmatprep.subr.bf16.mxu0 0
  %4287 = vmatpush1.bf16.msra.mxu0 0
  %4288 = vmatprep.subr.bf16.mxu0 0
  %4289 = vmatpush1.bf16.msra.mxu0 0
  %4290 = vmatprep.subr.bf16.mxu0 0
  %4291 = vmatpush1.bf16.msra.mxu0 0
  %4292 = vmatprep.subr.bf16.mxu0 0
  %4293 = vmatpush1.bf16.msra.mxu0 0
  %4294 = vmatprep.subr.bf16.mxu0 0
  %4295 = vmatpush1.bf16.msra.mxu0 0
  %4296 = vmatprep.subr.bf16.mxu0 0
  %4297 = vmatpush1.bf16.msra.mxu0 0
  %4298 = vmatprep.subr.bf16.mxu0 0
  %4299 = vmatpush1.bf16.msra.mxu0 0
  %4300 = vmatprep.subr.bf16.mxu0 0
  %4301 = vmatpush1.bf16.msra.mxu0 0
  %4302 = vmatprep.subr.bf16.mxu0 0
  %4303 = vmatpush1.bf16.msra.mxu0 0
  %4304 = vmatprep.subr.bf16.mxu0 0
  %4305 = vmatpush1.bf16.msra.mxu0 0
  %4306 = vmatprep.subr.bf16.mxu0 0
  %4307 = vmatpush1.bf16.msra.mxu0 0
  %4308 = vmatprep.subr.bf16.mxu0 0
  %4309 = vmatpush1.bf16.msra.mxu0 0
  %4310 = vmatprep.subr.bf16.mxu0 0
  %4311 = vmatpush1.bf16.msra.mxu0 0
  %4312 = vmatprep.mubr.bf16.mxu0 0
  %4313 = vmatmul.mubr.bf16.gmra.mrb[0].mxu0 %v4204
  %v4314 = vpop.f32.mrb[0].mxu0
  %v4315 = vadd.f32 0.0, %v4314
  %v4316 = vpop.f32.mrb[0].mxu0
  %v4317 = vadd.f32 0.0, %v4316
  %v4318 = vpop.f32.mrb[0].mxu0
  %v4319 = vpop.f32.mrb[0].mxu0
  %4320 = vdwg.mxu0
  %4321 = vmatprep.subr.bf16.mxu0 %v4222
  %4322 = vmatpush1.bf16.msra.mxu0 %v4219
  %4323 = vmatprep.subr.bf16.mxu0 0
  %4324 = vmatpush1.bf16.msra.mxu0 0
  %4325 = vmatprep.subr.bf16.mxu0 0
  %4326 = vmatpush1.bf16.msra.mxu0 0
  %4327 = vmatprep.subr.bf16.mxu0 0
  %4328 = vmatpush1.bf16.msra.mxu0 0
  %4329 = vmatprep.subr.bf16.mxu0 0
  %4330 = vmatpush1.bf16.msra.mxu0 0
  %4331 = vmatprep.subr.bf16.mxu0 0
  %4332 = vmatpush1.bf16.msra.mxu0 0
  %4333 = vmatprep.subr.bf16.mxu0 0
  %4334 = vmatpush1.bf16.msra.mxu0 0
  %4335 = vmatprep.subr.bf16.mxu0 0
  %4336 = vmatpush1.bf16.msra.mxu0 0
  %4337 = vmatprep.subr.bf16.mxu0 0
  %4338 = vmatpush1.bf16.msra.mxu0 0
  %4339 = vmatprep.subr.bf16.mxu0 0
  %4340 = vmatpush1.bf16.msra.mxu0 0
  %4341 = vmatprep.subr.bf16.mxu0 0
  %4342 = vmatpush1.bf16.msra.mxu0 0
  %4343 = vmatprep.subr.bf16.mxu0 0
  %4344 = vmatpush1.bf16.msra.mxu0 0
  %4345 = vmatprep.subr.bf16.mxu0 0
  %4346 = vmatpush1.bf16.msra.mxu0 0
  %4347 = vmatprep.subr.bf16.mxu0 0
  %4348 = vmatpush1.bf16.msra.mxu0 0
  %4349 = vmatprep.subr.bf16.mxu0 0
  %4350 = vmatpush1.bf16.msra.mxu0 0
  %4351 = vmatprep.subr.bf16.mxu0 0
  %4352 = vmatpush1.bf16.msra.mxu0 0
  %4353 = vmatprep.mubr.bf16.mxu0 0
  %4354 = vmatmul.mubr.bf16.gmra.mrb[0].mxu0 %v4204
  %v4355 = vpop.f32.mrb[0].mxu0
  %v4356 = vadd.f32 0.0, %v4355
  %v4357 = vpop.f32.mrb[0].mxu0
  %v4358 = vadd.f32 0.0, %v4357
  %v4359 = vpop.f32.mrb[0].mxu0
  %v4360 = vpop.f32.mrb[0].mxu0
  %4361 = vdwg.mxu0
  %4362 = vmatprep.subr.bf16.mxu0 %v4228
  %4363 = vmatpush1.bf16.msra.mxu0 %v4225
  %4364 = vmatprep.subr.bf16.mxu0 0
  %4365 = vmatpush1.bf16.msra.mxu0 0
  %4366 = vmatprep.subr.bf16.mxu0 0
  %4367 = vmatpush1.bf16.msra.mxu0 0
  %4368 = vmatprep.subr.bf16.mxu0 0
  %4369 = vmatpush1.bf16.msra.mxu0 0
  %4370 = vmatprep.subr.bf16.mxu0 0
  %4371 = vmatpush1.bf16.msra.mxu0 0
  %4372 = vmatprep.subr.bf16.mxu0 0
  %4373 = vmatpush1.bf16.msra.mxu0 0
  %4374 = vmatprep.subr.bf16.mxu0 0
  %4375 = vmatpush1.bf16.msra.mxu0 0
  %4376 = vmatprep.subr.bf16.mxu0 0
  %4377 = vmatpush1.bf16.msra.mxu0 0
  %4378 = vmatprep.subr.bf16.mxu0 0
  %4379 = vmatpush1.bf16.msra.mxu0 0
  %4380 = vmatprep.subr.bf16.mxu0 0
  %4381 = vmatpush1.bf16.msra.mxu0 0
  %4382 = vmatprep.subr.bf16.mxu0 0
  %4383 = vmatpush1.bf16.msra.mxu0 0
  %4384 = vmatprep.subr.bf16.mxu0 0
  %4385 = vmatpush1.bf16.msra.mxu0 0
  %4386 = vmatprep.subr.bf16.mxu0 0
  %4387 = vmatpush1.bf16.msra.mxu0 0
  %4388 = vmatprep.subr.bf16.mxu0 0
  %4389 = vmatpush1.bf16.msra.mxu0 0
  %4390 = vmatprep.subr.bf16.mxu0 0
  %4391 = vmatpush1.bf16.msra.mxu0 0
  %4392 = vmatprep.subr.bf16.mxu0 0
  %4393 = vmatpush1.bf16.msra.mxu0 0
  %4394 = vmatprep.mubr.bf16.mxu0 0
  %4395 = vmatmul.mubr.bf16.gmra.mrb[0].mxu0 %v4204
  %v4396 = vpop.f32.mrb[0].mxu0
  %v4397 = vadd.f32 0.0, %v4396
  %v4398 = vpop.f32.mrb[0].mxu0
  %v4399 = vadd.f32 0.0, %v4398
  %v4400 = vpop.f32.mrb[0].mxu0
  %v4401 = vpop.f32.mrb[0].mxu0
  %4402 = vdwg.mxu0
  %4403 = vmatprep.subr.bf16.mxu0 %v4234
  %4404 = vmatpush1.bf16.msra.mxu0 %v4231
  %4405 = vmatprep.subr.bf16.mxu0 0
  %4406 = vmatpush1.bf16.msra.mxu0 0
  %4407 = vmatprep.subr.bf16.mxu0 0
  %4408 = vmatpush1.bf16.msra.mxu0 0
  %4409 = vmatprep.subr.bf16.mxu0 0
  %4410 = vmatpush1.bf16.msra.mxu0 0
  %4411 = vmatprep.subr.bf16.mxu0 0
  %4412 = vmatpush1.bf16.msra.mxu0 0
  %4413 = vmatprep.subr.bf16.mxu0 0
  %4414 = vmatpush1.bf16.msra.mxu0 0
  %4415 = vmatprep.subr.bf16.mxu0 0
  %4416 = vmatpush1.bf16.msra.mxu0 0
  %4417 = vmatprep.subr.bf16.mxu0 0
  %4418 = vmatpush1.bf16.msra.mxu0 0
  %4419 = vmatprep.subr.bf16.mxu0 0
  %4420 = vmatpush1.bf16.msra.mxu0 0
  %4421 = vmatprep.subr.bf16.mxu0 0
  %4422 = vmatpush1.bf16.msra.mxu0 0
  %4423 = vmatprep.subr.bf16.mxu0 0
  %4424 = vmatpush1.bf16.msra.mxu0 0
  %4425 = vmatprep.subr.bf16.mxu0 0
  %4426 = vmatpush1.bf16.msra.mxu0 0
  %4427 = vmatprep.subr.bf16.mxu0 0
  %4428 = vmatpush1.bf16.msra.mxu0 0
  %4429 = vmatprep.subr.bf16.mxu0 0
  %4430 = vmatpush1.bf16.msra.mxu0 0
  %4431 = vmatprep.subr.bf16.mxu0 0
  %4432 = vmatpush1.bf16.msra.mxu0 0
  %4433 = vmatprep.subr.bf16.mxu0 0
  %4434 = vmatpush1.bf16.msra.mxu0 0
  %4435 = vmatprep.mubr.bf16.mxu0 0
  %4436 = vmatmul.mubr.bf16.gmra.mrb[0].mxu0 %v4204
  %v4437 = vpop.f32.mrb[0].mxu0
  %v4438 = vadd.f32 0.0, %v4437
  %v4439 = vpop.f32.mrb[0].mxu0
  %v4440 = vadd.f32 0.0, %v4439
  %v4441 = vpop.f32.mrb[0].mxu0
  %v4442 = vpop.f32.mrb[0].mxu0
  %4443 = vdwg.mxu0
  %4444 = vmatprep.subr.bf16.mxu0 0
  %4445 = vmatpush1.bf16.msra.mxu0 %v4237
  %4446 = vmatprep.subr.bf16.mxu0 0
  %4447 = vmatpush1.bf16.msra.mxu0 0
  %4448 = vmatprep.subr.bf16.mxu0 0
  %4449 = vmatpush1.bf16.msra.mxu0 0
  %4450 = vmatprep.subr.bf16.mxu0 0
  %4451 = vmatpush1.bf16.msra.mxu0 0
  %4452 = vmatprep.subr.bf16.mxu0 0
  %4453 = vmatpush1.bf16.msra.mxu0 0
  %4454 = vmatprep.subr.bf16.mxu0 0
  %4455 = vmatpush1.bf16.msra.mxu0 0
  %4456 = vmatprep.subr.bf16.mxu0 0
  %4457 = vmatpush1.bf16.msra.mxu0 0
  %4458 = vmatprep.subr.bf16.mxu0 0
  %4459 = vmatpush1.bf16.msra.mxu0 0
  %4460 = vmatprep.subr.bf16.mxu0 0
  %4461 = vmatpush1.bf16.msra.mxu0 0
  %4462 = vmatprep.subr.bf16.mxu0 0
  %4463 = vmatpush1.bf16.msra.mxu0 0
  %4464 = vmatprep.subr.bf16.mxu0 0
  %4465 = vmatpush1.bf16.msra.mxu0 0
  %4466 = vmatprep.subr.bf16.mxu0 0
  %4467 = vmatpush1.bf16.msra.mxu0 0
  %4468 = vmatprep.subr.bf16.mxu0 0
  %4469 = vmatpush1.bf16.msra.mxu0 0
  %4470 = vmatprep.subr.bf16.mxu0 0
  %4471 = vmatpush1.bf16.msra.mxu0 0
  %4472 = vmatprep.subr.bf16.mxu0 0
  %4473 = vmatpush1.bf16.msra.mxu0 0
  %4474 = vmatprep.subr.bf16.mxu0 0
  %4475 = vmatpush1.bf16.msra.mxu0 0
  %4476 = vmatprep.mubr.bf16.mxu0 0
  %4477 = vmatmul.mubr.bf16.gmra.mrb[0].mxu0 %v4204
  %v4478 = vpop.f32.mrb[0].mxu0
  %v4479 = vadd.f32 0.0, %v4478
  %v4480 = vpop.f32.mrb[0].mxu0
  %v4481 = vpop.f32.mrb[0].mxu0
  %v4482 = vpop.f32.mrb[0].mxu0
  %4483 = vdwg.mxu0
  %v4484 = vadd.f32 %v4152, %v4274
  %v4485 = vadd.f32 %v4153, %v4276
  %v4486 = vadd.f32 %v4154, %v4315
  %v4487 = vadd.f32 %v4155, %v4317
  %v4488 = vadd.f32 %v4156, %v4356
  %v4489 = vadd.f32 %v4157, %v4358
  %v4490 = vadd.f32 %v4158, %v4397
  %v4491 = vadd.f32 %v4159, %v4399
  %v4492 = vadd.f32 %v4160, %v4438
  %v4493 = vadd.f32 %v4161, %v4440
  %v4494 = vadd.f32 %v4162, %v4479
  %4495 = vrot.lane.b32.xlu0 %v4165, 112
  %v4496 = vpop.permute.xlu0 %4495
  %4497 = vrot.lane.b32.xlu0 %v3810, 31
  %v4498 = vpop.permute.xlu0 %4497
  %4499 = vrot.lane.b32.xlu0 %v3811, 31
  %v4500 = vpop.permute.xlu0 %4499
  %4501 = vrot.lane.b32.xlu0 %v3812, 31
  %v4502 = vpop.permute.xlu0 %4501
  %4503 = vrot.lane.b32.xlu0 %v3813, 31
  %v4504 = vpop.permute.xlu0 %4503
  %4505 = vrot.lane.b32.xlu0 %v3814, 31
  %v4506 = vpop.permute.xlu0 %4505
  %4507 = vrot.lane.b32.xlu0 %v3815, 31
  %v4508 = vpop.permute.xlu0 %4507
  %4509 = vrot.lane.b32.xlu0 %v3816, 31
  %v4510 = vpop.permute.xlu0 %4509
  %4511 = vrot.lane.b32.xlu0 %v3817, 31
  %v4512 = vpop.permute.xlu0 %4511
  %4513 = vrot.lane.b32.xlu0 %v3818, 31
  %v4514 = vpop.permute.xlu0 %4513
  %4515 = vrot.lane.b32.xlu0 %v3819, 31
  %v4516 = vpop.permute.xlu0 %4515
  %4517 = vrot.lane.b32.xlu0 %v3820, 31
  %v4518 = vpop.permute.xlu0 %4517
  %4519 = vrot.lane.b32.xlu0 %v3821, 31
  %v4520 = vpop.permute.xlu0 %4519
  %v4521 = vsel %vm906, %v4498, %v4500
  %v4522 = vsel %vm906, %v4500, %v4502
  %v4523 = vsel %vm906, %v4502, %v4504
  %v4524 = vsel %vm906, %v4504, %v4506
  %v4525 = vsel %vm906, %v4506, %v4508
  %v4526 = vsel %vm906, %v4508, %v4510
  %v4527 = vsel %vm906, %v4510, %v4512
  %v4528 = vsel %vm906, %v4512, %v4514
  %v4529 = vsel %vm906, %v4514, %v4516
  %v4530 = vsel %vm906, %v4516, %v4518
  %v4531 = vsel %vm906, %v4518, %v4520
  %v4533 = vsel %vm3869, %v4496, 0
  %v4536 = vsel %vm3873, %v4521, 0
  %v4539 = vsel %vm3873, %v4522, 0
  %v4542 = vsel %vm3873, %v4523, 0
  %v4545 = vsel %vm3873, %v4524, 0
  %v4548 = vsel %vm3873, %v4525, 0
  %v4551 = vsel %vm3873, %v4526, 0
  %v4554 = vsel %vm3873, %v4527, 0
  %v4557 = vsel %vm3873, %v4528, 0
  %v4560 = vsel %vm3873, %v4529, 0
  %v4563 = vsel %vm3873, %v4530, 0
  %v4566 = vsel %vm3873, %v4531, 0
  %4568 = vmatprep.subr.bf16.mxu0 %v4539
  %4569 = vmatpush1.bf16.msra.mxu0 %v4536
  %4570 = vmatprep.subr.bf16.mxu0 0
  %4571 = vmatpush1.bf16.msra.mxu0 0
  %4572 = vmatprep.subr.bf16.mxu0 0
  %4573 = vmatpush1.bf16.msra.mxu0 0
  %4574 = vmatprep.subr.bf16.mxu0 0
  %4575 = vmatpush1.bf16.msra.mxu0 0
  %4576 = vmatprep.subr.bf16.mxu0 0
  %4577 = vmatpush1.bf16.msra.mxu0 0
  %4578 = vmatprep.subr.bf16.mxu0 0
  %4579 = vmatpush1.bf16.msra.mxu0 0
  %4580 = vmatprep.subr.bf16.mxu0 0
  %4581 = vmatpush1.bf16.msra.mxu0 0
  %4582 = vmatprep.subr.bf16.mxu0 0
  %4583 = vmatpush1.bf16.msra.mxu0 0
  %4584 = vmatprep.subr.bf16.mxu0 0
  %4585 = vmatpush1.bf16.msra.mxu0 0
  %4586 = vmatprep.subr.bf16.mxu0 0
  %4587 = vmatpush1.bf16.msra.mxu0 0
  %4588 = vmatprep.subr.bf16.mxu0 0
  %4589 = vmatpush1.bf16.msra.mxu0 0
  %4590 = vmatprep.subr.bf16.mxu0 0
  %4591 = vmatpush1.bf16.msra.mxu0 0
  %4592 = vmatprep.subr.bf16.mxu0 0
  %4593 = vmatpush1.bf16.msra.mxu0 0
  %4594 = vmatprep.subr.bf16.mxu0 0
  %4595 = vmatpush1.bf16.msra.mxu0 0
  %4596 = vmatprep.subr.bf16.mxu0 0
  %4597 = vmatpush1.bf16.msra.mxu0 0
  %4598 = vmatprep.subr.bf16.mxu0 0
  %4599 = vmatpush1.bf16.msra.mxu0 0
  %4600 = vmatprep.mubr.bf16.mxu0 0
  %4601 = vmatmul.mubr.bf16.gmra.mrb[0].mxu0 %v4533
  %v4602 = vpop.f32.mrb[0].mxu0
  %v4603 = vadd.f32 0.0, %v4602
  %v4604 = vpop.f32.mrb[0].mxu0
  %v4605 = vadd.f32 0.0, %v4604
  %v4606 = vpop.f32.mrb[0].mxu0
  %v4607 = vpop.f32.mrb[0].mxu0
  %4608 = vdwg.mxu0
  %4609 = vmatprep.subr.bf16.mxu0 %v4545
  %4610 = vmatpush1.bf16.msra.mxu0 %v4542
  %4611 = vmatprep.subr.bf16.mxu0 0
  %4612 = vmatpush1.bf16.msra.mxu0 0
  %4613 = vmatprep.subr.bf16.mxu0 0
  %4614 = vmatpush1.bf16.msra.mxu0 0
  %4615 = vmatprep.subr.bf16.mxu0 0
  %4616 = vmatpush1.bf16.msra.mxu0 0
  %4617 = vmatprep.subr.bf16.mxu0 0
  %4618 = vmatpush1.bf16.msra.mxu0 0
  %4619 = vmatprep.subr.bf16.mxu0 0
  %4620 = vmatpush1.bf16.msra.mxu0 0
  %4621 = vmatprep.subr.bf16.mxu0 0
  %4622 = vmatpush1.bf16.msra.mxu0 0
  %4623 = vmatprep.subr.bf16.mxu0 0
  %4624 = vmatpush1.bf16.msra.mxu0 0
  %4625 = vmatprep.subr.bf16.mxu0 0
  %4626 = vmatpush1.bf16.msra.mxu0 0
  %4627 = vmatprep.subr.bf16.mxu0 0
  %4628 = vmatpush1.bf16.msra.mxu0 0
  %4629 = vmatprep.subr.bf16.mxu0 0
  %4630 = vmatpush1.bf16.msra.mxu0 0
  %4631 = vmatprep.subr.bf16.mxu0 0
  %4632 = vmatpush1.bf16.msra.mxu0 0
  %4633 = vmatprep.subr.bf16.mxu0 0
  %4634 = vmatpush1.bf16.msra.mxu0 0
  %4635 = vmatprep.subr.bf16.mxu0 0
  %4636 = vmatpush1.bf16.msra.mxu0 0
  %4637 = vmatprep.subr.bf16.mxu0 0
  %4638 = vmatpush1.bf16.msra.mxu0 0
  %4639 = vmatprep.subr.bf16.mxu0 0
  %4640 = vmatpush1.bf16.msra.mxu0 0
  %4641 = vmatprep.mubr.bf16.mxu0 0
  %4642 = vmatmul.mubr.bf16.gmra.mrb[0].mxu0 %v4533
  %v4643 = vpop.f32.mrb[0].mxu0
  %v4644 = vadd.f32 0.0, %v4643
  %v4645 = vpop.f32.mrb[0].mxu0
  %v4646 = vadd.f32 0.0, %v4645
  %v4647 = vpop.f32.mrb[0].mxu0
  %v4648 = vpop.f32.mrb[0].mxu0
  %4649 = vdwg.mxu0
  %4650 = vmatprep.subr.bf16.mxu0 %v4551
  %4651 = vmatpush1.bf16.msra.mxu0 %v4548
  %4652 = vmatprep.subr.bf16.mxu0 0
  %4653 = vmatpush1.bf16.msra.mxu0 0
  %4654 = vmatprep.subr.bf16.mxu0 0
  %4655 = vmatpush1.bf16.msra.mxu0 0
  %4656 = vmatprep.subr.bf16.mxu0 0
  %4657 = vmatpush1.bf16.msra.mxu0 0
  %4658 = vmatprep.subr.bf16.mxu0 0
  %4659 = vmatpush1.bf16.msra.mxu0 0
  %4660 = vmatprep.subr.bf16.mxu0 0
  %4661 = vmatpush1.bf16.msra.mxu0 0
  %4662 = vmatprep.subr.bf16.mxu0 0
  %4663 = vmatpush1.bf16.msra.mxu0 0
  %4664 = vmatprep.subr.bf16.mxu0 0
  %4665 = vmatpush1.bf16.msra.mxu0 0
  %4666 = vmatprep.subr.bf16.mxu0 0
  %4667 = vmatpush1.bf16.msra.mxu0 0
  %4668 = vmatprep.subr.bf16.mxu0 0
  %4669 = vmatpush1.bf16.msra.mxu0 0
  %4670 = vmatprep.subr.bf16.mxu0 0
  %4671 = vmatpush1.bf16.msra.mxu0 0
  %4672 = vmatprep.subr.bf16.mxu0 0
  %4673 = vmatpush1.bf16.msra.mxu0 0
  %4674 = vmatprep.subr.bf16.mxu0 0
  %4675 = vmatpush1.bf16.msra.mxu0 0
  %4676 = vmatprep.subr.bf16.mxu0 0
  %4677 = vmatpush1.bf16.msra.mxu0 0
  %4678 = vmatprep.subr.bf16.mxu0 0
  %4679 = vmatpush1.bf16.msra.mxu0 0
  %4680 = vmatprep.subr.bf16.mxu0 0
  %4681 = vmatpush1.bf16.msra.mxu0 0
  %4682 = vmatprep.mubr.bf16.mxu0 0
  %4683 = vmatmul.mubr.bf16.gmra.mrb[0].mxu0 %v4533
  %v4684 = vpop.f32.mrb[0].mxu0
  %v4685 = vadd.f32 0.0, %v4684
  %v4686 = vpop.f32.mrb[0].mxu0
  %v4687 = vadd.f32 0.0, %v4686
  %v4688 = vpop.f32.mrb[0].mxu0
  %v4689 = vpop.f32.mrb[0].mxu0
  %4690 = vdwg.mxu0
  %4691 = vmatprep.subr.bf16.mxu0 %v4557
  %4692 = vmatpush1.bf16.msra.mxu0 %v4554
  %4693 = vmatprep.subr.bf16.mxu0 0
  %4694 = vmatpush1.bf16.msra.mxu0 0
  %4695 = vmatprep.subr.bf16.mxu0 0
  %4696 = vmatpush1.bf16.msra.mxu0 0
  %4697 = vmatprep.subr.bf16.mxu0 0
  %4698 = vmatpush1.bf16.msra.mxu0 0
  %4699 = vmatprep.subr.bf16.mxu0 0
  %4700 = vmatpush1.bf16.msra.mxu0 0
  %4701 = vmatprep.subr.bf16.mxu0 0
  %4702 = vmatpush1.bf16.msra.mxu0 0
  %4703 = vmatprep.subr.bf16.mxu0 0
  %4704 = vmatpush1.bf16.msra.mxu0 0
  %4705 = vmatprep.subr.bf16.mxu0 0
  %4706 = vmatpush1.bf16.msra.mxu0 0
  %4707 = vmatprep.subr.bf16.mxu0 0
  %4708 = vmatpush1.bf16.msra.mxu0 0
  %4709 = vmatprep.subr.bf16.mxu0 0
  %4710 = vmatpush1.bf16.msra.mxu0 0
  %4711 = vmatprep.subr.bf16.mxu0 0
  %4712 = vmatpush1.bf16.msra.mxu0 0
  %4713 = vmatprep.subr.bf16.mxu0 0
  %4714 = vmatpush1.bf16.msra.mxu0 0
  %4715 = vmatprep.subr.bf16.mxu0 0
  %4716 = vmatpush1.bf16.msra.mxu0 0
  %4717 = vmatprep.subr.bf16.mxu0 0
  %4718 = vmatpush1.bf16.msra.mxu0 0
  %4719 = vmatprep.subr.bf16.mxu0 0
  %4720 = vmatpush1.bf16.msra.mxu0 0
  %4721 = vmatprep.subr.bf16.mxu0 0
  %4722 = vmatpush1.bf16.msra.mxu0 0
  %4723 = vmatprep.mubr.bf16.mxu0 0
  %4724 = vmatmul.mubr.bf16.gmra.mrb[0].mxu0 %v4533
  %v4725 = vpop.f32.mrb[0].mxu0
  %v4726 = vadd.f32 0.0, %v4725
  %v4727 = vpop.f32.mrb[0].mxu0
  %v4728 = vadd.f32 0.0, %v4727
  %v4729 = vpop.f32.mrb[0].mxu0
  %v4730 = vpop.f32.mrb[0].mxu0
  %4731 = vdwg.mxu0
  %4732 = vmatprep.subr.bf16.mxu0 %v4563
  %4733 = vmatpush1.bf16.msra.mxu0 %v4560
  %4734 = vmatprep.subr.bf16.mxu0 0
  %4735 = vmatpush1.bf16.msra.mxu0 0
  %4736 = vmatprep.subr.bf16.mxu0 0
  %4737 = vmatpush1.bf16.msra.mxu0 0
  %4738 = vmatprep.subr.bf16.mxu0 0
  %4739 = vmatpush1.bf16.msra.mxu0 0
  %4740 = vmatprep.subr.bf16.mxu0 0
  %4741 = vmatpush1.bf16.msra.mxu0 0
  %4742 = vmatprep.subr.bf16.mxu0 0
  %4743 = vmatpush1.bf16.msra.mxu0 0
  %4744 = vmatprep.subr.bf16.mxu0 0
  %4745 = vmatpush1.bf16.msra.mxu0 0
  %4746 = vmatprep.subr.bf16.mxu0 0
  %4747 = vmatpush1.bf16.msra.mxu0 0
  %4748 = vmatprep.subr.bf16.mxu0 0
  %4749 = vmatpush1.bf16.msra.mxu0 0
  %4750 = vmatprep.subr.bf16.mxu0 0
  %4751 = vmatpush1.bf16.msra.mxu0 0
  %4752 = vmatprep.subr.bf16.mxu0 0
  %4753 = vmatpush1.bf16.msra.mxu0 0
  %4754 = vmatprep.subr.bf16.mxu0 0
  %4755 = vmatpush1.bf16.msra.mxu0 0
  %4756 = vmatprep.subr.bf16.mxu0 0
  %4757 = vmatpush1.bf16.msra.mxu0 0
  %4758 = vmatprep.subr.bf16.mxu0 0
  %4759 = vmatpush1.bf16.msra.mxu0 0
  %4760 = vmatprep.subr.bf16.mxu0 0
  %4761 = vmatpush1.bf16.msra.mxu0 0
  %4762 = vmatprep.subr.bf16.mxu0 0
  %4763 = vmatpush1.bf16.msra.mxu0 0
  %4764 = vmatprep.mubr.bf16.mxu0 0
  %4765 = vmatmul.mubr.bf16.gmra.mrb[0].mxu0 %v4533
  %v4766 = vpop.f32.mrb[0].mxu0
  %v4767 = vadd.f32 0.0, %v4766
  %v4768 = vpop.f32.mrb[0].mxu0
  %v4769 = vadd.f32 0.0, %v4768
  %v4770 = vpop.f32.mrb[0].mxu0
  %v4771 = vpop.f32.mrb[0].mxu0
  %4772 = vdwg.mxu0
  %4773 = vmatprep.subr.bf16.mxu0 0
  %4774 = vmatpush1.bf16.msra.mxu0 %v4566
  %4775 = vmatprep.subr.bf16.mxu0 0
  %4776 = vmatpush1.bf16.msra.mxu0 0
  %4777 = vmatprep.subr.bf16.mxu0 0
  %4778 = vmatpush1.bf16.msra.mxu0 0
  %4779 = vmatprep.subr.bf16.mxu0 0
  %4780 = vmatpush1.bf16.msra.mxu0 0
  %4781 = vmatprep.subr.bf16.mxu0 0
  %4782 = vmatpush1.bf16.msra.mxu0 0
  %4783 = vmatprep.subr.bf16.mxu0 0
  %4784 = vmatpush1.bf16.msra.mxu0 0
  %4785 = vmatprep.subr.bf16.mxu0 0
  %4786 = vmatpush1.bf16.msra.mxu0 0
  %4787 = vmatprep.subr.bf16.mxu0 0
  %4788 = vmatpush1.bf16.msra.mxu0 0
  %4789 = vmatprep.subr.bf16.mxu0 0
  %4790 = vmatpush1.bf16.msra.mxu0 0
  %4791 = vmatprep.subr.bf16.mxu0 0
  %4792 = vmatpush1.bf16.msra.mxu0 0
  %4793 = vmatprep.subr.bf16.mxu0 0
  %4794 = vmatpush1.bf16.msra.mxu0 0
  %4795 = vmatprep.subr.bf16.mxu0 0
  %4796 = vmatpush1.bf16.msra.mxu0 0
  %4797 = vmatprep.subr.bf16.mxu0 0
  %4798 = vmatpush1.bf16.msra.mxu0 0
  %4799 = vmatprep.subr.bf16.mxu0 0
  %4800 = vmatpush1.bf16.msra.mxu0 0
  %4801 = vmatprep.subr.bf16.mxu0 0
  %4802 = vmatpush1.bf16.msra.mxu0 0
  %4803 = vmatprep.subr.bf16.mxu0 0
  %4804 = vmatpush1.bf16.msra.mxu0 0
  %4805 = vmatprep.mubr.bf16.mxu0 0
  %4806 = vmatmul.mubr.bf16.gmra.mrb[0].mxu0 %v4533
  %v4807 = vpop.f32.mrb[0].mxu0
  %v4808 = vadd.f32 0.0, %v4807
  %v4809 = vpop.f32.mrb[0].mxu0
  %v4810 = vpop.f32.mrb[0].mxu0
  %v4811 = vpop.f32.mrb[0].mxu0
  %4812 = vdwg.mxu0
  %v4813 = vadd.f32 %v4484, %v4603
  %v4814 = vadd.f32 %v4485, %v4605
  %v4815 = vadd.f32 %v4486, %v4644
  %v4816 = vadd.f32 %v4487, %v4646
  %v4817 = vadd.f32 %v4488, %v4685
  %v4818 = vadd.f32 %v4489, %v4687
  %v4819 = vadd.f32 %v4490, %v4726
  %v4820 = vadd.f32 %v4491, %v4728
  %v4821 = vadd.f32 %v4492, %v4767
  %v4822 = vadd.f32 %v4493, %v4769
  %v4823 = vadd.f32 %v4494, %v4808
  %4824 = vrot.lane.b32.xlu0 %v4165, 104
  %v4825 = vpop.permute.xlu0 %4824
  %4826 = vrot.lane.b32.xlu0 %v3810, 1
  %v4827 = vpop.permute.xlu0 %4826
  %4828 = vrot.lane.b32.xlu0 %v3811, 1
  %v4829 = vpop.permute.xlu0 %4828
  %4830 = vrot.lane.b32.xlu0 %v3812, 1
  %v4831 = vpop.permute.xlu0 %4830
  %4832 = vrot.lane.b32.xlu0 %v3813, 1
  %v4833 = vpop.permute.xlu0 %4832
  %4834 = vrot.lane.b32.xlu0 %v3814, 1
  %v4835 = vpop.permute.xlu0 %4834
  %4836 = vrot.lane.b32.xlu0 %v3815, 1
  %v4837 = vpop.permute.xlu0 %4836
  %4838 = vrot.lane.b32.xlu0 %v3816, 1
  %v4839 = vpop.permute.xlu0 %4838
  %4840 = vrot.lane.b32.xlu0 %v3817, 1
  %v4841 = vpop.permute.xlu0 %4840
  %4842 = vrot.lane.b32.xlu0 %v3818, 1
  %v4843 = vpop.permute.xlu0 %4842
  %4844 = vrot.lane.b32.xlu0 %v3819, 1
  %v4845 = vpop.permute.xlu0 %4844
  %4846 = vrot.lane.b32.xlu0 %v3820, 1
  %v4847 = vpop.permute.xlu0 %4846
  %4848 = vrot.lane.b32.xlu0 %v3821, 1
  %v4849 = vpop.permute.xlu0 %4848
  %v4850 = vsel %vm1288, %v4827, %v4829
  %v4851 = vsel %vm1288, %v4829, %v4831
  %v4852 = vsel %vm1288, %v4831, %v4833
  %v4853 = vsel %vm1288, %v4833, %v4835
  %v4854 = vsel %vm1288, %v4835, %v4837
  %v4855 = vsel %vm1288, %v4837, %v4839
  %v4856 = vsel %vm1288, %v4839, %v4841
  %v4857 = vsel %vm1288, %v4841, %v4843
  %v4858 = vsel %vm1288, %v4843, %v4845
  %v4859 = vsel %vm1288, %v4845, %v4847
  %v4860 = vsel %vm1288, %v4847, %v4849
  %v4862 = vsel %vm3869, %v4825, 0
  %v4865 = vsel %vm3873, %v4850, 0
  %v4868 = vsel %vm3873, %v4851, 0
  %v4871 = vsel %vm3873, %v4852, 0
  %v4874 = vsel %vm3873, %v4853, 0
  %v4877 = vsel %vm3873, %v4854, 0
  %v4880 = vsel %vm3873, %v4855, 0
  %v4883 = vsel %vm3873, %v4856, 0
  %v4886 = vsel %vm3873, %v4857, 0
  %v4889 = vsel %vm3873, %v4858, 0
  %v4892 = vsel %vm3873, %v4859, 0
  %v4895 = vsel %vm3873, %v4860, 0
  %4897 = vmatprep.subr.bf16.mxu0 %v4868
  %4898 = vmatpush1.bf16.msra.mxu0 %v4865
  %4899 = vmatprep.subr.bf16.mxu0 0
  %4900 = vmatpush1.bf16.msra.mxu0 0
  %4901 = vmatprep.subr.bf16.mxu0 0
  %4902 = vmatpush1.bf16.msra.mxu0 0
  %4903 = vmatprep.subr.bf16.mxu0 0
  %4904 = vmatpush1.bf16.msra.mxu0 0
  %4905 = vmatprep.subr.bf16.mxu0 0
  %4906 = vmatpush1.bf16.msra.mxu0 0
  %4907 = vmatprep.subr.bf16.mxu0 0
  %4908 = vmatpush1.bf16.msra.mxu0 0
  %4909 = vmatprep.subr.bf16.mxu0 0
  %4910 = vmatpush1.bf16.msra.mxu0 0
  %4911 = vmatprep.subr.bf16.mxu0 0
  %4912 = vmatpush1.bf16.msra.mxu0 0
  %4913 = vmatprep.subr.bf16.mxu0 0
  %4914 = vmatpush1.bf16.msra.mxu0 0
  %4915 = vmatprep.subr.bf16.mxu0 0
  %4916 = vmatpush1.bf16.msra.mxu0 0
  %4917 = vmatprep.subr.bf16.mxu0 0
  %4918 = vmatpush1.bf16.msra.mxu0 0
  %4919 = vmatprep.subr.bf16.mxu0 0
  %4920 = vmatpush1.bf16.msra.mxu0 0
  %4921 = vmatprep.subr.bf16.mxu0 0
  %4922 = vmatpush1.bf16.msra.mxu0 0
  %4923 = vmatprep.subr.bf16.mxu0 0
  %4924 = vmatpush1.bf16.msra.mxu0 0
  %4925 = vmatprep.subr.bf16.mxu0 0
  %4926 = vmatpush1.bf16.msra.mxu0 0
  %4927 = vmatprep.subr.bf16.mxu0 0
  %4928 = vmatpush1.bf16.msra.mxu0 0
  %4929 = vmatprep.mubr.bf16.mxu0 0
  %4930 = vmatmul.mubr.bf16.gmra.mrb[0].mxu0 %v4862
  %v4931 = vpop.f32.mrb[0].mxu0
  %v4932 = vadd.f32 0.0, %v4931
  %v4933 = vpop.f32.mrb[0].mxu0
  %v4934 = vadd.f32 0.0, %v4933
  %v4935 = vpop.f32.mrb[0].mxu0
  %v4936 = vpop.f32.mrb[0].mxu0
  %4937 = vdwg.mxu0
  %4938 = vmatprep.subr.bf16.mxu0 %v4874
  %4939 = vmatpush1.bf16.msra.mxu0 %v4871
  %4940 = vmatprep.subr.bf16.mxu0 0
  %4941 = vmatpush1.bf16.msra.mxu0 0
  %4942 = vmatprep.subr.bf16.mxu0 0
  %4943 = vmatpush1.bf16.msra.mxu0 0
  %4944 = vmatprep.subr.bf16.mxu0 0
  %4945 = vmatpush1.bf16.msra.mxu0 0
  %4946 = vmatprep.subr.bf16.mxu0 0
  %4947 = vmatpush1.bf16.msra.mxu0 0
  %4948 = vmatprep.subr.bf16.mxu0 0
  %4949 = vmatpush1.bf16.msra.mxu0 0
  %4950 = vmatprep.subr.bf16.mxu0 0
  %4951 = vmatpush1.bf16.msra.mxu0 0
  %4952 = vmatprep.subr.bf16.mxu0 0
  %4953 = vmatpush1.bf16.msra.mxu0 0
  %4954 = vmatprep.subr.bf16.mxu0 0
  %4955 = vmatpush1.bf16.msra.mxu0 0
  %4956 = vmatprep.subr.bf16.mxu0 0
  %4957 = vmatpush1.bf16.msra.mxu0 0
  %4958 = vmatprep.subr.bf16.mxu0 0
  %4959 = vmatpush1.bf16.msra.mxu0 0
  %4960 = vmatprep.subr.bf16.mxu0 0
  %4961 = vmatpush1.bf16.msra.mxu0 0
  %4962 = vmatprep.subr.bf16.mxu0 0
  %4963 = vmatpush1.bf16.msra.mxu0 0
  %4964 = vmatprep.subr.bf16.mxu0 0
  %4965 = vmatpush1.bf16.msra.mxu0 0
  %4966 = vmatprep.subr.bf16.mxu0 0
  %4967 = vmatpush1.bf16.msra.mxu0 0
  %4968 = vmatprep.subr.bf16.mxu0 0
  %4969 = vmatpush1.bf16.msra.mxu0 0
  %4970 = vmatprep.mubr.bf16.mxu0 0
  %4971 = vmatmul.mubr.bf16.gmra.mrb[0].mxu0 %v4862
  %v4972 = vpop.f32.mrb[0].mxu0
  %v4973 = vadd.f32 0.0, %v4972
  %v4974 = vpop.f32.mrb[0].mxu0
  %v4975 = vadd.f32 0.0, %v4974
  %v4976 = vpop.f32.mrb[0].mxu0
  %v4977 = vpop.f32.mrb[0].mxu0
  %4978 = vdwg.mxu0
  %4979 = vmatprep.subr.bf16.mxu0 %v4880
  %4980 = vmatpush1.bf16.msra.mxu0 %v4877
  %4981 = vmatprep.subr.bf16.mxu0 0
  %4982 = vmatpush1.bf16.msra.mxu0 0
  %4983 = vmatprep.subr.bf16.mxu0 0
  %4984 = vmatpush1.bf16.msra.mxu0 0
  %4985 = vmatprep.subr.bf16.mxu0 0
  %4986 = vmatpush1.bf16.msra.mxu0 0
  %4987 = vmatprep.subr.bf16.mxu0 0
  %4988 = vmatpush1.bf16.msra.mxu0 0
  %4989 = vmatprep.subr.bf16.mxu0 0
  %4990 = vmatpush1.bf16.msra.mxu0 0
  %4991 = vmatprep.subr.bf16.mxu0 0
  %4992 = vmatpush1.bf16.msra.mxu0 0
  %4993 = vmatprep.subr.bf16.mxu0 0
  %4994 = vmatpush1.bf16.msra.mxu0 0
  %4995 = vmatprep.subr.bf16.mxu0 0
  %4996 = vmatpush1.bf16.msra.mxu0 0
  %4997 = vmatprep.subr.bf16.mxu0 0
  %4998 = vmatpush1.bf16.msra.mxu0 0
  %4999 = vmatprep.subr.bf16.mxu0 0
  %5000 = vmatpush1.bf16.msra.mxu0 0
  %5001 = vmatprep.subr.bf16.mxu0 0
  %5002 = vmatpush1.bf16.msra.mxu0 0
  %5003 = vmatprep.subr.bf16.mxu0 0
  %5004 = vmatpush1.bf16.msra.mxu0 0
  %5005 = vmatprep.subr.bf16.mxu0 0
  %5006 = vmatpush1.bf16.msra.mxu0 0
  %5007 = vmatprep.subr.bf16.mxu0 0
  %5008 = vmatpush1.bf16.msra.mxu0 0
  %5009 = vmatprep.subr.bf16.mxu0 0
  %5010 = vmatpush1.bf16.msra.mxu0 0
  %5011 = vmatprep.mubr.bf16.mxu0 0
  %5012 = vmatmul.mubr.bf16.gmra.mrb[0].mxu0 %v4862
  %v5013 = vpop.f32.mrb[0].mxu0
  %v5014 = vadd.f32 0.0, %v5013
  %v5015 = vpop.f32.mrb[0].mxu0
  %v5016 = vadd.f32 0.0, %v5015
  %v5017 = vpop.f32.mrb[0].mxu0
  %v5018 = vpop.f32.mrb[0].mxu0
  %5019 = vdwg.mxu0
  %5020 = vmatprep.subr.bf16.mxu0 %v4886
  %5021 = vmatpush1.bf16.msra.mxu0 %v4883
  %5022 = vmatprep.subr.bf16.mxu0 0
  %5023 = vmatpush1.bf16.msra.mxu0 0
  %5024 = vmatprep.subr.bf16.mxu0 0
  %5025 = vmatpush1.bf16.msra.mxu0 0
  %5026 = vmatprep.subr.bf16.mxu0 0
  %5027 = vmatpush1.bf16.msra.mxu0 0
  %5028 = vmatprep.subr.bf16.mxu0 0
  %5029 = vmatpush1.bf16.msra.mxu0 0
  %5030 = vmatprep.subr.bf16.mxu0 0
  %5031 = vmatpush1.bf16.msra.mxu0 0
  %5032 = vmatprep.subr.bf16.mxu0 0
  %5033 = vmatpush1.bf16.msra.mxu0 0
  %5034 = vmatprep.subr.bf16.mxu0 0
  %5035 = vmatpush1.bf16.msra.mxu0 0
  %5036 = vmatprep.subr.bf16.mxu0 0
  %5037 = vmatpush1.bf16.msra.mxu0 0
  %5038 = vmatprep.subr.bf16.mxu0 0
  %5039 = vmatpush1.bf16.msra.mxu0 0
  %5040 = vmatprep.subr.bf16.mxu0 0
  %5041 = vmatpush1.bf16.msra.mxu0 0
  %5042 = vmatprep.subr.bf16.mxu0 0
  %5043 = vmatpush1.bf16.msra.mxu0 0
  %5044 = vmatprep.subr.bf16.mxu0 0
  %5045 = vmatpush1.bf16.msra.mxu0 0
  %5046 = vmatprep.subr.bf16.mxu0 0
  %5047 = vmatpush1.bf16.msra.mxu0 0
  %5048 = vmatprep.subr.bf16.mxu0 0
  %5049 = vmatpush1.bf16.msra.mxu0 0
  %5050 = vmatprep.subr.bf16.mxu0 0
  %5051 = vmatpush1.bf16.msra.mxu0 0
  %5052 = vmatprep.mubr.bf16.mxu0 0
  %5053 = vmatmul.mubr.bf16.gmra.mrb[0].mxu0 %v4862
  %v5054 = vpop.f32.mrb[0].mxu0
  %v5055 = vadd.f32 0.0, %v5054
  %v5056 = vpop.f32.mrb[0].mxu0
  %v5057 = vadd.f32 0.0, %v5056
  %v5058 = vpop.f32.mrb[0].mxu0
  %v5059 = vpop.f32.mrb[0].mxu0
  %5060 = vdwg.mxu0
  %5061 = vmatprep.subr.bf16.mxu0 %v4892
  %5062 = vmatpush1.bf16.msra.mxu0 %v4889
  %5063 = vmatprep.subr.bf16.mxu0 0
  %5064 = vmatpush1.bf16.msra.mxu0 0
  %5065 = vmatprep.subr.bf16.mxu0 0
  %5066 = vmatpush1.bf16.msra.mxu0 0
  %5067 = vmatprep.subr.bf16.mxu0 0
  %5068 = vmatpush1.bf16.msra.mxu0 0
  %5069 = vmatprep.subr.bf16.mxu0 0
  %5070 = vmatpush1.bf16.msra.mxu0 0
  %5071 = vmatprep.subr.bf16.mxu0 0
  %5072 = vmatpush1.bf16.msra.mxu0 0
  %5073 = vmatprep.subr.bf16.mxu0 0
  %5074 = vmatpush1.bf16.msra.mxu0 0
  %5075 = vmatprep.subr.bf16.mxu0 0
  %5076 = vmatpush1.bf16.msra.mxu0 0
  %5077 = vmatprep.subr.bf16.mxu0 0
  %5078 = vmatpush1.bf16.msra.mxu0 0
  %5079 = vmatprep.subr.bf16.mxu0 0
  %5080 = vmatpush1.bf16.msra.mxu0 0
  %5081 = vmatprep.subr.bf16.mxu0 0
  %5082 = vmatpush1.bf16.msra.mxu0 0
  %5083 = vmatprep.subr.bf16.mxu0 0
  %5084 = vmatpush1.bf16.msra.mxu0 0
  %5085 = vmatprep.subr.bf16.mxu0 0
  %5086 = vmatpush1.bf16.msra.mxu0 0
  %5087 = vmatprep.subr.bf16.mxu0 0
  %5088 = vmatpush1.bf16.msra.mxu0 0
  %5089 = vmatprep.subr.bf16.mxu0 0
  %5090 = vmatpush1.bf16.msra.mxu0 0
  %5091 = vmatprep.subr.bf16.mxu0 0
  %5092 = vmatpush1.bf16.msra.mxu0 0
  %5093 = vmatprep.mubr.bf16.mxu0 0
  %5094 = vmatmul.mubr.bf16.gmra.mrb[0].mxu0 %v4862
  %v5095 = vpop.f32.mrb[0].mxu0
  %v5096 = vadd.f32 0.0, %v5095
  %v5097 = vpop.f32.mrb[0].mxu0
  %v5098 = vadd.f32 0.0, %v5097
  %v5099 = vpop.f32.mrb[0].mxu0
  %v5100 = vpop.f32.mrb[0].mxu0
  %5101 = vdwg.mxu0
  %5102 = vmatprep.subr.bf16.mxu0 0
  %5103 = vmatpush1.bf16.msra.mxu0 %v4895
  %5104 = vmatprep.subr.bf16.mxu0 0
  %5105 = vmatpush1.bf16.msra.mxu0 0
  %5106 = vmatprep.subr.bf16.mxu0 0
  %5107 = vmatpush1.bf16.msra.mxu0 0
  %5108 = vmatprep.subr.bf16.mxu0 0
  %5109 = vmatpush1.bf16.msra.mxu0 0
  %5110 = vmatprep.subr.bf16.mxu0 0
  %5111 = vmatpush1.bf16.msra.mxu0 0
  %5112 = vmatprep.subr.bf16.mxu0 0
  %5113 = vmatpush1.bf16.msra.mxu0 0
  %5114 = vmatprep.subr.bf16.mxu0 0
  %5115 = vmatpush1.bf16.msra.mxu0 0
  %5116 = vmatprep.subr.bf16.mxu0 0
  %5117 = vmatpush1.bf16.msra.mxu0 0
  %5118 = vmatprep.subr.bf16.mxu0 0
  %5119 = vmatpush1.bf16.msra.mxu0 0
  %5120 = vmatprep.subr.bf16.mxu0 0
  %5121 = vmatpush1.bf16.msra.mxu0 0
  %5122 = vmatprep.subr.bf16.mxu0 0
  %5123 = vmatpush1.bf16.msra.mxu0 0
  %5124 = vmatprep.subr.bf16.mxu0 0
  %5125 = vmatpush1.bf16.msra.mxu0 0
  %5126 = vmatprep.subr.bf16.mxu0 0
  %5127 = vmatpush1.bf16.msra.mxu0 0
  %5128 = vmatprep.subr.bf16.mxu0 0
  %5129 = vmatpush1.bf16.msra.mxu0 0
  %5130 = vmatprep.subr.bf16.mxu0 0
  %5131 = vmatpush1.bf16.msra.mxu0 0
  %5132 = vmatprep.subr.bf16.mxu0 0
  %5133 = vmatpush1.bf16.msra.mxu0 0
  %5134 = vmatprep.mubr.bf16.mxu0 0
  %5135 = vmatmul.mubr.bf16.gmra.mrb[0].mxu0 %v4862
  %v5136 = vpop.f32.mrb[0].mxu0
  %v5137 = vadd.f32 0.0, %v5136
  %v5138 = vpop.f32.mrb[0].mxu0
  %v5139 = vpop.f32.mrb[0].mxu0
  %v5140 = vpop.f32.mrb[0].mxu0
  %5141 = vdwg.mxu0
  %v5142 = vadd.f32 %v4813, %v4932
  %v5143 = vadd.f32 %v4814, %v4934
  %v5144 = vadd.f32 %v4815, %v4973
  %v5145 = vadd.f32 %v4816, %v4975
  %v5146 = vadd.f32 %v4817, %v5014
  %v5147 = vadd.f32 %v4818, %v5016
  %v5148 = vadd.f32 %v4819, %v5055
  %v5149 = vadd.f32 %v4820, %v5057
  %v5150 = vadd.f32 %v4821, %v5096
  %v5151 = vadd.f32 %v4822, %v5098
  %v5152 = vadd.f32 %v4823, %v5137
  %5153 = vrot.lane.b32.xlu0 %v4165, 96
  %v5154 = vpop.permute.xlu0 %5153
  %v5156 = vsel %vm3869, %v5154, 0
  %v5159 = vsel %vm3873, %v3811, 0
  %v5162 = vsel %vm3873, %v3812, 0
  %v5165 = vsel %vm3873, %v3813, 0
  %v5168 = vsel %vm3873, %v3814, 0
  %v5171 = vsel %vm3873, %v3815, 0
  %v5174 = vsel %vm3873, %v3816, 0
  %v5177 = vsel %vm3873, %v3817, 0
  %v5180 = vsel %vm3873, %v3818, 0
  %v5183 = vsel %vm3873, %v3819, 0
  %v5186 = vsel %vm3873, %v3820, 0
  %v5189 = vsel %vm3873, %v3821, 0
  %5191 = vmatprep.subr.bf16.mxu0 %v5162
  %5192 = vmatpush1.bf16.msra.mxu0 %v5159
  %5193 = vmatprep.subr.bf16.mxu0 0
  %5194 = vmatpush1.bf16.msra.mxu0 0
  %5195 = vmatprep.subr.bf16.mxu0 0
  %5196 = vmatpush1.bf16.msra.mxu0 0
  %5197 = vmatprep.subr.bf16.mxu0 0
  %5198 = vmatpush1.bf16.msra.mxu0 0
  %5199 = vmatprep.subr.bf16.mxu0 0
  %5200 = vmatpush1.bf16.msra.mxu0 0
  %5201 = vmatprep.subr.bf16.mxu0 0
  %5202 = vmatpush1.bf16.msra.mxu0 0
  %5203 = vmatprep.subr.bf16.mxu0 0
  %5204 = vmatpush1.bf16.msra.mxu0 0
  %5205 = vmatprep.subr.bf16.mxu0 0
  %5206 = vmatpush1.bf16.msra.mxu0 0
  %5207 = vmatprep.subr.bf16.mxu0 0
  %5208 = vmatpush1.bf16.msra.mxu0 0
  %5209 = vmatprep.subr.bf16.mxu0 0
  %5210 = vmatpush1.bf16.msra.mxu0 0
  %5211 = vmatprep.subr.bf16.mxu0 0
  %5212 = vmatpush1.bf16.msra.mxu0 0
  %5213 = vmatprep.subr.bf16.mxu0 0
  %5214 = vmatpush1.bf16.msra.mxu0 0
  %5215 = vmatprep.subr.bf16.mxu0 0
  %5216 = vmatpush1.bf16.msra.mxu0 0
  %5217 = vmatprep.subr.bf16.mxu0 0
  %5218 = vmatpush1.bf16.msra.mxu0 0
  %5219 = vmatprep.subr.bf16.mxu0 0
  %5220 = vmatpush1.bf16.msra.mxu0 0
  %5221 = vmatprep.subr.bf16.mxu0 0
  %5222 = vmatpush1.bf16.msra.mxu0 0
  %5223 = vmatprep.mubr.bf16.mxu0 0
  %5224 = vmatmul.mubr.bf16.gmra.mrb[0].mxu0 %v5156
  %v5225 = vpop.f32.mrb[0].mxu0
  %v5226 = vadd.f32 0.0, %v5225
  %v5227 = vpop.f32.mrb[0].mxu0
  %v5228 = vadd.f32 0.0, %v5227
  %v5229 = vpop.f32.mrb[0].mxu0
  %v5230 = vpop.f32.mrb[0].mxu0
  %5231 = vdwg.mxu0
  %5232 = vmatprep.subr.bf16.mxu0 %v5168
  %5233 = vmatpush1.bf16.msra.mxu0 %v5165
  %5234 = vmatprep.subr.bf16.mxu0 0
  %5235 = vmatpush1.bf16.msra.mxu0 0
  %5236 = vmatprep.subr.bf16.mxu0 0
  %5237 = vmatpush1.bf16.msra.mxu0 0
  %5238 = vmatprep.subr.bf16.mxu0 0
  %5239 = vmatpush1.bf16.msra.mxu0 0
  %5240 = vmatprep.subr.bf16.mxu0 0
  %5241 = vmatpush1.bf16.msra.mxu0 0
  %5242 = vmatprep.subr.bf16.mxu0 0
  %5243 = vmatpush1.bf16.msra.mxu0 0
  %5244 = vmatprep.subr.bf16.mxu0 0
  %5245 = vmatpush1.bf16.msra.mxu0 0
  %5246 = vmatprep.subr.bf16.mxu0 0
  %5247 = vmatpush1.bf16.msra.mxu0 0
  %5248 = vmatprep.subr.bf16.mxu0 0
  %5249 = vmatpush1.bf16.msra.mxu0 0
  %5250 = vmatprep.subr.bf16.mxu0 0
  %5251 = vmatpush1.bf16.msra.mxu0 0
  %5252 = vmatprep.subr.bf16.mxu0 0
  %5253 = vmatpush1.bf16.msra.mxu0 0
  %5254 = vmatprep.subr.bf16.mxu0 0
  %5255 = vmatpush1.bf16.msra.mxu0 0
  %5256 = vmatprep.subr.bf16.mxu0 0
  %5257 = vmatpush1.bf16.msra.mxu0 0
  %5258 = vmatprep.subr.bf16.mxu0 0
  %5259 = vmatpush1.bf16.msra.mxu0 0
  %5260 = vmatprep.subr.bf16.mxu0 0
  %5261 = vmatpush1.bf16.msra.mxu0 0
  %5262 = vmatprep.subr.bf16.mxu0 0
  %5263 = vmatpush1.bf16.msra.mxu0 0
  %5264 = vmatprep.mubr.bf16.mxu0 0
  %5265 = vmatmul.mubr.bf16.gmra.mrb[0].mxu0 %v5156
  %v5266 = vpop.f32.mrb[0].mxu0
  %v5267 = vadd.f32 0.0, %v5266
  %v5268 = vpop.f32.mrb[0].mxu0
  %v5269 = vadd.f32 0.0, %v5268
  %v5270 = vpop.f32.mrb[0].mxu0
  %v5271 = vpop.f32.mrb[0].mxu0
  %5272 = vdwg.mxu0
  %5273 = vmatprep.subr.bf16.mxu0 %v5174
  %5274 = vmatpush1.bf16.msra.mxu0 %v5171
  %5275 = vmatprep.subr.bf16.mxu0 0
  %5276 = vmatpush1.bf16.msra.mxu0 0
  %5277 = vmatprep.subr.bf16.mxu0 0
  %5278 = vmatpush1.bf16.msra.mxu0 0
  %5279 = vmatprep.subr.bf16.mxu0 0
  %5280 = vmatpush1.bf16.msra.mxu0 0
  %5281 = vmatprep.subr.bf16.mxu0 0
  %5282 = vmatpush1.bf16.msra.mxu0 0
  %5283 = vmatprep.subr.bf16.mxu0 0
  %5284 = vmatpush1.bf16.msra.mxu0 0
  %5285 = vmatprep.subr.bf16.mxu0 0
  %5286 = vmatpush1.bf16.msra.mxu0 0
  %5287 = vmatprep.subr.bf16.mxu0 0
  %5288 = vmatpush1.bf16.msra.mxu0 0
  %5289 = vmatprep.subr.bf16.mxu0 0
  %5290 = vmatpush1.bf16.msra.mxu0 0
  %5291 = vmatprep.subr.bf16.mxu0 0
  %5292 = vmatpush1.bf16.msra.mxu0 0
  %5293 = vmatprep.subr.bf16.mxu0 0
  %5294 = vmatpush1.bf16.msra.mxu0 0
  %5295 = vmatprep.subr.bf16.mxu0 0
  %5296 = vmatpush1.bf16.msra.mxu0 0
  %5297 = vmatprep.subr.bf16.mxu0 0
  %5298 = vmatpush1.bf16.msra.mxu0 0
  %5299 = vmatprep.subr.bf16.mxu0 0
  %5300 = vmatpush1.bf16.msra.mxu0 0
  %5301 = vmatprep.subr.bf16.mxu0 0
  %5302 = vmatpush1.bf16.msra.mxu0 0
  %5303 = vmatprep.subr.bf16.mxu0 0
  %5304 = vmatpush1.bf16.msra.mxu0 0
  %5305 = vmatprep.mubr.bf16.mxu0 0
  %5306 = vmatmul.mubr.bf16.gmra.mrb[0].mxu0 %v5156
  %v5307 = vpop.f32.mrb[0].mxu0
  %v5308 = vadd.f32 0.0, %v5307
  %v5309 = vpop.f32.mrb[0].mxu0
  %v5310 = vadd.f32 0.0, %v5309
  %v5311 = vpop.f32.mrb[0].mxu0
  %v5312 = vpop.f32.mrb[0].mxu0
  %5313 = vdwg.mxu0
  %5314 = vmatprep.subr.bf16.mxu0 %v5180
  %5315 = vmatpush1.bf16.msra.mxu0 %v5177
  %5316 = vmatprep.subr.bf16.mxu0 0
  %5317 = vmatpush1.bf16.msra.mxu0 0
  %5318 = vmatprep.subr.bf16.mxu0 0
  %5319 = vmatpush1.bf16.msra.mxu0 0
  %5320 = vmatprep.subr.bf16.mxu0 0
  %5321 = vmatpush1.bf16.msra.mxu0 0
  %5322 = vmatprep.subr.bf16.mxu0 0
  %5323 = vmatpush1.bf16.msra.mxu0 0
  %5324 = vmatprep.subr.bf16.mxu0 0
  %5325 = vmatpush1.bf16.msra.mxu0 0
  %5326 = vmatprep.subr.bf16.mxu0 0
  %5327 = vmatpush1.bf16.msra.mxu0 0
  %5328 = vmatprep.subr.bf16.mxu0 0
  %5329 = vmatpush1.bf16.msra.mxu0 0
  %5330 = vmatprep.subr.bf16.mxu0 0
  %5331 = vmatpush1.bf16.msra.mxu0 0
  %5332 = vmatprep.subr.bf16.mxu0 0
  %5333 = vmatpush1.bf16.msra.mxu0 0
  %5334 = vmatprep.subr.bf16.mxu0 0
  %5335 = vmatpush1.bf16.msra.mxu0 0
  %5336 = vmatprep.subr.bf16.mxu0 0
  %5337 = vmatpush1.bf16.msra.mxu0 0
  %5338 = vmatprep.subr.bf16.mxu0 0
  %5339 = vmatpush1.bf16.msra.mxu0 0
  %5340 = vmatprep.subr.bf16.mxu0 0
  %5341 = vmatpush1.bf16.msra.mxu0 0
  %5342 = vmatprep.subr.bf16.mxu0 0
  %5343 = vmatpush1.bf16.msra.mxu0 0
  %5344 = vmatprep.subr.bf16.mxu0 0
  %5345 = vmatpush1.bf16.msra.mxu0 0
  %5346 = vmatprep.mubr.bf16.mxu0 0
  %5347 = vmatmul.mubr.bf16.gmra.mrb[0].mxu0 %v5156
  %v5348 = vpop.f32.mrb[0].mxu0
  %v5349 = vadd.f32 0.0, %v5348
  %v5350 = vpop.f32.mrb[0].mxu0
  %v5351 = vadd.f32 0.0, %v5350
  %v5352 = vpop.f32.mrb[0].mxu0
  %v5353 = vpop.f32.mrb[0].mxu0
  %5354 = vdwg.mxu0
  %5355 = vmatprep.subr.bf16.mxu0 %v5186
  %5356 = vmatpush1.bf16.msra.mxu0 %v5183
  %5357 = vmatprep.subr.bf16.mxu0 0
  %5358 = vmatpush1.bf16.msra.mxu0 0
  %5359 = vmatprep.subr.bf16.mxu0 0
  %5360 = vmatpush1.bf16.msra.mxu0 0
  %5361 = vmatprep.subr.bf16.mxu0 0
  %5362 = vmatpush1.bf16.msra.mxu0 0
  %5363 = vmatprep.subr.bf16.mxu0 0
  %5364 = vmatpush1.bf16.msra.mxu0 0
  %5365 = vmatprep.subr.bf16.mxu0 0
  %5366 = vmatpush1.bf16.msra.mxu0 0
  %5367 = vmatprep.subr.bf16.mxu0 0
  %5368 = vmatpush1.bf16.msra.mxu0 0
  %5369 = vmatprep.subr.bf16.mxu0 0
  %5370 = vmatpush1.bf16.msra.mxu0 0
  %5371 = vmatprep.subr.bf16.mxu0 0
  %5372 = vmatpush1.bf16.msra.mxu0 0
  %5373 = vmatprep.subr.bf16.mxu0 0
  %5374 = vmatpush1.bf16.msra.mxu0 0
  %5375 = vmatprep.subr.bf16.mxu0 0
  %5376 = vmatpush1.bf16.msra.mxu0 0
  %5377 = vmatprep.subr.bf16.mxu0 0
  %5378 = vmatpush1.bf16.msra.mxu0 0
  %5379 = vmatprep.subr.bf16.mxu0 0
  %5380 = vmatpush1.bf16.msra.mxu0 0
  %5381 = vmatprep.subr.bf16.mxu0 0
  %5382 = vmatpush1.bf16.msra.mxu0 0
  %5383 = vmatprep.subr.bf16.mxu0 0
  %5384 = vmatpush1.bf16.msra.mxu0 0
  %5385 = vmatprep.subr.bf16.mxu0 0
  %5386 = vmatpush1.bf16.msra.mxu0 0
  %5387 = vmatprep.mubr.bf16.mxu0 0
  %5388 = vmatmul.mubr.bf16.gmra.mrb[0].mxu0 %v5156
  %v5389 = vpop.f32.mrb[0].mxu0
  %v5390 = vadd.f32 0.0, %v5389
  %v5391 = vpop.f32.mrb[0].mxu0
  %v5392 = vadd.f32 0.0, %v5391
  %v5393 = vpop.f32.mrb[0].mxu0
  %v5394 = vpop.f32.mrb[0].mxu0
  %5395 = vdwg.mxu0
  %5396 = vmatprep.subr.bf16.mxu0 0
  %5397 = vmatpush1.bf16.msra.mxu0 %v5189
  %5398 = vmatprep.subr.bf16.mxu0 0
  %5399 = vmatpush1.bf16.msra.mxu0 0
  %5400 = vmatprep.subr.bf16.mxu0 0
  %5401 = vmatpush1.bf16.msra.mxu0 0
  %5402 = vmatprep.subr.bf16.mxu0 0
  %5403 = vmatpush1.bf16.msra.mxu0 0
  %5404 = vmatprep.subr.bf16.mxu0 0
  %5405 = vmatpush1.bf16.msra.mxu0 0
  %5406 = vmatprep.subr.bf16.mxu0 0
  %5407 = vmatpush1.bf16.msra.mxu0 0
  %5408 = vmatprep.subr.bf16.mxu0 0
  %5409 = vmatpush1.bf16.msra.mxu0 0
  %5410 = vmatprep.subr.bf16.mxu0 0
  %5411 = vmatpush1.bf16.msra.mxu0 0
  %5412 = vmatprep.subr.bf16.mxu0 0
  %5413 = vmatpush1.bf16.msra.mxu0 0
  %5414 = vmatprep.subr.bf16.mxu0 0
  %5415 = vmatpush1.bf16.msra.mxu0 0
  %5416 = vmatprep.subr.bf16.mxu0 0
  %5417 = vmatpush1.bf16.msra.mxu0 0
  %5418 = vmatprep.subr.bf16.mxu0 0
  %5419 = vmatpush1.bf16.msra.mxu0 0
  %5420 = vmatprep.subr.bf16.mxu0 0
  %5421 = vmatpush1.bf16.msra.mxu0 0
  %5422 = vmatprep.subr.bf16.mxu0 0
  %5423 = vmatpush1.bf16.msra.mxu0 0
  %5424 = vmatprep.subr.bf16.mxu0 0
  %5425 = vmatpush1.bf16.msra.mxu0 0
  %5426 = vmatprep.subr.bf16.mxu0 0
  %5427 = vmatpush1.bf16.msra.mxu0 0
  %5428 = vmatprep.mubr.bf16.mxu0 0
  %5429 = vmatmul.mubr.bf16.gmra.mrb[0].mxu0 %v5156
  %v5430 = vpop.f32.mrb[0].mxu0
  %v5431 = vadd.f32 0.0, %v5430
  %v5432 = vpop.f32.mrb[0].mxu0
  %v5433 = vpop.f32.mrb[0].mxu0
  %v5434 = vpop.f32.mrb[0].mxu0
  %5435 = vdwg.mxu0
  %v5436 = vadd.f32 %v5142, %v5226
  %v5437 = vadd.f32 %v5143, %v5228
  %v5438 = vadd.f32 %v5144, %v5267
  %v5439 = vadd.f32 %v5145, %v5269
  %v5440 = vadd.f32 %v5146, %v5308
  %v5441 = vadd.f32 %v5147, %v5310
  %v5442 = vadd.f32 %v5148, %v5349
  %v5443 = vadd.f32 %v5149, %v5351
  %v5444 = vadd.f32 %v5150, %v5390
  %v5445 = vadd.f32 %v5151, %v5392
  %v5446 = vadd.f32 %v5152, %v5431
  %v5447 = vld [vmem:[#allocation3 + $0x8] sm:$0xff]
  %v5448 = vld [vmem:[#allocation3 + $0x10] sm:$0xff]
  %v5449 = vld [vmem:[#allocation3 + $0x18] sm:$0xff]
  %v5450 = vld [vmem:[#allocation3 + $0x20] sm:$0xff]
  %v5451 = vld [vmem:[#allocation3 + $0x28] sm:$0xff]
  %v5452 = vld [vmem:[#allocation3 + $0x30] sm:$0xff]
  %v5453 = vld [vmem:[#allocation3 + $0x38] sm:$0xff]
  %v5454 = vld [vmem:[#allocation3 + $0x40] sm:$0xff]
  %v5455 = vld [vmem:[#allocation3 + $0x48] sm:$0xff]
  %v5456 = vld [vmem:[#allocation3 + $0x50] sm:$0xff]
  %v5457 = vld [vmem:[#allocation3 + $0x58] sm:$0xff]
  %v5458 = vld [vmem:[#allocation3 + $0x60] sm:$0xff]
  %v5459 = vpack.c.bf16 %v5447, %v5447
  %v5460 = vpack.c.bf16 %v5448, %v5448
  %v5461 = vpack.c.bf16 %v5449, %v5449
  %v5462 = vpack.c.bf16 %v5450, %v5450
  %v5463 = vpack.c.bf16 %v5451, %v5451
  %v5464 = vpack.c.bf16 %v5452, %v5452
  %v5465 = vpack.c.bf16 %v5453, %v5453
  %v5466 = vpack.c.bf16 %v5454, %v5454
  %v5467 = vpack.c.bf16 %v5455, %v5455
  %v5468 = vpack.c.bf16 %v5456, %v5456
  %v5469 = vpack.c.bf16 %v5457, %v5457
  %v5470 = vpack.c.bf16 %v5458, %v5458
  %5471 = vrot.lane.b32.xlu0 %v4165, 88
  %v5472 = vpop.permute.xlu0 %5471
  %5485 = vrot.lane.b32.xlu0 %v5459, 127
  %v5486 = vpop.permute.xlu0 %5485
  %5487 = vrot.lane.b32.xlu0 %v5460, 127
  %v5488 = vpop.permute.xlu0 %5487
  %5489 = vrot.lane.b32.xlu0 %v5461, 127
  %v5490 = vpop.permute.xlu0 %5489
  %5491 = vrot.lane.b32.xlu0 %v5462, 127
  %v5492 = vpop.permute.xlu0 %5491
  %5493 = vrot.lane.b32.xlu0 %v5463, 127
  %v5494 = vpop.permute.xlu0 %5493
  %5495 = vrot.lane.b32.xlu0 %v5464, 127
  %v5496 = vpop.permute.xlu0 %5495
  %5497 = vrot.lane.b32.xlu0 %v5465, 127
  %v5498 = vpop.permute.xlu0 %5497
  %5499 = vrot.lane.b32.xlu0 %v5466, 127
  %v5500 = vpop.permute.xlu0 %5499
  %5501 = vrot.lane.b32.xlu0 %v5467, 127
  %v5502 = vpop.permute.xlu0 %5501
  %5503 = vrot.lane.b32.xlu0 %v5468, 127
  %v5504 = vpop.permute.xlu0 %5503
  %5505 = vrot.lane.b32.xlu0 %v5469, 127
  %v5506 = vpop.permute.xlu0 %5505
  %5507 = vrot.lane.b32.xlu0 %v5470, 127
  %v5508 = vpop.permute.xlu0 %5507
  %v5509 = vsel %vm2000, %v5486, %v5488
  %v5510 = vsel %vm2000, %v5488, %v5490
  %v5511 = vsel %vm2000, %v5490, %v5492
  %v5512 = vsel %vm2000, %v5492, %v5494
  %v5513 = vsel %vm2000, %v5494, %v5496
  %v5514 = vsel %vm2000, %v5496, %v5498
  %v5515 = vsel %vm2000, %v5498, %v5500
  %v5516 = vsel %vm2000, %v5500, %v5502
  %v5517 = vsel %vm2000, %v5502, %v5504
  %v5518 = vsel %vm2000, %v5504, %v5506
  %v5519 = vsel %vm2000, %v5506, %v5508
  %v5521 = vsel %vm3869, %v5472, 0
  %v5524 = vsel %vm3873, %v5509, 0
  %v5527 = vsel %vm3873, %v5510, 0
  %v5530 = vsel %vm3873, %v5511, 0
  %v5533 = vsel %vm3873, %v5512, 0
  %v5536 = vsel %vm3873, %v5513, 0
  %v5539 = vsel %vm3873, %v5514, 0
  %v5542 = vsel %vm3873, %v5515, 0
  %v5545 = vsel %vm3873, %v5516, 0
  %v5548 = vsel %vm3873, %v5517, 0
  %v5551 = vsel %vm3873, %v5518, 0
  %v5554 = vsel %vm3873, %v5519, 0
  %5556 = vmatprep.subr.bf16.mxu0 %v5527
  %5557 = vmatpush1.bf16.msra.mxu0 %v5524
  %5558 = vmatprep.subr.bf16.mxu0 0
  %5559 = vmatpush1.bf16.msra.mxu0 0
  %5560 = vmatprep.subr.bf16.mxu0 0
  %5561 = vmatpush1.bf16.msra.mxu0 0
  %5562 = vmatprep.subr.bf16.mxu0 0
  %5563 = vmatpush1.bf16.msra.mxu0 0
  %5564 = vmatprep.subr.bf16.mxu0 0
  %5565 = vmatpush1.bf16.msra.mxu0 0
  %5566 = vmatprep.subr.bf16.mxu0 0
  %5567 = vmatpush1.bf16.msra.mxu0 0
  %5568 = vmatprep.subr.bf16.mxu0 0
  %5569 = vmatpush1.bf16.msra.mxu0 0
  %5570 = vmatprep.subr.bf16.mxu0 0
  %5571 = vmatpush1.bf16.msra.mxu0 0
  %5572 = vmatprep.subr.bf16.mxu0 0
  %5573 = vmatpush1.bf16.msra.mxu0 0
  %5574 = vmatprep.subr.bf16.mxu0 0
  %5575 = vmatpush1.bf16.msra.mxu0 0
  %5576 = vmatprep.subr.bf16.mxu0 0
  %5577 = vmatpush1.bf16.msra.mxu0 0
  %5578 = vmatprep.subr.bf16.mxu0 0
  %5579 = vmatpush1.bf16.msra.mxu0 0
  %5580 = vmatprep.subr.bf16.mxu0 0
  %5581 = vmatpush1.bf16.msra.mxu0 0
  %5582 = vmatprep.subr.bf16.mxu0 0
  %5583 = vmatpush1.bf16.msra.mxu0 0
  %5584 = vmatprep.subr.bf16.mxu0 0
  %5585 = vmatpush1.bf16.msra.mxu0 0
  %5586 = vmatprep.subr.bf16.mxu0 0
  %5587 = vmatpush1.bf16.msra.mxu0 0
  %5588 = vmatprep.mubr.bf16.mxu0 0
  %5589 = vmatmul.mubr.bf16.gmra.mrb[0].mxu0 %v5521
  %v5590 = vpop.f32.mrb[0].mxu0
  %v5591 = vadd.f32 0.0, %v5590
  %v5592 = vpop.f32.mrb[0].mxu0
  %v5593 = vadd.f32 0.0, %v5592
  %v5594 = vpop.f32.mrb[0].mxu0
  %v5595 = vpop.f32.mrb[0].mxu0
  %5596 = vdwg.mxu0
  %5597 = vmatprep.subr.bf16.mxu0 %v5533
  %5598 = vmatpush1.bf16.msra.mxu0 %v5530
  %5599 = vmatprep.subr.bf16.mxu0 0
  %5600 = vmatpush1.bf16.msra.mxu0 0
  %5601 = vmatprep.subr.bf16.mxu0 0
  %5602 = vmatpush1.bf16.msra.mxu0 0
  %5603 = vmatprep.subr.bf16.mxu0 0
  %5604 = vmatpush1.bf16.msra.mxu0 0
  %5605 = vmatprep.subr.bf16.mxu0 0
  %5606 = vmatpush1.bf16.msra.mxu0 0
  %5607 = vmatprep.subr.bf16.mxu0 0
  %5608 = vmatpush1.bf16.msra.mxu0 0
  %5609 = vmatprep.subr.bf16.mxu0 0
  %5610 = vmatpush1.bf16.msra.mxu0 0
  %5611 = vmatprep.subr.bf16.mxu0 0
  %5612 = vmatpush1.bf16.msra.mxu0 0
  %5613 = vmatprep.subr.bf16.mxu0 0
  %5614 = vmatpush1.bf16.msra.mxu0 0
  %5615 = vmatprep.subr.bf16.mxu0 0
  %5616 = vmatpush1.bf16.msra.mxu0 0
  %5617 = vmatprep.subr.bf16.mxu0 0
  %5618 = vmatpush1.bf16.msra.mxu0 0
  %5619 = vmatprep.subr.bf16.mxu0 0
  %5620 = vmatpush1.bf16.msra.mxu0 0
  %5621 = vmatprep.subr.bf16.mxu0 0
  %5622 = vmatpush1.bf16.msra.mxu0 0
  %5623 = vmatprep.subr.bf16.mxu0 0
  %5624 = vmatpush1.bf16.msra.mxu0 0
  %5625 = vmatprep.subr.bf16.mxu0 0
  %5626 = vmatpush1.bf16.msra.mxu0 0
  %5627 = vmatprep.subr.bf16.mxu0 0
  %5628 = vmatpush1.bf16.msra.mxu0 0
  %5629 = vmatprep.mubr.bf16.mxu0 0
  %5630 = vmatmul.mubr.bf16.gmra.mrb[0].mxu0 %v5521
  %v5631 = vpop.f32.mrb[0].mxu0
  %v5632 = vadd.f32 0.0, %v5631
  %v5633 = vpop.f32.mrb[0].mxu0
  %v5634 = vadd.f32 0.0, %v5633
  %v5635 = vpop.f32.mrb[0].mxu0
  %v5636 = vpop.f32.mrb[0].mxu0
  %5637 = vdwg.mxu0
  %5638 = vmatprep.subr.bf16.mxu0 %v5539
  %5639 = vmatpush1.bf16.msra.mxu0 %v5536
  %5640 = vmatprep.subr.bf16.mxu0 0
  %5641 = vmatpush1.bf16.msra.mxu0 0
  %5642 = vmatprep.subr.bf16.mxu0 0
  %5643 = vmatpush1.bf16.msra.mxu0 0
  %5644 = vmatprep.subr.bf16.mxu0 0
  %5645 = vmatpush1.bf16.msra.mxu0 0
  %5646 = vmatprep.subr.bf16.mxu0 0
  %5647 = vmatpush1.bf16.msra.mxu0 0
  %5648 = vmatprep.subr.bf16.mxu0 0
  %5649 = vmatpush1.bf16.msra.mxu0 0
  %5650 = vmatprep.subr.bf16.mxu0 0
  %5651 = vmatpush1.bf16.msra.mxu0 0
  %5652 = vmatprep.subr.bf16.mxu0 0
  %5653 = vmatpush1.bf16.msra.mxu0 0
  %5654 = vmatprep.subr.bf16.mxu0 0
  %5655 = vmatpush1.bf16.msra.mxu0 0
  %5656 = vmatprep.subr.bf16.mxu0 0
  %5657 = vmatpush1.bf16.msra.mxu0 0
  %5658 = vmatprep.subr.bf16.mxu0 0
  %5659 = vmatpush1.bf16.msra.mxu0 0
  %5660 = vmatprep.subr.bf16.mxu0 0
  %5661 = vmatpush1.bf16.msra.mxu0 0
  %5662 = vmatprep.subr.bf16.mxu0 0
  %5663 = vmatpush1.bf16.msra.mxu0 0
  %5664 = vmatprep.subr.bf16.mxu0 0
  %5665 = vmatpush1.bf16.msra.mxu0 0
  %5666 = vmatprep.subr.bf16.mxu0 0
  %5667 = vmatpush1.bf16.msra.mxu0 0
  %5668 = vmatprep.subr.bf16.mxu0 0
  %5669 = vmatpush1.bf16.msra.mxu0 0
  %5670 = vmatprep.mubr.bf16.mxu0 0
  %5671 = vmatmul.mubr.bf16.gmra.mrb[0].mxu0 %v5521
  %v5672 = vpop.f32.mrb[0].mxu0
  %v5673 = vadd.f32 0.0, %v5672
  %v5674 = vpop.f32.mrb[0].mxu0
  %v5675 = vadd.f32 0.0, %v5674
  %v5676 = vpop.f32.mrb[0].mxu0
  %v5677 = vpop.f32.mrb[0].mxu0
  %5678 = vdwg.mxu0
  %5679 = vmatprep.subr.bf16.mxu0 %v5545
  %5680 = vmatpush1.bf16.msra.mxu0 %v5542
  %5681 = vmatprep.subr.bf16.mxu0 0
  %5682 = vmatpush1.bf16.msra.mxu0 0
  %5683 = vmatprep.subr.bf16.mxu0 0
  %5684 = vmatpush1.bf16.msra.mxu0 0
  %5685 = vmatprep.subr.bf16.mxu0 0
  %5686 = vmatpush1.bf16.msra.mxu0 0
  %5687 = vmatprep.subr.bf16.mxu0 0
  %5688 = vmatpush1.bf16.msra.mxu0 0
  %5689 = vmatprep.subr.bf16.mxu0 0
  %5690 = vmatpush1.bf16.msra.mxu0 0
  %5691 = vmatprep.subr.bf16.mxu0 0
  %5692 = vmatpush1.bf16.msra.mxu0 0
  %5693 = vmatprep.subr.bf16.mxu0 0
  %5694 = vmatpush1.bf16.msra.mxu0 0
  %5695 = vmatprep.subr.bf16.mxu0 0
  %5696 = vmatpush1.bf16.msra.mxu0 0
  %5697 = vmatprep.subr.bf16.mxu0 0
  %5698 = vmatpush1.bf16.msra.mxu0 0
  %5699 = vmatprep.subr.bf16.mxu0 0
  %5700 = vmatpush1.bf16.msra.mxu0 0
  %5701 = vmatprep.subr.bf16.mxu0 0
  %5702 = vmatpush1.bf16.msra.mxu0 0
  %5703 = vmatprep.subr.bf16.mxu0 0
  %5704 = vmatpush1.bf16.msra.mxu0 0
  %5705 = vmatprep.subr.bf16.mxu0 0
  %5706 = vmatpush1.bf16.msra.mxu0 0
  %5707 = vmatprep.subr.bf16.mxu0 0
  %5708 = vmatpush1.bf16.msra.mxu0 0
  %5709 = vmatprep.subr.bf16.mxu0 0
  %5710 = vmatpush1.bf16.msra.mxu0 0
  %5711 = vmatprep.mubr.bf16.mxu0 0
  %5712 = vmatmul.mubr.bf16.gmra.mrb[0].mxu0 %v5521
  %v5713 = vpop.f32.mrb[0].mxu0
  %v5714 = vadd.f32 0.0, %v5713
  %v5715 = vpop.f32.mrb[0].mxu0
  %v5716 = vadd.f32 0.0, %v5715
  %v5717 = vpop.f32.mrb[0].mxu0
  %v5718 = vpop.f32.mrb[0].mxu0
  %5719 = vdwg.mxu0
  %5720 = vmatprep.subr.bf16.mxu0 %v5551
  %5721 = vmatpush1.bf16.msra.mxu0 %v5548
  %5722 = vmatprep.subr.bf16.mxu0 0
  %5723 = vmatpush1.bf16.msra.mxu0 0
  %5724 = vmatprep.subr.bf16.mxu0 0
  %5725 = vmatpush1.bf16.msra.mxu0 0
  %5726 = vmatprep.subr.bf16.mxu0 0
  %5727 = vmatpush1.bf16.msra.mxu0 0
  %5728 = vmatprep.subr.bf16.mxu0 0
  %5729 = vmatpush1.bf16.msra.mxu0 0
  %5730 = vmatprep.subr.bf16.mxu0 0
  %5731 = vmatpush1.bf16.msra.mxu0 0
  %5732 = vmatprep.subr.bf16.mxu0 0
  %5733 = vmatpush1.bf16.msra.mxu0 0
  %5734 = vmatprep.subr.bf16.mxu0 0
  %5735 = vmatpush1.bf16.msra.mxu0 0
  %5736 = vmatprep.subr.bf16.mxu0 0
  %5737 = vmatpush1.bf16.msra.mxu0 0
  %5738 = vmatprep.subr.bf16.mxu0 0
  %5739 = vmatpush1.bf16.msra.mxu0 0
  %5740 = vmatprep.subr.bf16.mxu0 0
  %5741 = vmatpush1.bf16.msra.mxu0 0
  %5742 = vmatprep.subr.bf16.mxu0 0
  %5743 = vmatpush1.bf16.msra.mxu0 0
  %5744 = vmatprep.subr.bf16.mxu0 0
  %5745 = vmatpush1.bf16.msra.mxu0 0
  %5746 = vmatprep.subr.bf16.mxu0 0
  %5747 = vmatpush1.bf16.msra.mxu0 0
  %5748 = vmatprep.subr.bf16.mxu0 0
  %5749 = vmatpush1.bf16.msra.mxu0 0
  %5750 = vmatprep.subr.bf16.mxu0 0
  %5751 = vmatpush1.bf16.msra.mxu0 0
  %5752 = vmatprep.mubr.bf16.mxu0 0
  %5753 = vmatmul.mubr.bf16.gmra.mrb[0].mxu0 %v5521
  %v5754 = vpop.f32.mrb[0].mxu0
  %v5755 = vadd.f32 0.0, %v5754
  %v5756 = vpop.f32.mrb[0].mxu0
  %v5757 = vadd.f32 0.0, %v5756
  %v5758 = vpop.f32.mrb[0].mxu0
  %v5759 = vpop.f32.mrb[0].mxu0
  %5760 = vdwg.mxu0
  %5761 = vmatprep.subr.bf16.mxu0 0
  %5762 = vmatpush1.bf16.msra.mxu0 %v5554
  %5763 = vmatprep.subr.bf16.mxu0 0
  %5764 = vmatpush1.bf16.msra.mxu0 0
  %5765 = vmatprep.subr.bf16.mxu0 0
  %5766 = vmatpush1.bf16.msra.mxu0 0
  %5767 = vmatprep.subr.bf16.mxu0 0
  %5768 = vmatpush1.bf16.msra.mxu0 0
  %5769 = vmatprep.subr.bf16.mxu0 0
  %5770 = vmatpush1.bf16.msra.mxu0 0
  %5771 = vmatprep.subr.bf16.mxu0 0
  %5772 = vmatpush1.bf16.msra.mxu0 0
  %5773 = vmatprep.subr.bf16.mxu0 0
  %5774 = vmatpush1.bf16.msra.mxu0 0
  %5775 = vmatprep.subr.bf16.mxu0 0
  %5776 = vmatpush1.bf16.msra.mxu0 0
  %5777 = vmatprep.subr.bf16.mxu0 0
  %5778 = vmatpush1.bf16.msra.mxu0 0
  %5779 = vmatprep.subr.bf16.mxu0 0
  %5780 = vmatpush1.bf16.msra.mxu0 0
  %5781 = vmatprep.subr.bf16.mxu0 0
  %5782 = vmatpush1.bf16.msra.mxu0 0
  %5783 = vmatprep.subr.bf16.mxu0 0
  %5784 = vmatpush1.bf16.msra.mxu0 0
  %5785 = vmatprep.subr.bf16.mxu0 0
  %5786 = vmatpush1.bf16.msra.mxu0 0
  %5787 = vmatprep.subr.bf16.mxu0 0
  %5788 = vmatpush1.bf16.msra.mxu0 0
  %5789 = vmatprep.subr.bf16.mxu0 0
  %5790 = vmatpush1.bf16.msra.mxu0 0
  %5791 = vmatprep.subr.bf16.mxu0 0
  %5792 = vmatpush1.bf16.msra.mxu0 0
  %5793 = vmatprep.mubr.bf16.mxu0 0
  %5794 = vmatmul.mubr.bf16.gmra.mrb[0].mxu0 %v5521
  %v5795 = vpop.f32.mrb[0].mxu0
  %v5796 = vadd.f32 0.0, %v5795
  %v5797 = vpop.f32.mrb[0].mxu0
  %v5798 = vpop.f32.mrb[0].mxu0
  %v5799 = vpop.f32.mrb[0].mxu0
  %5800 = vdwg.mxu0
  %v5801 = vadd.f32 %v5436, %v5591
  %v5802 = vadd.f32 %v5437, %v5593
  %v5803 = vadd.f32 %v5438, %v5632
  %v5804 = vadd.f32 %v5439, %v5634
  %v5805 = vadd.f32 %v5440, %v5673
  %v5806 = vadd.f32 %v5441, %v5675
  %v5807 = vadd.f32 %v5442, %v5714
  %v5808 = vadd.f32 %v5443, %v5716
  %v5809 = vadd.f32 %v5444, %v5755
  %v5810 = vadd.f32 %v5445, %v5757
  %v5811 = vadd.f32 %v5446, %v5796
  %5812 = vrot.lane.b32.xlu0 %v4165, 80
  %v5813 = vpop.permute.xlu0 %5812
  %5814 = vrot.lane.b32.xlu0 %v5459, 97
  %v5815 = vpop.permute.xlu0 %5814
  %5816 = vrot.lane.b32.xlu0 %v5460, 97
  %v5817 = vpop.permute.xlu0 %5816
  %5818 = vrot.lane.b32.xlu0 %v5461, 97
  %v5819 = vpop.permute.xlu0 %5818
  %5820 = vrot.lane.b32.xlu0 %v5462, 97
  %v5821 = vpop.permute.xlu0 %5820
  %5822 = vrot.lane.b32.xlu0 %v5463, 97
  %v5823 = vpop.permute.xlu0 %5822
  %5824 = vrot.lane.b32.xlu0 %v5464, 97
  %v5825 = vpop.permute.xlu0 %5824
  %5826 = vrot.lane.b32.xlu0 %v5465, 97
  %v5827 = vpop.permute.xlu0 %5826
  %5828 = vrot.lane.b32.xlu0 %v5466, 97
  %v5829 = vpop.permute.xlu0 %5828
  %5830 = vrot.lane.b32.xlu0 %v5467, 97
  %v5831 = vpop.permute.xlu0 %5830
  %5832 = vrot.lane.b32.xlu0 %v5468, 97
  %v5833 = vpop.permute.xlu0 %5832
  %5834 = vrot.lane.b32.xlu0 %v5469, 97
  %v5835 = vpop.permute.xlu0 %5834
  %5836 = vrot.lane.b32.xlu0 %v5470, 97
  %v5837 = vpop.permute.xlu0 %5836
  %v5838 = vsel %vm2382, %v5815, %v5817
  %v5839 = vsel %vm2382, %v5817, %v5819
  %v5840 = vsel %vm2382, %v5819, %v5821
  %v5841 = vsel %vm2382, %v5821, %v5823
  %v5842 = vsel %vm2382, %v5823, %v5825
  %v5843 = vsel %vm2382, %v5825, %v5827
  %v5844 = vsel %vm2382, %v5827, %v5829
  %v5845 = vsel %vm2382, %v5829, %v5831
  %v5846 = vsel %vm2382, %v5831, %v5833
  %v5847 = vsel %vm2382, %v5833, %v5835
  %v5848 = vsel %vm2382, %v5835, %v5837
  %v5850 = vsel %vm3869, %v5813, 0
  %v5853 = vsel %vm3873, %v5838, 0
  %v5856 = vsel %vm3873, %v5839, 0
  %v5859 = vsel %vm3873, %v5840, 0
  %v5862 = vsel %vm3873, %v5841, 0
  %v5865 = vsel %vm3873, %v5842, 0
  %v5868 = vsel %vm3873, %v5843, 0
  %v5871 = vsel %vm3873, %v5844, 0
  %v5874 = vsel %vm3873, %v5845, 0
  %v5877 = vsel %vm3873, %v5846, 0
  %v5880 = vsel %vm3873, %v5847, 0
  %v5883 = vsel %vm3873, %v5848, 0
  %5885 = vmatprep.subr.bf16.mxu0 %v5856
  %5886 = vmatpush1.bf16.msra.mxu0 %v5853
  %5887 = vmatprep.subr.bf16.mxu0 0
  %5888 = vmatpush1.bf16.msra.mxu0 0
  %5889 = vmatprep.subr.bf16.mxu0 0
  %5890 = vmatpush1.bf16.msra.mxu0 0
  %5891 = vmatprep.subr.bf16.mxu0 0
  %5892 = vmatpush1.bf16.msra.mxu0 0
  %5893 = vmatprep.subr.bf16.mxu0 0
  %5894 = vmatpush1.bf16.msra.mxu0 0
  %5895 = vmatprep.subr.bf16.mxu0 0
  %5896 = vmatpush1.bf16.msra.mxu0 0
  %5897 = vmatprep.subr.bf16.mxu0 0
  %5898 = vmatpush1.bf16.msra.mxu0 0
  %5899 = vmatprep.subr.bf16.mxu0 0
  %5900 = vmatpush1.bf16.msra.mxu0 0
  %5901 = vmatprep.subr.bf16.mxu0 0
  %5902 = vmatpush1.bf16.msra.mxu0 0
  %5903 = vmatprep.subr.bf16.mxu0 0
  %5904 = vmatpush1.bf16.msra.mxu0 0
  %5905 = vmatprep.subr.bf16.mxu0 0
  %5906 = vmatpush1.bf16.msra.mxu0 0
  %5907 = vmatprep.subr.bf16.mxu0 0
  %5908 = vmatpush1.bf16.msra.mxu0 0
  %5909 = vmatprep.subr.bf16.mxu0 0
  %5910 = vmatpush1.bf16.msra.mxu0 0
  %5911 = vmatprep.subr.bf16.mxu0 0
  %5912 = vmatpush1.bf16.msra.mxu0 0
  %5913 = vmatprep.subr.bf16.mxu0 0
  %5914 = vmatpush1.bf16.msra.mxu0 0
  %5915 = vmatprep.subr.bf16.mxu0 0
  %5916 = vmatpush1.bf16.msra.mxu0 0
  %5917 = vmatprep.mubr.bf16.mxu0 0
  %5918 = vmatmul.mubr.bf16.gmra.mrb[0].mxu0 %v5850
  %v5919 = vpop.f32.mrb[0].mxu0
  %v5920 = vadd.f32 0.0, %v5919
  %v5921 = vpop.f32.mrb[0].mxu0
  %v5922 = vadd.f32 0.0, %v5921
  %v5923 = vpop.f32.mrb[0].mxu0
  %v5924 = vpop.f32.mrb[0].mxu0
  %5925 = vdwg.mxu0
  %5926 = vmatprep.subr.bf16.mxu0 %v5862
  %5927 = vmatpush1.bf16.msra.mxu0 %v5859
  %5928 = vmatprep.subr.bf16.mxu0 0
  %5929 = vmatpush1.bf16.msra.mxu0 0
  %5930 = vmatprep.subr.bf16.mxu0 0
  %5931 = vmatpush1.bf16.msra.mxu0 0
  %5932 = vmatprep.subr.bf16.mxu0 0
  %5933 = vmatpush1.bf16.msra.mxu0 0
  %5934 = vmatprep.subr.bf16.mxu0 0
  %5935 = vmatpush1.bf16.msra.mxu0 0
  %5936 = vmatprep.subr.bf16.mxu0 0
  %5937 = vmatpush1.bf16.msra.mxu0 0
  %5938 = vmatprep.subr.bf16.mxu0 0
  %5939 = vmatpush1.bf16.msra.mxu0 0
  %5940 = vmatprep.subr.bf16.mxu0 0
  %5941 = vmatpush1.bf16.msra.mxu0 0
  %5942 = vmatprep.subr.bf16.mxu0 0
  %5943 = vmatpush1.bf16.msra.mxu0 0
  %5944 = vmatprep.subr.bf16.mxu0 0
  %5945 = vmatpush1.bf16.msra.mxu0 0
  %5946 = vmatprep.subr.bf16.mxu0 0
  %5947 = vmatpush1.bf16.msra.mxu0 0
  %5948 = vmatprep.subr.bf16.mxu0 0
  %5949 = vmatpush1.bf16.msra.mxu0 0
  %5950 = vmatprep.subr.bf16.mxu0 0
  %5951 = vmatpush1.bf16.msra.mxu0 0
  %5952 = vmatprep.subr.bf16.mxu0 0
  %5953 = vmatpush1.bf16.msra.mxu0 0
  %5954 = vmatprep.subr.bf16.mxu0 0
  %5955 = vmatpush1.bf16.msra.mxu0 0
  %5956 = vmatprep.subr.bf16.mxu0 0
  %5957 = vmatpush1.bf16.msra.mxu0 0
  %5958 = vmatprep.mubr.bf16.mxu0 0
  %5959 = vmatmul.mubr.bf16.gmra.mrb[0].mxu0 %v5850
  %v5960 = vpop.f32.mrb[0].mxu0
  %v5961 = vadd.f32 0.0, %v5960
  %v5962 = vpop.f32.mrb[0].mxu0
  %v5963 = vadd.f32 0.0, %v5962
  %v5964 = vpop.f32.mrb[0].mxu0
  %v5965 = vpop.f32.mrb[0].mxu0
  %5966 = vdwg.mxu0
  %5967 = vmatprep.subr.bf16.mxu0 %v5868
  %5968 = vmatpush1.bf16.msra.mxu0 %v5865
  %5969 = vmatprep.subr.bf16.mxu0 0
  %5970 = vmatpush1.bf16.msra.mxu0 0
  %5971 = vmatprep.subr.bf16.mxu0 0
  %5972 = vmatpush1.bf16.msra.mxu0 0
  %5973 = vmatprep.subr.bf16.mxu0 0
  %5974 = vmatpush1.bf16.msra.mxu0 0
  %5975 = vmatprep.subr.bf16.mxu0 0
  %5976 = vmatpush1.bf16.msra.mxu0 0
  %5977 = vmatprep.subr.bf16.mxu0 0
  %5978 = vmatpush1.bf16.msra.mxu0 0
  %5979 = vmatprep.subr.bf16.mxu0 0
  %5980 = vmatpush1.bf16.msra.mxu0 0
  %5981 = vmatprep.subr.bf16.mxu0 0
  %5982 = vmatpush1.bf16.msra.mxu0 0
  %5983 = vmatprep.subr.bf16.mxu0 0
  %5984 = vmatpush1.bf16.msra.mxu0 0
  %5985 = vmatprep.subr.bf16.mxu0 0
  %5986 = vmatpush1.bf16.msra.mxu0 0
  %5987 = vmatprep.subr.bf16.mxu0 0
  %5988 = vmatpush1.bf16.msra.mxu0 0
  %5989 = vmatprep.subr.bf16.mxu0 0
  %5990 = vmatpush1.bf16.msra.mxu0 0
  %5991 = vmatprep.subr.bf16.mxu0 0
  %5992 = vmatpush1.bf16.msra.mxu0 0
  %5993 = vmatprep.subr.bf16.mxu0 0
  %5994 = vmatpush1.bf16.msra.mxu0 0
  %5995 = vmatprep.subr.bf16.mxu0 0
  %5996 = vmatpush1.bf16.msra.mxu0 0
  %5997 = vmatprep.subr.bf16.mxu0 0
  %5998 = vmatpush1.bf16.msra.mxu0 0
  %5999 = vmatprep.mubr.bf16.mxu0 0
  %6000 = vmatmul.mubr.bf16.gmra.mrb[0].mxu0 %v5850
  %v6001 = vpop.f32.mrb[0].mxu0
  %v6002 = vadd.f32 0.0, %v6001
  %v6003 = vpop.f32.mrb[0].mxu0
  %v6004 = vadd.f32 0.0, %v6003
  %v6005 = vpop.f32.mrb[0].mxu0
  %v6006 = vpop.f32.mrb[0].mxu0
  %6007 = vdwg.mxu0
  %6008 = vmatprep.subr.bf16.mxu0 %v5874
  %6009 = vmatpush1.bf16.msra.mxu0 %v5871
  %6010 = vmatprep.subr.bf16.mxu0 0
  %6011 = vmatpush1.bf16.msra.mxu0 0
  %6012 = vmatprep.subr.bf16.mxu0 0
  %6013 = vmatpush1.bf16.msra.mxu0 0
  %6014 = vmatprep.subr.bf16.mxu0 0
  %6015 = vmatpush1.bf16.msra.mxu0 0
  %6016 = vmatprep.subr.bf16.mxu0 0
  %6017 = vmatpush1.bf16.msra.mxu0 0
  %6018 = vmatprep.subr.bf16.mxu0 0
  %6019 = vmatpush1.bf16.msra.mxu0 0
  %6020 = vmatprep.subr.bf16.mxu0 0
  %6021 = vmatpush1.bf16.msra.mxu0 0
  %6022 = vmatprep.subr.bf16.mxu0 0
  %6023 = vmatpush1.bf16.msra.mxu0 0
  %6024 = vmatprep.subr.bf16.mxu0 0
  %6025 = vmatpush1.bf16.msra.mxu0 0
  %6026 = vmatprep.subr.bf16.mxu0 0
  %6027 = vmatpush1.bf16.msra.mxu0 0
  %6028 = vmatprep.subr.bf16.mxu0 0
  %6029 = vmatpush1.bf16.msra.mxu0 0
  %6030 = vmatprep.subr.bf16.mxu0 0
  %6031 = vmatpush1.bf16.msra.mxu0 0
  %6032 = vmatprep.subr.bf16.mxu0 0
  %6033 = vmatpush1.bf16.msra.mxu0 0
  %6034 = vmatprep.subr.bf16.mxu0 0
  %6035 = vmatpush1.bf16.msra.mxu0 0
  %6036 = vmatprep.subr.bf16.mxu0 0
  %6037 = vmatpush1.bf16.msra.mxu0 0
  %6038 = vmatprep.subr.bf16.mxu0 0
  %6039 = vmatpush1.bf16.msra.mxu0 0
  %6040 = vmatprep.mubr.bf16.mxu0 0
  %6041 = vmatmul.mubr.bf16.gmra.mrb[0].mxu0 %v5850
  %v6042 = vpop.f32.mrb[0].mxu0
  %v6043 = vadd.f32 0.0, %v6042
  %v6044 = vpop.f32.mrb[0].mxu0
  %v6045 = vadd.f32 0.0, %v6044
  %v6046 = vpop.f32.mrb[0].mxu0
  %v6047 = vpop.f32.mrb[0].mxu0
  %6048 = vdwg.mxu0
  %6049 = vmatprep.subr.bf16.mxu0 %v5880
  %6050 = vmatpush1.bf16.msra.mxu0 %v5877
  %6051 = vmatprep.subr.bf16.mxu0 0
  %6052 = vmatpush1.bf16.msra.mxu0 0
  %6053 = vmatprep.subr.bf16.mxu0 0
  %6054 = vmatpush1.bf16.msra.mxu0 0
  %6055 = vmatprep.subr.bf16.mxu0 0
  %6056 = vmatpush1.bf16.msra.mxu0 0
  %6057 = vmatprep.subr.bf16.mxu0 0
  %6058 = vmatpush1.bf16.msra.mxu0 0
  %6059 = vmatprep.subr.bf16.mxu0 0
  %6060 = vmatpush1.bf16.msra.mxu0 0
  %6061 = vmatprep.subr.bf16.mxu0 0
  %6062 = vmatpush1.bf16.msra.mxu0 0
  %6063 = vmatprep.subr.bf16.mxu0 0
  %6064 = vmatpush1.bf16.msra.mxu0 0
  %6065 = vmatprep.subr.bf16.mxu0 0
  %6066 = vmatpush1.bf16.msra.mxu0 0
  %6067 = vmatprep.subr.bf16.mxu0 0
  %6068 = vmatpush1.bf16.msra.mxu0 0
  %6069 = vmatprep.subr.bf16.mxu0 0
  %6070 = vmatpush1.bf16.msra.mxu0 0
  %6071 = vmatprep.subr.bf16.mxu0 0
  %6072 = vmatpush1.bf16.msra.mxu0 0
  %6073 = vmatprep.subr.bf16.mxu0 0
  %6074 = vmatpush1.bf16.msra.mxu0 0
  %6075 = vmatprep.subr.bf16.mxu0 0
  %6076 = vmatpush1.bf16.msra.mxu0 0
  %6077 = vmatprep.subr.bf16.mxu0 0
  %6078 = vmatpush1.bf16.msra.mxu0 0
  %6079 = vmatprep.subr.bf16.mxu0 0
  %6080 = vmatpush1.bf16.msra.mxu0 0
  %6081 = vmatprep.mubr.bf16.mxu0 0
  %6082 = vmatmul.mubr.bf16.gmra.mrb[0].mxu0 %v5850
  %v6083 = vpop.f32.mrb[0].mxu0
  %v6084 = vadd.f32 0.0, %v6083
  %v6085 = vpop.f32.mrb[0].mxu0
  %v6086 = vadd.f32 0.0, %v6085
  %v6087 = vpop.f32.mrb[0].mxu0
  %v6088 = vpop.f32.mrb[0].mxu0
  %6089 = vdwg.mxu0
  %6090 = vmatprep.subr.bf16.mxu0 0
  %6091 = vmatpush1.bf16.msra.mxu0 %v5883
  %6092 = vmatprep.subr.bf16.mxu0 0
  %6093 = vmatpush1.bf16.msra.mxu0 0
  %6094 = vmatprep.subr.bf16.mxu0 0
  %6095 = vmatpush1.bf16.msra.mxu0 0
  %6096 = vmatprep.subr.bf16.mxu0 0
  %6097 = vmatpush1.bf16.msra.mxu0 0
  %6098 = vmatprep.subr.bf16.mxu0 0
  %6099 = vmatpush1.bf16.msra.mxu0 0
  %6100 = vmatprep.subr.bf16.mxu0 0
  %6101 = vmatpush1.bf16.msra.mxu0 0
  %6102 = vmatprep.subr.bf16.mxu0 0
  %6103 = vmatpush1.bf16.msra.mxu0 0
  %6104 = vmatprep.subr.bf16.mxu0 0
  %6105 = vmatpush1.bf16.msra.mxu0 0
  %6106 = vmatprep.subr.bf16.mxu0 0
  %6107 = vmatpush1.bf16.msra.mxu0 0
  %6108 = vmatprep.subr.bf16.mxu0 0
  %6109 = vmatpush1.bf16.msra.mxu0 0
  %6110 = vmatprep.subr.bf16.mxu0 0
  %6111 = vmatpush1.bf16.msra.mxu0 0
  %6112 = vmatprep.subr.bf16.mxu0 0
  %6113 = vmatpush1.bf16.msra.mxu0 0
  %6114 = vmatprep.subr.bf16.mxu0 0
  %6115 = vmatpush1.bf16.msra.mxu0 0
  %6116 = vmatprep.subr.bf16.mxu0 0
  %6117 = vmatpush1.bf16.msra.mxu0 0
  %6118 = vmatprep.subr.bf16.mxu0 0
  %6119 = vmatpush1.bf16.msra.mxu0 0
  %6120 = vmatprep.subr.bf16.mxu0 0
  %6121 = vmatpush1.bf16.msra.mxu0 0
  %6122 = vmatprep.mubr.bf16.mxu0 0
  %6123 = vmatmul.mubr.bf16.gmra.mrb[0].mxu0 %v5850
  %v6124 = vpop.f32.mrb[0].mxu0
  %v6125 = vadd.f32 0.0, %v6124
  %v6126 = vpop.f32.mrb[0].mxu0
  %v6127 = vpop.f32.mrb[0].mxu0
  %v6128 = vpop.f32.mrb[0].mxu0
  %6129 = vdwg.mxu0
  %v6130 = vadd.f32 %v5801, %v5920
  %v6131 = vadd.f32 %v5802, %v5922
  %v6132 = vadd.f32 %v5803, %v5961
  %v6133 = vadd.f32 %v5804, %v5963
  %v6134 = vadd.f32 %v5805, %v6002
  %v6135 = vadd.f32 %v5806, %v6004
  %v6136 = vadd.f32 %v5807, %v6043
  %v6137 = vadd.f32 %v5808, %v6045
  %v6138 = vadd.f32 %v5809, %v6084
  %v6139 = vadd.f32 %v5810, %v6086
  %v6140 = vadd.f32 %v5811, %v6125
  %6141 = vrot.lane.b32.xlu0 %v4165, 72
  %v6142 = vpop.permute.xlu0 %6141
  %6143 = vrot.lane.b32.xlu0 %v5459, 96
  %v6144 = vpop.permute.xlu0 %6143
  %6145 = vrot.lane.b32.xlu0 %v5460, 96
  %v6146 = vpop.permute.xlu0 %6145
  %6147 = vrot.lane.b32.xlu0 %v5461, 96
  %v6148 = vpop.permute.xlu0 %6147
  %6149 = vrot.lane.b32.xlu0 %v5462, 96
  %v6150 = vpop.permute.xlu0 %6149
  %6151 = vrot.lane.b32.xlu0 %v5463, 96
  %v6152 = vpop.permute.xlu0 %6151
  %6153 = vrot.lane.b32.xlu0 %v5464, 96
  %v6154 = vpop.permute.xlu0 %6153
  %6155 = vrot.lane.b32.xlu0 %v5465, 96
  %v6156 = vpop.permute.xlu0 %6155
  %6157 = vrot.lane.b32.xlu0 %v5466, 96
  %v6158 = vpop.permute.xlu0 %6157
  %6159 = vrot.lane.b32.xlu0 %v5467, 96
  %v6160 = vpop.permute.xlu0 %6159
  %6161 = vrot.lane.b32.xlu0 %v5468, 96
  %v6162 = vpop.permute.xlu0 %6161
  %6163 = vrot.lane.b32.xlu0 %v5469, 96
  %v6164 = vpop.permute.xlu0 %6163
  %6165 = vrot.lane.b32.xlu0 %v5470, 96
  %v6166 = vpop.permute.xlu0 %6165
  %v6167 = vsel %vm2764, %v6144, %v6146
  %v6168 = vsel %vm2764, %v6146, %v6148
  %v6169 = vsel %vm2764, %v6148, %v6150
  %v6170 = vsel %vm2764, %v6150, %v6152
  %v6171 = vsel %vm2764, %v6152, %v6154
  %v6172 = vsel %vm2764, %v6154, %v6156
  %v6173 = vsel %vm2764, %v6156, %v6158
  %v6174 = vsel %vm2764, %v6158, %v6160
  %v6175 = vsel %vm2764, %v6160, %v6162
  %v6176 = vsel %vm2764, %v6162, %v6164
  %v6177 = vsel %vm2764, %v6164, %v6166
  %v6179 = vsel %vm3869, %v6142, 0
  %v6182 = vsel %vm3873, %v6167, 0
  %v6185 = vsel %vm3873, %v6168, 0
  %v6188 = vsel %vm3873, %v6169, 0
  %v6191 = vsel %vm3873, %v6170, 0
  %v6194 = vsel %vm3873, %v6171, 0
  %v6197 = vsel %vm3873, %v6172, 0
  %v6200 = vsel %vm3873, %v6173, 0
  %v6203 = vsel %vm3873, %v6174, 0
  %v6206 = vsel %vm3873, %v6175, 0
  %v6209 = vsel %vm3873, %v6176, 0
  %v6212 = vsel %vm3873, %v6177, 0
  %6214 = vmatprep.subr.bf16.mxu0 %v6185
  %6215 = vmatpush1.bf16.msra.mxu0 %v6182
  %6216 = vmatprep.subr.bf16.mxu0 0
  %6217 = vmatpush1.bf16.msra.mxu0 0
  %6218 = vmatprep.subr.bf16.mxu0 0
  %6219 = vmatpush1.bf16.msra.mxu0 0
  %6220 = vmatprep.subr.bf16.mxu0 0
  %6221 = vmatpush1.bf16.msra.mxu0 0
  %6222 = vmatprep.subr.bf16.mxu0 0
  %6223 = vmatpush1.bf16.msra.mxu0 0
  %6224 = vmatprep.subr.bf16.mxu0 0
  %6225 = vmatpush1.bf16.msra.mxu0 0
  %6226 = vmatprep.subr.bf16.mxu0 0
  %6227 = vmatpush1.bf16.msra.mxu0 0
  %6228 = vmatprep.subr.bf16.mxu0 0
  %6229 = vmatpush1.bf16.msra.mxu0 0
  %6230 = vmatprep.subr.bf16.mxu0 0
  %6231 = vmatpush1.bf16.msra.mxu0 0
  %6232 = vmatprep.subr.bf16.mxu0 0
  %6233 = vmatpush1.bf16.msra.mxu0 0
  %6234 = vmatprep.subr.bf16.mxu0 0
  %6235 = vmatpush1.bf16.msra.mxu0 0
  %6236 = vmatprep.subr.bf16.mxu0 0
  %6237 = vmatpush1.bf16.msra.mxu0 0
  %6238 = vmatprep.subr.bf16.mxu0 0
  %6239 = vmatpush1.bf16.msra.mxu0 0
  %6240 = vmatprep.subr.bf16.mxu0 0
  %6241 = vmatpush1.bf16.msra.mxu0 0
  %6242 = vmatprep.subr.bf16.mxu0 0
  %6243 = vmatpush1.bf16.msra.mxu0 0
  %6244 = vmatprep.subr.bf16.mxu0 0
  %6245 = vmatpush1.bf16.msra.mxu0 0
  %6246 = vmatprep.mubr.bf16.mxu0 0
  %6247 = vmatmul.mubr.bf16.gmra.mrb[0].mxu0 %v6179
  %v6248 = vpop.f32.mrb[0].mxu0
  %v6249 = vadd.f32 0.0, %v6248
  %v6250 = vpop.f32.mrb[0].mxu0
  %v6251 = vadd.f32 0.0, %v6250
  %v6252 = vpop.f32.mrb[0].mxu0
  %v6253 = vpop.f32.mrb[0].mxu0
  %6254 = vdwg.mxu0
  %6255 = vmatprep.subr.bf16.mxu0 %v6191
  %6256 = vmatpush1.bf16.msra.mxu0 %v6188
  %6257 = vmatprep.subr.bf16.mxu0 0
  %6258 = vmatpush1.bf16.msra.mxu0 0
  %6259 = vmatprep.subr.bf16.mxu0 0
  %6260 = vmatpush1.bf16.msra.mxu0 0
  %6261 = vmatprep.subr.bf16.mxu0 0
  %6262 = vmatpush1.bf16.msra.mxu0 0
  %6263 = vmatprep.subr.bf16.mxu0 0
  %6264 = vmatpush1.bf16.msra.mxu0 0
  %6265 = vmatprep.subr.bf16.mxu0 0
  %6266 = vmatpush1.bf16.msra.mxu0 0
  %6267 = vmatprep.subr.bf16.mxu0 0
  %6268 = vmatpush1.bf16.msra.mxu0 0
  %6269 = vmatprep.subr.bf16.mxu0 0
  %6270 = vmatpush1.bf16.msra.mxu0 0
  %6271 = vmatprep.subr.bf16.mxu0 0
  %6272 = vmatpush1.bf16.msra.mxu0 0
  %6273 = vmatprep.subr.bf16.mxu0 0
  %6274 = vmatpush1.bf16.msra.mxu0 0
  %6275 = vmatprep.subr.bf16.mxu0 0
  %6276 = vmatpush1.bf16.msra.mxu0 0
  %6277 = vmatprep.subr.bf16.mxu0 0
  %6278 = vmatpush1.bf16.msra.mxu0 0
  %6279 = vmatprep.subr.bf16.mxu0 0
  %6280 = vmatpush1.bf16.msra.mxu0 0
  %6281 = vmatprep.subr.bf16.mxu0 0
  %6282 = vmatpush1.bf16.msra.mxu0 0
  %6283 = vmatprep.subr.bf16.mxu0 0
  %6284 = vmatpush1.bf16.msra.mxu0 0
  %6285 = vmatprep.subr.bf16.mxu0 0
  %6286 = vmatpush1.bf16.msra.mxu0 0
  %6287 = vmatprep.mubr.bf16.mxu0 0
  %6288 = vmatmul.mubr.bf16.gmra.mrb[0].mxu0 %v6179
  %v6289 = vpop.f32.mrb[0].mxu0
  %v6290 = vadd.f32 0.0, %v6289
  %v6291 = vpop.f32.mrb[0].mxu0
  %v6292 = vadd.f32 0.0, %v6291
  %v6293 = vpop.f32.mrb[0].mxu0
  %v6294 = vpop.f32.mrb[0].mxu0
  %6295 = vdwg.mxu0
  %6296 = vmatprep.subr.bf16.mxu0 %v6197
  %6297 = vmatpush1.bf16.msra.mxu0 %v6194
  %6298 = vmatprep.subr.bf16.mxu0 0
  %6299 = vmatpush1.bf16.msra.mxu0 0
  %6300 = vmatprep.subr.bf16.mxu0 0
  %6301 = vmatpush1.bf16.msra.mxu0 0
  %6302 = vmatprep.subr.bf16.mxu0 0
  %6303 = vmatpush1.bf16.msra.mxu0 0
  %6304 = vmatprep.subr.bf16.mxu0 0
  %6305 = vmatpush1.bf16.msra.mxu0 0
  %6306 = vmatprep.subr.bf16.mxu0 0
  %6307 = vmatpush1.bf16.msra.mxu0 0
  %6308 = vmatprep.subr.bf16.mxu0 0
  %6309 = vmatpush1.bf16.msra.mxu0 0
  %6310 = vmatprep.subr.bf16.mxu0 0
  %6311 = vmatpush1.bf16.msra.mxu0 0
  %6312 = vmatprep.subr.bf16.mxu0 0
  %6313 = vmatpush1.bf16.msra.mxu0 0
  %6314 = vmatprep.subr.bf16.mxu0 0
  %6315 = vmatpush1.bf16.msra.mxu0 0
  %6316 = vmatprep.subr.bf16.mxu0 0
  %6317 = vmatpush1.bf16.msra.mxu0 0
  %6318 = vmatprep.subr.bf16.mxu0 0
  %6319 = vmatpush1.bf16.msra.mxu0 0
  %6320 = vmatprep.subr.bf16.mxu0 0
  %6321 = vmatpush1.bf16.msra.mxu0 0
  %6322 = vmatprep.subr.bf16.mxu0 0
  %6323 = vmatpush1.bf16.msra.mxu0 0
  %6324 = vmatprep.subr.bf16.mxu0 0
  %6325 = vmatpush1.bf16.msra.mxu0 0
  %6326 = vmatprep.subr.bf16.mxu0 0
  %6327 = vmatpush1.bf16.msra.mxu0 0
  %6328 = vmatprep.mubr.bf16.mxu0 0
  %6329 = vmatmul.mubr.bf16.gmra.mrb[0].mxu0 %v6179
  %v6330 = vpop.f32.mrb[0].mxu0
  %v6331 = vadd.f32 0.0, %v6330
  %v6332 = vpop.f32.mrb[0].mxu0
  %v6333 = vadd.f32 0.0, %v6332
  %v6334 = vpop.f32.mrb[0].mxu0
  %v6335 = vpop.f32.mrb[0].mxu0
  %6336 = vdwg.mxu0
  %6337 = vmatprep.subr.bf16.mxu0 %v6203
  %6338 = vmatpush1.bf16.msra.mxu0 %v6200
  %6339 = vmatprep.subr.bf16.mxu0 0
  %6340 = vmatpush1.bf16.msra.mxu0 0
  %6341 = vmatprep.subr.bf16.mxu0 0
  %6342 = vmatpush1.bf16.msra.mxu0 0
  %6343 = vmatprep.subr.bf16.mxu0 0
  %6344 = vmatpush1.bf16.msra.mxu0 0
  %6345 = vmatprep.subr.bf16.mxu0 0
  %6346 = vmatpush1.bf16.msra.mxu0 0
  %6347 = vmatprep.subr.bf16.mxu0 0
  %6348 = vmatpush1.bf16.msra.mxu0 0
  %6349 = vmatprep.subr.bf16.mxu0 0
  %6350 = vmatpush1.bf16.msra.mxu0 0
  %6351 = vmatprep.subr.bf16.mxu0 0
  %6352 = vmatpush1.bf16.msra.mxu0 0
  %6353 = vmatprep.subr.bf16.mxu0 0
  %6354 = vmatpush1.bf16.msra.mxu0 0
  %6355 = vmatprep.subr.bf16.mxu0 0
  %6356 = vmatpush1.bf16.msra.mxu0 0
  %6357 = vmatprep.subr.bf16.mxu0 0
  %6358 = vmatpush1.bf16.msra.mxu0 0
  %6359 = vmatprep.subr.bf16.mxu0 0
  %6360 = vmatpush1.bf16.msra.mxu0 0
  %6361 = vmatprep.subr.bf16.mxu0 0
  %6362 = vmatpush1.bf16.msra.mxu0 0
  %6363 = vmatprep.subr.bf16.mxu0 0
  %6364 = vmatpush1.bf16.msra.mxu0 0
  %6365 = vmatprep.subr.bf16.mxu0 0
  %6366 = vmatpush1.bf16.msra.mxu0 0
  %6367 = vmatprep.subr.bf16.mxu0 0
  %6368 = vmatpush1.bf16.msra.mxu0 0
  %6369 = vmatprep.mubr.bf16.mxu0 0
  %6370 = vmatmul.mubr.bf16.gmra.mrb[0].mxu0 %v6179
  %v6371 = vpop.f32.mrb[0].mxu0
  %v6372 = vadd.f32 0.0, %v6371
  %v6373 = vpop.f32.mrb[0].mxu0
  %v6374 = vadd.f32 0.0, %v6373
  %v6375 = vpop.f32.mrb[0].mxu0
  %v6376 = vpop.f32.mrb[0].mxu0
  %6377 = vdwg.mxu0
  %6378 = vmatprep.subr.bf16.mxu0 %v6209
  %6379 = vmatpush1.bf16.msra.mxu0 %v6206
  %6380 = vmatprep.subr.bf16.mxu0 0
  %6381 = vmatpush1.bf16.msra.mxu0 0
  %6382 = vmatprep.subr.bf16.mxu0 0
  %6383 = vmatpush1.bf16.msra.mxu0 0
  %6384 = vmatprep.subr.bf16.mxu0 0
  %6385 = vmatpush1.bf16.msra.mxu0 0
  %6386 = vmatprep.subr.bf16.mxu0 0
  %6387 = vmatpush1.bf16.msra.mxu0 0
  %6388 = vmatprep.subr.bf16.mxu0 0
  %6389 = vmatpush1.bf16.msra.mxu0 0
  %6390 = vmatprep.subr.bf16.mxu0 0
  %6391 = vmatpush1.bf16.msra.mxu0 0
  %6392 = vmatprep.subr.bf16.mxu0 0
  %6393 = vmatpush1.bf16.msra.mxu0 0
  %6394 = vmatprep.subr.bf16.mxu0 0
  %6395 = vmatpush1.bf16.msra.mxu0 0
  %6396 = vmatprep.subr.bf16.mxu0 0
  %6397 = vmatpush1.bf16.msra.mxu0 0
  %6398 = vmatprep.subr.bf16.mxu0 0
  %6399 = vmatpush1.bf16.msra.mxu0 0
  %6400 = vmatprep.subr.bf16.mxu0 0
  %6401 = vmatpush1.bf16.msra.mxu0 0
  %6402 = vmatprep.subr.bf16.mxu0 0
  %6403 = vmatpush1.bf16.msra.mxu0 0
  %6404 = vmatprep.subr.bf16.mxu0 0
  %6405 = vmatpush1.bf16.msra.mxu0 0
  %6406 = vmatprep.subr.bf16.mxu0 0
  %6407 = vmatpush1.bf16.msra.mxu0 0
  %6408 = vmatprep.subr.bf16.mxu0 0
  %6409 = vmatpush1.bf16.msra.mxu0 0
  %6410 = vmatprep.mubr.bf16.mxu0 0
  %6411 = vmatmul.mubr.bf16.gmra.mrb[0].mxu0 %v6179
  %v6412 = vpop.f32.mrb[0].mxu0
  %v6413 = vadd.f32 0.0, %v6412
  %v6414 = vpop.f32.mrb[0].mxu0
  %v6415 = vadd.f32 0.0, %v6414
  %v6416 = vpop.f32.mrb[0].mxu0
  %v6417 = vpop.f32.mrb[0].mxu0
  %6418 = vdwg.mxu0
  %6419 = vmatprep.subr.bf16.mxu0 0
  %6420 = vmatpush1.bf16.msra.mxu0 %v6212
  %6421 = vmatprep.subr.bf16.mxu0 0
  %6422 = vmatpush1.bf16.msra.mxu0 0
  %6423 = vmatprep.subr.bf16.mxu0 0
  %6424 = vmatpush1.bf16.msra.mxu0 0
  %6425 = vmatprep.subr.bf16.mxu0 0
  %6426 = vmatpush1.bf16.msra.mxu0 0
  %6427 = vmatprep.subr.bf16.mxu0 0
  %6428 = vmatpush1.bf16.msra.mxu0 0
  %6429 = vmatprep.subr.bf16.mxu0 0
  %6430 = vmatpush1.bf16.msra.mxu0 0
  %6431 = vmatprep.subr.bf16.mxu0 0
  %6432 = vmatpush1.bf16.msra.mxu0 0
  %6433 = vmatprep.subr.bf16.mxu0 0
  %6434 = vmatpush1.bf16.msra.mxu0 0
  %6435 = vmatprep.subr.bf16.mxu0 0
  %6436 = vmatpush1.bf16.msra.mxu0 0
  %6437 = vmatprep.subr.bf16.mxu0 0
  %6438 = vmatpush1.bf16.msra.mxu0 0
  %6439 = vmatprep.subr.bf16.mxu0 0
  %6440 = vmatpush1.bf16.msra.mxu0 0
  %6441 = vmatprep.subr.bf16.mxu0 0
  %6442 = vmatpush1.bf16.msra.mxu0 0
  %6443 = vmatprep.subr.bf16.mxu0 0
  %6444 = vmatpush1.bf16.msra.mxu0 0
  %6445 = vmatprep.subr.bf16.mxu0 0
  %6446 = vmatpush1.bf16.msra.mxu0 0
  %6447 = vmatprep.subr.bf16.mxu0 0
  %6448 = vmatpush1.bf16.msra.mxu0 0
  %6449 = vmatprep.subr.bf16.mxu0 0
  %6450 = vmatpush1.bf16.msra.mxu0 0
  %6451 = vmatprep.mubr.bf16.mxu0 0
  %6452 = vmatmul.mubr.bf16.gmra.mrb[0].mxu0 %v6179
  %v6453 = vpop.f32.mrb[0].mxu0
  %v6454 = vadd.f32 0.0, %v6453
  %v6455 = vpop.f32.mrb[0].mxu0
  %v6456 = vpop.f32.mrb[0].mxu0
  %v6457 = vpop.f32.mrb[0].mxu0
  %6458 = vdwg.mxu0
  %v6459 = vadd.f32 %v6130, %v6249
  %v6460 = vadd.f32 %v6131, %v6251
  %v6461 = vadd.f32 %v6132, %v6290
  %v6462 = vadd.f32 %v6133, %v6292
  %v6463 = vadd.f32 %v6134, %v6331
  %v6464 = vadd.f32 %v6135, %v6333
  %v6465 = vadd.f32 %v6136, %v6372
  %v6466 = vadd.f32 %v6137, %v6374
  %v6467 = vadd.f32 %v6138, %v6413
  %v6468 = vadd.f32 %v6139, %v6415
  %v6469 = vadd.f32 %v6140, %v6454
  %6470 = vrot.lane.b32.xlu0 %v4165, 64
  %v6471 = vpop.permute.xlu0 %6470
  %6472 = vrot.lane.b32.xlu0 %v5459, 95
  %v6473 = vpop.permute.xlu0 %6472
  %6474 = vrot.lane.b32.xlu0 %v5460, 95
  %v6475 = vpop.permute.xlu0 %6474
  %6476 = vrot.lane.b32.xlu0 %v5461, 95
  %v6477 = vpop.permute.xlu0 %6476
  %6478 = vrot.lane.b32.xlu0 %v5462, 95
  %v6479 = vpop.permute.xlu0 %6478
  %6480 = vrot.lane.b32.xlu0 %v5463, 95
  %v6481 = vpop.permute.xlu0 %6480
  %6482 = vrot.lane.b32.xlu0 %v5464, 95
  %v6483 = vpop.permute.xlu0 %6482
  %6484 = vrot.lane.b32.xlu0 %v5465, 95
  %v6485 = vpop.permute.xlu0 %6484
  %6486 = vrot.lane.b32.xlu0 %v5466, 95
  %v6487 = vpop.permute.xlu0 %6486
  %6488 = vrot.lane.b32.xlu0 %v5467, 95
  %v6489 = vpop.permute.xlu0 %6488
  %6490 = vrot.lane.b32.xlu0 %v5468, 95
  %v6491 = vpop.permute.xlu0 %6490
  %6492 = vrot.lane.b32.xlu0 %v5469, 95
  %v6493 = vpop.permute.xlu0 %6492
  %6494 = vrot.lane.b32.xlu0 %v5470, 95
  %v6495 = vpop.permute.xlu0 %6494
  %v6496 = vsel %vm3146, %v6473, %v6475
  %v6497 = vsel %vm3146, %v6475, %v6477
  %v6498 = vsel %vm3146, %v6477, %v6479
  %v6499 = vsel %vm3146, %v6479, %v6481
  %v6500 = vsel %vm3146, %v6481, %v6483
  %v6501 = vsel %vm3146, %v6483, %v6485
  %v6502 = vsel %vm3146, %v6485, %v6487
  %v6503 = vsel %vm3146, %v6487, %v6489
  %v6504 = vsel %vm3146, %v6489, %v6491
  %v6505 = vsel %vm3146, %v6491, %v6493
  %v6506 = vsel %vm3146, %v6493, %v6495
  %v6508 = vsel %vm3869, %v6471, 0
  %v6511 = vsel %vm3873, %v6496, 0
  %v6514 = vsel %vm3873, %v6497, 0
  %v6517 = vsel %vm3873, %v6498, 0
  %v6520 = vsel %vm3873, %v6499, 0
  %v6523 = vsel %vm3873, %v6500, 0
  %v6526 = vsel %vm3873, %v6501, 0
  %v6529 = vsel %vm3873, %v6502, 0
  %v6532 = vsel %vm3873, %v6503, 0
  %v6535 = vsel %vm3873, %v6504, 0
  %v6538 = vsel %vm3873, %v6505, 0
  %v6541 = vsel %vm3873, %v6506, 0
  %6543 = vmatprep.subr.bf16.mxu0 %v6514
  %6544 = vmatpush1.bf16.msra.mxu0 %v6511
  %6545 = vmatprep.subr.bf16.mxu0 0
  %6546 = vmatpush1.bf16.msra.mxu0 0
  %6547 = vmatprep.subr.bf16.mxu0 0
  %6548 = vmatpush1.bf16.msra.mxu0 0
  %6549 = vmatprep.subr.bf16.mxu0 0
  %6550 = vmatpush1.bf16.msra.mxu0 0
  %6551 = vmatprep.subr.bf16.mxu0 0
  %6552 = vmatpush1.bf16.msra.mxu0 0
  %6553 = vmatprep.subr.bf16.mxu0 0
  %6554 = vmatpush1.bf16.msra.mxu0 0
  %6555 = vmatprep.subr.bf16.mxu0 0
  %6556 = vmatpush1.bf16.msra.mxu0 0
  %6557 = vmatprep.subr.bf16.mxu0 0
  %6558 = vmatpush1.bf16.msra.mxu0 0
  %6559 = vmatprep.subr.bf16.mxu0 0
  %6560 = vmatpush1.bf16.msra.mxu0 0
  %6561 = vmatprep.subr.bf16.mxu0 0
  %6562 = vmatpush1.bf16.msra.mxu0 0
  %6563 = vmatprep.subr.bf16.mxu0 0
  %6564 = vmatpush1.bf16.msra.mxu0 0
  %6565 = vmatprep.subr.bf16.mxu0 0
  %6566 = vmatpush1.bf16.msra.mxu0 0
  %6567 = vmatprep.subr.bf16.mxu0 0
  %6568 = vmatpush1.bf16.msra.mxu0 0
  %6569 = vmatprep.subr.bf16.mxu0 0
  %6570 = vmatpush1.bf16.msra.mxu0 0
  %6571 = vmatprep.subr.bf16.mxu0 0
  %6572 = vmatpush1.bf16.msra.mxu0 0
  %6573 = vmatprep.subr.bf16.mxu0 0
  %6574 = vmatpush1.bf16.msra.mxu0 0
  %6575 = vmatprep.mubr.bf16.mxu0 0
  %6576 = vmatmul.mubr.bf16.gmra.mrb[0].mxu0 %v6508
  %v6577 = vpop.f32.mrb[0].mxu0
  %v6578 = vadd.f32 0.0, %v6577
  %v6579 = vpop.f32.mrb[0].mxu0
  %v6580 = vadd.f32 0.0, %v6579
  %v6581 = vpop.f32.mrb[0].mxu0
  %v6582 = vpop.f32.mrb[0].mxu0
  %6583 = vdwg.mxu0
  %6584 = vmatprep.subr.bf16.mxu0 %v6520
  %6585 = vmatpush1.bf16.msra.mxu0 %v6517
  %6586 = vmatprep.subr.bf16.mxu0 0
  %6587 = vmatpush1.bf16.msra.mxu0 0
  %6588 = vmatprep.subr.bf16.mxu0 0
  %6589 = vmatpush1.bf16.msra.mxu0 0
  %6590 = vmatprep.subr.bf16.mxu0 0
  %6591 = vmatpush1.bf16.msra.mxu0 0
  %6592 = vmatprep.subr.bf16.mxu0 0
  %6593 = vmatpush1.bf16.msra.mxu0 0
  %6594 = vmatprep.subr.bf16.mxu0 0
  %6595 = vmatpush1.bf16.msra.mxu0 0
  %6596 = vmatprep.subr.bf16.mxu0 0
  %6597 = vmatpush1.bf16.msra.mxu0 0
  %6598 = vmatprep.subr.bf16.mxu0 0
  %6599 = vmatpush1.bf16.msra.mxu0 0
  %6600 = vmatprep.subr.bf16.mxu0 0
  %6601 = vmatpush1.bf16.msra.mxu0 0
  %6602 = vmatprep.subr.bf16.mxu0 0
  %6603 = vmatpush1.bf16.msra.mxu0 0
  %6604 = vmatprep.subr.bf16.mxu0 0
  %6605 = vmatpush1.bf16.msra.mxu0 0
  %6606 = vmatprep.subr.bf16.mxu0 0
  %6607 = vmatpush1.bf16.msra.mxu0 0
  %6608 = vmatprep.subr.bf16.mxu0 0
  %6609 = vmatpush1.bf16.msra.mxu0 0
  %6610 = vmatprep.subr.bf16.mxu0 0
  %6611 = vmatpush1.bf16.msra.mxu0 0
  %6612 = vmatprep.subr.bf16.mxu0 0
  %6613 = vmatpush1.bf16.msra.mxu0 0
  %6614 = vmatprep.subr.bf16.mxu0 0
  %6615 = vmatpush1.bf16.msra.mxu0 0
  %6616 = vmatprep.mubr.bf16.mxu0 0
  %6617 = vmatmul.mubr.bf16.gmra.mrb[0].mxu0 %v6508
  %v6618 = vpop.f32.mrb[0].mxu0
  %v6619 = vadd.f32 0.0, %v6618
  %v6620 = vpop.f32.mrb[0].mxu0
  %v6621 = vadd.f32 0.0, %v6620
  %v6622 = vpop.f32.mrb[0].mxu0
  %v6623 = vpop.f32.mrb[0].mxu0
  %6624 = vdwg.mxu0
  %6625 = vmatprep.subr.bf16.mxu0 %v6526
  %6626 = vmatpush1.bf16.msra.mxu0 %v6523
  %6627 = vmatprep.subr.bf16.mxu0 0
  %6628 = vmatpush1.bf16.msra.mxu0 0
  %6629 = vmatprep.subr.bf16.mxu0 0
  %6630 = vmatpush1.bf16.msra.mxu0 0
  %6631 = vmatprep.subr.bf16.mxu0 0
  %6632 = vmatpush1.bf16.msra.mxu0 0
  %6633 = vmatprep.subr.bf16.mxu0 0
  %6634 = vmatpush1.bf16.msra.mxu0 0
  %6635 = vmatprep.subr.bf16.mxu0 0
  %6636 = vmatpush1.bf16.msra.mxu0 0
  %6637 = vmatprep.subr.bf16.mxu0 0
  %6638 = vmatpush1.bf16.msra.mxu0 0
  %6639 = vmatprep.subr.bf16.mxu0 0
  %6640 = vmatpush1.bf16.msra.mxu0 0
  %6641 = vmatprep.subr.bf16.mxu0 0
  %6642 = vmatpush1.bf16.msra.mxu0 0
  %6643 = vmatprep.subr.bf16.mxu0 0
  %6644 = vmatpush1.bf16.msra.mxu0 0
  %6645 = vmatprep.subr.bf16.mxu0 0
  %6646 = vmatpush1.bf16.msra.mxu0 0
  %6647 = vmatprep.subr.bf16.mxu0 0
  %6648 = vmatpush1.bf16.msra.mxu0 0
  %6649 = vmatprep.subr.bf16.mxu0 0
  %6650 = vmatpush1.bf16.msra.mxu0 0
  %6651 = vmatprep.subr.bf16.mxu0 0
  %6652 = vmatpush1.bf16.msra.mxu0 0
  %6653 = vmatprep.subr.bf16.mxu0 0
  %6654 = vmatpush1.bf16.msra.mxu0 0
  %6655 = vmatprep.subr.bf16.mxu0 0
  %6656 = vmatpush1.bf16.msra.mxu0 0
  %6657 = vmatprep.mubr.bf16.mxu0 0
  %6658 = vmatmul.mubr.bf16.gmra.mrb[0].mxu0 %v6508
  %v6659 = vpop.f32.mrb[0].mxu0
  %v6660 = vadd.f32 0.0, %v6659
  %v6661 = vpop.f32.mrb[0].mxu0
  %v6662 = vadd.f32 0.0, %v6661
  %v6663 = vpop.f32.mrb[0].mxu0
  %v6664 = vpop.f32.mrb[0].mxu0
  %6665 = vdwg.mxu0
  %6666 = vmatprep.subr.bf16.mxu0 %v6532
  %6667 = vmatpush1.bf16.msra.mxu0 %v6529
  %6668 = vmatprep.subr.bf16.mxu0 0
  %6669 = vmatpush1.bf16.msra.mxu0 0
  %6670 = vmatprep.subr.bf16.mxu0 0
  %6671 = vmatpush1.bf16.msra.mxu0 0
  %6672 = vmatprep.subr.bf16.mxu0 0
  %6673 = vmatpush1.bf16.msra.mxu0 0
  %6674 = vmatprep.subr.bf16.mxu0 0
  %6675 = vmatpush1.bf16.msra.mxu0 0
  %6676 = vmatprep.subr.bf16.mxu0 0
  %6677 = vmatpush1.bf16.msra.mxu0 0
  %6678 = vmatprep.subr.bf16.mxu0 0
  %6679 = vmatpush1.bf16.msra.mxu0 0
  %6680 = vmatprep.subr.bf16.mxu0 0
  %6681 = vmatpush1.bf16.msra.mxu0 0
  %6682 = vmatprep.subr.bf16.mxu0 0
  %6683 = vmatpush1.bf16.msra.mxu0 0
  %6684 = vmatprep.subr.bf16.mxu0 0
  %6685 = vmatpush1.bf16.msra.mxu0 0
  %6686 = vmatprep.subr.bf16.mxu0 0
  %6687 = vmatpush1.bf16.msra.mxu0 0
  %6688 = vmatprep.subr.bf16.mxu0 0
  %6689 = vmatpush1.bf16.msra.mxu0 0
  %6690 = vmatprep.subr.bf16.mxu0 0
  %6691 = vmatpush1.bf16.msra.mxu0 0
  %6692 = vmatprep.subr.bf16.mxu0 0
  %6693 = vmatpush1.bf16.msra.mxu0 0
  %6694 = vmatprep.subr.bf16.mxu0 0
  %6695 = vmatpush1.bf16.msra.mxu0 0
  %6696 = vmatprep.subr.bf16.mxu0 0
  %6697 = vmatpush1.bf16.msra.mxu0 0
  %6698 = vmatprep.mubr.bf16.mxu0 0
  %6699 = vmatmul.mubr.bf16.gmra.mrb[0].mxu0 %v6508
  %v6700 = vpop.f32.mrb[0].mxu0
  %v6701 = vadd.f32 0.0, %v6700
  %v6702 = vpop.f32.mrb[0].mxu0
  %v6703 = vadd.f32 0.0, %v6702
  %v6704 = vpop.f32.mrb[0].mxu0
  %v6705 = vpop.f32.mrb[0].mxu0
  %6706 = vdwg.mxu0
  %6707 = vmatprep.subr.bf16.mxu0 %v6538
  %6708 = vmatpush1.bf16.msra.mxu0 %v6535
  %6709 = vmatprep.subr.bf16.mxu0 0
  %6710 = vmatpush1.bf16.msra.mxu0 0
  %6711 = vmatprep.subr.bf16.mxu0 0
  %6712 = vmatpush1.bf16.msra.mxu0 0
  %6713 = vmatprep.subr.bf16.mxu0 0
  %6714 = vmatpush1.bf16.msra.mxu0 0
  %6715 = vmatprep.subr.bf16.mxu0 0
  %6716 = vmatpush1.bf16.msra.mxu0 0
  %6717 = vmatprep.subr.bf16.mxu0 0
  %6718 = vmatpush1.bf16.msra.mxu0 0
  %6719 = vmatprep.subr.bf16.mxu0 0
  %6720 = vmatpush1.bf16.msra.mxu0 0
  %6721 = vmatprep.subr.bf16.mxu0 0
  %6722 = vmatpush1.bf16.msra.mxu0 0
  %6723 = vmatprep.subr.bf16.mxu0 0
  %6724 = vmatpush1.bf16.msra.mxu0 0
  %6725 = vmatprep.subr.bf16.mxu0 0
  %6726 = vmatpush1.bf16.msra.mxu0 0
  %6727 = vmatprep.subr.bf16.mxu0 0
  %6728 = vmatpush1.bf16.msra.mxu0 0
  %6729 = vmatprep.subr.bf16.mxu0 0
  %6730 = vmatpush1.bf16.msra.mxu0 0
  %6731 = vmatprep.subr.bf16.mxu0 0
  %6732 = vmatpush1.bf16.msra.mxu0 0
  %6733 = vmatprep.subr.bf16.mxu0 0
  %6734 = vmatpush1.bf16.msra.mxu0 0
  %6735 = vmatprep.subr.bf16.mxu0 0
  %6736 = vmatpush1.bf16.msra.mxu0 0
  %6737 = vmatprep.subr.bf16.mxu0 0
  %6738 = vmatpush1.bf16.msra.mxu0 0
  %6739 = vmatprep.mubr.bf16.mxu0 0
  %6740 = vmatmul.mubr.bf16.gmra.mrb[0].mxu0 %v6508
  %v6741 = vpop.f32.mrb[0].mxu0
  %v6742 = vadd.f32 0.0, %v6741
  %v6743 = vpop.f32.mrb[0].mxu0
  %v6744 = vadd.f32 0.0, %v6743
  %v6745 = vpop.f32.mrb[0].mxu0
  %v6746 = vpop.f32.mrb[0].mxu0
  %6747 = vdwg.mxu0
  %6748 = vmatprep.subr.bf16.mxu0 0
  %6749 = vmatpush1.bf16.msra.mxu0 %v6541
  %6750 = vmatprep.subr.bf16.mxu0 0
  %6751 = vmatpush1.bf16.msra.mxu0 0
  %6752 = vmatprep.subr.bf16.mxu0 0
  %6753 = vmatpush1.bf16.msra.mxu0 0
  %6754 = vmatprep.subr.bf16.mxu0 0
  %6755 = vmatpush1.bf16.msra.mxu0 0
  %6756 = vmatprep.subr.bf16.mxu0 0
  %6757 = vmatpush1.bf16.msra.mxu0 0
  %6758 = vmatprep.subr.bf16.mxu0 0
  %6759 = vmatpush1.bf16.msra.mxu0 0
  %6760 = vmatprep.subr.bf16.mxu0 0
  %6761 = vmatpush1.bf16.msra.mxu0 0
  %6762 = vmatprep.subr.bf16.mxu0 0
  %6763 = vmatpush1.bf16.msra.mxu0 0
  %6764 = vmatprep.subr.bf16.mxu0 0
  %6765 = vmatpush1.bf16.msra.mxu0 0
  %6766 = vmatprep.subr.bf16.mxu0 0
  %6767 = vmatpush1.bf16.msra.mxu0 0
  %6768 = vmatprep.subr.bf16.mxu0 0
  %6769 = vmatpush1.bf16.msra.mxu0 0
  %6770 = vmatprep.subr.bf16.mxu0 0
  %6771 = vmatpush1.bf16.msra.mxu0 0
  %6772 = vmatprep.subr.bf16.mxu0 0
  %6773 = vmatpush1.bf16.msra.mxu0 0
  %6774 = vmatprep.subr.bf16.mxu0 0
  %6775 = vmatpush1.bf16.msra.mxu0 0
  %6776 = vmatprep.subr.bf16.mxu0 0
  %6777 = vmatpush1.bf16.msra.mxu0 0
  %6778 = vmatprep.subr.bf16.mxu0 0
  %6779 = vmatpush1.bf16.msra.mxu0 0
  %6780 = vmatprep.mubr.bf16.mxu0 0
  %6781 = vmatmul.mubr.bf16.gmra.mrb[0].mxu0 %v6508
  %v6782 = vpop.f32.mrb[0].mxu0
  %v6783 = vadd.f32 0.0, %v6782
  %v6784 = vpop.f32.mrb[0].mxu0
  %v6785 = vpop.f32.mrb[0].mxu0
  %v6786 = vpop.f32.mrb[0].mxu0
  %6787 = vdwg.mxu0
  %v6788 = vadd.f32 %v6459, %v6578
  %v6789 = vadd.f32 %v6460, %v6580
  %v6790 = vadd.f32 %v6461, %v6619
  %v6791 = vadd.f32 %v6462, %v6621
  %v6792 = vadd.f32 %v6463, %v6660
  %v6793 = vadd.f32 %v6464, %v6662
  %v6794 = vadd.f32 %v6465, %v6701
  %v6795 = vadd.f32 %v6466, %v6703
  %v6796 = vadd.f32 %v6467, %v6742
  %v6797 = vadd.f32 %v6468, %v6744
  %v6798 = vadd.f32 %v6469, %v6783
  %6799 = vst [vmem:[%s4] sm:$0xff] %v6788
  %6800 = vst [vmem:[%s4 + $0x8] sm:$0xff] %v6789
  %6801 = vst [vmem:[%s4 + $0x10] sm:$0xff] %v6790
  %6802 = vst [vmem:[%s4 + $0x18] sm:$0xff] %v6791
  %6803 = vst [vmem:[%s4 + $0x20] sm:$0xff] %v6792
  %6804 = vst [vmem:[%s4 + $0x28] sm:$0xff] %v6793
  %6805 = vst [vmem:[%s4 + $0x30] sm:$0xff] %v6794
  %6806 = vst [vmem:[%s4 + $0x38] sm:$0xff] %v6795
  %6807 = vst [vmem:[%s4 + $0x40] sm:$0xff] %v6796
  %6808 = vst [vmem:[%s4 + $0x48] sm:$0xff] %v6797
  %6809 = vst [vmem:[%s4 + $0x50] sm:$0xff] %v6798
  // Predicated region
  $region18: #{forward.1} parent=0 // pred_check
    _
  $region19: #{forward.1} parent=0 // pred_check_branch
    %6811 = sbr.rel (0) target = $region21
  $region20: #{forward.1} parent=0 // pred_region
    _
  $region21: #{forward.1} parent=0 // pred_fallthru
    _
  // Predicated region
  $region22: #{forward.1} parent=0 // pred_check
    _
  $region23: #{forward.1} parent=0 // pred_check_branch
    %6813 = sbr.rel (0) target = $region25
  $region24: #{forward.1} parent=0 // pred_region
    _
  $region25: #{forward.1} parent=0 // pred_fallthru
    _

</llo_original>
